<compile_context>
chip_gen: v7x
topology: tpu7x:2x2x1
jax: 0.10.0
libtpu: 0.0.40
codegen_flags: <defaults>
</compile_context>

<pallas_src>
import functools

import jax
import jax.numpy as jnp
from jax import lax
from jax.experimental import pallas as pl
from jax.experimental.pallas import tpu as pltpu


# ----------------------------------------------------------------------------
# helpers
# ----------------------------------------------------------------------------
def _pick_tile(dim, pref):
    """Largest multiple of 128 that divides `dim` and is <= pref, else full dim."""
    best = None
    t = 128
    while t <= min(dim, pref):
        if dim % t == 0:
            best = t
        t += 128
    return best if best is not None else dim


# ----------------------------------------------------------------------------
# Pallas kernels
# ----------------------------------------------------------------------------
def _mm_bias_act_kernel(x_ref, w_ref, b_ref, o_ref, *, relu):
    """Single-K-step fused matmul + bias (+ReLU): no accumulator scratch."""
    y = jnp.dot(x_ref[...], w_ref[...], preferred_element_type=jnp.float32)
    y = y + b_ref[...]                       # (1, tn) bias broadcasts over rows
    if relu:
        y = jnp.maximum(y, 0.0)
    o_ref[...] = y.astype(o_ref.dtype)


def _mm_bias_act_ktiled_kernel(x_ref, w_ref, b_ref, o_ref, acc_ref, *, relu):
    """K-tiled fused matmul + bias (+ReLU) with f32 VMEM accumulator (fallback)."""
    @pl.when(pl.program_id(2) == 0)
    def _():
        acc_ref[...] = jnp.zeros_like(acc_ref)

    acc_ref[...] += jnp.dot(x_ref[...], w_ref[...],
                            preferred_element_type=jnp.float32)

    @pl.when(pl.program_id(2) == pl.num_programs(2) - 1)
    def _():
        y = acc_ref[...] + b_ref[...]
        if relu:
            y = jnp.maximum(y, 0.0)
        o_ref[...] = y.astype(o_ref.dtype)


def matmul_bias_act(x, w, b_row, *, relu, out_dtype=None,
                    tm_pref=256, tn_pref=512):
    """y = act(x @ w + b).  x:(M,K), w:(K,N), b_row:(1,N)."""
    M, K = x.shape
    K2, N = w.shape
    assert K == K2, (K, K2)
    out_dtype = out_dtype or x.dtype
    tm = _pick_tile(M, tm_pref)
    tn = _pick_tile(N, tn_pref)
    gm, gn = M // tm, N // tn
    out_isz = jnp.dtype(out_dtype).itemsize
    flops = 2 * M * K * N
    # Re-reads: x streamed once per N tile, w once per M tile.
    bytes_accessed = (gn * M * K * x.dtype.itemsize
                      + gm * K * N * w.dtype.itemsize
                      + gm * N * b_row.dtype.itemsize
                      + M * N * out_isz)

    # Full-K single step whenever double-buffered operand blocks fit a small
    # VMEM budget (conv1: ~0.5 MB, conv2: ~1.9 MB -> always true here).
    full_k_bytes = 2 * (tm * K * x.dtype.itemsize + K * tn * w.dtype.itemsize)
    if full_k_bytes <= (8 << 20):
        return pl.pallas_call(
            functools.partial(_mm_bias_act_kernel, relu=relu),
            out_shape=jax.ShapeDtypeStruct((M, N), out_dtype),
            grid=(gm, gn),
            in_specs=[
                pl.BlockSpec((tm, K), lambda i, j: (i, 0)),
                pl.BlockSpec((K, tn), lambda i, j: (0, j)),
                pl.BlockSpec((1, tn), lambda i, j: (0, j)),
            ],
            out_specs=pl.BlockSpec((tm, tn), lambda i, j: (i, j)),
            compiler_params=pltpu.CompilerParams(
                dimension_semantics=("parallel", "parallel")),
            cost_estimate=pl.CostEstimate(flops=flops, transcendentals=0,
                                          bytes_accessed=bytes_accessed),
        )(x, w, b_row)

    # Fallback: K-tiled reduction with f32 accumulator (not hit at these sizes).
    tk = _pick_tile(K, 768)
    gk = K // tk
    return pl.pallas_call(
        functools.partial(_mm_bias_act_ktiled_kernel, relu=relu),
        out_shape=jax.ShapeDtypeStruct((M, N), out_dtype),
        grid=(gm, gn, gk),
        in_specs=[
            pl.BlockSpec((tm, tk), lambda i, j, k: (i, k)),
            pl.BlockSpec((tk, tn), lambda i, j, k: (k, j)),
            pl.BlockSpec((1, tn), lambda i, j, k: (0, j)),
        ],
        out_specs=pl.BlockSpec((tm, tn), lambda i, j, k: (i, j)),
        scratch_shapes=[pltpu.VMEM((tm, tn), jnp.float32)],
        compiler_params=pltpu.CompilerParams(
            dimension_semantics=("parallel", "parallel", "arbitrary")),
        cost_estimate=pl.CostEstimate(flops=flops, transcendentals=0,
                                      bytes_accessed=bytes_accessed),
    )(x, w, b_row)


def _classifier_kernel(x_ref, w1_ref, b1_ref, w2_ref, b2_ref, w3_ref, b3_ref,
                       o_ref, acc_ref):
    """Fused fc1->ReLU->fc2->ReLU->fc3.  grid over fc1 output-feature chunks;
    fc2 partial products accumulate in VMEM; fc3 runs in the last-step epilogue."""
    j = pl.program_id(0)

    @pl.when(j == 0)
    def _():
        acc_ref[...] = jnp.zeros_like(acc_ref)

    h1 = jnp.dot(x_ref[...], w1_ref[...], preferred_element_type=jnp.float32)
    h1 = jnp.maximum(h1 + b1_ref[...], 0.0)                 # (M, tn1) chunk of fc1 out
    acc_ref[...] += jnp.dot(h1.astype(w2_ref.dtype), w2_ref[...],
                            preferred_element_type=jnp.float32)

    @pl.when(j == pl.num_programs(0) - 1)
    def _():
        h2 = jnp.maximum(acc_ref[...] + b2_ref[...], 0.0)   # (M, 1024)
        y = jnp.dot(h2.astype(w3_ref.dtype), w3_ref[...],
                    preferred_element_type=jnp.float32) + b3_ref[...]
        o_ref[...] = y.astype(o_ref.dtype)


def classifier_forward(x, w1, b1, w2, b2, w3, b3, *, tn1=512):
    """Pure weight-streaming stage; tn1=512 keeps fixed per-step overhead at
    ~10-15% of the ~2.8 MB/step DMA.  NOTE(v7x): the resident x block and the
    (M, N2) f32 accumulator scale with batch; add an M-tile grid axis and set
    vmem_limit_bytes before using batches much larger than a few hundred."""
    M, K1 = x.shape
    N1 = w1.shape[1]
    N2 = w2.shape[1]
    N3 = w3.shape[1]
    assert N1 % tn1 == 0
    n_chunks = N1 // tn1
    flops = 2 * M * (K1 * N1 + N1 * N2 + N2 * N3)
    bytes_accessed = (n_chunks * x.size * x.dtype.itemsize        # x re-read per chunk
                      + w1.size * w1.dtype.itemsize
                      + w2.size * w2.dtype.itemsize
                      + w3.size * w3.dtype.itemsize
                      + 4 * (N1 + N2 + N3) + 4 * M * N3)
    return pl.pallas_call(
        _classifier_kernel,
        out_shape=jax.ShapeDtypeStruct((M, N3), jnp.float32),
        grid=(n_chunks,),
        in_specs=[
            pl.BlockSpec((M, K1), lambda j: (0, 0)),      # activations (resident)
            pl.BlockSpec((K1, tn1), lambda j: (0, j)),    # fc1 weight chunk
            pl.BlockSpec((1, tn1), lambda j: (0, j)),     # fc1 bias chunk
            pl.BlockSpec((tn1, N2), lambda j: (j, 0)),    # fc2 weight chunk
            pl.BlockSpec((1, N2), lambda j: (0, 0)),      # fc2 bias (resident)
            pl.BlockSpec((N2, N3), lambda j: (0, 0)),     # fc3 weight (resident)
            pl.BlockSpec((1, N3), lambda j: (0, 0)),      # fc3 bias (resident)
        ],
        out_specs=pl.BlockSpec((M, N3), lambda j: (0, 0)),
        scratch_shapes=[pltpu.VMEM((M, N2), jnp.float32)],
        compiler_params=pltpu.CompilerParams(
            dimension_semantics=("arbitrary",)),
        cost_estimate=pl.CostEstimate(flops=flops, transcendentals=0,
                                      bytes_accessed=bytes_accessed),
    )(x, w1, b1, w2, b2, w3, b3)


# ----------------------------------------------------------------------------
# Layer wrappers (thin XLA glue + Pallas calls)
# ----------------------------------------------------------------------------
def conv2d_relu(x_nhwc, wmat, b_row, *, ksize, stride, padding, k_pad=0):
    """Conv2d + ReLU: fused im2col (one XLA op, (Cin,kh,kw) feature order)
    + single-step Pallas GEMM+bias+ReLU."""
    N = x_nhwc.shape[0]
    patches = lax.conv_general_dilated_patches(
        x_nhwc,
        filter_shape=(ksize, ksize),
        window_strides=(stride, stride),
        padding=[(padding, padding), (padding, padding)],
        dimension_numbers=("NHWC", "HWIO", "NHWC"))
    _, oh, ow, K = patches.shape
    cols = patches.reshape(N * oh * ow, K).astype(wmat.dtype)
    if k_pad:
        cols = jnp.pad(cols, ((0, 0), (0, k_pad)))        # align K (e.g. 363 -> 384)
    cout = wmat.shape[1]
    y = matmul_bias_act(cols, wmat, b_row, relu=True, out_dtype=x_nhwc.dtype)
    return y.reshape(N, oh, ow, cout)


def maxpool2d(x_nhwc, k, s):
    """MaxPool2d(kernel=k, stride=s) on NHWC via XLA reduce_window (no window
    materialization, no extra kernel launch — per perf review)."""
    return lax.reduce_window(
        x_nhwc, jnp.array(-jnp.inf, dtype=x_nhwc.dtype), lax.max,
        window_dimensions=(1, k, k, 1), window_strides=(1, s, s, 1),
        padding="VALID")


# ----------------------------------------------------------------------------
# CNNModel forward
# ----------------------------------------------------------------------------
def cnn_model_forward(params, x_nchw, num_classes=8):
    x = jnp.transpose(x_nchw, (0, 2, 3, 1)).astype(jnp.bfloat16)   # NCHW -> NHWC, bf16
    # layer1: Conv2d(3,64,k=11,s=4,p=2) + ReLU  (K padded 363 -> 384 with zeros)
    x = conv2d_relu(x, params["conv1_w"], params["conv1_b"],
                    ksize=11, stride=4, padding=2, k_pad=384 - 363)
    # pool1: MaxPool2d(3, 2)
    x = maxpool2d(x, 3, 2)
    # layer2: Conv2d(64,192,k=5,s=1,p=2) + ReLU
    x = conv2d_relu(x, params["conv2_w"], params["conv2_b"],
                    ksize=5, stride=1, padding=2)
    # pool2: MaxPool2d(3, 2)
    x = maxpool2d(x, 3, 2)
    # Flatten in NHWC order; fc1_w rows were permuted at init so this equals
    # torch.flatten(x, 1) on the NCHW tensor (no runtime transpose).
    x = x.reshape(x.shape[0], -1)
    # TODO(synk): nn.Dropout treated as identity (eval-mode forward).
    logits = classifier_forward(x, params["fc1_w"], params["fc1_b"],
                                params["fc2_w"], params["fc2_b"],
                                params["fc3_w"], params["fc3_b"])
    return logits[:, :num_classes]                                  # un-pad fc3 (128 -> 8)


# ----------------------------------------------------------------------------
# Weights: raw (torch-layout) + packed (kernel-layout)
# ----------------------------------------------------------------------------
def init_raw_weights(key, pooled_chw=(192, 3, 3), num_classes=8):
    c_p, h_p, w_p = pooled_chw
    flat = c_p * h_p * w_p
    ks = jax.random.split(key, 10)
    std = 0.02
    f32 = jnp.float32
    return {
        "conv1_w": jax.random.normal(ks[0], (64, 3, 11, 11), f32) * std,   # (O,I,kh,kw)
        "conv1_b": jax.random.normal(ks[1], (64,), f32) * std,
        "conv2_w": jax.random.normal(ks[2], (192, 64, 5, 5), f32) * std,
        "conv2_b": jax.random.normal(ks[3], (192,), f32) * std,
        "fc1_w": jax.random.normal(ks[4], (flat, 2048), f32) * std,  # rows = NCHW-flat order
        "fc1_b": jax.random.normal(ks[5], (2048,), f32) * std,
        "fc2_w": jax.random.normal(ks[6], (2048, 1024), f32) * std,
        "fc2_b": jax.random.normal(ks[7], (1024,), f32) * std,
        "fc3_w": jax.random.normal(ks[8], (1024, num_classes), f32) * std,
        "fc3_b": jax.random.normal(ks[9], (num_classes,), f32) * std,
    }


def pack_params(raw, pooled_chw=(192, 3, 3), num_classes=8):
    """Kernel layout: bf16, (in,out) GEMM layout, channel-major (Cin,kh,kw) conv
    rows, conv1 K padded 363->384, fc1 rows permuted to NHWC-flat order,
    fc3 outputs padded to a lane-dense 128."""
    bf16 = jnp.bfloat16
    c_p, h_p, w_p = pooled_chw
    flat = c_p * h_p * w_p
    # conv1
    w1m = jnp.transpose(raw["conv1_w"], (1, 2, 3, 0)).reshape(3 * 11 * 11, 64)
    w1m = jnp.pad(w1m.astype(bf16), ((0, 384 - 363), (0, 0)))        # (384, 64)
    b1r = raw["conv1_b"].reshape(1, 64)
    # conv2 (no channel padding: K = 64*5*5 = 1600)
    w2m = jnp.transpose(raw["conv2_w"], (1, 2, 3, 0)).reshape(64 * 5 * 5, 192).astype(bf16)
    b2r = raw["conv2_b"].reshape(1, 192)
    # fc1 rows: (C,H,W) order -> (H,W,C) order
    fc1 = (raw["fc1_w"].astype(bf16).reshape(c_p, h_p, w_p, -1)
           .transpose(1, 2, 0, 3).reshape(flat, -1))
    fc3 = jnp.pad(raw["fc3_w"].astype(bf16), ((0, 0), (0, 128 - num_classes)))
    fc3_b = jnp.pad(raw["fc3_b"], (0, 128 - num_classes))
    return {
        "conv1_w": w1m, "conv1_b": b1r,
        "conv2_w": w2m, "conv2_b": b2r,
        "fc1_w": fc1, "fc1_b": raw["fc1_b"].reshape(1, -1),
        "fc2_w": raw["fc2_w"].astype(bf16), "fc2_b": raw["fc2_b"].reshape(1, -1),
        "fc3_w": fc3, "fc3_b": fc3_b.reshape(1, -1),
    }


def reference_forward(raw, x_nchw):
    """Pure-XLA reference with the same bf16/f32 discipline (validates the
    im2col feature ordering and the flatten permutation)."""
    bf16 = jnp.bfloat16
    x = jnp.transpose(x_nchw, (0, 2, 3, 1)).astype(bf16)
    w1 = jnp.transpose(raw["conv1_w"].astype(bf16), (2, 3, 1, 0))    # HWIO
    y = lax.conv_general_dilated(x, w1, (4, 4), [(2, 2), (2, 2)],
                                 dimension_numbers=("NHWC", "HWIO", "NHWC"),
                                 preferred_element_type=jnp.float32)
    y = jnp.maximum(y + raw["conv1_b"], 0.0).astype(bf16)
    y = maxpool2d(y, 3, 2)
    w2 = jnp.transpose(raw["conv2_w"].astype(bf16), (2, 3, 1, 0))
    y = lax.conv_general_dilated(y, w2, (1, 1), [(2, 2), (2, 2)],
                                 dimension_numbers=("NHWC", "HWIO", "NHWC"),
                                 preferred_element_type=jnp.float32)
    y = jnp.maximum(y + raw["conv2_b"], 0.0).astype(bf16)
    y = maxpool2d(y, 3, 2)
    flat = jnp.transpose(y, (0, 3, 1, 2)).reshape(y.shape[0], -1)    # torch.flatten(NCHW)
    h1 = jnp.dot(flat, raw["fc1_w"].astype(bf16), preferred_element_type=jnp.float32)
    h1 = jnp.maximum(h1 + raw["fc1_b"], 0.0).astype(bf16)
    h2 = jnp.dot(h1, raw["fc2_w"].astype(bf16), preferred_element_type=jnp.float32)
    h2 = jnp.maximum(h2 + raw["fc2_b"], 0.0).astype(bf16)
    out = jnp.dot(h2, raw["fc3_w"].astype(bf16), preferred_element_type=jnp.float32)
    return out + raw["fc3_b"]


if __name__ == "__main__":
    key = jax.random.PRNGKey(0)
    kx, kp = jax.random.split(key)

    # Small input: (2, 3, 67, 67)
    #   conv1 (k=11,s=4,p=2) -> 16x16x64 ; pool1 (3,2) -> 7x7x64
    #   conv2 (k=5,s=1,p=2)  -> 7x7x192  ; pool2 (3,2) -> 3x3x192
    #   flatten -> 1728 -> 2048 -> 1024 -> 8
    N, H, W = 2, 67, 67
    x = jax.random.normal(kx, (N, 3, H, W), jnp.float32)

    raw = init_raw_weights(kp, pooled_chw=(192, 3, 3), num_classes=8)
    params = pack_params(raw, pooled_chw=(192, 3, 3), num_classes=8)

    fwd = jax.jit(cnn_model_forward)
    out = jax.block_until_ready(fwd(params, x))

    assert out.shape == (N, 8), out.shape
    assert out.dtype == jnp.float32
    assert bool(jnp.all(jnp.isfinite(out)))

    ref = jax.block_until_ready(jax.jit(reference_forward)(raw, x))
    max_diff = float(jnp.max(jnp.abs(out - ref)))
    assert bool(jnp.allclose(out, ref, atol=5e-2, rtol=5e-2)), max_diff

    print("KERNEL_OK")
</pallas_src>

<mosaic_0001>
module attributes {stable_mosaic.version = 11 : i64} {
  func.func @_mm_bias_act_kernel(%arg0: i32, %arg1: i32, %arg2: memref<256x384xbf16, #tpu.memory_space<vmem>>, %arg3: memref<384x64xbf16, #tpu.memory_space<vmem>>, %arg4: memref<1x64xf32, #tpu.memory_space<vmem>>, %arg5: memref<256x64xbf16, #tpu.memory_space<vmem>>) attributes {dimension_semantics = [#tpu.dimension_semantics<parallel>, #tpu.dimension_semantics<parallel>], iteration_bounds = array<i64: 2, 1>, scalar_prefetch = 0 : i64, scratch_operands = 0 : i64, tpu.core_type = #tpu.core_type<tc>, window_params = [{transform_indices = @transform_0, window_bounds = array<i64: 256, 384>}, {transform_indices = @transform_1, window_bounds = array<i64: 384, 64>}, {transform_indices = @transform_2, window_bounds = array<i64: 1, 64>}, {transform_indices = @transform_3, window_bounds = array<i64: 256, 64>}]} {
    %c0 = arith.constant 0 : index
    %c0_0 = arith.constant 0 : index
    %0 = vector.load %arg2[%c0, %c0_0] : memref<256x384xbf16, #tpu.memory_space<vmem>>, vector<256x384xbf16>
    %c0_1 = arith.constant 0 : index
    %c0_2 = arith.constant 0 : index
    %1 = vector.load %arg3[%c0_1, %c0_2] : memref<384x64xbf16, #tpu.memory_space<vmem>>, vector<384x64xbf16>
    %cst = arith.constant dense<0.000000e+00> : vector<256x64xf32>
    %2 = tpu.matmul %0, %1, %cst {dimension_numbers = #tpu.dot_dimension_numbers<[1], [0], [0], [1], [0, 0, 1, 1], [], []>} : vector<256x384xbf16>, vector<384x64xbf16>, vector<256x64xf32> -> vector<256x64xf32>
    %c0_3 = arith.constant 0 : index
    %c0_4 = arith.constant 0 : index
    %3 = vector.load %arg4[%c0_3, %c0_4] : memref<1x64xf32, #tpu.memory_space<vmem>>, vector<1x64xf32>
    %4 = vector.broadcast %3 : vector<1x64xf32> to vector<256x64xf32>
    %5 = arith.addf %2, %4 : vector<256x64xf32>
    %cst_5 = arith.constant 0.000000e+00 : f32
    %6 = vector.broadcast %cst_5 : f32 to vector<256x64xf32>
    %7 = arith.maximumf %5, %6 : vector<256x64xf32>
    %8 = arith.truncf %7 : vector<256x64xf32> to vector<256x64xbf16>
    %c0_6 = arith.constant 0 : index
    %c0_7 = arith.constant 0 : index
    %9 = vector.load %arg5[%c0_6, %c0_7] : memref<256x64xbf16, #tpu.memory_space<vmem>>, vector<256x64xbf16>
    tpu.vector_store %arg5[%c0_6, %c0_7], %8 {strides = array<i32>} : memref<256x64xbf16, #tpu.memory_space<vmem>>, vector<256x64xbf16>,
    return
  }
  func.func @transform_0(%arg0: i32, %arg1: i32) -> (i32, i32) {
    %c0_i32 = arith.constant 0 : i32
    %c0_i32_0 = arith.constant 0 : i32
    return %arg0, %c0_i32 : i32, i32
  }
  func.func @transform_1(%arg0: i32, %arg1: i32) -> (i32, i32) {
    %c0_i32 = arith.constant 0 : i32
    %c0_i32_0 = arith.constant 0 : i32
    return %c0_i32, %arg1 : i32, i32
  }
  func.func @transform_2(%arg0: i32, %arg1: i32) -> (i32, i32) {
    %c0_i32 = arith.constant 0 : i32
    %c0_i32_0 = arith.constant 0 : i32
    return %c0_i32, %arg1 : i32, i32
  }
  func.func @transform_3(%arg0: i32, %arg1: i32) -> (i32, i32) {
    %c0_i32 = arith.constant 0 : i32
    return %arg0, %arg1 : i32, i32
  }
}

module attributes {stable_mosaic.version = 11 : i64} {
  func.func @_mm_bias_act_kernel(%arg0: i32, %arg1: i32, %arg2: memref<98x1600xbf16, #tpu.memory_space<vmem>>, %arg3: memref<1600x192xbf16, #tpu.memory_space<vmem>>, %arg4: memref<1x192xf32, #tpu.memory_space<vmem>>, %arg5: memref<98x192xbf16, #tpu.memory_space<vmem>>) attributes {dimension_semantics = [#tpu.dimension_semantics<parallel>, #tpu.dimension_semantics<parallel>], iteration_bounds = array<i64: 1, 1>, scalar_prefetch = 0 : i64, scratch_operands = 0 : i64, tpu.core_type = #tpu.core_type<tc>, window_params = [{transform_indices = @transform_0, window_bounds = array<i64: 98, 1600>}, {transform_indices = @transform_1, window_bounds = array<i64: 1600, 192>}, {transform_indices = @transform_2, window_bounds = array<i64: 1, 192>}, {transform_indices = @transform_3, window_bounds = array<i64: 98, 192>}]} {
    %c0 = arith.constant 0 : index
    %c0_0 = arith.constant 0 : index
    %0 = vector.load %arg2[%c0, %c0_0] : memref<98x1600xbf16, #tpu.memory_space<vmem>>, vector<98x1600xbf16>
    %c0_1 = arith.constant 0 : index
    %c0_2 = arith.constant 0 : index
    %1 = vector.load %arg3[%c0_1, %c0_2] : memref<1600x192xbf16, #tpu.memory_space<vmem>>, vector<1600x192xbf16>
    %cst = arith.constant dense<0.000000e+00> : vector<98x192xf32>
    %2 = tpu.matmul %0, %1, %cst {dimension_numbers = #tpu.dot_dimension_numbers<[1], [0], [0], [1], [0, 0, 1, 1], [], []>} : vector<98x1600xbf16>, vector<1600x192xbf16>, vector<98x192xf32> -> vector<98x192xf32>
    %c0_3 = arith.constant 0 : index
    %c0_4 = arith.constant 0 : index
    %3 = vector.load %arg4[%c0_3, %c0_4] : memref<1x192xf32, #tpu.memory_space<vmem>>, vector<1x192xf32>
    %4 = vector.broadcast %3 : vector<1x192xf32> to vector<98x192xf32>
    %5 = arith.addf %2, %4 : vector<98x192xf32>
    %cst_5 = arith.constant 0.000000e+00 : f32
    %6 = vector.broadcast %cst_5 : f32 to vector<98x192xf32>
    %7 = arith.maximumf %5, %6 : vector<98x192xf32>
    %8 = arith.truncf %7 : vector<98x192xf32> to vector<98x192xbf16>
    %c0_6 = arith.constant 0 : index
    %c0_7 = arith.constant 0 : index
    %9 = vector.load %arg5[%c0_6, %c0_7] : memref<98x192xbf16, #tpu.memory_space<vmem>>, vector<98x192xbf16>
    tpu.vector_store %arg5[%c0_6, %c0_7], %8 {strides = array<i32>} : memref<98x192xbf16, #tpu.memory_space<vmem>>, vector<98x192xbf16>,
    return
  }
  func.func @transform_0(%arg0: i32, %arg1: i32) -> (i32, i32) {
    %c0_i32 = arith.constant 0 : i32
    %c0_i32_0 = arith.constant 0 : i32
    return %arg0, %c0_i32 : i32, i32
  }
  func.func @transform_1(%arg0: i32, %arg1: i32) -> (i32, i32) {
    %c0_i32 = arith.constant 0 : i32
    %c0_i32_0 = arith.constant 0 : i32
    return %c0_i32, %arg1 : i32, i32
  }
  func.func @transform_2(%arg0: i32, %arg1: i32) -> (i32, i32) {
    %c0_i32 = arith.constant 0 : i32
    %c0_i32_0 = arith.constant 0 : i32
    return %c0_i32, %arg1 : i32, i32
  }
  func.func @transform_3(%arg0: i32, %arg1: i32) -> (i32, i32) {
    %c0_i32 = arith.constant 0 : i32
    return %arg0, %arg1 : i32, i32
  }
}

module attributes {stable_mosaic.version = 11 : i64} {
  func.func @_classifier_kernel(%arg0: i32, %arg1: memref<2x1728xbf16, #tpu.memory_space<vmem>>, %arg2: memref<1728x512xbf16, #tpu.memory_space<vmem>>, %arg3: memref<1x512xf32, #tpu.memory_space<vmem>>, %arg4: memref<512x1024xbf16, #tpu.memory_space<vmem>>, %arg5: memref<1x1024xf32, #tpu.memory_space<vmem>>, %arg6: memref<1024x128xbf16, #tpu.memory_space<vmem>>, %arg7: memref<1x128xf32, #tpu.memory_space<vmem>>, %arg8: memref<2x128xf32, #tpu.memory_space<vmem>>, %arg9: memref<2x1024xf32, #tpu.memory_space<vmem>>) attributes {dimension_semantics = [#tpu.dimension_semantics<arbitrary>], iteration_bounds = array<i64: 4>, scalar_prefetch = 0 : i64, scratch_operands = 1 : i64, tpu.core_type = #tpu.core_type<tc>, window_params = [{pipeline_mode = #tpu.pipeline_mode<synchronous>, transform_indices = @transform_0, window_bounds = array<i64: 2, 1728>}, {transform_indices = @transform_1, window_bounds = array<i64: 1728, 512>}, {transform_indices = @transform_2, window_bounds = array<i64: 1, 512>}, {transform_indices = @transform_3, window_bounds = array<i64: 512, 1024>}, {pipeline_mode = #tpu.pipeline_mode<synchronous>, transform_indices = @transform_4, window_bounds = array<i64: 1, 1024>}, {pipeline_mode = #tpu.pipeline_mode<synchronous>, transform_indices = @transform_5, window_bounds = array<i64: 1024, 128>}, {pipeline_mode = #tpu.pipeline_mode<synchronous>, transform_indices = @transform_6, window_bounds = array<i64: 1, 128>}, {pipeline_mode = #tpu.pipeline_mode<synchronous>, transform_indices = @transform_7, window_bounds = array<i64: 2, 128>}]} {
    %c0_i32 = arith.constant 0 : i32
    %0 = arith.cmpi eq, %arg0, %c0_i32 : i32
    %1 = arith.extui %0 : i1 to i32
    %c0_i32_0 = arith.constant 0 : i32
    %2 = arith.cmpi ne, %1, %c0_i32_0 : i32
    scf.if %2 {
      %cst_15 = arith.constant 0.000000e+00 : f32
      %20 = vector.broadcast %cst_15 : f32 to vector<2x1024xf32>
      %c0_16 = arith.constant 0 : index
      %c0_17 = arith.constant 0 : index
      %21 = vector.load %arg9[%c0_16, %c0_17] : memref<2x1024xf32, #tpu.memory_space<vmem>>, vector<2x1024xf32>
      tpu.vector_store %arg9[%c0_16, %c0_17], %20 {strides = array<i32>} : memref<2x1024xf32, #tpu.memory_space<vmem>>, vector<2x1024xf32>,
    } else {
    }
    %c0 = arith.constant 0 : index
    %c0_1 = arith.constant 0 : index
    %3 = vector.load %arg1[%c0, %c0_1] : memref<2x1728xbf16, #tpu.memory_space<vmem>>, vector<2x1728xbf16>
    %c0_2 = arith.constant 0 : index
    %c0_3 = arith.constant 0 : index
    %4 = vector.load %arg2[%c0_2, %c0_3] : memref<1728x512xbf16, #tpu.memory_space<vmem>>, vector<1728x512xbf16>
    %cst = arith.constant dense<0.000000e+00> : vector<2x512xf32>
    %5 = tpu.matmul %3, %4, %cst {dimension_numbers = #tpu.dot_dimension_numbers<[1], [0], [0], [1], [0, 0, 1, 1], [], []>} : vector<2x1728xbf16>, vector<1728x512xbf16>, vector<2x512xf32> -> vector<2x512xf32>
    %c0_4 = arith.constant 0 : index
    %c0_5 = arith.constant 0 : index
    %6 = vector.load %arg3[%c0_4, %c0_5] : memref<1x512xf32, #tpu.memory_space<vmem>>, vector<1x512xf32>
    %7 = vector.broadcast %6 : vector<1x512xf32> to vector<2x512xf32>
    %8 = arith.addf %5, %7 : vector<2x512xf32>
    %cst_6 = arith.constant 0.000000e+00 : f32
    %9 = vector.broadcast %cst_6 : f32 to vector<2x512xf32>
    %10 = arith.maximumf %8, %9 : vector<2x512xf32>
    %c0_7 = arith.constant 0 : index
    %c0_8 = arith.constant 0 : index
    %11 = vector.load %arg9[%c0_7, %c0_8] : memref<2x1024xf32, #tpu.memory_space<vmem>>, vector<2x1024xf32>
    %12 = arith.truncf %10 : vector<2x512xf32> to vector<2x512xbf16>
    %c0_9 = arith.constant 0 : index
    %c0_10 = arith.constant 0 : index
    %13 = vector.load %arg4[%c0_9, %c0_10] : memref<512x1024xbf16, #tpu.memory_space<vmem>>, vector<512x1024xbf16>
    %cst_11 = arith.constant dense<0.000000e+00> : vector<2x1024xf32>
    %14 = tpu.matmul %12, %13, %cst_11 {dimension_numbers = #tpu.dot_dimension_numbers<[1], [0], [0], [1], [0, 0, 1, 1], [], []>} : vector<2x512xbf16>, vector<512x1024xbf16>, vector<2x1024xf32> -> vector<2x1024xf32>
    %15 = arith.addf %11, %14 : vector<2x1024xf32>
    %c0_12 = arith.constant 0 : index
    %c0_13 = arith.constant 0 : index
    %16 = vector.load %arg9[%c0_12, %c0_13] : memref<2x1024xf32, #tpu.memory_space<vmem>>, vector<2x1024xf32>
    tpu.vector_store %arg9[%c0_12, %c0_13], %15 {strides = array<i32>} : memref<2x1024xf32, #tpu.memory_space<vmem>>, vector<2x1024xf32>,
    %c3_i32 = arith.constant 3 : i32
    %17 = arith.cmpi eq, %arg0, %c3_i32 : i32
    %18 = arith.extui %17 : i1 to i32
    %c0_i32_14 = arith.constant 0 : i32
    %19 = arith.cmpi ne, %18, %c0_i32_14 : i32
    scf.if %19 {
      %c0_15 = arith.constant 0 : index
      %c0_16 = arith.constant 0 : index
      %20 = vector.load %arg9[%c0_15, %c0_16] : memref<2x1024xf32, #tpu.memory_space<vmem>>, vector<2x1024xf32>
      %c0_17 = arith.constant 0 : index
      %c0_18 = arith.constant 0 : index
      %21 = vector.load %arg5[%c0_17, %c0_18] : memref<1x1024xf32, #tpu.memory_space<vmem>>, vector<1x1024xf32>
      %22 = vector.broadcast %21 : vector<1x1024xf32> to vector<2x1024xf32>
      %23 = arith.addf %20, %22 : vector<2x1024xf32>
      %cst_19 = arith.constant 0.000000e+00 : f32
      %24 = vector.broadcast %cst_19 : f32 to vector<2x1024xf32>
      %25 = arith.maximumf %23, %24 : vector<2x1024xf32>
      %26 = arith.truncf %25 : vector<2x1024xf32> to vector<2x1024xbf16>
      %c0_20 = arith.constant 0 : index
      %c0_21 = arith.constant 0 : index
      %27 = vector.load %arg6[%c0_20, %c0_21] : memref<1024x128xbf16, #tpu.memory_space<vmem>>, vector<1024x128xbf16>
      %cst_22 = arith.constant dense<0.000000e+00> : vector<2x128xf32>
      %28 = tpu.matmul %26, %27, %cst_22 {dimension_numbers = #tpu.dot_dimension_numbers<[1], [0], [0], [1], [0, 0, 1, 1], [], []>} : vector<2x1024xbf16>, vector<1024x128xbf16>, vector<2x128xf32> -> vector<2x128xf32>
      %c0_23 = arith.constant 0 : index
      %c0_24 = arith.constant 0 : index
      %29 = vector.load %arg7[%c0_23, %c0_24] : memref<1x128xf32, #tpu.memory_space<vmem>>, vector<1x128xf32>
      %30 = vector.broadcast %29 : vector<1x128xf32> to vector<2x128xf32>
      %31 = arith.addf %28, %30 : vector<2x128xf32>
      %c0_25 = arith.constant 0 : index
      %c0_26 = arith.constant 0 : index
      %32 = vector.load %arg8[%c0_25, %c0_26] : memref<2x128xf32, #tpu.memory_space<vmem>>, vector<2x128xf32>
      tpu.vector_store %arg8[%c0_25, %c0_26], %31 {strides = array<i32>} : memref<2x128xf32, #tpu.memory_space<vmem>>, vector<2x128xf32>,
    } else {
    }
    return
  }
  func.func @transform_0(%arg0: i32) -> (i32, i32) {
    %c0_i32 = arith.constant 0 : i32
    %c0_i32_0 = arith.constant 0 : i32
    %c0_i32_1 = arith.constant 0 : i32
    return %c0_i32, %c0_i32_0 : i32, i32
  }
  func.func @transform_1(%arg0: i32) -> (i32, i32) {
    %c0_i32 = arith.constant 0 : i32
    %c0_i32_0 = arith.constant 0 : i32
    return %c0_i32, %arg0 : i32, i32
  }
  func.func @transform_2(%arg0: i32) -> (i32, i32) {
    %c0_i32 = arith.constant 0 : i32
    %c0_i32_0 = arith.constant 0 : i32
    return %c0_i32, %arg0 : i32, i32
  }
  func.func @transform_3(%arg0: i32) -> (i32, i32) {
    %c0_i32 = arith.constant 0 : i32
    %c0_i32_0 = arith.constant 0 : i32
    return %arg0, %c0_i32 : i32, i32
  }
  func.func @transform_4(%arg0: i32) -> (i32, i32) {
    %c0_i32 = arith.constant 0 : i32
    %c0_i32_0 = arith.constant 0 : i32
    %c0_i32_1 = arith.constant 0 : i32
    return %c0_i32, %c0_i32_0 : i32, i32
  }
  func.func @transform_5(%arg0: i32) -> (i32, i32) {
    %c0_i32 = arith.constant 0 : i32
    %c0_i32_0 = arith.constant 0 : i32
    %c0_i32_1 = arith.constant 0 : i32
    return %c0_i32, %c0_i32_0 : i32, i32
  }
  func.func @transform_6(%arg0: i32) -> (i32, i32) {
    %c0_i32 = arith.constant 0 : i32
    %c0_i32_0 = arith.constant 0 : i32
    %c0_i32_1 = arith.constant 0 : i32
    return %c0_i32, %c0_i32_0 : i32, i32
  }
  func.func @transform_7(%arg0: i32) -> (i32, i32) {
    %c0_i32 = arith.constant 0 : i32
    %c0_i32_0 = arith.constant 0 : i32
    %c0_i32_1 = arith.constant 0 : i32
    return %c0_i32, %c0_i32_0 : i32, i32
  }
}

</mosaic_0001>

<llo_original>
// kernel: cnn_model_forward.3
$region0: #{cnn_model_forward.3}
  #allocation0 [shape = 'u32[]', space=smem, size = 0x4, offset = 0x4, fixed_abs, tag = 'smem constant byte address 0x4 - core index']
  #allocation1 [shape = 'u32[144,128]{1,0:T(1,128)}', space=vmem, size = 0x12000, scoped, tag = 'internal scratch']
  %s0 = inlined_call_operand.vmem [shape: bf16[512,384], index: 0, kind: input, shape index: {}]
  %s1 = inlined_call_operand.vmem [shape: bf16[384,64], index: 1, kind: input, shape index: {}]
  %s2 = inlined_call_operand.vmem [shape: f32[1,64], index: 2, kind: input, shape index: {}]
  %s3 = inlined_call_operand.vmem [shape: bf16[512,64], index: 3, kind: output, shape index: {}]
  %s4 = sld [smem:[#allocation0]]
  $region45: #{cnn_model_forward.3} parent=0
    _
  %s6 = ssub.s32 1, %s4
  %s7 = scalar_select 0, %s6, %s4
  loop: start=0, step=1, limit=4
  $region2: #{cnn_model_forward.3} parent=0 // loop_pre_header
    _
  $region3: #{cnn_model_forward.3} parent=0 // loop_header
    %s9 = sphi 0, %s13
    %p10 = scmp.ge.s32.totalorder %s9, 4
    %s16 = sphi 0, %s28
    %s17 = sphi 0, %s24
    %s18 = sphi 0, %s16
    %s19 = sphi 0, %s17
    %s20 = sphi 0, %s18
    %s21 = sphi 0, %s19
    %s31 = sphi 0, %s33
    %s34 = sphi 0, %s31
    %s35 = sphi 0, %s34
    %s51 = sphi 0, %s35
    %s57 = sphi 0, %s59
    %s60 = sphi 0, %s57
    %s61 = sphi 0, %s60
    %s77 = sphi 0, %s61
    %s83 = sphi 0, %s85
    %s86 = sphi 0, %s83
    %s87 = sphi 0, %s86
    %s103 = sphi 0, %s87
    %s111 = sphi 0, %s113
    %s114 = sphi 0, %s111
    %s115 = sphi 0, %s114
    %s131 = sphi 0, %s115
  $region4: #{cnn_model_forward.3} parent=0 // loop_header_branch
    %12 = sbr.rel (%p10) target = $region8
  $region5: #{cnn_model_forward.3} parent=0 // loop_body
    %s14 = ssub.s32 %s9, 1
    %s15 = ssub.s32 %s9, 2
    %s22 = sadd.s32 1, %s17
    %p23 = scmp.ge.s32.totalorder %s22, 1
    %s24 = scalar_select %p23, 0, %s22
    %s25 = sadd.s32 1, %s16
    %s26 = scalar_select %p23, %s25, %s16
    %p27 = scmp.ge.s32.totalorder %s26, 2
    %s28 = scalar_select %p27, 0, %s26
    %s29 = ssub.s32 %s16, %s28
    %p30 = scmp.eq.s32.totalorder %s29, 0
    %s32 = sadd.s32 %s31, 1
    %s33 = scalar_select %p30, %s31, %s32
    %p36 = pneg %p30
    %p37 = scmp.eq.s32.totalorder %s9, 1
    %p38 = por %p36, %p37
    %p39 = scmp.ne.s32.totalorder %s31, %s34
    %p40 = scmp.eq.s32.totalorder %s9, 0
    %p41 = por %p39, %p40
    %p42 = scmp.ne.s32.totalorder %s31, %s34
    %p43 = scmp.eq.s32.totalorder %s14, 1
    %p44 = por %p42, %p43
    %p45 = scmp.ne.s32.totalorder %s34, %s35
    %p46 = scmp.eq.s32.totalorder %s14, 0
    %p47 = por %p45, %p46
    %p48 = scmp.ne.s32.totalorder %s34, %s35
    %p49 = scmp.eq.s32.totalorder %s15, 1
    %p50 = por %p48, %p49
    %p52 = scmp.ne.s32.totalorder %s35, %s51
    %p53 = scmp.eq.s32.totalorder %s15, 0
    %p54 = por %p52, %p53
    %s55 = ssub.s32 %s17, %s24
    %p56 = scmp.eq.s32.totalorder %s55, 0
    %s58 = sadd.s32 %s57, 1
    %s59 = scalar_select %p56, %s57, %s58
    %p62 = pneg %p56
    %p63 = scmp.eq.s32.totalorder %s9, 1
    %p64 = por %p62, %p63
    %p65 = scmp.ne.s32.totalorder %s57, %s60
    %p66 = scmp.eq.s32.totalorder %s9, 0
    %p67 = por %p65, %p66
    %p68 = scmp.ne.s32.totalorder %s57, %s60
    %p69 = scmp.eq.s32.totalorder %s14, 1
    %p70 = por %p68, %p69
    %p71 = scmp.ne.s32.totalorder %s60, %s61
    %p72 = scmp.eq.s32.totalorder %s14, 0
    %p73 = por %p71, %p72
    %p74 = scmp.ne.s32.totalorder %s60, %s61
    %p75 = scmp.eq.s32.totalorder %s15, 1
    %p76 = por %p74, %p75
    %p78 = scmp.ne.s32.totalorder %s61, %s77
    %p79 = scmp.eq.s32.totalorder %s15, 0
    %p80 = por %p78, %p79
    %s81 = ssub.s32 %s17, %s24
    %p82 = scmp.eq.s32.totalorder %s81, 0
    %s84 = sadd.s32 %s83, 1
    %s85 = scalar_select %p82, %s83, %s84
    %p88 = pneg %p82
    %p89 = scmp.eq.s32.totalorder %s9, 1
    %p90 = por %p88, %p89
    %p91 = scmp.ne.s32.totalorder %s83, %s86
    %p92 = scmp.eq.s32.totalorder %s9, 0
    %p93 = por %p91, %p92
    %p94 = scmp.ne.s32.totalorder %s83, %s86
    %p95 = scmp.eq.s32.totalorder %s14, 1
    %p96 = por %p94, %p95
    %p97 = scmp.ne.s32.totalorder %s86, %s87
    %p98 = scmp.eq.s32.totalorder %s14, 0
    %p99 = por %p97, %p98
    %p100 = scmp.ne.s32.totalorder %s86, %s87
    %p101 = scmp.eq.s32.totalorder %s15, 1
    %p102 = por %p100, %p101
    %p104 = scmp.ne.s32.totalorder %s87, %s103
    %p105 = scmp.eq.s32.totalorder %s15, 0
    %p106 = por %p104, %p105
    %s107 = ssub.s32 %s16, %s28
    %s108 = ssub.s32 %s17, %s24
    %s109 = sor.u32 %s107, %s108
    %p110 = scmp.eq.s32.totalorder %s109, 0
    %s112 = sadd.s32 %s111, 1
    %s113 = scalar_select %p110, %s111, %s112
    %p116 = pneg %p110
    %p117 = scmp.eq.s32.totalorder %s9, 1
    %p118 = por %p116, %p117
    %p119 = scmp.ne.s32.totalorder %s111, %s114
    %p120 = scmp.eq.s32.totalorder %s9, 0
    %p121 = por %p119, %p120
    %p122 = scmp.ne.s32.totalorder %s111, %s114
    %p123 = scmp.eq.s32.totalorder %s14, 1
    %p124 = por %p122, %p123
    %p125 = scmp.ne.s32.totalorder %s114, %s115
    %p126 = scmp.eq.s32.totalorder %s14, 0
    %p127 = por %p125, %p126
    %p128 = scmp.ne.s32.totalorder %s114, %s115
    %p129 = scmp.eq.s32.totalorder %s15, 1
    %p130 = por %p128, %p129
    %p132 = scmp.ne.s32.totalorder %s115, %s131
    %p133 = scmp.eq.s32.totalorder %s15, 0
    %p134 = por %p132, %p133
    %p135 = scmp.le.s32.totalorder 1, %s9
    %p136 = scmp.lt.s32.totalorder %s9, 3
    %p137 = pnand %p135, %p136
    %p138 = pneg %p137
    // Predicated region
    $region9: #{cnn_model_forward.3} parent=5 // pred_check
      _
    $region10: #{cnn_model_forward.3} parent=5 // pred_check_branch
      %140 = sbr.rel (%p137) target = $region12
    $region11: #{cnn_model_forward.3} parent=5 // pred_region
      %s141 = ssub.s32 %s9, 1
      // Predicated region
      $region13: #{cnn_model_forward.3} parent=11 // pred_check
        %p142 = pneg %p73
      $region14: #{cnn_model_forward.3} parent=11 // pred_check_branch
        %144 = sbr.rel (%p142) target = $region16
      $region15: #{cnn_model_forward.3} parent=11 // pred_region
        %p145 = scmp.lt.s32.totalorder %s19, 0
        %s146 = scalar_select %p145, %s19, 0
        %s147 = smul.addr %s146, 4
        %s148 = scalar_lea.vmem %s1, %s147
      $region16: #{cnn_model_forward.3} parent=11 // pred_fallthru
        _
      // Predicated region
      $region17: #{cnn_model_forward.3} parent=11 // pred_check
        %p149 = pneg %p99
      $region18: #{cnn_model_forward.3} parent=11 // pred_check_branch
        %151 = sbr.rel (%p149) target = $region20
      $region19: #{cnn_model_forward.3} parent=11 // pred_region
        %p152 = scmp.lt.s32.totalorder %s19, 0
        %s153 = scalar_select %p152, %s19, 0
        %s154 = scalar_lea.vmem %s2, %s153
      $region20: #{cnn_model_forward.3} parent=11 // pred_fallthru
        _
    $region12: #{cnn_model_forward.3} parent=5 // pred_fallthru
      _
    %p155 = scmp.lt.s32.totalorder %s9, 2
    // Predicated region
    $region21: #{cnn_model_forward.3} parent=5 // pred_check
      %p156 = pneg %p155
    $region22: #{cnn_model_forward.3} parent=5 // pred_check_branch
      %158 = sbr.rel (%p156) target = $region24
    $region23: #{cnn_model_forward.3} parent=5 // pred_region
      // Predicated region
      $region25: #{cnn_model_forward.3} parent=23 // pred_check
        %p159 = pneg %p41
      $region26: #{cnn_model_forward.3} parent=23 // pred_check_branch
        %161 = sbr.rel (%p159) target = $region28
      $region27: #{cnn_model_forward.3} parent=23 // pred_region
        %s162 = smul.u32 32, %s16
        %p163 = scmp.lt.s32.totalorder %s162, 63
        %s164 = scalar_select %p163, %s162, 63
        %s165 = smul.addr %s164, 3
        %s166 = smul.addr %s165, 4
        %s167 = scalar_lea.vmem %s0, %s166
        %s168 = smul.u32 32, %s16
      $region28: #{cnn_model_forward.3} parent=23 // pred_fallthru
        _
    $region24: #{cnn_model_forward.3} parent=5 // pred_fallthru
      _
    %p169 = scmp.le.s32.totalorder 1, %s9
    %p170 = scmp.lt.s32.totalorder %s9, 3
    %p171 = pnand %p169, %p170
    %p172 = pneg %p171
    // Predicated region
    $region29: #{cnn_model_forward.3} parent=5 // pred_check
      _
    $region30: #{cnn_model_forward.3} parent=5 // pred_check_branch
      %174 = sbr.rel (%p171) target = $region32
    $region31: #{cnn_model_forward.3} parent=5 // pred_region
      %s175 = ssub.s32 %s9, 1
      %s176 = smul.u32 32, %s18
      %p177 = scmp.lt.s32.totalorder %s176, 63
      %s178 = scalar_select %p177, %s176, 63
      %s179 = smul.addr %s178, 3
      %s180 = smul.addr %s179, 4
      %s181 = scalar_lea.vmem %s0, %s180
      %p182 = pneg %p47
      %p183 = pneg %p44
      %p184 = scmp.lt.s32.totalorder %s19, 0
      %s185 = scalar_select %p184, %s19, 0
      %s186 = smul.addr %s185, 4
      %s187 = scalar_lea.vmem %s1, %s186
      %p188 = pneg %p73
      %p189 = pneg %p70
      %p190 = scmp.lt.s32.totalorder %s19, 0
      %s191 = scalar_select %p190, %s19, 0
      %s192 = scalar_lea.vmem %s2, %s191
      %p193 = pneg %p99
      %p194 = pneg %p96
      %p195 = pneg %p127
      %p196 = pneg %p124
      %s197 = smul.u32 32, %s18
      %p198 = scmp.lt.s32.totalorder %s197, 63
      %s199 = scalar_select %p198, %s197, 63
      %p200 = scmp.lt.s32.totalorder %s19, 0
      %s201 = scalar_select %p200, %s19, 0
      %s202 = sadd.s32 %s201, %s199
      %s203 = smul.addr %s202, 4
      %s204 = scalar_lea.vmem %s3, %s203
      %s205 = smul.u32 32, %s18
      %p206 = scmp.lt.s32.totalorder %s205, 63
      %s207 = scalar_select %p206, %s205, 63
      %s208 = smul.addr %s207, 3
      %s209 = smul.addr %s208, 4
      %s210 = scalar_lea.vmem %s0, %s209
      %s211 = smul.u32 32, %s18
      %p212 = scmp.lt.s32.totalorder %s19, 0
      %s213 = scalar_select %p212, %s19, 0
      %s214 = smul.addr %s213, 4
      %s215 = scalar_lea.vmem %s1, %s214
      %p216 = scmp.lt.s32.totalorder %s19, 0
      %s217 = scalar_select %p216, %s19, 0
      %s218 = scalar_lea.vmem %s2, %s217
      %s219 = smul.u32 32, %s18
      %p220 = scmp.lt.s32.totalorder %s219, 63
      %s221 = scalar_select %p220, %s219, 63
      %p222 = scmp.lt.s32.totalorder %s19, 0
      %s223 = scalar_select %p222, %s19, 0
      %s224 = sadd.s32 %s223, %s221
      %s225 = smul.addr %s224, 4
      %s226 = scalar_lea.vmem %s3, %s225
      %s227 = smul.u32 32, %s18
      %v229 = vld [vmem:[%s210] sm:$0xff]
      %v230 = vld [vmem:[%s210 + $0x8] sm:$0xf]
      %v231 = vld [vmem:[%s210 + $0xc] sm:$0xff]
      %v232 = vld [vmem:[%s210 + $0x14] sm:$0xf]
      %v233 = vld [vmem:[%s210 + $0x18] sm:$0xff]
      %v234 = vld [vmem:[%s210 + $0x20] sm:$0xf]
      %v235 = vld [vmem:[%s210 + $0x24] sm:$0xff]
      %v236 = vld [vmem:[%s210 + $0x2c] sm:$0xf]
      %v237 = vld [vmem:[%s210 + $0x30] sm:$0xff]
      %v238 = vld [vmem:[%s210 + $0x38] sm:$0xf]
      %v239 = vld [vmem:[%s210 + $0x3c] sm:$0xff]
      %v240 = vld [vmem:[%s210 + $0x44] sm:$0xf]
      %v241 = vld [vmem:[%s210 + $0x48] sm:$0xff]
      %v242 = vld [vmem:[%s210 + $0x50] sm:$0xf]
      %v243 = vld [vmem:[%s210 + $0x54] sm:$0xff]
      %v244 = vld [vmem:[%s210 + $0x5c] sm:$0xf]
      %v245 = vld [vmem:[%s210 + $0x60] sm:$0xff]
      %v246 = vld [vmem:[%s210 + $0x68] sm:$0xf]
      %v247 = vld [vmem:[%s210 + $0x6c] sm:$0xff]
      %v248 = vld [vmem:[%s210 + $0x74] sm:$0xf]
      %v249 = vld [vmem:[%s210 + $0x78] sm:$0xff]
      %v250 = vld [vmem:[%s210 + $0x80] sm:$0xf]
      %v251 = vld [vmem:[%s210 + $0x84] sm:$0xff]
      %v252 = vld [vmem:[%s210 + $0x8c] sm:$0xf]
      %v253 = vld [vmem:[%s210 + $0x90] sm:$0xff]
      %v254 = vld [vmem:[%s210 + $0x98] sm:$0xf]
      %v255 = vld [vmem:[%s210 + $0x9c] sm:$0xff]
      %v256 = vld [vmem:[%s210 + $0xa4] sm:$0xf]
      %v257 = vld [vmem:[%s210 + $0xa8] sm:$0xff]
      %v258 = vld [vmem:[%s210 + $0xb0] sm:$0xf]
      %v259 = vld [vmem:[%s210 + $0xb4] sm:$0xff]
      %v260 = vld [vmem:[%s210 + $0xbc] sm:$0xf]
      %v261 = vld [vmem:[%s210 + $0xc0] sm:$0xff]
      %v262 = vld [vmem:[%s210 + $0xc8] sm:$0xf]
      %v263 = vld [vmem:[%s210 + $0xcc] sm:$0xff]
      %v264 = vld [vmem:[%s210 + $0xd4] sm:$0xf]
      %v265 = vld [vmem:[%s210 + $0xd8] sm:$0xff]
      %v266 = vld [vmem:[%s210 + $0xe0] sm:$0xf]
      %v267 = vld [vmem:[%s210 + $0xe4] sm:$0xff]
      %v268 = vld [vmem:[%s210 + $0xec] sm:$0xf]
      %v269 = vld [vmem:[%s210 + $0xf0] sm:$0xff]
      %v270 = vld [vmem:[%s210 + $0xf8] sm:$0xf]
      %v271 = vld [vmem:[%s210 + $0xfc] sm:$0xff]
      %v272 = vld [vmem:[%s210 + $0x104] sm:$0xf]
      %v273 = vld [vmem:[%s210 + $0x108] sm:$0xff]
      %v274 = vld [vmem:[%s210 + $0x110] sm:$0xf]
      %v275 = vld [vmem:[%s210 + $0x114] sm:$0xff]
      %v276 = vld [vmem:[%s210 + $0x11c] sm:$0xf]
      %v277 = vld [vmem:[%s210 + $0x120] sm:$0xff]
      %v278 = vld [vmem:[%s210 + $0x128] sm:$0xf]
      %v279 = vld [vmem:[%s210 + $0x12c] sm:$0xff]
      %v280 = vld [vmem:[%s210 + $0x134] sm:$0xf]
      %v281 = vld [vmem:[%s210 + $0x138] sm:$0xff]
      %v282 = vld [vmem:[%s210 + $0x140] sm:$0xf]
      %v283 = vld [vmem:[%s210 + $0x144] sm:$0xff]
      %v284 = vld [vmem:[%s210 + $0x14c] sm:$0xf]
      %v285 = vld [vmem:[%s210 + $0x150] sm:$0xff]
      %v286 = vld [vmem:[%s210 + $0x158] sm:$0xf]
      %v287 = vld [vmem:[%s210 + $0x15c] sm:$0xff]
      %v288 = vld [vmem:[%s210 + $0x164] sm:$0xf]
      %v289 = vld [vmem:[%s210 + $0x168] sm:$0xff]
      %v290 = vld [vmem:[%s210 + $0x170] sm:$0xf]
      %v291 = vld [vmem:[%s210 + $0x174] sm:$0xff]
      %v292 = vld [vmem:[%s210 + $0x17c] sm:$0xf]
      %v293 = vld [vmem:[%s215] sm:$0xf]
      %v294 = vld [vmem:[%s215 + $0x4] sm:$0xf]
      %v295 = vld [vmem:[%s215 + $0x8] sm:$0xf]
      %v296 = vld [vmem:[%s215 + $0xc] sm:$0xf]
      %v297 = vld [vmem:[%s215 + $0x10] sm:$0xf]
      %v298 = vld [vmem:[%s215 + $0x14] sm:$0xf]
      %v299 = vld [vmem:[%s215 + $0x18] sm:$0xf]
      %v300 = vld [vmem:[%s215 + $0x1c] sm:$0xf]
      %v301 = vld [vmem:[%s215 + $0x20] sm:$0xf]
      %v302 = vld [vmem:[%s215 + $0x24] sm:$0xf]
      %v303 = vld [vmem:[%s215 + $0x28] sm:$0xf]
      %v304 = vld [vmem:[%s215 + $0x2c] sm:$0xf]
      %v305 = vld [vmem:[%s215 + $0x30] sm:$0xf]
      %v306 = vld [vmem:[%s215 + $0x34] sm:$0xf]
      %v307 = vld [vmem:[%s215 + $0x38] sm:$0xf]
      %v308 = vld [vmem:[%s215 + $0x3c] sm:$0xf]
      %v309 = vld [vmem:[%s215 + $0x40] sm:$0xf]
      %v310 = vld [vmem:[%s215 + $0x44] sm:$0xf]
      %v311 = vld [vmem:[%s215 + $0x48] sm:$0xf]
      %v312 = vld [vmem:[%s215 + $0x4c] sm:$0xf]
      %v313 = vld [vmem:[%s215 + $0x50] sm:$0xf]
      %v314 = vld [vmem:[%s215 + $0x54] sm:$0xf]
      %v315 = vld [vmem:[%s215 + $0x58] sm:$0xf]
      %v316 = vld [vmem:[%s215 + $0x5c] sm:$0xf]
      %v317 = vld [vmem:[%s215 + $0x60] sm:$0xf]
      %v318 = vld [vmem:[%s215 + $0x64] sm:$0xf]
      %v319 = vld [vmem:[%s215 + $0x68] sm:$0xf]
      %v320 = vld [vmem:[%s215 + $0x6c] sm:$0xf]
      %v321 = vld [vmem:[%s215 + $0x70] sm:$0xf]
      %v322 = vld [vmem:[%s215 + $0x74] sm:$0xf]
      %v323 = vld [vmem:[%s215 + $0x78] sm:$0xf]
      %v324 = vld [vmem:[%s215 + $0x7c] sm:$0xf]
      %v325 = vld [vmem:[%s215 + $0x80] sm:$0xf]
      %v326 = vld [vmem:[%s215 + $0x84] sm:$0xf]
      %v327 = vld [vmem:[%s215 + $0x88] sm:$0xf]
      %v328 = vld [vmem:[%s215 + $0x8c] sm:$0xf]
      %v329 = vld [vmem:[%s215 + $0x90] sm:$0xf]
      %v330 = vld [vmem:[%s215 + $0x94] sm:$0xf]
      %v331 = vld [vmem:[%s215 + $0x98] sm:$0xf]
      %v332 = vld [vmem:[%s215 + $0x9c] sm:$0xf]
      %v333 = vld [vmem:[%s215 + $0xa0] sm:$0xf]
      %v334 = vld [vmem:[%s215 + $0xa4] sm:$0xf]
      %v335 = vld [vmem:[%s215 + $0xa8] sm:$0xf]
      %v336 = vld [vmem:[%s215 + $0xac] sm:$0xf]
      %v337 = vld [vmem:[%s215 + $0xb0] sm:$0xf]
      %v338 = vld [vmem:[%s215 + $0xb4] sm:$0xf]
      %v339 = vld [vmem:[%s215 + $0xb8] sm:$0xf]
      %v340 = vld [vmem:[%s215 + $0xbc] sm:$0xf]
      %v341 = vld [vmem:[%s218] sm:$0x1]
      %v343 = vlaneseq
      %v344 = vshrl.u32 %v343, 7
      %v345 = vsub.s32 0, %v344
      %v346 = vrot.slane %v341, %v345
      %v412 = vunpack.c.l.b16 %v229
      %v413 = vunpack.c.h.b16 %v229
      %v414 = vunpack.c.l.b16 %v230
      %v415 = vunpack.c.l.b16 %v231
      %v416 = vunpack.c.h.b16 %v231
      %v417 = vunpack.c.l.b16 %v232
      %v418 = vunpack.c.l.b16 %v233
      %v419 = vunpack.c.h.b16 %v233
      %v420 = vunpack.c.l.b16 %v234
      %v421 = vunpack.c.l.b16 %v235
      %v422 = vunpack.c.h.b16 %v235
      %v423 = vunpack.c.l.b16 %v236
      %v424 = vunpack.c.l.b16 %v237
      %v425 = vunpack.c.h.b16 %v237
      %v426 = vunpack.c.l.b16 %v238
      %v427 = vunpack.c.l.b16 %v239
      %v428 = vunpack.c.h.b16 %v239
      %v429 = vunpack.c.l.b16 %v240
      %v430 = vunpack.c.l.b16 %v241
      %v431 = vunpack.c.h.b16 %v241
      %v432 = vunpack.c.l.b16 %v242
      %v433 = vunpack.c.l.b16 %v243
      %v434 = vunpack.c.h.b16 %v243
      %v435 = vunpack.c.l.b16 %v244
      %v436 = vunpack.c.l.b16 %v245
      %v437 = vunpack.c.h.b16 %v245
      %v438 = vunpack.c.l.b16 %v246
      %v439 = vunpack.c.l.b16 %v247
      %v440 = vunpack.c.h.b16 %v247
      %v441 = vunpack.c.l.b16 %v248
      %v442 = vunpack.c.l.b16 %v249
      %v443 = vunpack.c.h.b16 %v249
      %v444 = vunpack.c.l.b16 %v250
      %v445 = vunpack.c.l.b16 %v251
      %v446 = vunpack.c.h.b16 %v251
      %v447 = vunpack.c.l.b16 %v252
      %v448 = vunpack.c.l.b16 %v253
      %v449 = vunpack.c.h.b16 %v253
      %v450 = vunpack.c.l.b16 %v254
      %v451 = vunpack.c.l.b16 %v255
      %v452 = vunpack.c.h.b16 %v255
      %v453 = vunpack.c.l.b16 %v256
      %v454 = vunpack.c.l.b16 %v257
      %v455 = vunpack.c.h.b16 %v257
      %v456 = vunpack.c.l.b16 %v258
      %v457 = vunpack.c.l.b16 %v259
      %v458 = vunpack.c.h.b16 %v259
      %v459 = vunpack.c.l.b16 %v260
      %v460 = vunpack.c.l.b16 %v261
      %v461 = vunpack.c.h.b16 %v261
      %v462 = vunpack.c.l.b16 %v262
      %v463 = vunpack.c.l.b16 %v263
      %v464 = vunpack.c.h.b16 %v263
      %v465 = vunpack.c.l.b16 %v264
      %v466 = vunpack.c.l.b16 %v265
      %v467 = vunpack.c.h.b16 %v265
      %v468 = vunpack.c.l.b16 %v266
      %v469 = vunpack.c.l.b16 %v267
      %v470 = vunpack.c.h.b16 %v267
      %v471 = vunpack.c.l.b16 %v268
      %v472 = vunpack.c.l.b16 %v269
      %v473 = vunpack.c.h.b16 %v269
      %v474 = vunpack.c.l.b16 %v270
      %v475 = vunpack.c.l.b16 %v271
      %v476 = vunpack.c.h.b16 %v271
      %v477 = vunpack.c.l.b16 %v272
      %v478 = vunpack.c.l.b16 %v273
      %v479 = vunpack.c.h.b16 %v273
      %v480 = vunpack.c.l.b16 %v274
      %v481 = vunpack.c.l.b16 %v275
      %v482 = vunpack.c.h.b16 %v275
      %v483 = vunpack.c.l.b16 %v276
      %v484 = vunpack.c.l.b16 %v277
      %v485 = vunpack.c.h.b16 %v277
      %v486 = vunpack.c.l.b16 %v278
      %v487 = vunpack.c.l.b16 %v279
      %v488 = vunpack.c.h.b16 %v279
      %v489 = vunpack.c.l.b16 %v280
      %v490 = vunpack.c.l.b16 %v281
      %v491 = vunpack.c.h.b16 %v281
      %v492 = vunpack.c.l.b16 %v282
      %v493 = vunpack.c.l.b16 %v283
      %v494 = vunpack.c.h.b16 %v283
      %v495 = vunpack.c.l.b16 %v284
      %v496 = vunpack.c.l.b16 %v285
      %v497 = vunpack.c.h.b16 %v285
      %v498 = vunpack.c.l.b16 %v286
      %v499 = vunpack.c.l.b16 %v287
      %v500 = vunpack.c.h.b16 %v287
      %v501 = vunpack.c.l.b16 %v288
      %v502 = vunpack.c.l.b16 %v289
      %v503 = vunpack.c.h.b16 %v289
      %v504 = vunpack.c.l.b16 %v290
      %v505 = vunpack.c.l.b16 %v291
      %v506 = vunpack.c.h.b16 %v291
      %v507 = vunpack.c.l.b16 %v292
      %v508 = vpack.c.b16 %v415, %v412
      %v509 = vpack.c.b16 %v416, %v413
      %v510 = vpack.c.b16 %v417, %v414
      %v511 = vpack.c.b16 %v421, %v418
      %v512 = vpack.c.b16 %v422, %v419
      %v513 = vpack.c.b16 %v423, %v420
      %v514 = vpack.c.b16 %v427, %v424
      %v515 = vpack.c.b16 %v428, %v425
      %v516 = vpack.c.b16 %v429, %v426
      %v517 = vpack.c.b16 %v433, %v430
      %v518 = vpack.c.b16 %v434, %v431
      %v519 = vpack.c.b16 %v435, %v432
      %v520 = vpack.c.b16 %v439, %v436
      %v521 = vpack.c.b16 %v440, %v437
      %v522 = vpack.c.b16 %v441, %v438
      %v523 = vpack.c.b16 %v445, %v442
      %v524 = vpack.c.b16 %v446, %v443
      %v525 = vpack.c.b16 %v447, %v444
      %v526 = vpack.c.b16 %v451, %v448
      %v527 = vpack.c.b16 %v452, %v449
      %v528 = vpack.c.b16 %v453, %v450
      %v529 = vpack.c.b16 %v457, %v454
      %v530 = vpack.c.b16 %v458, %v455
      %v531 = vpack.c.b16 %v459, %v456
      %v532 = vpack.c.b16 %v463, %v460
      %v533 = vpack.c.b16 %v464, %v461
      %v534 = vpack.c.b16 %v465, %v462
      %v535 = vpack.c.b16 %v469, %v466
      %v536 = vpack.c.b16 %v470, %v467
      %v537 = vpack.c.b16 %v471, %v468
      %v538 = vpack.c.b16 %v475, %v472
      %v539 = vpack.c.b16 %v476, %v473
      %v540 = vpack.c.b16 %v477, %v474
      %v541 = vpack.c.b16 %v481, %v478
      %v542 = vpack.c.b16 %v482, %v479
      %v543 = vpack.c.b16 %v483, %v480
      %v544 = vpack.c.b16 %v487, %v484
      %v545 = vpack.c.b16 %v488, %v485
      %v546 = vpack.c.b16 %v489, %v486
      %v547 = vpack.c.b16 %v493, %v490
      %v548 = vpack.c.b16 %v494, %v491
      %v549 = vpack.c.b16 %v495, %v492
      %v550 = vpack.c.b16 %v499, %v496
      %v551 = vpack.c.b16 %v500, %v497
      %v552 = vpack.c.b16 %v501, %v498
      %v553 = vpack.c.b16 %v505, %v502
      %v554 = vpack.c.b16 %v506, %v503
      %v555 = vpack.c.b16 %v507, %v504
      %v652 = vunpack.c.l.b16 %v293
      %v653 = vunpack.c.l.b16 %v294
      %v654 = vunpack.c.l.b16 %v295
      %v655 = vunpack.c.l.b16 %v296
      %v656 = vunpack.c.l.b16 %v297
      %v657 = vunpack.c.l.b16 %v298
      %v658 = vunpack.c.l.b16 %v299
      %v659 = vunpack.c.l.b16 %v300
      %v660 = vunpack.c.l.b16 %v301
      %v661 = vunpack.c.l.b16 %v302
      %v662 = vunpack.c.l.b16 %v303
      %v663 = vunpack.c.l.b16 %v304
      %v664 = vunpack.c.l.b16 %v305
      %v665 = vunpack.c.l.b16 %v306
      %v666 = vunpack.c.l.b16 %v307
      %v667 = vunpack.c.l.b16 %v308
      %v668 = vunpack.c.l.b16 %v309
      %v669 = vunpack.c.l.b16 %v310
      %v670 = vunpack.c.l.b16 %v311
      %v671 = vunpack.c.l.b16 %v312
      %v672 = vunpack.c.l.b16 %v313
      %v673 = vunpack.c.l.b16 %v314
      %v674 = vunpack.c.l.b16 %v315
      %v675 = vunpack.c.l.b16 %v316
      %v676 = vunpack.c.l.b16 %v317
      %v677 = vunpack.c.l.b16 %v318
      %v678 = vunpack.c.l.b16 %v319
      %v679 = vunpack.c.l.b16 %v320
      %v680 = vunpack.c.l.b16 %v321
      %v681 = vunpack.c.l.b16 %v322
      %v682 = vunpack.c.l.b16 %v323
      %v683 = vunpack.c.l.b16 %v324
      %v684 = vunpack.c.l.b16 %v325
      %v685 = vunpack.c.l.b16 %v326
      %v686 = vunpack.c.l.b16 %v327
      %v687 = vunpack.c.l.b16 %v328
      %v688 = vunpack.c.l.b16 %v329
      %v689 = vunpack.c.l.b16 %v330
      %v690 = vunpack.c.l.b16 %v331
      %v691 = vunpack.c.l.b16 %v332
      %v692 = vunpack.c.l.b16 %v333
      %v693 = vunpack.c.l.b16 %v334
      %v694 = vunpack.c.l.b16 %v335
      %v695 = vunpack.c.l.b16 %v336
      %v696 = vunpack.c.l.b16 %v337
      %v697 = vunpack.c.l.b16 %v338
      %v698 = vunpack.c.l.b16 %v339
      %v699 = vunpack.c.l.b16 %v340
      %v700 = vpack.c.b16 %v653, %v652
      %v701 = vpack.c.b16 %v655, %v654
      %v702 = vpack.c.b16 %v657, %v656
      %v703 = vpack.c.b16 %v659, %v658
      %v704 = vpack.c.b16 %v661, %v660
      %v705 = vpack.c.b16 %v663, %v662
      %v706 = vpack.c.b16 %v665, %v664
      %v707 = vpack.c.b16 %v667, %v666
      %v708 = vpack.c.b16 %v669, %v668
      %v709 = vpack.c.b16 %v671, %v670
      %v710 = vpack.c.b16 %v673, %v672
      %v711 = vpack.c.b16 %v675, %v674
      %v712 = vpack.c.b16 %v677, %v676
      %v713 = vpack.c.b16 %v679, %v678
      %v714 = vpack.c.b16 %v681, %v680
      %v715 = vpack.c.b16 %v683, %v682
      %v716 = vpack.c.b16 %v685, %v684
      %v717 = vpack.c.b16 %v687, %v686
      %v718 = vpack.c.b16 %v689, %v688
      %v719 = vpack.c.b16 %v691, %v690
      %v720 = vpack.c.b16 %v693, %v692
      %v721 = vpack.c.b16 %v695, %v694
      %v722 = vpack.c.b16 %v697, %v696
      %v723 = vpack.c.b16 %v699, %v698
      %748 = vmatprep.subr.bf16.mxu0 0
      %749 = vmatpush1.bf16.msra.mxu0 %v700
      %750 = vmatprep.subr.bf16.mxu0 0
      %751 = vmatpush1.bf16.msra.mxu0 %v701
      %752 = vmatprep.subr.bf16.mxu0 0
      %753 = vmatpush1.bf16.msra.mxu0 %v702
      %754 = vmatprep.subr.bf16.mxu0 0
      %755 = vmatpush1.bf16.msra.mxu0 %v703
      %756 = vmatprep.subr.bf16.mxu0 0
      %757 = vmatpush1.bf16.msra.mxu0 %v704
      %758 = vmatprep.subr.bf16.mxu0 0
      %759 = vmatpush1.bf16.msra.mxu0 %v705
      %760 = vmatprep.subr.bf16.mxu0 0
      %761 = vmatpush1.bf16.msra.mxu0 %v706
      %762 = vmatprep.subr.bf16.mxu0 0
      %763 = vmatpush1.bf16.msra.mxu0 %v707
      %764 = vmatprep.subr.bf16.mxu0 0
      %765 = vmatpush1.bf16.msra.mxu0 %v708
      %766 = vmatprep.subr.bf16.mxu0 0
      %767 = vmatpush1.bf16.msra.mxu0 %v709
      %768 = vmatprep.subr.bf16.mxu0 0
      %769 = vmatpush1.bf16.msra.mxu0 %v710
      %770 = vmatprep.subr.bf16.mxu0 0
      %771 = vmatpush1.bf16.msra.mxu0 %v711
      %772 = vmatprep.subr.bf16.mxu0 0
      %773 = vmatpush1.bf16.msra.mxu0 %v712
      %774 = vmatprep.subr.bf16.mxu0 0
      %775 = vmatpush1.bf16.msra.mxu0 %v713
      %776 = vmatprep.subr.bf16.mxu0 0
      %777 = vmatpush1.bf16.msra.mxu0 %v714
      %778 = vmatprep.subr.bf16.mxu0 0
      %779 = vmatpush1.bf16.msra.mxu0 %v715
      %780 = vmatprep.mubr.bf16.mxu0 %v509
      %781 = vmatmul.mubr.bf16.gmra.mrb[0].mxu0 %v508
      %v782 = vpop.f32.mrb[0].mxu0
      %v783 = vadd.f32 %v346, %v782
      %v784 = vpop.f32.mrb[0].mxu0
      %v785 = vpop.f32.mrb[0].mxu0
      %v786 = vadd.f32 %v346, %v785
      %v787 = vpop.f32.mrb[0].mxu0
      %788 = vmatprep.mubr.bf16.mxu0 %v512
      %789 = vmatmul.mubr.bf16.gmra.mrb[0].mxu0 %v511
      %v790 = vpop.f32.mrb[0].mxu0
      %v791 = vadd.f32 %v346, %v790
      %v792 = vpop.f32.mrb[0].mxu0
      %v793 = vpop.f32.mrb[0].mxu0
      %v794 = vadd.f32 %v346, %v793
      %v795 = vpop.f32.mrb[0].mxu0
      %796 = vmatprep.mubr.bf16.mxu0 %v515
      %797 = vmatmul.mubr.bf16.gmra.mrb[0].mxu0 %v514
      %v798 = vpop.f32.mrb[0].mxu0
      %v799 = vadd.f32 %v346, %v798
      %v800 = vpop.f32.mrb[0].mxu0
      %v801 = vpop.f32.mrb[0].mxu0
      %v802 = vadd.f32 %v346, %v801
      %v803 = vpop.f32.mrb[0].mxu0
      %804 = vmatprep.mubr.bf16.mxu0 %v518
      %805 = vmatmul.mubr.bf16.gmra.mrb[0].mxu0 %v517
      %v806 = vpop.f32.mrb[0].mxu0
      %v807 = vadd.f32 %v346, %v806
      %v808 = vpop.f32.mrb[0].mxu0
      %v809 = vpop.f32.mrb[0].mxu0
      %v810 = vadd.f32 %v346, %v809
      %v811 = vpop.f32.mrb[0].mxu0
      %812 = vmatprep.mubr.bf16.mxu0 %v521
      %813 = vmatmul.mubr.bf16.gmra.mrb[0].mxu0 %v520
      %v814 = vpop.f32.mrb[0].mxu0
      %v815 = vadd.f32 %v346, %v814
      %v816 = vpop.f32.mrb[0].mxu0
      %v817 = vpop.f32.mrb[0].mxu0
      %v818 = vadd.f32 %v346, %v817
      %v819 = vpop.f32.mrb[0].mxu0
      %820 = vmatprep.mubr.bf16.mxu0 %v524
      %821 = vmatmul.mubr.bf16.gmra.mrb[0].mxu0 %v523
      %v822 = vpop.f32.mrb[0].mxu0
      %v823 = vadd.f32 %v346, %v822
      %v824 = vpop.f32.mrb[0].mxu0
      %v825 = vpop.f32.mrb[0].mxu0
      %v826 = vadd.f32 %v346, %v825
      %v827 = vpop.f32.mrb[0].mxu0
      %828 = vmatprep.mubr.bf16.mxu0 %v527
      %829 = vmatmul.mubr.bf16.gmra.mrb[0].mxu0 %v526
      %v830 = vpop.f32.mrb[0].mxu0
      %v831 = vadd.f32 %v346, %v830
      %v832 = vpop.f32.mrb[0].mxu0
      %v833 = vpop.f32.mrb[0].mxu0
      %v834 = vadd.f32 %v346, %v833
      %v835 = vpop.f32.mrb[0].mxu0
      %836 = vmatprep.mubr.bf16.mxu0 %v530
      %837 = vmatmul.mubr.bf16.gmra.mrb[0].mxu0 %v529
      %v838 = vpop.f32.mrb[0].mxu0
      %v839 = vadd.f32 %v346, %v838
      %v840 = vpop.f32.mrb[0].mxu0
      %v841 = vpop.f32.mrb[0].mxu0
      %v842 = vadd.f32 %v346, %v841
      %v843 = vpop.f32.mrb[0].mxu0
      %844 = vmatprep.mubr.bf16.mxu0 %v533
      %845 = vmatmul.mubr.bf16.gmra.mrb[0].mxu0 %v532
      %v846 = vpop.f32.mrb[0].mxu0
      %v847 = vadd.f32 %v346, %v846
      %v848 = vpop.f32.mrb[0].mxu0
      %v849 = vpop.f32.mrb[0].mxu0
      %v850 = vadd.f32 %v346, %v849
      %v851 = vpop.f32.mrb[0].mxu0
      %852 = vmatprep.mubr.bf16.mxu0 %v536
      %853 = vmatmul.mubr.bf16.gmra.mrb[0].mxu0 %v535
      %v854 = vpop.f32.mrb[0].mxu0
      %v855 = vadd.f32 %v346, %v854
      %v856 = vpop.f32.mrb[0].mxu0
      %v857 = vpop.f32.mrb[0].mxu0
      %v858 = vadd.f32 %v346, %v857
      %v859 = vpop.f32.mrb[0].mxu0
      %860 = vmatprep.mubr.bf16.mxu0 %v539
      %861 = vmatmul.mubr.bf16.gmra.mrb[0].mxu0 %v538
      %v862 = vpop.f32.mrb[0].mxu0
      %v863 = vadd.f32 %v346, %v862
      %v864 = vpop.f32.mrb[0].mxu0
      %v865 = vpop.f32.mrb[0].mxu0
      %v866 = vadd.f32 %v346, %v865
      %v867 = vpop.f32.mrb[0].mxu0
      %868 = vmatprep.mubr.bf16.mxu0 %v542
      %869 = vmatmul.mubr.bf16.gmra.mrb[0].mxu0 %v541
      %v870 = vpop.f32.mrb[0].mxu0
      %v871 = vadd.f32 %v346, %v870
      %v872 = vpop.f32.mrb[0].mxu0
      %v873 = vpop.f32.mrb[0].mxu0
      %v874 = vadd.f32 %v346, %v873
      %v875 = vpop.f32.mrb[0].mxu0
      %876 = vmatprep.mubr.bf16.mxu0 %v545
      %877 = vmatmul.mubr.bf16.gmra.mrb[0].mxu0 %v544
      %v878 = vpop.f32.mrb[0].mxu0
      %v879 = vadd.f32 %v346, %v878
      %v880 = vpop.f32.mrb[0].mxu0
      %v881 = vpop.f32.mrb[0].mxu0
      %v882 = vadd.f32 %v346, %v881
      %v883 = vpop.f32.mrb[0].mxu0
      %884 = vmatprep.mubr.bf16.mxu0 %v548
      %885 = vmatmul.mubr.bf16.gmra.mrb[0].mxu0 %v547
      %v886 = vpop.f32.mrb[0].mxu0
      %v887 = vadd.f32 %v346, %v886
      %v888 = vpop.f32.mrb[0].mxu0
      %v889 = vpop.f32.mrb[0].mxu0
      %v890 = vadd.f32 %v346, %v889
      %v891 = vpop.f32.mrb[0].mxu0
      %892 = vmatprep.mubr.bf16.mxu0 %v551
      %893 = vmatmul.mubr.bf16.gmra.mrb[0].mxu0 %v550
      %v894 = vpop.f32.mrb[0].mxu0
      %v895 = vadd.f32 %v346, %v894
      %v896 = vpop.f32.mrb[0].mxu0
      %v897 = vpop.f32.mrb[0].mxu0
      %v898 = vadd.f32 %v346, %v897
      %v899 = vpop.f32.mrb[0].mxu0
      %900 = vmatprep.mubr.bf16.mxu0 %v554
      %901 = vmatmul.mubr.bf16.gmra.mrb[0].mxu0 %v553
      %v902 = vpop.f32.mrb[0].mxu0
      %v903 = vadd.f32 %v346, %v902
      %v904 = vpop.f32.mrb[0].mxu0
      %v905 = vpop.f32.mrb[0].mxu0
      %v906 = vadd.f32 %v346, %v905
      %v907 = vpop.f32.mrb[0].mxu0
      %908 = vdwg.mxu0
      %909 = vmatprep.subr.bf16.mxu0 0
      %910 = vmatpush1.bf16.msra.mxu0 %v716
      %911 = vmatprep.subr.bf16.mxu0 0
      %912 = vmatpush1.bf16.msra.mxu0 %v717
      %913 = vmatprep.subr.bf16.mxu0 0
      %914 = vmatpush1.bf16.msra.mxu0 %v718
      %915 = vmatprep.subr.bf16.mxu0 0
      %916 = vmatpush1.bf16.msra.mxu0 %v719
      %917 = vmatprep.subr.bf16.mxu0 0
      %918 = vmatpush1.bf16.msra.mxu0 %v720
      %919 = vmatprep.subr.bf16.mxu0 0
      %920 = vmatpush1.bf16.msra.mxu0 %v721
      %921 = vmatprep.subr.bf16.mxu0 0
      %922 = vmatpush1.bf16.msra.mxu0 %v722
      %923 = vmatprep.subr.bf16.mxu0 0
      %924 = vmatpush1.bf16.msra.mxu0 %v723
      %925 = vmatprep.subr.bf16.mxu0 0
      %926 = vmatpush1.bf16.msra.mxu0 0
      %927 = vmatprep.subr.bf16.mxu0 0
      %928 = vmatpush1.bf16.msra.mxu0 0
      %929 = vmatprep.subr.bf16.mxu0 0
      %930 = vmatpush1.bf16.msra.mxu0 0
      %931 = vmatprep.subr.bf16.mxu0 0
      %932 = vmatpush1.bf16.msra.mxu0 0
      %933 = vmatprep.subr.bf16.mxu0 0
      %934 = vmatpush1.bf16.msra.mxu0 0
      %935 = vmatprep.subr.bf16.mxu0 0
      %936 = vmatpush1.bf16.msra.mxu0 0
      %937 = vmatprep.subr.bf16.mxu0 0
      %938 = vmatpush1.bf16.msra.mxu0 0
      %939 = vmatprep.subr.bf16.mxu0 0
      %940 = vmatpush1.bf16.msra.mxu0 0
      %941 = vmatprep.mubr.bf16.mxu0 0
      %942 = vmatmul.mubr.bf16.gmra.mrb[0].mxu0 %v510
      %v943 = vpop.f32.mrb[0].mxu0
      %v944 = vadd.f32 %v783, %v943
      %v945 = vpop.f32.mrb[0].mxu0
      %v946 = vpop.f32.mrb[0].mxu0
      %v947 = vadd.f32 %v786, %v946
      %v948 = vpop.f32.mrb[0].mxu0
      %949 = vmatprep.mubr.bf16.mxu0 0
      %950 = vmatmul.mubr.bf16.gmra.mrb[0].mxu0 %v513
      %v951 = vpop.f32.mrb[0].mxu0
      %v952 = vadd.f32 %v791, %v951
      %v953 = vpop.f32.mrb[0].mxu0
      %v954 = vpop.f32.mrb[0].mxu0
      %v955 = vadd.f32 %v794, %v954
      %v956 = vpop.f32.mrb[0].mxu0
      %957 = vmatprep.mubr.bf16.mxu0 0
      %958 = vmatmul.mubr.bf16.gmra.mrb[0].mxu0 %v516
      %v959 = vpop.f32.mrb[0].mxu0
      %v960 = vadd.f32 %v799, %v959
      %v961 = vpop.f32.mrb[0].mxu0
      %v962 = vpop.f32.mrb[0].mxu0
      %v963 = vadd.f32 %v802, %v962
      %v964 = vpop.f32.mrb[0].mxu0
      %965 = vmatprep.mubr.bf16.mxu0 0
      %966 = vmatmul.mubr.bf16.gmra.mrb[0].mxu0 %v519
      %v967 = vpop.f32.mrb[0].mxu0
      %v968 = vadd.f32 %v807, %v967
      %v969 = vpop.f32.mrb[0].mxu0
      %v970 = vpop.f32.mrb[0].mxu0
      %v971 = vadd.f32 %v810, %v970
      %v972 = vpop.f32.mrb[0].mxu0
      %973 = vmatprep.mubr.bf16.mxu0 0
      %974 = vmatmul.mubr.bf16.gmra.mrb[0].mxu0 %v522
      %v975 = vpop.f32.mrb[0].mxu0
      %v976 = vadd.f32 %v815, %v975
      %v977 = vpop.f32.mrb[0].mxu0
      %v978 = vpop.f32.mrb[0].mxu0
      %v979 = vadd.f32 %v818, %v978
      %v980 = vpop.f32.mrb[0].mxu0
      %981 = vmatprep.mubr.bf16.mxu0 0
      %982 = vmatmul.mubr.bf16.gmra.mrb[0].mxu0 %v525
      %v983 = vpop.f32.mrb[0].mxu0
      %v984 = vadd.f32 %v823, %v983
      %v985 = vpop.f32.mrb[0].mxu0
      %v986 = vpop.f32.mrb[0].mxu0
      %v987 = vadd.f32 %v826, %v986
      %v988 = vpop.f32.mrb[0].mxu0
      %989 = vmatprep.mubr.bf16.mxu0 0
      %990 = vmatmul.mubr.bf16.gmra.mrb[0].mxu0 %v528
      %v991 = vpop.f32.mrb[0].mxu0
      %v992 = vadd.f32 %v831, %v991
      %v993 = vpop.f32.mrb[0].mxu0
      %v994 = vpop.f32.mrb[0].mxu0
      %v995 = vadd.f32 %v834, %v994
      %v996 = vpop.f32.mrb[0].mxu0
      %997 = vmatprep.mubr.bf16.mxu0 0
      %998 = vmatmul.mubr.bf16.gmra.mrb[0].mxu0 %v531
      %v999 = vpop.f32.mrb[0].mxu0
      %v1000 = vadd.f32 %v839, %v999
      %v1001 = vpop.f32.mrb[0].mxu0
      %v1002 = vpop.f32.mrb[0].mxu0
      %v1003 = vadd.f32 %v842, %v1002
      %v1004 = vpop.f32.mrb[0].mxu0
      %1005 = vmatprep.mubr.bf16.mxu0 0
      %1006 = vmatmul.mubr.bf16.gmra.mrb[0].mxu0 %v534
      %v1007 = vpop.f32.mrb[0].mxu0
      %v1008 = vadd.f32 %v847, %v1007
      %v1009 = vpop.f32.mrb[0].mxu0
      %v1010 = vpop.f32.mrb[0].mxu0
      %v1011 = vadd.f32 %v850, %v1010
      %v1012 = vpop.f32.mrb[0].mxu0
      %1013 = vmatprep.mubr.bf16.mxu0 0
      %1014 = vmatmul.mubr.bf16.gmra.mrb[0].mxu0 %v537
      %v1015 = vpop.f32.mrb[0].mxu0
      %v1016 = vadd.f32 %v855, %v1015
      %v1017 = vpop.f32.mrb[0].mxu0
      %v1018 = vpop.f32.mrb[0].mxu0
      %v1019 = vadd.f32 %v858, %v1018
      %v1020 = vpop.f32.mrb[0].mxu0
      %1021 = vmatprep.mubr.bf16.mxu0 0
      %1022 = vmatmul.mubr.bf16.gmra.mrb[0].mxu0 %v540
      %v1023 = vpop.f32.mrb[0].mxu0
      %v1024 = vadd.f32 %v863, %v1023
      %v1025 = vpop.f32.mrb[0].mxu0
      %v1026 = vpop.f32.mrb[0].mxu0
      %v1027 = vadd.f32 %v866, %v1026
      %v1028 = vpop.f32.mrb[0].mxu0
      %1029 = vmatprep.mubr.bf16.mxu0 0
      %1030 = vmatmul.mubr.bf16.gmra.mrb[0].mxu0 %v543
      %v1031 = vpop.f32.mrb[0].mxu0
      %v1032 = vadd.f32 %v871, %v1031
      %v1033 = vpop.f32.mrb[0].mxu0
      %v1034 = vpop.f32.mrb[0].mxu0
      %v1035 = vadd.f32 %v874, %v1034
      %v1036 = vpop.f32.mrb[0].mxu0
      %1037 = vmatprep.mubr.bf16.mxu0 0
      %1038 = vmatmul.mubr.bf16.gmra.mrb[0].mxu0 %v546
      %v1039 = vpop.f32.mrb[0].mxu0
      %v1040 = vadd.f32 %v879, %v1039
      %v1041 = vpop.f32.mrb[0].mxu0
      %v1042 = vpop.f32.mrb[0].mxu0
      %v1043 = vadd.f32 %v882, %v1042
      %v1044 = vpop.f32.mrb[0].mxu0
      %1045 = vmatprep.mubr.bf16.mxu0 0
      %1046 = vmatmul.mubr.bf16.gmra.mrb[0].mxu0 %v549
      %v1047 = vpop.f32.mrb[0].mxu0
      %v1048 = vadd.f32 %v887, %v1047
      %v1049 = vpop.f32.mrb[0].mxu0
      %v1050 = vpop.f32.mrb[0].mxu0
      %v1051 = vadd.f32 %v890, %v1050
      %v1052 = vpop.f32.mrb[0].mxu0
      %1053 = vmatprep.mubr.bf16.mxu0 0
      %1054 = vmatmul.mubr.bf16.gmra.mrb[0].mxu0 %v552
      %v1055 = vpop.f32.mrb[0].mxu0
      %v1056 = vadd.f32 %v895, %v1055
      %v1057 = vpop.f32.mrb[0].mxu0
      %v1058 = vpop.f32.mrb[0].mxu0
      %v1059 = vadd.f32 %v898, %v1058
      %v1060 = vpop.f32.mrb[0].mxu0
      %1061 = vmatprep.mubr.bf16.mxu0 0
      %1062 = vmatmul.mubr.bf16.gmra.mrb[0].mxu0 %v555
      %v1063 = vpop.f32.mrb[0].mxu0
      %v1064 = vadd.f32 %v903, %v1063
      %v1065 = vpop.f32.mrb[0].mxu0
      %v1066 = vpop.f32.mrb[0].mxu0
      %v1067 = vadd.f32 %v906, %v1066
      %v1068 = vpop.f32.mrb[0].mxu0
      %1069 = vdwg.mxu0
      %v1070 = vmax.f32 %v944, 0.0
      %v1071 = vmax.f32 %v947, 0.0
      %v1072 = vmax.f32 %v952, 0.0
      %v1073 = vmax.f32 %v955, 0.0
      %v1074 = vmax.f32 %v960, 0.0
      %v1075 = vmax.f32 %v963, 0.0
      %v1076 = vmax.f32 %v968, 0.0
      %v1077 = vmax.f32 %v971, 0.0
      %v1078 = vmax.f32 %v976, 0.0
      %v1079 = vmax.f32 %v979, 0.0
      %v1080 = vmax.f32 %v984, 0.0
      %v1081 = vmax.f32 %v987, 0.0
      %v1082 = vmax.f32 %v992, 0.0
      %v1083 = vmax.f32 %v995, 0.0
      %v1084 = vmax.f32 %v1000, 0.0
      %v1085 = vmax.f32 %v1003, 0.0
      %v1086 = vmax.f32 %v1008, 0.0
      %v1087 = vmax.f32 %v1011, 0.0
      %v1088 = vmax.f32 %v1016, 0.0
      %v1089 = vmax.f32 %v1019, 0.0
      %v1090 = vmax.f32 %v1024, 0.0
      %v1091 = vmax.f32 %v1027, 0.0
      %v1092 = vmax.f32 %v1032, 0.0
      %v1093 = vmax.f32 %v1035, 0.0
      %v1094 = vmax.f32 %v1040, 0.0
      %v1095 = vmax.f32 %v1043, 0.0
      %v1096 = vmax.f32 %v1048, 0.0
      %v1097 = vmax.f32 %v1051, 0.0
      %v1098 = vmax.f32 %v1056, 0.0
      %v1099 = vmax.f32 %v1059, 0.0
      %v1100 = vmax.f32 %v1064, 0.0
      %v1101 = vmax.f32 %v1067, 0.0
      %v1102 = vpack.c.bf16 %v1071, %v1070
      %v1103 = vpack.c.bf16 %v1073, %v1072
      %v1104 = vpack.c.bf16 %v1075, %v1074
      %v1105 = vpack.c.bf16 %v1077, %v1076
      %v1106 = vpack.c.bf16 %v1079, %v1078
      %v1107 = vpack.c.bf16 %v1081, %v1080
      %v1108 = vpack.c.bf16 %v1083, %v1082
      %v1109 = vpack.c.bf16 %v1085, %v1084
      %v1110 = vpack.c.bf16 %v1087, %v1086
      %v1111 = vpack.c.bf16 %v1089, %v1088
      %v1112 = vpack.c.bf16 %v1091, %v1090
      %v1113 = vpack.c.bf16 %v1093, %v1092
      %v1114 = vpack.c.bf16 %v1095, %v1094
      %v1115 = vpack.c.bf16 %v1097, %v1096
      %v1116 = vpack.c.bf16 %v1099, %v1098
      %v1117 = vpack.c.bf16 %v1101, %v1100
      %v1134 = vunpack.c.l.b16 %v1102
      %v1135 = vunpack.c.h.b16 %v1102
      %v1136 = vunpack.c.l.b16 %v1103
      %v1137 = vunpack.c.h.b16 %v1103
      %v1138 = vunpack.c.l.b16 %v1104
      %v1139 = vunpack.c.h.b16 %v1104
      %v1140 = vunpack.c.l.b16 %v1105
      %v1141 = vunpack.c.h.b16 %v1105
      %v1142 = vunpack.c.l.b16 %v1106
      %v1143 = vunpack.c.h.b16 %v1106
      %v1144 = vunpack.c.l.b16 %v1107
      %v1145 = vunpack.c.h.b16 %v1107
      %v1146 = vunpack.c.l.b16 %v1108
      %v1147 = vunpack.c.h.b16 %v1108
      %v1148 = vunpack.c.l.b16 %v1109
      %v1149 = vunpack.c.h.b16 %v1109
      %v1150 = vunpack.c.l.b16 %v1110
      %v1151 = vunpack.c.h.b16 %v1110
      %v1152 = vunpack.c.l.b16 %v1111
      %v1153 = vunpack.c.h.b16 %v1111
      %v1154 = vunpack.c.l.b16 %v1112
      %v1155 = vunpack.c.h.b16 %v1112
      %v1156 = vunpack.c.l.b16 %v1113
      %v1157 = vunpack.c.h.b16 %v1113
      %v1158 = vunpack.c.l.b16 %v1114
      %v1159 = vunpack.c.h.b16 %v1114
      %v1160 = vunpack.c.l.b16 %v1115
      %v1161 = vunpack.c.h.b16 %v1115
      %v1162 = vunpack.c.l.b16 %v1116
      %v1163 = vunpack.c.h.b16 %v1116
      %v1164 = vunpack.c.l.b16 %v1117
      %v1165 = vunpack.c.h.b16 %v1117
      %v1166 = vpack.c.b16 %v1134, %v1134
      %v1167 = vpack.c.b16 %v1135, %v1135
      %v1168 = vpack.c.b16 %v1136, %v1136
      %v1169 = vpack.c.b16 %v1137, %v1137
      %v1170 = vpack.c.b16 %v1138, %v1138
      %v1171 = vpack.c.b16 %v1139, %v1139
      %v1172 = vpack.c.b16 %v1140, %v1140
      %v1173 = vpack.c.b16 %v1141, %v1141
      %v1174 = vpack.c.b16 %v1142, %v1142
      %v1175 = vpack.c.b16 %v1143, %v1143
      %v1176 = vpack.c.b16 %v1144, %v1144
      %v1177 = vpack.c.b16 %v1145, %v1145
      %v1178 = vpack.c.b16 %v1146, %v1146
      %v1179 = vpack.c.b16 %v1147, %v1147
      %v1180 = vpack.c.b16 %v1148, %v1148
      %v1181 = vpack.c.b16 %v1149, %v1149
      %v1182 = vpack.c.b16 %v1150, %v1150
      %v1183 = vpack.c.b16 %v1151, %v1151
      %v1184 = vpack.c.b16 %v1152, %v1152
      %v1185 = vpack.c.b16 %v1153, %v1153
      %v1186 = vpack.c.b16 %v1154, %v1154
      %v1187 = vpack.c.b16 %v1155, %v1155
      %v1188 = vpack.c.b16 %v1156, %v1156
      %v1189 = vpack.c.b16 %v1157, %v1157
      %v1190 = vpack.c.b16 %v1158, %v1158
      %v1191 = vpack.c.b16 %v1159, %v1159
      %v1192 = vpack.c.b16 %v1160, %v1160
      %v1193 = vpack.c.b16 %v1161, %v1161
      %v1194 = vpack.c.b16 %v1162, %v1162
      %v1195 = vpack.c.b16 %v1163, %v1163
      %v1196 = vpack.c.b16 %v1164, %v1164
      %v1197 = vpack.c.b16 %v1165, %v1165
      %vm1230 = vcmask 519168
      %1231 = vst.msk [vmem:[%s226] sm:$0xf] %vm1230, %v1166
      %1232 = vst.msk [vmem:[%s226 + $0x4] sm:$0xf] %vm1230, %v1167
      %1233 = vst.msk [vmem:[%s226 + $0x8] sm:$0xf] %vm1230, %v1168
      %1234 = vst.msk [vmem:[%s226 + $0xc] sm:$0xf] %vm1230, %v1169
      %1235 = vst.msk [vmem:[%s226 + $0x10] sm:$0xf] %vm1230, %v1170
      %1236 = vst.msk [vmem:[%s226 + $0x14] sm:$0xf] %vm1230, %v1171
      %1237 = vst.msk [vmem:[%s226 + $0x18] sm:$0xf] %vm1230, %v1172
      %1238 = vst.msk [vmem:[%s226 + $0x1c] sm:$0xf] %vm1230, %v1173
      %1239 = vst.msk [vmem:[%s226 + $0x20] sm:$0xf] %vm1230, %v1174
      %1240 = vst.msk [vmem:[%s226 + $0x24] sm:$0xf] %vm1230, %v1175
      %1241 = vst.msk [vmem:[%s226 + $0x28] sm:$0xf] %vm1230, %v1176
      %1242 = vst.msk [vmem:[%s226 + $0x2c] sm:$0xf] %vm1230, %v1177
      %1243 = vst.msk [vmem:[%s226 + $0x30] sm:$0xf] %vm1230, %v1178
      %1244 = vst.msk [vmem:[%s226 + $0x34] sm:$0xf] %vm1230, %v1179
      %1245 = vst.msk [vmem:[%s226 + $0x38] sm:$0xf] %vm1230, %v1180
      %1246 = vst.msk [vmem:[%s226 + $0x3c] sm:$0xf] %vm1230, %v1181
      %1247 = vst.msk [vmem:[%s226 + $0x40] sm:$0xf] %vm1230, %v1182
      %1248 = vst.msk [vmem:[%s226 + $0x44] sm:$0xf] %vm1230, %v1183
      %1249 = vst.msk [vmem:[%s226 + $0x48] sm:$0xf] %vm1230, %v1184
      %1250 = vst.msk [vmem:[%s226 + $0x4c] sm:$0xf] %vm1230, %v1185
      %1251 = vst.msk [vmem:[%s226 + $0x50] sm:$0xf] %vm1230, %v1186
      %1252 = vst.msk [vmem:[%s226 + $0x54] sm:$0xf] %vm1230, %v1187
      %1253 = vst.msk [vmem:[%s226 + $0x58] sm:$0xf] %vm1230, %v1188
      %1254 = vst.msk [vmem:[%s226 + $0x5c] sm:$0xf] %vm1230, %v1189
      %1255 = vst.msk [vmem:[%s226 + $0x60] sm:$0xf] %vm1230, %v1190
      %1256 = vst.msk [vmem:[%s226 + $0x64] sm:$0xf] %vm1230, %v1191
      %1257 = vst.msk [vmem:[%s226 + $0x68] sm:$0xf] %vm1230, %v1192
      %1258 = vst.msk [vmem:[%s226 + $0x6c] sm:$0xf] %vm1230, %v1193
      %1259 = vst.msk [vmem:[%s226 + $0x70] sm:$0xf] %vm1230, %v1194
      %1260 = vst.msk [vmem:[%s226 + $0x74] sm:$0xf] %vm1230, %v1195
      %1261 = vst.msk [vmem:[%s226 + $0x78] sm:$0xf] %vm1230, %v1196
      %1262 = vst.msk [vmem:[%s226 + $0x7c] sm:$0xf] %vm1230, %v1197
      %s1263 = smul.u32 32, %s18
      %p1264 = scmp.lt.s32.totalorder %s1263, 63
      %s1265 = scalar_select %p1264, %s1263, 63
      %p1266 = scmp.lt.s32.totalorder %s19, 0
      %s1267 = scalar_select %p1266, %s19, 0
      %s1268 = sadd.s32 %s1267, %s1265
      %s1269 = smul.addr %s1268, 4
      %s1270 = scalar_lea.vmem %s3, %s1269
      // Predicated region
      $region33: #{cnn_model_forward.3} parent=31 // pred_check
        %p1271 = pneg %p124
      $region34: #{cnn_model_forward.3} parent=31 // pred_check_branch
        %1273 = sbr.rel (%p1271) target = $region36
      $region35: #{cnn_model_forward.3} parent=31 // pred_region
        %s1274 = smul.u32 32, %s18
      $region36: #{cnn_model_forward.3} parent=31 // pred_fallthru
        _
    $region32: #{cnn_model_forward.3} parent=5 // pred_fallthru
      _
    %p1275 = scmp.le.s32.totalorder 2, %s9
    // Predicated region
    $region37: #{cnn_model_forward.3} parent=5 // pred_check
      %p1276 = pneg %p1275
    $region38: #{cnn_model_forward.3} parent=5 // pred_check_branch
      %1278 = sbr.rel (%p1276) target = $region40
    $region39: #{cnn_model_forward.3} parent=5 // pred_region
      %s1279 = ssub.s32 %s9, 2
      // Predicated region
      $region41: #{cnn_model_forward.3} parent=39 // pred_check
        %p1280 = pneg %p130
      $region42: #{cnn_model_forward.3} parent=39 // pred_check_branch
        %1282 = sbr.rel (%p1280) target = $region44
      $region43: #{cnn_model_forward.3} parent=39 // pred_region
        %s1283 = smul.u32 32, %s20
        %p1284 = scmp.lt.s32.totalorder %s1283, 63
        %s1285 = scalar_select %p1284, %s1283, 63
        %p1286 = scmp.lt.s32.totalorder %s21, 0
        %s1287 = scalar_select %p1286, %s21, 0
        %s1288 = sadd.s32 %s1287, %s1285
        %s1289 = smul.addr %s1288, 4
        %s1290 = scalar_lea.vmem %s3, %s1289
      $region44: #{cnn_model_forward.3} parent=39 // pred_fallthru
        _
    $region40: #{cnn_model_forward.3} parent=5 // pred_fallthru
      _
  $region6: #{cnn_model_forward.3} parent=0 // loop_footer
    %s13 = sadd.s32 1, %s9
  $region7: #{cnn_model_forward.3} parent=0 // loop_footer_branch
    %8 = sbr.rel target = $region3
  $region8: #{cnn_model_forward.3} parent=0 // loop_exit
    _

// kernel: cnn_model_forward.4
$region0: #{cnn_model_forward.4}
  #allocation0 [shape = 'u32[]', space=smem, size = 0x4, offset = 0x4, fixed_abs, tag = 'smem constant byte address 0x4 - core index']
  #allocation1 [shape = 'u32[144,128]{1,0:T(1,128)}', space=vmem, size = 0x12000, scoped, tag = 'internal scratch']
  %s0 = inlined_call_operand.vmem [shape: bf16[98,1600], index: 0, kind: input, shape index: {}]
  %s1 = inlined_call_operand.vmem [shape: bf16[1600,192], index: 1, kind: input, shape index: {}]
  %s2 = inlined_call_operand.vmem [shape: f32[1,192], index: 2, kind: input, shape index: {}]
  %s3 = inlined_call_operand.vmem [shape: bf16[98,192], index: 3, kind: output, shape index: {}]
  %s4 = sld [smem:[#allocation0]]
  $region22: #{cnn_model_forward.4} parent=0
    _
  %s6 = ssub.s32 1, %s4
  %s7 = scalar_select 0, %s6, %s4
  // Predicated region
  $region2: #{cnn_model_forward.4} parent=0 // pred_check
    _
  $region3: #{cnn_model_forward.4} parent=0 // pred_check_branch
    %9 = sbr.rel (0) target = $region5
  $region4: #{cnn_model_forward.4} parent=0 // pred_region
    _
  $region5: #{cnn_model_forward.4} parent=0 // pred_fallthru
    _
  // Predicated region
  $region6: #{cnn_model_forward.4} parent=0 // pred_check
    _
  $region7: #{cnn_model_forward.4} parent=0 // pred_check_branch
    %11 = sbr.rel (0) target = $region9
  $region8: #{cnn_model_forward.4} parent=0 // pred_region
    _
  $region9: #{cnn_model_forward.4} parent=0 // pred_fallthru
    _
  // Predicated region
  $region10: #{cnn_model_forward.4} parent=0 // pred_check
    _
  $region11: #{cnn_model_forward.4} parent=0 // pred_check_branch
    %13 = sbr.rel (0) target = $region13
  $region12: #{cnn_model_forward.4} parent=0 // pred_region
    _
  $region13: #{cnn_model_forward.4} parent=0 // pred_fallthru
    _
  %v15 = vld [vmem:[%s0] sm:$0xff]
  %v16 = vld [vmem:[%s0 + $0x8] sm:$0xff]
  %v17 = vld [vmem:[%s0 + $0x10] sm:$0xff]
  %v18 = vld [vmem:[%s0 + $0x18] sm:$0xff]
  %v19 = vld [vmem:[%s0 + $0x20] sm:$0xff]
  %v20 = vld [vmem:[%s0 + $0x28] sm:$0xff]
  %v21 = vld [vmem:[%s0 + $0x30] sm:$0xf]
  %v22 = vld [vmem:[%s0 + $0x34] sm:$0xff]
  %v23 = vld [vmem:[%s0 + $0x3c] sm:$0xff]
  %v24 = vld [vmem:[%s0 + $0x44] sm:$0xff]
  %v25 = vld [vmem:[%s0 + $0x4c] sm:$0xff]
  %v26 = vld [vmem:[%s0 + $0x54] sm:$0xff]
  %v27 = vld [vmem:[%s0 + $0x5c] sm:$0xff]
  %v28 = vld [vmem:[%s0 + $0x64] sm:$0xf]
  %v29 = vld [vmem:[%s0 + $0x68] sm:$0xff]
  %v30 = vld [vmem:[%s0 + $0x70] sm:$0xff]
  %v31 = vld [vmem:[%s0 + $0x78] sm:$0xff]
  %v32 = vld [vmem:[%s0 + $0x80] sm:$0xff]
  %v33 = vld [vmem:[%s0 + $0x88] sm:$0xff]
  %v34 = vld [vmem:[%s0 + $0x90] sm:$0xff]
  %v35 = vld [vmem:[%s0 + $0x98] sm:$0xf]
  %v36 = vld [vmem:[%s0 + $0x9c] sm:$0xff]
  %v37 = vld [vmem:[%s0 + $0xa4] sm:$0xff]
  %v38 = vld [vmem:[%s0 + $0xac] sm:$0xff]
  %v39 = vld [vmem:[%s0 + $0xb4] sm:$0xff]
  %v40 = vld [vmem:[%s0 + $0xbc] sm:$0xff]
  %v41 = vld [vmem:[%s0 + $0xc4] sm:$0xff]
  %v42 = vld [vmem:[%s0 + $0xcc] sm:$0xf]
  %v43 = vld [vmem:[%s0 + $0xd0] sm:$0xff]
  %v44 = vld [vmem:[%s0 + $0xd8] sm:$0xff]
  %v45 = vld [vmem:[%s0 + $0xe0] sm:$0xff]
  %v46 = vld [vmem:[%s0 + $0xe8] sm:$0xff]
  %v47 = vld [vmem:[%s0 + $0xf0] sm:$0xff]
  %v48 = vld [vmem:[%s0 + $0xf8] sm:$0xff]
  %v49 = vld [vmem:[%s0 + $0x100] sm:$0xf]
  %v50 = vld [vmem:[%s0 + $0x104] sm:$0xff]
  %v51 = vld [vmem:[%s0 + $0x10c] sm:$0xff]
  %v52 = vld [vmem:[%s0 + $0x114] sm:$0xff]
  %v53 = vld [vmem:[%s0 + $0x11c] sm:$0xff]
  %v54 = vld [vmem:[%s0 + $0x124] sm:$0xff]
  %v55 = vld [vmem:[%s0 + $0x12c] sm:$0xff]
  %v56 = vld [vmem:[%s0 + $0x134] sm:$0xf]
  %v57 = vld [vmem:[%s0 + $0x138] sm:$0xff]
  %v58 = vld [vmem:[%s0 + $0x140] sm:$0xff]
  %v59 = vld [vmem:[%s0 + $0x148] sm:$0xff]
  %v60 = vld [vmem:[%s0 + $0x150] sm:$0xff]
  %v61 = vld [vmem:[%s0 + $0x158] sm:$0xff]
  %v62 = vld [vmem:[%s0 + $0x160] sm:$0xff]
  %v63 = vld [vmem:[%s0 + $0x168] sm:$0xf]
  %v64 = vld [vmem:[%s0 + $0x16c] sm:$0xff]
  %v65 = vld [vmem:[%s0 + $0x174] sm:$0xff]
  %v66 = vld [vmem:[%s0 + $0x17c] sm:$0xff]
  %v67 = vld [vmem:[%s0 + $0x184] sm:$0xff]
  %v68 = vld [vmem:[%s0 + $0x18c] sm:$0xff]
  %v69 = vld [vmem:[%s0 + $0x194] sm:$0xff]
  %v70 = vld [vmem:[%s0 + $0x19c] sm:$0xf]
  %v71 = vld [vmem:[%s0 + $0x1a0] sm:$0xff]
  %v72 = vld [vmem:[%s0 + $0x1a8] sm:$0xff]
  %v73 = vld [vmem:[%s0 + $0x1b0] sm:$0xff]
  %v74 = vld [vmem:[%s0 + $0x1b8] sm:$0xff]
  %v75 = vld [vmem:[%s0 + $0x1c0] sm:$0xff]
  %v76 = vld [vmem:[%s0 + $0x1c8] sm:$0xff]
  %v77 = vld [vmem:[%s0 + $0x1d0] sm:$0xf]
  %v78 = vld [vmem:[%s0 + $0x1d4] sm:$0xff]
  %v79 = vld [vmem:[%s0 + $0x1dc] sm:$0xff]
  %v80 = vld [vmem:[%s0 + $0x1e4] sm:$0xff]
  %v81 = vld [vmem:[%s0 + $0x1ec] sm:$0xff]
  %v82 = vld [vmem:[%s0 + $0x1f4] sm:$0xff]
  %v83 = vld [vmem:[%s0 + $0x1fc] sm:$0xff]
  %v84 = vld [vmem:[%s0 + $0x204] sm:$0xf]
  %v85 = vld [vmem:[%s0 + $0x208] sm:$0xff]
  %v86 = vld [vmem:[%s0 + $0x210] sm:$0xff]
  %v87 = vld [vmem:[%s0 + $0x218] sm:$0xff]
  %v88 = vld [vmem:[%s0 + $0x220] sm:$0xff]
  %v89 = vld [vmem:[%s0 + $0x228] sm:$0xff]
  %v90 = vld [vmem:[%s0 + $0x230] sm:$0xff]
  %v91 = vld [vmem:[%s0 + $0x238] sm:$0xf]
  %v92 = vld [vmem:[%s0 + $0x23c] sm:$0xff]
  %v93 = vld [vmem:[%s0 + $0x244] sm:$0xff]
  %v94 = vld [vmem:[%s0 + $0x24c] sm:$0xff]
  %v95 = vld [vmem:[%s0 + $0x254] sm:$0xff]
  %v96 = vld [vmem:[%s0 + $0x25c] sm:$0xff]
  %v97 = vld [vmem:[%s0 + $0x264] sm:$0xff]
  %v98 = vld [vmem:[%s0 + $0x26c] sm:$0xf]
  %v99 = vld [vmem:[%s0 + $0x270] sm:$0x11]
  %v100 = vld [vmem:[%s0 + $0x278] sm:$0x11]
  %v101 = vld [vmem:[%s0 + $0x280] sm:$0x11]
  %v102 = vld [vmem:[%s0 + $0x288] sm:$0x11]
  %v103 = vld [vmem:[%s0 + $0x290] sm:$0x11]
  %v104 = vld [vmem:[%s0 + $0x298] sm:$0x11]
  %v105 = vld [vmem:[%s0 + $0x2a0] sm:$0x1]
  %v106 = vld [vmem:[%s1] sm:$0xff]
  %v107 = vld [vmem:[%s1 + $0x8] sm:$0xff]
  %v108 = vld [vmem:[%s1 + $0x10] sm:$0xff]
  %v109 = vld [vmem:[%s1 + $0x18] sm:$0xff]
  %v110 = vld [vmem:[%s1 + $0x20] sm:$0xff]
  %v111 = vld [vmem:[%s1 + $0x28] sm:$0xff]
  %v112 = vld [vmem:[%s1 + $0x30] sm:$0xff]
  %v113 = vld [vmem:[%s1 + $0x38] sm:$0xff]
  %v114 = vld [vmem:[%s1 + $0x40] sm:$0xff]
  %v115 = vld [vmem:[%s1 + $0x48] sm:$0xff]
  %v116 = vld [vmem:[%s1 + $0x50] sm:$0xff]
  %v117 = vld [vmem:[%s1 + $0x58] sm:$0xff]
  %v118 = vld [vmem:[%s1 + $0x60] sm:$0xff]
  %v119 = vld [vmem:[%s1 + $0x68] sm:$0xff]
  %v120 = vld [vmem:[%s1 + $0x70] sm:$0xff]
  %v121 = vld [vmem:[%s1 + $0x78] sm:$0xff]
  %v122 = vld [vmem:[%s1 + $0x80] sm:$0xff]
  %v123 = vld [vmem:[%s1 + $0x88] sm:$0xff]
  %v124 = vld [vmem:[%s1 + $0x90] sm:$0xff]
  %v125 = vld [vmem:[%s1 + $0x98] sm:$0xff]
  %v126 = vld [vmem:[%s1 + $0xa0] sm:$0xff]
  %v127 = vld [vmem:[%s1 + $0xa8] sm:$0xff]
  %v128 = vld [vmem:[%s1 + $0xb0] sm:$0xff]
  %v129 = vld [vmem:[%s1 + $0xb8] sm:$0xff]
  %v130 = vld [vmem:[%s1 + $0xc0] sm:$0xff]
  %v131 = vld [vmem:[%s1 + $0xc8] sm:$0xff]
  %v132 = vld [vmem:[%s1 + $0xd0] sm:$0xff]
  %v133 = vld [vmem:[%s1 + $0xd8] sm:$0xff]
  %v134 = vld [vmem:[%s1 + $0xe0] sm:$0xff]
  %v135 = vld [vmem:[%s1 + $0xe8] sm:$0xff]
  %v136 = vld [vmem:[%s1 + $0xf0] sm:$0xff]
  %v137 = vld [vmem:[%s1 + $0xf8] sm:$0xff]
  %v138 = vld [vmem:[%s1 + $0x100] sm:$0xff]
  %v139 = vld [vmem:[%s1 + $0x108] sm:$0xff]
  %v140 = vld [vmem:[%s1 + $0x110] sm:$0xff]
  %v141 = vld [vmem:[%s1 + $0x118] sm:$0xff]
  %v142 = vld [vmem:[%s1 + $0x120] sm:$0xff]
  %v143 = vld [vmem:[%s1 + $0x128] sm:$0xff]
  %v144 = vld [vmem:[%s1 + $0x130] sm:$0xff]
  %v145 = vld [vmem:[%s1 + $0x138] sm:$0xff]
  %v146 = vld [vmem:[%s1 + $0x140] sm:$0xff]
  %v147 = vld [vmem:[%s1 + $0x148] sm:$0xff]
  %v148 = vld [vmem:[%s1 + $0x150] sm:$0xff]
  %v149 = vld [vmem:[%s1 + $0x158] sm:$0xff]
  %v150 = vld [vmem:[%s1 + $0x160] sm:$0xff]
  %v151 = vld [vmem:[%s1 + $0x168] sm:$0xff]
  %v152 = vld [vmem:[%s1 + $0x170] sm:$0xff]
  %v153 = vld [vmem:[%s1 + $0x178] sm:$0xff]
  %v154 = vld [vmem:[%s1 + $0x180] sm:$0xff]
  %v155 = vld [vmem:[%s1 + $0x188] sm:$0xff]
  %v156 = vld [vmem:[%s1 + $0x190] sm:$0xff]
  %v157 = vld [vmem:[%s1 + $0x198] sm:$0xff]
  %v158 = vld [vmem:[%s1 + $0x1a0] sm:$0xff]
  %v159 = vld [vmem:[%s1 + $0x1a8] sm:$0xff]
  %v160 = vld [vmem:[%s1 + $0x1b0] sm:$0xff]
  %v161 = vld [vmem:[%s1 + $0x1b8] sm:$0xff]
  %v162 = vld [vmem:[%s1 + $0x1c0] sm:$0xff]
  %v163 = vld [vmem:[%s1 + $0x1c8] sm:$0xff]
  %v164 = vld [vmem:[%s1 + $0x1d0] sm:$0xff]
  %v165 = vld [vmem:[%s1 + $0x1d8] sm:$0xff]
  %v166 = vld [vmem:[%s1 + $0x1e0] sm:$0xff]
  %v167 = vld [vmem:[%s1 + $0x1e8] sm:$0xff]
  %v168 = vld [vmem:[%s1 + $0x1f0] sm:$0xff]
  %v169 = vld [vmem:[%s1 + $0x1f8] sm:$0xff]
  %v170 = vld [vmem:[%s1 + $0x200] sm:$0xff]
  %v171 = vld [vmem:[%s1 + $0x208] sm:$0xff]
  %v172 = vld [vmem:[%s1 + $0x210] sm:$0xff]
  %v173 = vld [vmem:[%s1 + $0x218] sm:$0xff]
  %v174 = vld [vmem:[%s1 + $0x220] sm:$0xff]
  %v175 = vld [vmem:[%s1 + $0x228] sm:$0xff]
  %v176 = vld [vmem:[%s1 + $0x230] sm:$0xff]
  %v177 = vld [vmem:[%s1 + $0x238] sm:$0xff]
  %v178 = vld [vmem:[%s1 + $0x240] sm:$0xff]
  %v179 = vld [vmem:[%s1 + $0x248] sm:$0xff]
  %v180 = vld [vmem:[%s1 + $0x250] sm:$0xff]
  %v181 = vld [vmem:[%s1 + $0x258] sm:$0xff]
  %v182 = vld [vmem:[%s1 + $0x260] sm:$0xff]
  %v183 = vld [vmem:[%s1 + $0x268] sm:$0xff]
  %v184 = vld [vmem:[%s1 + $0x270] sm:$0xff]
  %v185 = vld [vmem:[%s1 + $0x278] sm:$0xff]
  %v186 = vld [vmem:[%s1 + $0x280] sm:$0xff]
  %v187 = vld [vmem:[%s1 + $0x288] sm:$0xff]
  %v188 = vld [vmem:[%s1 + $0x290] sm:$0xff]
  %v189 = vld [vmem:[%s1 + $0x298] sm:$0xff]
  %v190 = vld [vmem:[%s1 + $0x2a0] sm:$0xff]
  %v191 = vld [vmem:[%s1 + $0x2a8] sm:$0xff]
  %v192 = vld [vmem:[%s1 + $0x2b0] sm:$0xff]
  %v193 = vld [vmem:[%s1 + $0x2b8] sm:$0xff]
  %v194 = vld [vmem:[%s1 + $0x2c0] sm:$0xff]
  %v195 = vld [vmem:[%s1 + $0x2c8] sm:$0xff]
  %v196 = vld [vmem:[%s1 + $0x2d0] sm:$0xff]
  %v197 = vld [vmem:[%s1 + $0x2d8] sm:$0xff]
  %v198 = vld [vmem:[%s1 + $0x2e0] sm:$0xff]
  %v199 = vld [vmem:[%s1 + $0x2e8] sm:$0xff]
  %v200 = vld [vmem:[%s1 + $0x2f0] sm:$0xff]
  %v201 = vld [vmem:[%s1 + $0x2f8] sm:$0xff]
  %v202 = vld [vmem:[%s1 + $0x300] sm:$0xff]
  %v203 = vld [vmem:[%s1 + $0x308] sm:$0xff]
  %v204 = vld [vmem:[%s1 + $0x310] sm:$0xff]
  %v205 = vld [vmem:[%s1 + $0x318] sm:$0xff]
  %v206 = vld [vmem:[%s1 + $0x320] sm:$0xff]
  %v207 = vld [vmem:[%s1 + $0x328] sm:$0xff]
  %v208 = vld [vmem:[%s1 + $0x330] sm:$0xff]
  %v209 = vld [vmem:[%s1 + $0x338] sm:$0xff]
  %v210 = vld [vmem:[%s1 + $0x340] sm:$0xff]
  %v211 = vld [vmem:[%s1 + $0x348] sm:$0xff]
  %v212 = vld [vmem:[%s1 + $0x350] sm:$0xff]
  %v213 = vld [vmem:[%s1 + $0x358] sm:$0xff]
  %v214 = vld [vmem:[%s1 + $0x360] sm:$0xff]
  %v215 = vld [vmem:[%s1 + $0x368] sm:$0xff]
  %v216 = vld [vmem:[%s1 + $0x370] sm:$0xff]
  %v217 = vld [vmem:[%s1 + $0x378] sm:$0xff]
  %v218 = vld [vmem:[%s1 + $0x380] sm:$0xff]
  %v219 = vld [vmem:[%s1 + $0x388] sm:$0xff]
  %v220 = vld [vmem:[%s1 + $0x390] sm:$0xff]
  %v221 = vld [vmem:[%s1 + $0x398] sm:$0xff]
  %v222 = vld [vmem:[%s1 + $0x3a0] sm:$0xff]
  %v223 = vld [vmem:[%s1 + $0x3a8] sm:$0xff]
  %v224 = vld [vmem:[%s1 + $0x3b0] sm:$0xff]
  %v225 = vld [vmem:[%s1 + $0x3b8] sm:$0xff]
  %v226 = vld [vmem:[%s1 + $0x3c0] sm:$0xff]
  %v227 = vld [vmem:[%s1 + $0x3c8] sm:$0xff]
  %v228 = vld [vmem:[%s1 + $0x3d0] sm:$0xff]
  %v229 = vld [vmem:[%s1 + $0x3d8] sm:$0xff]
  %v230 = vld [vmem:[%s1 + $0x3e0] sm:$0xff]
  %v231 = vld [vmem:[%s1 + $0x3e8] sm:$0xff]
  %v232 = vld [vmem:[%s1 + $0x3f0] sm:$0xff]
  %v233 = vld [vmem:[%s1 + $0x3f8] sm:$0xff]
  %v234 = vld [vmem:[%s1 + $0x400] sm:$0xff]
  %v235 = vld [vmem:[%s1 + $0x408] sm:$0xff]
  %v236 = vld [vmem:[%s1 + $0x410] sm:$0xff]
  %v237 = vld [vmem:[%s1 + $0x418] sm:$0xff]
  %v238 = vld [vmem:[%s1 + $0x420] sm:$0xff]
  %v239 = vld [vmem:[%s1 + $0x428] sm:$0xff]
  %v240 = vld [vmem:[%s1 + $0x430] sm:$0xff]
  %v241 = vld [vmem:[%s1 + $0x438] sm:$0xff]
  %v242 = vld [vmem:[%s1 + $0x440] sm:$0xff]
  %v243 = vld [vmem:[%s1 + $0x448] sm:$0xff]
  %v244 = vld [vmem:[%s1 + $0x450] sm:$0xff]
  %v245 = vld [vmem:[%s1 + $0x458] sm:$0xff]
  %v246 = vld [vmem:[%s1 + $0x460] sm:$0xff]
  %v247 = vld [vmem:[%s1 + $0x468] sm:$0xff]
  %v248 = vld [vmem:[%s1 + $0x470] sm:$0xff]
  %v249 = vld [vmem:[%s1 + $0x478] sm:$0xff]
  %v250 = vld [vmem:[%s1 + $0x480] sm:$0xff]
  %v251 = vld [vmem:[%s1 + $0x488] sm:$0xff]
  %v252 = vld [vmem:[%s1 + $0x490] sm:$0xff]
  %v253 = vld [vmem:[%s1 + $0x498] sm:$0xff]
  %v254 = vld [vmem:[%s1 + $0x4a0] sm:$0xff]
  %v255 = vld [vmem:[%s1 + $0x4a8] sm:$0xff]
  %v256 = vld [vmem:[%s1 + $0x4b0] sm:$0xff]
  %v257 = vld [vmem:[%s1 + $0x4b8] sm:$0xff]
  %v258 = vld [vmem:[%s1 + $0x4c0] sm:$0xff]
  %v259 = vld [vmem:[%s1 + $0x4c8] sm:$0xff]
  %v260 = vld [vmem:[%s1 + $0x4d0] sm:$0xff]
  %v261 = vld [vmem:[%s1 + $0x4d8] sm:$0xff]
  %v262 = vld [vmem:[%s1 + $0x4e0] sm:$0xff]
  %v263 = vld [vmem:[%s1 + $0x4e8] sm:$0xff]
  %v264 = vld [vmem:[%s1 + $0x4f0] sm:$0xff]
  %v265 = vld [vmem:[%s1 + $0x4f8] sm:$0xff]
  %v266 = vld [vmem:[%s1 + $0x500] sm:$0xff]
  %v267 = vld [vmem:[%s1 + $0x508] sm:$0xff]
  %v268 = vld [vmem:[%s1 + $0x510] sm:$0xff]
  %v269 = vld [vmem:[%s1 + $0x518] sm:$0xff]
  %v270 = vld [vmem:[%s1 + $0x520] sm:$0xff]
  %v271 = vld [vmem:[%s1 + $0x528] sm:$0xff]
  %v272 = vld [vmem:[%s1 + $0x530] sm:$0xff]
  %v273 = vld [vmem:[%s1 + $0x538] sm:$0xff]
  %v274 = vld [vmem:[%s1 + $0x540] sm:$0xff]
  %v275 = vld [vmem:[%s1 + $0x548] sm:$0xff]
  %v276 = vld [vmem:[%s1 + $0x550] sm:$0xff]
  %v277 = vld [vmem:[%s1 + $0x558] sm:$0xff]
  %v278 = vld [vmem:[%s1 + $0x560] sm:$0xff]
  %v279 = vld [vmem:[%s1 + $0x568] sm:$0xff]
  %v280 = vld [vmem:[%s1 + $0x570] sm:$0xff]
  %v281 = vld [vmem:[%s1 + $0x578] sm:$0xff]
  %v282 = vld [vmem:[%s1 + $0x580] sm:$0xff]
  %v283 = vld [vmem:[%s1 + $0x588] sm:$0xff]
  %v284 = vld [vmem:[%s1 + $0x590] sm:$0xff]
  %v285 = vld [vmem:[%s1 + $0x598] sm:$0xff]
  %v286 = vld [vmem:[%s1 + $0x5a0] sm:$0xff]
  %v287 = vld [vmem:[%s1 + $0x5a8] sm:$0xff]
  %v288 = vld [vmem:[%s1 + $0x5b0] sm:$0xff]
  %v289 = vld [vmem:[%s1 + $0x5b8] sm:$0xff]
  %v290 = vld [vmem:[%s1 + $0x5c0] sm:$0xff]
  %v291 = vld [vmem:[%s1 + $0x5c8] sm:$0xff]
  %v292 = vld [vmem:[%s1 + $0x5d0] sm:$0xff]
  %v293 = vld [vmem:[%s1 + $0x5d8] sm:$0xff]
  %v294 = vld [vmem:[%s1 + $0x5e0] sm:$0xff]
  %v295 = vld [vmem:[%s1 + $0x5e8] sm:$0xff]
  %v296 = vld [vmem:[%s1 + $0x5f0] sm:$0xff]
  %v297 = vld [vmem:[%s1 + $0x5f8] sm:$0xff]
  %v298 = vld [vmem:[%s1 + $0x600] sm:$0xff]
  %v299 = vld [vmem:[%s1 + $0x608] sm:$0xff]
  %v300 = vld [vmem:[%s1 + $0x610] sm:$0xff]
  %v301 = vld [vmem:[%s1 + $0x618] sm:$0xff]
  %v302 = vld [vmem:[%s1 + $0x620] sm:$0xff]
  %v303 = vld [vmem:[%s1 + $0x628] sm:$0xff]
  %v304 = vld [vmem:[%s1 + $0x630] sm:$0xff]
  %v305 = vld [vmem:[%s1 + $0x638] sm:$0xff]
  %v306 = vld [vmem:[%s2] sm:$0x3]
  %v308 = vlaneseq
  %v309 = vshrl.u32 %v308, 7
  %v310 = vsub.s32 0, %v309
  %v311 = vrot.slane %v306, %v310
  %v312 = vlaneseq
  %v313 = vshrl.u32 %v312, 7
  %v314 = vsub.s32 1, %v313
  %v315 = vrot.slane %v306, %v314
  %v409 = vunpack.c.l.b16 %v15
  %v410 = vunpack.c.h.b16 %v15
  %v411 = vunpack.c.l.b16 %v16
  %v412 = vunpack.c.h.b16 %v16
  %v413 = vunpack.c.l.b16 %v17
  %v414 = vunpack.c.h.b16 %v17
  %v415 = vunpack.c.l.b16 %v18
  %v416 = vunpack.c.h.b16 %v18
  %v417 = vunpack.c.l.b16 %v19
  %v418 = vunpack.c.h.b16 %v19
  %v419 = vunpack.c.l.b16 %v20
  %v420 = vunpack.c.h.b16 %v20
  %v421 = vunpack.c.l.b16 %v21
  %v422 = vunpack.c.l.b16 %v22
  %v423 = vunpack.c.h.b16 %v22
  %v424 = vunpack.c.l.b16 %v23
  %v425 = vunpack.c.h.b16 %v23
  %v426 = vunpack.c.l.b16 %v24
  %v427 = vunpack.c.h.b16 %v24
  %v428 = vunpack.c.l.b16 %v25
  %v429 = vunpack.c.h.b16 %v25
  %v430 = vunpack.c.l.b16 %v26
  %v431 = vunpack.c.h.b16 %v26
  %v432 = vunpack.c.l.b16 %v27
  %v433 = vunpack.c.h.b16 %v27
  %v434 = vunpack.c.l.b16 %v28
  %v435 = vunpack.c.l.b16 %v29
  %v436 = vunpack.c.h.b16 %v29
  %v437 = vunpack.c.l.b16 %v30
  %v438 = vunpack.c.h.b16 %v30
  %v439 = vunpack.c.l.b16 %v31
  %v440 = vunpack.c.h.b16 %v31
  %v441 = vunpack.c.l.b16 %v32
  %v442 = vunpack.c.h.b16 %v32
  %v443 = vunpack.c.l.b16 %v33
  %v444 = vunpack.c.h.b16 %v33
  %v445 = vunpack.c.l.b16 %v34
  %v446 = vunpack.c.h.b16 %v34
  %v447 = vunpack.c.l.b16 %v35
  %v448 = vunpack.c.l.b16 %v36
  %v449 = vunpack.c.h.b16 %v36
  %v450 = vunpack.c.l.b16 %v37
  %v451 = vunpack.c.h.b16 %v37
  %v452 = vunpack.c.l.b16 %v38
  %v453 = vunpack.c.h.b16 %v38
  %v454 = vunpack.c.l.b16 %v39
  %v455 = vunpack.c.h.b16 %v39
  %v456 = vunpack.c.l.b16 %v40
  %v457 = vunpack.c.h.b16 %v40
  %v458 = vunpack.c.l.b16 %v41
  %v459 = vunpack.c.h.b16 %v41
  %v460 = vunpack.c.l.b16 %v42
  %v461 = vunpack.c.l.b16 %v43
  %v462 = vunpack.c.h.b16 %v43
  %v463 = vunpack.c.l.b16 %v44
  %v464 = vunpack.c.h.b16 %v44
  %v465 = vunpack.c.l.b16 %v45
  %v466 = vunpack.c.h.b16 %v45
  %v467 = vunpack.c.l.b16 %v46
  %v468 = vunpack.c.h.b16 %v46
  %v469 = vunpack.c.l.b16 %v47
  %v470 = vunpack.c.h.b16 %v47
  %v471 = vunpack.c.l.b16 %v48
  %v472 = vunpack.c.h.b16 %v48
  %v473 = vunpack.c.l.b16 %v49
  %v474 = vunpack.c.l.b16 %v50
  %v475 = vunpack.c.h.b16 %v50
  %v476 = vunpack.c.l.b16 %v51
  %v477 = vunpack.c.h.b16 %v51
  %v478 = vunpack.c.l.b16 %v52
  %v479 = vunpack.c.h.b16 %v52
  %v480 = vunpack.c.l.b16 %v53
  %v481 = vunpack.c.h.b16 %v53
  %v482 = vunpack.c.l.b16 %v54
  %v483 = vunpack.c.h.b16 %v54
  %v484 = vunpack.c.l.b16 %v55
  %v485 = vunpack.c.h.b16 %v55
  %v486 = vunpack.c.l.b16 %v56
  %v487 = vunpack.c.l.b16 %v57
  %v488 = vunpack.c.h.b16 %v57
  %v489 = vunpack.c.l.b16 %v58
  %v490 = vunpack.c.h.b16 %v58
  %v491 = vunpack.c.l.b16 %v59
  %v492 = vunpack.c.h.b16 %v59
  %v493 = vunpack.c.l.b16 %v60
  %v494 = vunpack.c.h.b16 %v60
  %v495 = vunpack.c.l.b16 %v61
  %v496 = vunpack.c.h.b16 %v61
  %v497 = vunpack.c.l.b16 %v62
  %v498 = vunpack.c.h.b16 %v62
  %v499 = vunpack.c.l.b16 %v63
  %v500 = vunpack.c.l.b16 %v64
  %v501 = vunpack.c.h.b16 %v64
  %v502 = vunpack.c.l.b16 %v65
  %v503 = vunpack.c.h.b16 %v65
  %v504 = vunpack.c.l.b16 %v66
  %v505 = vunpack.c.h.b16 %v66
  %v506 = vunpack.c.l.b16 %v67
  %v507 = vunpack.c.h.b16 %v67
  %v508 = vunpack.c.l.b16 %v68
  %v509 = vunpack.c.h.b16 %v68
  %v510 = vunpack.c.l.b16 %v69
  %v511 = vunpack.c.h.b16 %v69
  %v512 = vunpack.c.l.b16 %v70
  %v513 = vunpack.c.l.b16 %v71
  %v514 = vunpack.c.h.b16 %v71
  %v515 = vunpack.c.l.b16 %v72
  %v516 = vunpack.c.h.b16 %v72
  %v517 = vunpack.c.l.b16 %v73
  %v518 = vunpack.c.h.b16 %v73
  %v519 = vunpack.c.l.b16 %v74
  %v520 = vunpack.c.h.b16 %v74
  %v521 = vunpack.c.l.b16 %v75
  %v522 = vunpack.c.h.b16 %v75
  %v523 = vunpack.c.l.b16 %v76
  %v524 = vunpack.c.h.b16 %v76
  %v525 = vunpack.c.l.b16 %v77
  %v526 = vunpack.c.l.b16 %v78
  %v527 = vunpack.c.h.b16 %v78
  %v528 = vunpack.c.l.b16 %v79
  %v529 = vunpack.c.h.b16 %v79
  %v530 = vunpack.c.l.b16 %v80
  %v531 = vunpack.c.h.b16 %v80
  %v532 = vunpack.c.l.b16 %v81
  %v533 = vunpack.c.h.b16 %v81
  %v534 = vunpack.c.l.b16 %v82
  %v535 = vunpack.c.h.b16 %v82
  %v536 = vunpack.c.l.b16 %v83
  %v537 = vunpack.c.h.b16 %v83
  %v538 = vunpack.c.l.b16 %v84
  %v539 = vunpack.c.l.b16 %v85
  %v540 = vunpack.c.h.b16 %v85
  %v541 = vunpack.c.l.b16 %v86
  %v542 = vunpack.c.h.b16 %v86
  %v543 = vunpack.c.l.b16 %v87
  %v544 = vunpack.c.h.b16 %v87
  %v545 = vunpack.c.l.b16 %v88
  %v546 = vunpack.c.h.b16 %v88
  %v547 = vunpack.c.l.b16 %v89
  %v548 = vunpack.c.h.b16 %v89
  %v549 = vunpack.c.l.b16 %v90
  %v550 = vunpack.c.h.b16 %v90
  %v551 = vunpack.c.l.b16 %v91
  %v552 = vunpack.c.l.b16 %v92
  %v553 = vunpack.c.h.b16 %v92
  %v554 = vunpack.c.l.b16 %v93
  %v555 = vunpack.c.h.b16 %v93
  %v556 = vunpack.c.l.b16 %v94
  %v557 = vunpack.c.h.b16 %v94
  %v558 = vunpack.c.l.b16 %v95
  %v559 = vunpack.c.h.b16 %v95
  %v560 = vunpack.c.l.b16 %v96
  %v561 = vunpack.c.h.b16 %v96
  %v562 = vunpack.c.l.b16 %v97
  %v563 = vunpack.c.h.b16 %v97
  %v564 = vunpack.c.l.b16 %v98
  %v565 = vunpack.c.l.b16 %v99
  %v566 = vunpack.c.h.b16 %v99
  %v567 = vunpack.c.l.b16 %v100
  %v568 = vunpack.c.h.b16 %v100
  %v569 = vunpack.c.l.b16 %v101
  %v570 = vunpack.c.h.b16 %v101
  %v571 = vunpack.c.l.b16 %v102
  %v572 = vunpack.c.h.b16 %v102
  %v573 = vunpack.c.l.b16 %v103
  %v574 = vunpack.c.h.b16 %v103
  %v575 = vunpack.c.l.b16 %v104
  %v576 = vunpack.c.h.b16 %v104
  %v577 = vunpack.c.l.b16 %v105
  %v578 = vpack.c.b16 %v422, %v409
  %v579 = vpack.c.b16 %v423, %v410
  %v580 = vpack.c.b16 %v424, %v411
  %v581 = vpack.c.b16 %v425, %v412
  %v582 = vpack.c.b16 %v426, %v413
  %v583 = vpack.c.b16 %v427, %v414
  %v584 = vpack.c.b16 %v428, %v415
  %v585 = vpack.c.b16 %v429, %v416
  %v586 = vpack.c.b16 %v430, %v417
  %v587 = vpack.c.b16 %v431, %v418
  %v588 = vpack.c.b16 %v432, %v419
  %v589 = vpack.c.b16 %v433, %v420
  %v590 = vpack.c.b16 %v434, %v421
  %v591 = vpack.c.b16 %v448, %v435
  %v592 = vpack.c.b16 %v449, %v436
  %v593 = vpack.c.b16 %v450, %v437
  %v594 = vpack.c.b16 %v451, %v438
  %v595 = vpack.c.b16 %v452, %v439
  %v596 = vpack.c.b16 %v453, %v440
  %v597 = vpack.c.b16 %v454, %v441
  %v598 = vpack.c.b16 %v455, %v442
  %v599 = vpack.c.b16 %v456, %v443
  %v600 = vpack.c.b16 %v457, %v444
  %v601 = vpack.c.b16 %v458, %v445
  %v602 = vpack.c.b16 %v459, %v446
  %v603 = vpack.c.b16 %v460, %v447
  %v604 = vpack.c.b16 %v474, %v461
  %v605 = vpack.c.b16 %v475, %v462
  %v606 = vpack.c.b16 %v476, %v463
  %v607 = vpack.c.b16 %v477, %v464
  %v608 = vpack.c.b16 %v478, %v465
  %v609 = vpack.c.b16 %v479, %v466
  %v610 = vpack.c.b16 %v480, %v467
  %v611 = vpack.c.b16 %v481, %v468
  %v612 = vpack.c.b16 %v482, %v469
  %v613 = vpack.c.b16 %v483, %v470
  %v614 = vpack.c.b16 %v484, %v471
  %v615 = vpack.c.b16 %v485, %v472
  %v616 = vpack.c.b16 %v486, %v473
  %v617 = vpack.c.b16 %v500, %v487
  %v618 = vpack.c.b16 %v501, %v488
  %v619 = vpack.c.b16 %v502, %v489
  %v620 = vpack.c.b16 %v503, %v490
  %v621 = vpack.c.b16 %v504, %v491
  %v622 = vpack.c.b16 %v505, %v492
  %v623 = vpack.c.b16 %v506, %v493
  %v624 = vpack.c.b16 %v507, %v494
  %v625 = vpack.c.b16 %v508, %v495
  %v626 = vpack.c.b16 %v509, %v496
  %v627 = vpack.c.b16 %v510, %v497
  %v628 = vpack.c.b16 %v511, %v498
  %v629 = vpack.c.b16 %v512, %v499
  %v630 = vpack.c.b16 %v526, %v513
  %v631 = vpack.c.b16 %v527, %v514
  %v632 = vpack.c.b16 %v528, %v515
  %v633 = vpack.c.b16 %v529, %v516
  %v634 = vpack.c.b16 %v530, %v517
  %v635 = vpack.c.b16 %v531, %v518
  %v636 = vpack.c.b16 %v532, %v519
  %v637 = vpack.c.b16 %v533, %v520
  %v638 = vpack.c.b16 %v534, %v521
  %v639 = vpack.c.b16 %v535, %v522
  %v640 = vpack.c.b16 %v536, %v523
  %v641 = vpack.c.b16 %v537, %v524
  %v642 = vpack.c.b16 %v538, %v525
  %v643 = vpack.c.b16 %v552, %v539
  %v644 = vpack.c.b16 %v553, %v540
  %v645 = vpack.c.b16 %v554, %v541
  %v646 = vpack.c.b16 %v555, %v542
  %v647 = vpack.c.b16 %v556, %v543
  %v648 = vpack.c.b16 %v557, %v544
  %v649 = vpack.c.b16 %v558, %v545
  %v650 = vpack.c.b16 %v559, %v546
  %v651 = vpack.c.b16 %v560, %v547
  %v652 = vpack.c.b16 %v561, %v548
  %v653 = vpack.c.b16 %v562, %v549
  %v654 = vpack.c.b16 %v563, %v550
  %v655 = vpack.c.b16 %v564, %v551
  %v656 = vpack.c.b16 %v565, %v565
  %v657 = vpack.c.b16 %v566, %v566
  %v658 = vpack.c.b16 %v567, %v567
  %v659 = vpack.c.b16 %v568, %v568
  %v660 = vpack.c.b16 %v569, %v569
  %v661 = vpack.c.b16 %v570, %v570
  %v662 = vpack.c.b16 %v571, %v571
  %v663 = vpack.c.b16 %v572, %v572
  %v664 = vpack.c.b16 %v573, %v573
  %v665 = vpack.c.b16 %v574, %v574
  %v666 = vpack.c.b16 %v575, %v575
  %v667 = vpack.c.b16 %v576, %v576
  %v668 = vpack.c.b16 %v577, %v577
  %v953 = vunpack.c.l.b16 %v106
  %v954 = vunpack.c.h.b16 %v106
  %v955 = vunpack.c.l.b16 %v107
  %v956 = vunpack.c.h.b16 %v107
  %v957 = vunpack.c.l.b16 %v108
  %v958 = vunpack.c.h.b16 %v108
  %v959 = vunpack.c.l.b16 %v109
  %v960 = vunpack.c.h.b16 %v109
  %v961 = vunpack.c.l.b16 %v110
  %v962 = vunpack.c.h.b16 %v110
  %v963 = vunpack.c.l.b16 %v111
  %v964 = vunpack.c.h.b16 %v111
  %v965 = vunpack.c.l.b16 %v112
  %v966 = vunpack.c.h.b16 %v112
  %v967 = vunpack.c.l.b16 %v113
  %v968 = vunpack.c.h.b16 %v113
  %v969 = vunpack.c.l.b16 %v114
  %v970 = vunpack.c.h.b16 %v114
  %v971 = vunpack.c.l.b16 %v115
  %v972 = vunpack.c.h.b16 %v115
  %v973 = vunpack.c.l.b16 %v116
  %v974 = vunpack.c.h.b16 %v116
  %v975 = vunpack.c.l.b16 %v117
  %v976 = vunpack.c.h.b16 %v117
  %v977 = vunpack.c.l.b16 %v118
  %v978 = vunpack.c.h.b16 %v118
  %v979 = vunpack.c.l.b16 %v119
  %v980 = vunpack.c.h.b16 %v119
  %v981 = vunpack.c.l.b16 %v120
  %v982 = vunpack.c.h.b16 %v120
  %v983 = vunpack.c.l.b16 %v121
  %v984 = vunpack.c.h.b16 %v121
  %v985 = vunpack.c.l.b16 %v122
  %v986 = vunpack.c.h.b16 %v122
  %v987 = vunpack.c.l.b16 %v123
  %v988 = vunpack.c.h.b16 %v123
  %v989 = vunpack.c.l.b16 %v124
  %v990 = vunpack.c.h.b16 %v124
  %v991 = vunpack.c.l.b16 %v125
  %v992 = vunpack.c.h.b16 %v125
  %v993 = vunpack.c.l.b16 %v126
  %v994 = vunpack.c.h.b16 %v126
  %v995 = vunpack.c.l.b16 %v127
  %v996 = vunpack.c.h.b16 %v127
  %v997 = vunpack.c.l.b16 %v128
  %v998 = vunpack.c.h.b16 %v128
  %v999 = vunpack.c.l.b16 %v129
  %v1000 = vunpack.c.h.b16 %v129
  %v1001 = vunpack.c.l.b16 %v130
  %v1002 = vunpack.c.h.b16 %v130
  %v1003 = vunpack.c.l.b16 %v131
  %v1004 = vunpack.c.h.b16 %v131
  %v1005 = vunpack.c.l.b16 %v132
  %v1006 = vunpack.c.h.b16 %v132
  %v1007 = vunpack.c.l.b16 %v133
  %v1008 = vunpack.c.h.b16 %v133
  %v1009 = vunpack.c.l.b16 %v134
  %v1010 = vunpack.c.h.b16 %v134
  %v1011 = vunpack.c.l.b16 %v135
  %v1012 = vunpack.c.h.b16 %v135
  %v1013 = vunpack.c.l.b16 %v136
  %v1014 = vunpack.c.h.b16 %v136
  %v1015 = vunpack.c.l.b16 %v137
  %v1016 = vunpack.c.h.b16 %v137
  %v1017 = vunpack.c.l.b16 %v138
  %v1018 = vunpack.c.h.b16 %v138
  %v1019 = vunpack.c.l.b16 %v139
  %v1020 = vunpack.c.h.b16 %v139
  %v1021 = vunpack.c.l.b16 %v140
  %v1022 = vunpack.c.h.b16 %v140
  %v1023 = vunpack.c.l.b16 %v141
  %v1024 = vunpack.c.h.b16 %v141
  %v1025 = vunpack.c.l.b16 %v142
  %v1026 = vunpack.c.h.b16 %v142
  %v1027 = vunpack.c.l.b16 %v143
  %v1028 = vunpack.c.h.b16 %v143
  %v1029 = vunpack.c.l.b16 %v144
  %v1030 = vunpack.c.h.b16 %v144
  %v1031 = vunpack.c.l.b16 %v145
  %v1032 = vunpack.c.h.b16 %v145
  %v1033 = vunpack.c.l.b16 %v146
  %v1034 = vunpack.c.h.b16 %v146
  %v1035 = vunpack.c.l.b16 %v147
  %v1036 = vunpack.c.h.b16 %v147
  %v1037 = vunpack.c.l.b16 %v148
  %v1038 = vunpack.c.h.b16 %v148
  %v1039 = vunpack.c.l.b16 %v149
  %v1040 = vunpack.c.h.b16 %v149
  %v1041 = vunpack.c.l.b16 %v150
  %v1042 = vunpack.c.h.b16 %v150
  %v1043 = vunpack.c.l.b16 %v151
  %v1044 = vunpack.c.h.b16 %v151
  %v1045 = vunpack.c.l.b16 %v152
  %v1046 = vunpack.c.h.b16 %v152
  %v1047 = vunpack.c.l.b16 %v153
  %v1048 = vunpack.c.h.b16 %v153
  %v1049 = vunpack.c.l.b16 %v154
  %v1050 = vunpack.c.h.b16 %v154
  %v1051 = vunpack.c.l.b16 %v155
  %v1052 = vunpack.c.h.b16 %v155
  %v1053 = vunpack.c.l.b16 %v156
  %v1054 = vunpack.c.h.b16 %v156
  %v1055 = vunpack.c.l.b16 %v157
  %v1056 = vunpack.c.h.b16 %v157
  %v1057 = vunpack.c.l.b16 %v158
  %v1058 = vunpack.c.h.b16 %v158
  %v1059 = vunpack.c.l.b16 %v159
  %v1060 = vunpack.c.h.b16 %v159
  %v1061 = vunpack.c.l.b16 %v160
  %v1062 = vunpack.c.h.b16 %v160
  %v1063 = vunpack.c.l.b16 %v161
  %v1064 = vunpack.c.h.b16 %v161
  %v1065 = vunpack.c.l.b16 %v162
  %v1066 = vunpack.c.h.b16 %v162
  %v1067 = vunpack.c.l.b16 %v163
  %v1068 = vunpack.c.h.b16 %v163
  %v1069 = vunpack.c.l.b16 %v164
  %v1070 = vunpack.c.h.b16 %v164
  %v1071 = vunpack.c.l.b16 %v165
  %v1072 = vunpack.c.h.b16 %v165
  %v1073 = vunpack.c.l.b16 %v166
  %v1074 = vunpack.c.h.b16 %v166
  %v1075 = vunpack.c.l.b16 %v167
  %v1076 = vunpack.c.h.b16 %v167
  %v1077 = vunpack.c.l.b16 %v168
  %v1078 = vunpack.c.h.b16 %v168
  %v1079 = vunpack.c.l.b16 %v169
  %v1080 = vunpack.c.h.b16 %v169
  %v1081 = vunpack.c.l.b16 %v170
  %v1082 = vunpack.c.h.b16 %v170
  %v1083 = vunpack.c.l.b16 %v171
  %v1084 = vunpack.c.h.b16 %v171
  %v1085 = vunpack.c.l.b16 %v172
  %v1086 = vunpack.c.h.b16 %v172
  %v1087 = vunpack.c.l.b16 %v173
  %v1088 = vunpack.c.h.b16 %v173
  %v1089 = vunpack.c.l.b16 %v174
  %v1090 = vunpack.c.h.b16 %v174
  %v1091 = vunpack.c.l.b16 %v175
  %v1092 = vunpack.c.h.b16 %v175
  %v1093 = vunpack.c.l.b16 %v176
  %v1094 = vunpack.c.h.b16 %v176
  %v1095 = vunpack.c.l.b16 %v177
  %v1096 = vunpack.c.h.b16 %v177
  %v1097 = vunpack.c.l.b16 %v178
  %v1098 = vunpack.c.h.b16 %v178
  %v1099 = vunpack.c.l.b16 %v179
  %v1100 = vunpack.c.h.b16 %v179
  %v1101 = vunpack.c.l.b16 %v180
  %v1102 = vunpack.c.h.b16 %v180
  %v1103 = vunpack.c.l.b16 %v181
  %v1104 = vunpack.c.h.b16 %v181
  %v1105 = vunpack.c.l.b16 %v182
  %v1106 = vunpack.c.h.b16 %v182
  %v1107 = vunpack.c.l.b16 %v183
  %v1108 = vunpack.c.h.b16 %v183
  %v1109 = vunpack.c.l.b16 %v184
  %v1110 = vunpack.c.h.b16 %v184
  %v1111 = vunpack.c.l.b16 %v185
  %v1112 = vunpack.c.h.b16 %v185
  %v1113 = vunpack.c.l.b16 %v186
  %v1114 = vunpack.c.h.b16 %v186
  %v1115 = vunpack.c.l.b16 %v187
  %v1116 = vunpack.c.h.b16 %v187
  %v1117 = vunpack.c.l.b16 %v188
  %v1118 = vunpack.c.h.b16 %v188
  %v1119 = vunpack.c.l.b16 %v189
  %v1120 = vunpack.c.h.b16 %v189
  %v1121 = vunpack.c.l.b16 %v190
  %v1122 = vunpack.c.h.b16 %v190
  %v1123 = vunpack.c.l.b16 %v191
  %v1124 = vunpack.c.h.b16 %v191
  %v1125 = vunpack.c.l.b16 %v192
  %v1126 = vunpack.c.h.b16 %v192
  %v1127 = vunpack.c.l.b16 %v193
  %v1128 = vunpack.c.h.b16 %v193
  %v1129 = vunpack.c.l.b16 %v194
  %v1130 = vunpack.c.h.b16 %v194
  %v1131 = vunpack.c.l.b16 %v195
  %v1132 = vunpack.c.h.b16 %v195
  %v1133 = vunpack.c.l.b16 %v196
  %v1134 = vunpack.c.h.b16 %v196
  %v1135 = vunpack.c.l.b16 %v197
  %v1136 = vunpack.c.h.b16 %v197
  %v1137 = vunpack.c.l.b16 %v198
  %v1138 = vunpack.c.h.b16 %v198
  %v1139 = vunpack.c.l.b16 %v199
  %v1140 = vunpack.c.h.b16 %v199
  %v1141 = vunpack.c.l.b16 %v200
  %v1142 = vunpack.c.h.b16 %v200
  %v1143 = vunpack.c.l.b16 %v201
  %v1144 = vunpack.c.h.b16 %v201
  %v1145 = vunpack.c.l.b16 %v202
  %v1146 = vunpack.c.h.b16 %v202
  %v1147 = vunpack.c.l.b16 %v203
  %v1148 = vunpack.c.h.b16 %v203
  %v1149 = vunpack.c.l.b16 %v204
  %v1150 = vunpack.c.h.b16 %v204
  %v1151 = vunpack.c.l.b16 %v205
  %v1152 = vunpack.c.h.b16 %v205
  %v1153 = vunpack.c.l.b16 %v206
  %v1154 = vunpack.c.h.b16 %v206
  %v1155 = vunpack.c.l.b16 %v207
  %v1156 = vunpack.c.h.b16 %v207
  %v1157 = vunpack.c.l.b16 %v208
  %v1158 = vunpack.c.h.b16 %v208
  %v1159 = vunpack.c.l.b16 %v209
  %v1160 = vunpack.c.h.b16 %v209
  %v1161 = vunpack.c.l.b16 %v210
  %v1162 = vunpack.c.h.b16 %v210
  %v1163 = vunpack.c.l.b16 %v211
  %v1164 = vunpack.c.h.b16 %v211
  %v1165 = vunpack.c.l.b16 %v212
  %v1166 = vunpack.c.h.b16 %v212
  %v1167 = vunpack.c.l.b16 %v213
  %v1168 = vunpack.c.h.b16 %v213
  %v1169 = vunpack.c.l.b16 %v214
  %v1170 = vunpack.c.h.b16 %v214
  %v1171 = vunpack.c.l.b16 %v215
  %v1172 = vunpack.c.h.b16 %v215
  %v1173 = vunpack.c.l.b16 %v216
  %v1174 = vunpack.c.h.b16 %v216
  %v1175 = vunpack.c.l.b16 %v217
  %v1176 = vunpack.c.h.b16 %v217
  %v1177 = vunpack.c.l.b16 %v218
  %v1178 = vunpack.c.h.b16 %v218
  %v1179 = vunpack.c.l.b16 %v219
  %v1180 = vunpack.c.h.b16 %v219
  %v1181 = vunpack.c.l.b16 %v220
  %v1182 = vunpack.c.h.b16 %v220
  %v1183 = vunpack.c.l.b16 %v221
  %v1184 = vunpack.c.h.b16 %v221
  %v1185 = vunpack.c.l.b16 %v222
  %v1186 = vunpack.c.h.b16 %v222
  %v1187 = vunpack.c.l.b16 %v223
  %v1188 = vunpack.c.h.b16 %v223
  %v1189 = vunpack.c.l.b16 %v224
  %v1190 = vunpack.c.h.b16 %v224
  %v1191 = vunpack.c.l.b16 %v225
  %v1192 = vunpack.c.h.b16 %v225
  %v1193 = vunpack.c.l.b16 %v226
  %v1194 = vunpack.c.h.b16 %v226
  %v1195 = vunpack.c.l.b16 %v227
  %v1196 = vunpack.c.h.b16 %v227
  %v1197 = vunpack.c.l.b16 %v228
  %v1198 = vunpack.c.h.b16 %v228
  %v1199 = vunpack.c.l.b16 %v229
  %v1200 = vunpack.c.h.b16 %v229
  %v1201 = vunpack.c.l.b16 %v230
  %v1202 = vunpack.c.h.b16 %v230
  %v1203 = vunpack.c.l.b16 %v231
  %v1204 = vunpack.c.h.b16 %v231
  %v1205 = vunpack.c.l.b16 %v232
  %v1206 = vunpack.c.h.b16 %v232
  %v1207 = vunpack.c.l.b16 %v233
  %v1208 = vunpack.c.h.b16 %v233
  %v1209 = vunpack.c.l.b16 %v234
  %v1210 = vunpack.c.h.b16 %v234
  %v1211 = vunpack.c.l.b16 %v235
  %v1212 = vunpack.c.h.b16 %v235
  %v1213 = vunpack.c.l.b16 %v236
  %v1214 = vunpack.c.h.b16 %v236
  %v1215 = vunpack.c.l.b16 %v237
  %v1216 = vunpack.c.h.b16 %v237
  %v1217 = vunpack.c.l.b16 %v238
  %v1218 = vunpack.c.h.b16 %v238
  %v1219 = vunpack.c.l.b16 %v239
  %v1220 = vunpack.c.h.b16 %v239
  %v1221 = vunpack.c.l.b16 %v240
  %v1222 = vunpack.c.h.b16 %v240
  %v1223 = vunpack.c.l.b16 %v241
  %v1224 = vunpack.c.h.b16 %v241
  %v1225 = vunpack.c.l.b16 %v242
  %v1226 = vunpack.c.h.b16 %v242
  %v1227 = vunpack.c.l.b16 %v243
  %v1228 = vunpack.c.h.b16 %v243
  %v1229 = vunpack.c.l.b16 %v244
  %v1230 = vunpack.c.h.b16 %v244
  %v1231 = vunpack.c.l.b16 %v245
  %v1232 = vunpack.c.h.b16 %v245
  %v1233 = vunpack.c.l.b16 %v246
  %v1234 = vunpack.c.h.b16 %v246
  %v1235 = vunpack.c.l.b16 %v247
  %v1236 = vunpack.c.h.b16 %v247
  %v1237 = vunpack.c.l.b16 %v248
  %v1238 = vunpack.c.h.b16 %v248
  %v1239 = vunpack.c.l.b16 %v249
  %v1240 = vunpack.c.h.b16 %v249
  %v1241 = vunpack.c.l.b16 %v250
  %v1242 = vunpack.c.h.b16 %v250
  %v1243 = vunpack.c.l.b16 %v251
  %v1244 = vunpack.c.h.b16 %v251
  %v1245 = vunpack.c.l.b16 %v252
  %v1246 = vunpack.c.h.b16 %v252
  %v1247 = vunpack.c.l.b16 %v253
  %v1248 = vunpack.c.h.b16 %v253
  %v1249 = vunpack.c.l.b16 %v254
  %v1250 = vunpack.c.h.b16 %v254
  %v1251 = vunpack.c.l.b16 %v255
  %v1252 = vunpack.c.h.b16 %v255
  %v1253 = vunpack.c.l.b16 %v256
  %v1254 = vunpack.c.h.b16 %v256
  %v1255 = vunpack.c.l.b16 %v257
  %v1256 = vunpack.c.h.b16 %v257
  %v1257 = vunpack.c.l.b16 %v258
  %v1258 = vunpack.c.h.b16 %v258
  %v1259 = vunpack.c.l.b16 %v259
  %v1260 = vunpack.c.h.b16 %v259
  %v1261 = vunpack.c.l.b16 %v260
  %v1262 = vunpack.c.h.b16 %v260
  %v1263 = vunpack.c.l.b16 %v261
  %v1264 = vunpack.c.h.b16 %v261
  %v1265 = vunpack.c.l.b16 %v262
  %v1266 = vunpack.c.h.b16 %v262
  %v1267 = vunpack.c.l.b16 %v263
  %v1268 = vunpack.c.h.b16 %v263
  %v1269 = vunpack.c.l.b16 %v264
  %v1270 = vunpack.c.h.b16 %v264
  %v1271 = vunpack.c.l.b16 %v265
  %v1272 = vunpack.c.h.b16 %v265
  %v1273 = vunpack.c.l.b16 %v266
  %v1274 = vunpack.c.h.b16 %v266
  %v1275 = vunpack.c.l.b16 %v267
  %v1276 = vunpack.c.h.b16 %v267
  %v1277 = vunpack.c.l.b16 %v268
  %v1278 = vunpack.c.h.b16 %v268
  %v1279 = vunpack.c.l.b16 %v269
  %v1280 = vunpack.c.h.b16 %v269
  %v1281 = vunpack.c.l.b16 %v270
  %v1282 = vunpack.c.h.b16 %v270
  %v1283 = vunpack.c.l.b16 %v271
  %v1284 = vunpack.c.h.b16 %v271
  %v1285 = vunpack.c.l.b16 %v272
  %v1286 = vunpack.c.h.b16 %v272
  %v1287 = vunpack.c.l.b16 %v273
  %v1288 = vunpack.c.h.b16 %v273
  %v1289 = vunpack.c.l.b16 %v274
  %v1290 = vunpack.c.h.b16 %v274
  %v1291 = vunpack.c.l.b16 %v275
  %v1292 = vunpack.c.h.b16 %v275
  %v1293 = vunpack.c.l.b16 %v276
  %v1294 = vunpack.c.h.b16 %v276
  %v1295 = vunpack.c.l.b16 %v277
  %v1296 = vunpack.c.h.b16 %v277
  %v1297 = vunpack.c.l.b16 %v278
  %v1298 = vunpack.c.h.b16 %v278
  %v1299 = vunpack.c.l.b16 %v279
  %v1300 = vunpack.c.h.b16 %v279
  %v1301 = vunpack.c.l.b16 %v280
  %v1302 = vunpack.c.h.b16 %v280
  %v1303 = vunpack.c.l.b16 %v281
  %v1304 = vunpack.c.h.b16 %v281
  %v1305 = vunpack.c.l.b16 %v282
  %v1306 = vunpack.c.h.b16 %v282
  %v1307 = vunpack.c.l.b16 %v283
  %v1308 = vunpack.c.h.b16 %v283
  %v1309 = vunpack.c.l.b16 %v284
  %v1310 = vunpack.c.h.b16 %v284
  %v1311 = vunpack.c.l.b16 %v285
  %v1312 = vunpack.c.h.b16 %v285
  %v1313 = vunpack.c.l.b16 %v286
  %v1314 = vunpack.c.h.b16 %v286
  %v1315 = vunpack.c.l.b16 %v287
  %v1316 = vunpack.c.h.b16 %v287
  %v1317 = vunpack.c.l.b16 %v288
  %v1318 = vunpack.c.h.b16 %v288
  %v1319 = vunpack.c.l.b16 %v289
  %v1320 = vunpack.c.h.b16 %v289
  %v1321 = vunpack.c.l.b16 %v290
  %v1322 = vunpack.c.h.b16 %v290
  %v1323 = vunpack.c.l.b16 %v291
  %v1324 = vunpack.c.h.b16 %v291
  %v1325 = vunpack.c.l.b16 %v292
  %v1326 = vunpack.c.h.b16 %v292
  %v1327 = vunpack.c.l.b16 %v293
  %v1328 = vunpack.c.h.b16 %v293
  %v1329 = vunpack.c.l.b16 %v294
  %v1330 = vunpack.c.h.b16 %v294
  %v1331 = vunpack.c.l.b16 %v295
  %v1332 = vunpack.c.h.b16 %v295
  %v1333 = vunpack.c.l.b16 %v296
  %v1334 = vunpack.c.h.b16 %v296
  %v1335 = vunpack.c.l.b16 %v297
  %v1336 = vunpack.c.h.b16 %v297
  %v1337 = vunpack.c.l.b16 %v298
  %v1338 = vunpack.c.h.b16 %v298
  %v1339 = vunpack.c.l.b16 %v299
  %v1340 = vunpack.c.h.b16 %v299
  %v1341 = vunpack.c.l.b16 %v300
  %v1342 = vunpack.c.h.b16 %v300
  %v1343 = vunpack.c.l.b16 %v301
  %v1344 = vunpack.c.h.b16 %v301
  %v1345 = vunpack.c.l.b16 %v302
  %v1346 = vunpack.c.h.b16 %v302
  %v1347 = vunpack.c.l.b16 %v303
  %v1348 = vunpack.c.h.b16 %v303
  %v1349 = vunpack.c.l.b16 %v304
  %v1350 = vunpack.c.h.b16 %v304
  %v1351 = vunpack.c.l.b16 %v305
  %v1352 = vunpack.c.h.b16 %v305
  %v1353 = vpack.c.b16 %v955, %v953
  %v1354 = vpack.c.b16 %v956, %v954
  %v1355 = vpack.c.b16 %v959, %v957
  %v1356 = vpack.c.b16 %v960, %v958
  %v1357 = vpack.c.b16 %v963, %v961
  %v1358 = vpack.c.b16 %v964, %v962
  %v1359 = vpack.c.b16 %v967, %v965
  %v1360 = vpack.c.b16 %v968, %v966
  %v1361 = vpack.c.b16 %v971, %v969
  %v1362 = vpack.c.b16 %v972, %v970
  %v1363 = vpack.c.b16 %v975, %v973
  %v1364 = vpack.c.b16 %v976, %v974
  %v1365 = vpack.c.b16 %v979, %v977
  %v1366 = vpack.c.b16 %v980, %v978
  %v1367 = vpack.c.b16 %v983, %v981
  %v1368 = vpack.c.b16 %v984, %v982
  %v1369 = vpack.c.b16 %v987, %v985
  %v1370 = vpack.c.b16 %v988, %v986
  %v1371 = vpack.c.b16 %v991, %v989
  %v1372 = vpack.c.b16 %v992, %v990
  %v1373 = vpack.c.b16 %v995, %v993
  %v1374 = vpack.c.b16 %v996, %v994
  %v1375 = vpack.c.b16 %v999, %v997
  %v1376 = vpack.c.b16 %v1000, %v998
  %v1377 = vpack.c.b16 %v1003, %v1001
  %v1378 = vpack.c.b16 %v1004, %v1002
  %v1379 = vpack.c.b16 %v1007, %v1005
  %v1380 = vpack.c.b16 %v1008, %v1006
  %v1381 = vpack.c.b16 %v1011, %v1009
  %v1382 = vpack.c.b16 %v1012, %v1010
  %v1383 = vpack.c.b16 %v1015, %v1013
  %v1384 = vpack.c.b16 %v1016, %v1014
  %v1385 = vpack.c.b16 %v1019, %v1017
  %v1386 = vpack.c.b16 %v1020, %v1018
  %v1387 = vpack.c.b16 %v1023, %v1021
  %v1388 = vpack.c.b16 %v1024, %v1022
  %v1389 = vpack.c.b16 %v1027, %v1025
  %v1390 = vpack.c.b16 %v1028, %v1026
  %v1391 = vpack.c.b16 %v1031, %v1029
  %v1392 = vpack.c.b16 %v1032, %v1030
  %v1393 = vpack.c.b16 %v1035, %v1033
  %v1394 = vpack.c.b16 %v1036, %v1034
  %v1395 = vpack.c.b16 %v1039, %v1037
  %v1396 = vpack.c.b16 %v1040, %v1038
  %v1397 = vpack.c.b16 %v1043, %v1041
  %v1398 = vpack.c.b16 %v1044, %v1042
  %v1399 = vpack.c.b16 %v1047, %v1045
  %v1400 = vpack.c.b16 %v1048, %v1046
  %v1401 = vpack.c.b16 %v1051, %v1049
  %v1402 = vpack.c.b16 %v1052, %v1050
  %v1403 = vpack.c.b16 %v1055, %v1053
  %v1404 = vpack.c.b16 %v1056, %v1054
  %v1405 = vpack.c.b16 %v1059, %v1057
  %v1406 = vpack.c.b16 %v1060, %v1058
  %v1407 = vpack.c.b16 %v1063, %v1061
  %v1408 = vpack.c.b16 %v1064, %v1062
  %v1409 = vpack.c.b16 %v1067, %v1065
  %v1410 = vpack.c.b16 %v1068, %v1066
  %v1411 = vpack.c.b16 %v1071, %v1069
  %v1412 = vpack.c.b16 %v1072, %v1070
  %v1413 = vpack.c.b16 %v1075, %v1073
  %v1414 = vpack.c.b16 %v1076, %v1074
  %v1415 = vpack.c.b16 %v1079, %v1077
  %v1416 = vpack.c.b16 %v1080, %v1078
  %v1417 = vpack.c.b16 %v1083, %v1081
  %v1418 = vpack.c.b16 %v1084, %v1082
  %v1419 = vpack.c.b16 %v1087, %v1085
  %v1420 = vpack.c.b16 %v1088, %v1086
  %v1421 = vpack.c.b16 %v1091, %v1089
  %v1422 = vpack.c.b16 %v1092, %v1090
  %v1423 = vpack.c.b16 %v1095, %v1093
  %v1424 = vpack.c.b16 %v1096, %v1094
  %v1425 = vpack.c.b16 %v1099, %v1097
  %v1426 = vpack.c.b16 %v1100, %v1098
  %v1427 = vpack.c.b16 %v1103, %v1101
  %v1428 = vpack.c.b16 %v1104, %v1102
  %v1429 = vpack.c.b16 %v1107, %v1105
  %v1430 = vpack.c.b16 %v1108, %v1106
  %v1431 = vpack.c.b16 %v1111, %v1109
  %v1432 = vpack.c.b16 %v1112, %v1110
  %v1433 = vpack.c.b16 %v1115, %v1113
  %v1434 = vpack.c.b16 %v1116, %v1114
  %v1435 = vpack.c.b16 %v1119, %v1117
  %v1436 = vpack.c.b16 %v1120, %v1118
  %v1437 = vpack.c.b16 %v1123, %v1121
  %v1438 = vpack.c.b16 %v1124, %v1122
  %v1439 = vpack.c.b16 %v1127, %v1125
  %v1440 = vpack.c.b16 %v1128, %v1126
  %v1441 = vpack.c.b16 %v1131, %v1129
  %v1442 = vpack.c.b16 %v1132, %v1130
  %v1443 = vpack.c.b16 %v1135, %v1133
  %v1444 = vpack.c.b16 %v1136, %v1134
  %v1445 = vpack.c.b16 %v1139, %v1137
  %v1446 = vpack.c.b16 %v1140, %v1138
  %v1447 = vpack.c.b16 %v1143, %v1141
  %v1448 = vpack.c.b16 %v1144, %v1142
  %v1449 = vpack.c.b16 %v1147, %v1145
  %v1450 = vpack.c.b16 %v1148, %v1146
  %v1451 = vpack.c.b16 %v1151, %v1149
  %v1452 = vpack.c.b16 %v1152, %v1150
  %v1453 = vpack.c.b16 %v1155, %v1153
  %v1454 = vpack.c.b16 %v1156, %v1154
  %v1455 = vpack.c.b16 %v1159, %v1157
  %v1456 = vpack.c.b16 %v1160, %v1158
  %v1457 = vpack.c.b16 %v1163, %v1161
  %v1458 = vpack.c.b16 %v1164, %v1162
  %v1459 = vpack.c.b16 %v1167, %v1165
  %v1460 = vpack.c.b16 %v1168, %v1166
  %v1461 = vpack.c.b16 %v1171, %v1169
  %v1462 = vpack.c.b16 %v1172, %v1170
  %v1463 = vpack.c.b16 %v1175, %v1173
  %v1464 = vpack.c.b16 %v1176, %v1174
  %v1465 = vpack.c.b16 %v1179, %v1177
  %v1466 = vpack.c.b16 %v1180, %v1178
  %v1467 = vpack.c.b16 %v1183, %v1181
  %v1468 = vpack.c.b16 %v1184, %v1182
  %v1469 = vpack.c.b16 %v1187, %v1185
  %v1470 = vpack.c.b16 %v1188, %v1186
  %v1471 = vpack.c.b16 %v1191, %v1189
  %v1472 = vpack.c.b16 %v1192, %v1190
  %v1473 = vpack.c.b16 %v1195, %v1193
  %v1474 = vpack.c.b16 %v1196, %v1194
  %v1475 = vpack.c.b16 %v1199, %v1197
  %v1476 = vpack.c.b16 %v1200, %v1198
  %v1477 = vpack.c.b16 %v1203, %v1201
  %v1478 = vpack.c.b16 %v1204, %v1202
  %v1479 = vpack.c.b16 %v1207, %v1205
  %v1480 = vpack.c.b16 %v1208, %v1206
  %v1481 = vpack.c.b16 %v1211, %v1209
  %v1482 = vpack.c.b16 %v1212, %v1210
  %v1483 = vpack.c.b16 %v1215, %v1213
  %v1484 = vpack.c.b16 %v1216, %v1214
  %v1485 = vpack.c.b16 %v1219, %v1217
  %v1486 = vpack.c.b16 %v1220, %v1218
  %v1487 = vpack.c.b16 %v1223, %v1221
  %v1488 = vpack.c.b16 %v1224, %v1222
  %v1489 = vpack.c.b16 %v1227, %v1225
  %v1490 = vpack.c.b16 %v1228, %v1226
  %v1491 = vpack.c.b16 %v1231, %v1229
  %v1492 = vpack.c.b16 %v1232, %v1230
  %v1493 = vpack.c.b16 %v1235, %v1233
  %v1494 = vpack.c.b16 %v1236, %v1234
  %v1495 = vpack.c.b16 %v1239, %v1237
  %v1496 = vpack.c.b16 %v1240, %v1238
  %v1497 = vpack.c.b16 %v1243, %v1241
  %v1498 = vpack.c.b16 %v1244, %v1242
  %v1499 = vpack.c.b16 %v1247, %v1245
  %v1500 = vpack.c.b16 %v1248, %v1246
  %v1501 = vpack.c.b16 %v1251, %v1249
  %v1502 = vpack.c.b16 %v1252, %v1250
  %v1503 = vpack.c.b16 %v1255, %v1253
  %v1504 = vpack.c.b16 %v1256, %v1254
  %v1505 = vpack.c.b16 %v1259, %v1257
  %v1506 = vpack.c.b16 %v1260, %v1258
  %v1507 = vpack.c.b16 %v1263, %v1261
  %v1508 = vpack.c.b16 %v1264, %v1262
  %v1509 = vpack.c.b16 %v1267, %v1265
  %v1510 = vpack.c.b16 %v1268, %v1266
  %v1511 = vpack.c.b16 %v1271, %v1269
  %v1512 = vpack.c.b16 %v1272, %v1270
  %v1513 = vpack.c.b16 %v1275, %v1273
  %v1514 = vpack.c.b16 %v1276, %v1274
  %v1515 = vpack.c.b16 %v1279, %v1277
  %v1516 = vpack.c.b16 %v1280, %v1278
  %v1517 = vpack.c.b16 %v1283, %v1281
  %v1518 = vpack.c.b16 %v1284, %v1282
  %v1519 = vpack.c.b16 %v1287, %v1285
  %v1520 = vpack.c.b16 %v1288, %v1286
  %v1521 = vpack.c.b16 %v1291, %v1289
  %v1522 = vpack.c.b16 %v1292, %v1290
  %v1523 = vpack.c.b16 %v1295, %v1293
  %v1524 = vpack.c.b16 %v1296, %v1294
  %v1525 = vpack.c.b16 %v1299, %v1297
  %v1526 = vpack.c.b16 %v1300, %v1298
  %v1527 = vpack.c.b16 %v1303, %v1301
  %v1528 = vpack.c.b16 %v1304, %v1302
  %v1529 = vpack.c.b16 %v1307, %v1305
  %v1530 = vpack.c.b16 %v1308, %v1306
  %v1531 = vpack.c.b16 %v1311, %v1309
  %v1532 = vpack.c.b16 %v1312, %v1310
  %v1533 = vpack.c.b16 %v1315, %v1313
  %v1534 = vpack.c.b16 %v1316, %v1314
  %v1535 = vpack.c.b16 %v1319, %v1317
  %v1536 = vpack.c.b16 %v1320, %v1318
  %v1537 = vpack.c.b16 %v1323, %v1321
  %v1538 = vpack.c.b16 %v1324, %v1322
  %v1539 = vpack.c.b16 %v1327, %v1325
  %v1540 = vpack.c.b16 %v1328, %v1326
  %v1541 = vpack.c.b16 %v1331, %v1329
  %v1542 = vpack.c.b16 %v1332, %v1330
  %v1543 = vpack.c.b16 %v1335, %v1333
  %v1544 = vpack.c.b16 %v1336, %v1334
  %v1545 = vpack.c.b16 %v1339, %v1337
  %v1546 = vpack.c.b16 %v1340, %v1338
  %v1547 = vpack.c.b16 %v1343, %v1341
  %v1548 = vpack.c.b16 %v1344, %v1342
  %v1549 = vpack.c.b16 %v1347, %v1345
  %v1550 = vpack.c.b16 %v1348, %v1346
  %v1551 = vpack.c.b16 %v1351, %v1349
  %v1552 = vpack.c.b16 %v1352, %v1350
  %vm1753 = vcmask 523264
  %v1755 = vsel %vm1753, %v590, 0
  %v1758 = vsel %vm1753, %v603, 0
  %v1761 = vsel %vm1753, %v616, 0
  %v1764 = vsel %vm1753, %v629, 0
  %v1767 = vsel %vm1753, %v642, 0
  %v1770 = vsel %vm1753, %v655, 0
  %v1773 = vsel %vm1753, %v668, 0
  %1775 = vmatprep.subr.bf16.mxu0 %v1354
  %1776 = vmatpush1.bf16.msra.mxu0 %v1353
  %1777 = vmatprep.subr.bf16.mxu0 %v1356
  %1778 = vmatpush1.bf16.msra.mxu0 %v1355
  %1779 = vmatprep.subr.bf16.mxu0 %v1358
  %1780 = vmatpush1.bf16.msra.mxu0 %v1357
  %1781 = vmatprep.subr.bf16.mxu0 %v1360
  %1782 = vmatpush1.bf16.msra.mxu0 %v1359
  %1783 = vmatprep.subr.bf16.mxu0 %v1362
  %1784 = vmatpush1.bf16.msra.mxu0 %v1361
  %1785 = vmatprep.subr.bf16.mxu0 %v1364
  %1786 = vmatpush1.bf16.msra.mxu0 %v1363
  %1787 = vmatprep.subr.bf16.mxu0 %v1366
  %1788 = vmatpush1.bf16.msra.mxu0 %v1365
  %1789 = vmatprep.subr.bf16.mxu0 %v1368
  %1790 = vmatpush1.bf16.msra.mxu0 %v1367
  %1791 = vmatprep.subr.bf16.mxu0 %v1370
  %1792 = vmatpush1.bf16.msra.mxu0 %v1369
  %1793 = vmatprep.subr.bf16.mxu0 %v1372
  %1794 = vmatpush1.bf16.msra.mxu0 %v1371
  %1795 = vmatprep.subr.bf16.mxu0 %v1374
  %1796 = vmatpush1.bf16.msra.mxu0 %v1373
  %1797 = vmatprep.subr.bf16.mxu0 %v1376
  %1798 = vmatpush1.bf16.msra.mxu0 %v1375
  %1799 = vmatprep.subr.bf16.mxu0 %v1378
  %1800 = vmatpush1.bf16.msra.mxu0 %v1377
  %1801 = vmatprep.subr.bf16.mxu0 %v1380
  %1802 = vmatpush1.bf16.msra.mxu0 %v1379
  %1803 = vmatprep.subr.bf16.mxu0 %v1382
  %1804 = vmatpush1.bf16.msra.mxu0 %v1381
  %1805 = vmatprep.subr.bf16.mxu0 %v1384
  %1806 = vmatpush1.bf16.msra.mxu0 %v1383
  %1807 = vmatprep.mubr.bf16.mxu0 %v579
  %1808 = vmatmul.mubr.bf16.gmra.mrb[0].mxu0 %v578
  %v1809 = vpop.f32.mrb[0].mxu0
  %v1810 = vadd.f32 %v311, %v1809
  %v1811 = vpop.f32.mrb[0].mxu0
  %v1812 = vadd.f32 %v315, %v1811
  %v1813 = vpop.f32.mrb[0].mxu0
  %v1814 = vadd.f32 %v311, %v1813
  %v1815 = vpop.f32.mrb[0].mxu0
  %v1816 = vadd.f32 %v315, %v1815
  %1817 = vmatprep.mubr.bf16.mxu0 %v592
  %1818 = vmatmul.mubr.bf16.gmra.mrb[0].mxu0 %v591
  %v1819 = vpop.f32.mrb[0].mxu0
  %v1820 = vadd.f32 %v311, %v1819
  %v1821 = vpop.f32.mrb[0].mxu0
  %v1822 = vadd.f32 %v315, %v1821
  %v1823 = vpop.f32.mrb[0].mxu0
  %v1824 = vadd.f32 %v311, %v1823
  %v1825 = vpop.f32.mrb[0].mxu0
  %v1826 = vadd.f32 %v315, %v1825
  %1827 = vmatprep.mubr.bf16.mxu0 %v605
  %1828 = vmatmul.mubr.bf16.gmra.mrb[0].mxu0 %v604
  %v1829 = vpop.f32.mrb[0].mxu0
  %v1830 = vadd.f32 %v311, %v1829
  %v1831 = vpop.f32.mrb[0].mxu0
  %v1832 = vadd.f32 %v315, %v1831
  %v1833 = vpop.f32.mrb[0].mxu0
  %v1834 = vadd.f32 %v311, %v1833
  %v1835 = vpop.f32.mrb[0].mxu0
  %v1836 = vadd.f32 %v315, %v1835
  %1837 = vmatprep.mubr.bf16.mxu0 %v618
  %1838 = vmatmul.mubr.bf16.gmra.mrb[0].mxu0 %v617
  %v1839 = vpop.f32.mrb[0].mxu0
  %v1840 = vadd.f32 %v311, %v1839
  %v1841 = vpop.f32.mrb[0].mxu0
  %v1842 = vadd.f32 %v315, %v1841
  %v1843 = vpop.f32.mrb[0].mxu0
  %v1844 = vadd.f32 %v311, %v1843
  %v1845 = vpop.f32.mrb[0].mxu0
  %v1846 = vadd.f32 %v315, %v1845
  %1847 = vmatprep.mubr.bf16.mxu0 %v631
  %1848 = vmatmul.mubr.bf16.gmra.mrb[0].mxu0 %v630
  %v1849 = vpop.f32.mrb[0].mxu0
  %v1850 = vadd.f32 %v311, %v1849
  %v1851 = vpop.f32.mrb[0].mxu0
  %v1852 = vadd.f32 %v315, %v1851
  %v1853 = vpop.f32.mrb[0].mxu0
  %v1854 = vadd.f32 %v311, %v1853
  %v1855 = vpop.f32.mrb[0].mxu0
  %v1856 = vadd.f32 %v315, %v1855
  %1857 = vmatprep.mubr.bf16.mxu0 %v644
  %1858 = vmatmul.mubr.bf16.gmra.mrb[0].mxu0 %v643
  %v1859 = vpop.f32.mrb[0].mxu0
  %v1860 = vadd.f32 %v311, %v1859
  %v1861 = vpop.f32.mrb[0].mxu0
  %v1862 = vadd.f32 %v315, %v1861
  %v1863 = vpop.f32.mrb[0].mxu0
  %v1864 = vadd.f32 %v311, %v1863
  %v1865 = vpop.f32.mrb[0].mxu0
  %v1866 = vadd.f32 %v315, %v1865
  %1867 = vmatprep.mubr.bf16.mxu0 %v657
  %1868 = vmatmul.mubr.bf16.gmra.mrb[0].mxu0 %v656
  %v1869 = vpop.f32.mrb[0].mxu0
  %v1870 = vadd.f32 %v311, %v1869
  %v1871 = vpop.f32.mrb[0].mxu0
  %v1872 = vadd.f32 %v315, %v1871
  %v1873 = vpop.f32.mrb[0].mxu0
  %v1874 = vpop.f32.mrb[0].mxu0
  %1875 = vdwg.mxu0
  %1876 = vmatprep.subr.bf16.mxu0 %v1386
  %1877 = vmatpush1.bf16.msra.mxu0 %v1385
  %1878 = vmatprep.subr.bf16.mxu0 %v1388
  %1879 = vmatpush1.bf16.msra.mxu0 %v1387
  %1880 = vmatprep.subr.bf16.mxu0 %v1390
  %1881 = vmatpush1.bf16.msra.mxu0 %v1389
  %1882 = vmatprep.subr.bf16.mxu0 %v1392
  %1883 = vmatpush1.bf16.msra.mxu0 %v1391
  %1884 = vmatprep.subr.bf16.mxu0 %v1394
  %1885 = vmatpush1.bf16.msra.mxu0 %v1393
  %1886 = vmatprep.subr.bf16.mxu0 %v1396
  %1887 = vmatpush1.bf16.msra.mxu0 %v1395
  %1888 = vmatprep.subr.bf16.mxu0 %v1398
  %1889 = vmatpush1.bf16.msra.mxu0 %v1397
  %1890 = vmatprep.subr.bf16.mxu0 %v1400
  %1891 = vmatpush1.bf16.msra.mxu0 %v1399
  %1892 = vmatprep.subr.bf16.mxu0 %v1402
  %1893 = vmatpush1.bf16.msra.mxu0 %v1401
  %1894 = vmatprep.subr.bf16.mxu0 %v1404
  %1895 = vmatpush1.bf16.msra.mxu0 %v1403
  %1896 = vmatprep.subr.bf16.mxu0 %v1406
  %1897 = vmatpush1.bf16.msra.mxu0 %v1405
  %1898 = vmatprep.subr.bf16.mxu0 %v1408
  %1899 = vmatpush1.bf16.msra.mxu0 %v1407
  %1900 = vmatprep.subr.bf16.mxu0 %v1410
  %1901 = vmatpush1.bf16.msra.mxu0 %v1409
  %1902 = vmatprep.subr.bf16.mxu0 %v1412
  %1903 = vmatpush1.bf16.msra.mxu0 %v1411
  %1904 = vmatprep.subr.bf16.mxu0 %v1414
  %1905 = vmatpush1.bf16.msra.mxu0 %v1413
  %1906 = vmatprep.subr.bf16.mxu0 %v1416
  %1907 = vmatpush1.bf16.msra.mxu0 %v1415
  %1908 = vmatprep.mubr.bf16.mxu0 %v581
  %1909 = vmatmul.mubr.bf16.gmra.mrb[0].mxu0 %v580
  %v1910 = vpop.f32.mrb[0].mxu0
  %v1911 = vadd.f32 %v1810, %v1910
  %v1912 = vpop.f32.mrb[0].mxu0
  %v1913 = vadd.f32 %v1812, %v1912
  %v1914 = vpop.f32.mrb[0].mxu0
  %v1915 = vadd.f32 %v1814, %v1914
  %v1916 = vpop.f32.mrb[0].mxu0
  %v1917 = vadd.f32 %v1816, %v1916
  %1918 = vmatprep.mubr.bf16.mxu0 %v594
  %1919 = vmatmul.mubr.bf16.gmra.mrb[0].mxu0 %v593
  %v1920 = vpop.f32.mrb[0].mxu0
  %v1921 = vadd.f32 %v1820, %v1920
  %v1922 = vpop.f32.mrb[0].mxu0
  %v1923 = vadd.f32 %v1822, %v1922
  %v1924 = vpop.f32.mrb[0].mxu0
  %v1925 = vadd.f32 %v1824, %v1924
  %v1926 = vpop.f32.mrb[0].mxu0
  %v1927 = vadd.f32 %v1826, %v1926
  %1928 = vmatprep.mubr.bf16.mxu0 %v607
  %1929 = vmatmul.mubr.bf16.gmra.mrb[0].mxu0 %v606
  %v1930 = vpop.f32.mrb[0].mxu0
  %v1931 = vadd.f32 %v1830, %v1930
  %v1932 = vpop.f32.mrb[0].mxu0
  %v1933 = vadd.f32 %v1832, %v1932
  %v1934 = vpop.f32.mrb[0].mxu0
  %v1935 = vadd.f32 %v1834, %v1934
  %v1936 = vpop.f32.mrb[0].mxu0
  %v1937 = vadd.f32 %v1836, %v1936
  %1938 = vmatprep.mubr.bf16.mxu0 %v620
  %1939 = vmatmul.mubr.bf16.gmra.mrb[0].mxu0 %v619
  %v1940 = vpop.f32.mrb[0].mxu0
  %v1941 = vadd.f32 %v1840, %v1940
  %v1942 = vpop.f32.mrb[0].mxu0
  %v1943 = vadd.f32 %v1842, %v1942
  %v1944 = vpop.f32.mrb[0].mxu0
  %v1945 = vadd.f32 %v1844, %v1944
  %v1946 = vpop.f32.mrb[0].mxu0
  %v1947 = vadd.f32 %v1846, %v1946
  %1948 = vmatprep.mubr.bf16.mxu0 %v633
  %1949 = vmatmul.mubr.bf16.gmra.mrb[0].mxu0 %v632
  %v1950 = vpop.f32.mrb[0].mxu0
  %v1951 = vadd.f32 %v1850, %v1950
  %v1952 = vpop.f32.mrb[0].mxu0
  %v1953 = vadd.f32 %v1852, %v1952
  %v1954 = vpop.f32.mrb[0].mxu0
  %v1955 = vadd.f32 %v1854, %v1954
  %v1956 = vpop.f32.mrb[0].mxu0
  %v1957 = vadd.f32 %v1856, %v1956
  %1958 = vmatprep.mubr.bf16.mxu0 %v646
  %1959 = vmatmul.mubr.bf16.gmra.mrb[0].mxu0 %v645
  %v1960 = vpop.f32.mrb[0].mxu0
  %v1961 = vadd.f32 %v1860, %v1960
  %v1962 = vpop.f32.mrb[0].mxu0
  %v1963 = vadd.f32 %v1862, %v1962
  %v1964 = vpop.f32.mrb[0].mxu0
  %v1965 = vadd.f32 %v1864, %v1964
  %v1966 = vpop.f32.mrb[0].mxu0
  %v1967 = vadd.f32 %v1866, %v1966
  %1968 = vmatprep.mubr.bf16.mxu0 %v659
  %1969 = vmatmul.mubr.bf16.gmra.mrb[0].mxu0 %v658
  %v1970 = vpop.f32.mrb[0].mxu0
  %v1971 = vadd.f32 %v1870, %v1970
  %v1972 = vpop.f32.mrb[0].mxu0
  %v1973 = vadd.f32 %v1872, %v1972
  %v1974 = vpop.f32.mrb[0].mxu0
  %v1975 = vpop.f32.mrb[0].mxu0
  %1976 = vdwg.mxu0
  %1977 = vmatprep.subr.bf16.mxu0 %v1418
  %1978 = vmatpush1.bf16.msra.mxu0 %v1417
  %1979 = vmatprep.subr.bf16.mxu0 %v1420
  %1980 = vmatpush1.bf16.msra.mxu0 %v1419
  %1981 = vmatprep.subr.bf16.mxu0 %v1422
  %1982 = vmatpush1.bf16.msra.mxu0 %v1421
  %1983 = vmatprep.subr.bf16.mxu0 %v1424
  %1984 = vmatpush1.bf16.msra.mxu0 %v1423
  %1985 = vmatprep.subr.bf16.mxu0 %v1426
  %1986 = vmatpush1.bf16.msra.mxu0 %v1425
  %1987 = vmatprep.subr.bf16.mxu0 %v1428
  %1988 = vmatpush1.bf16.msra.mxu0 %v1427
  %1989 = vmatprep.subr.bf16.mxu0 %v1430
  %1990 = vmatpush1.bf16.msra.mxu0 %v1429
  %1991 = vmatprep.subr.bf16.mxu0 %v1432
  %1992 = vmatpush1.bf16.msra.mxu0 %v1431
  %1993 = vmatprep.subr.bf16.mxu0 %v1434
  %1994 = vmatpush1.bf16.msra.mxu0 %v1433
  %1995 = vmatprep.subr.bf16.mxu0 %v1436
  %1996 = vmatpush1.bf16.msra.mxu0 %v1435
  %1997 = vmatprep.subr.bf16.mxu0 %v1438
  %1998 = vmatpush1.bf16.msra.mxu0 %v1437
  %1999 = vmatprep.subr.bf16.mxu0 %v1440
  %2000 = vmatpush1.bf16.msra.mxu0 %v1439
  %2001 = vmatprep.subr.bf16.mxu0 %v1442
  %2002 = vmatpush1.bf16.msra.mxu0 %v1441
  %2003 = vmatprep.subr.bf16.mxu0 %v1444
  %2004 = vmatpush1.bf16.msra.mxu0 %v1443
  %2005 = vmatprep.subr.bf16.mxu0 %v1446
  %2006 = vmatpush1.bf16.msra.mxu0 %v1445
  %2007 = vmatprep.subr.bf16.mxu0 %v1448
  %2008 = vmatpush1.bf16.msra.mxu0 %v1447
  %2009 = vmatprep.mubr.bf16.mxu0 %v583
  %2010 = vmatmul.mubr.bf16.gmra.mrb[0].mxu0 %v582
  %v2011 = vpop.f32.mrb[0].mxu0
  %v2012 = vadd.f32 %v1911, %v2011
  %v2013 = vpop.f32.mrb[0].mxu0
  %v2014 = vadd.f32 %v1913, %v2013
  %v2015 = vpop.f32.mrb[0].mxu0
  %v2016 = vadd.f32 %v1915, %v2015
  %v2017 = vpop.f32.mrb[0].mxu0
  %v2018 = vadd.f32 %v1917, %v2017
  %2019 = vmatprep.mubr.bf16.mxu0 %v596
  %2020 = vmatmul.mubr.bf16.gmra.mrb[0].mxu0 %v595
  %v2021 = vpop.f32.mrb[0].mxu0
  %v2022 = vadd.f32 %v1921, %v2021
  %v2023 = vpop.f32.mrb[0].mxu0
  %v2024 = vadd.f32 %v1923, %v2023
  %v2025 = vpop.f32.mrb[0].mxu0
  %v2026 = vadd.f32 %v1925, %v2025
  %v2027 = vpop.f32.mrb[0].mxu0
  %v2028 = vadd.f32 %v1927, %v2027
  %2029 = vmatprep.mubr.bf16.mxu0 %v609
  %2030 = vmatmul.mubr.bf16.gmra.mrb[0].mxu0 %v608
  %v2031 = vpop.f32.mrb[0].mxu0
  %v2032 = vadd.f32 %v1931, %v2031
  %v2033 = vpop.f32.mrb[0].mxu0
  %v2034 = vadd.f32 %v1933, %v2033
  %v2035 = vpop.f32.mrb[0].mxu0
  %v2036 = vadd.f32 %v1935, %v2035
  %v2037 = vpop.f32.mrb[0].mxu0
  %v2038 = vadd.f32 %v1937, %v2037
  %2039 = vmatprep.mubr.bf16.mxu0 %v622
  %2040 = vmatmul.mubr.bf16.gmra.mrb[0].mxu0 %v621
  %v2041 = vpop.f32.mrb[0].mxu0
  %v2042 = vadd.f32 %v1941, %v2041
  %v2043 = vpop.f32.mrb[0].mxu0
  %v2044 = vadd.f32 %v1943, %v2043
  %v2045 = vpop.f32.mrb[0].mxu0
  %v2046 = vadd.f32 %v1945, %v2045
  %v2047 = vpop.f32.mrb[0].mxu0
  %v2048 = vadd.f32 %v1947, %v2047
  %2049 = vmatprep.mubr.bf16.mxu0 %v635
  %2050 = vmatmul.mubr.bf16.gmra.mrb[0].mxu0 %v634
  %v2051 = vpop.f32.mrb[0].mxu0
  %v2052 = vadd.f32 %v1951, %v2051
  %v2053 = vpop.f32.mrb[0].mxu0
  %v2054 = vadd.f32 %v1953, %v2053
  %v2055 = vpop.f32.mrb[0].mxu0
  %v2056 = vadd.f32 %v1955, %v2055
  %v2057 = vpop.f32.mrb[0].mxu0
  %v2058 = vadd.f32 %v1957, %v2057
  %2059 = vmatprep.mubr.bf16.mxu0 %v648
  %2060 = vmatmul.mubr.bf16.gmra.mrb[0].mxu0 %v647
  %v2061 = vpop.f32.mrb[0].mxu0
  %v2062 = vadd.f32 %v1961, %v2061
  %v2063 = vpop.f32.mrb[0].mxu0
  %v2064 = vadd.f32 %v1963, %v2063
  %v2065 = vpop.f32.mrb[0].mxu0
  %v2066 = vadd.f32 %v1965, %v2065
  %v2067 = vpop.f32.mrb[0].mxu0
  %v2068 = vadd.f32 %v1967, %v2067
  %2069 = vmatprep.mubr.bf16.mxu0 %v661
  %2070 = vmatmul.mubr.bf16.gmra.mrb[0].mxu0 %v660
  %v2071 = vpop.f32.mrb[0].mxu0
  %v2072 = vadd.f32 %v1971, %v2071
  %v2073 = vpop.f32.mrb[0].mxu0
  %v2074 = vadd.f32 %v1973, %v2073
  %v2075 = vpop.f32.mrb[0].mxu0
  %v2076 = vpop.f32.mrb[0].mxu0
  %2077 = vdwg.mxu0
  %2078 = vmatprep.subr.bf16.mxu0 %v1450
  %2079 = vmatpush1.bf16.msra.mxu0 %v1449
  %2080 = vmatprep.subr.bf16.mxu0 %v1452
  %2081 = vmatpush1.bf16.msra.mxu0 %v1451
  %2082 = vmatprep.subr.bf16.mxu0 %v1454
  %2083 = vmatpush1.bf16.msra.mxu0 %v1453
  %2084 = vmatprep.subr.bf16.mxu0 %v1456
  %2085 = vmatpush1.bf16.msra.mxu0 %v1455
  %2086 = vmatprep.subr.bf16.mxu0 %v1458
  %2087 = vmatpush1.bf16.msra.mxu0 %v1457
  %2088 = vmatprep.subr.bf16.mxu0 %v1460
  %2089 = vmatpush1.bf16.msra.mxu0 %v1459
  %2090 = vmatprep.subr.bf16.mxu0 %v1462
  %2091 = vmatpush1.bf16.msra.mxu0 %v1461
  %2092 = vmatprep.subr.bf16.mxu0 %v1464
  %2093 = vmatpush1.bf16.msra.mxu0 %v1463
  %2094 = vmatprep.subr.bf16.mxu0 %v1466
  %2095 = vmatpush1.bf16.msra.mxu0 %v1465
  %2096 = vmatprep.subr.bf16.mxu0 %v1468
  %2097 = vmatpush1.bf16.msra.mxu0 %v1467
  %2098 = vmatprep.subr.bf16.mxu0 %v1470
  %2099 = vmatpush1.bf16.msra.mxu0 %v1469
  %2100 = vmatprep.subr.bf16.mxu0 %v1472
  %2101 = vmatpush1.bf16.msra.mxu0 %v1471
  %2102 = vmatprep.subr.bf16.mxu0 %v1474
  %2103 = vmatpush1.bf16.msra.mxu0 %v1473
  %2104 = vmatprep.subr.bf16.mxu0 %v1476
  %2105 = vmatpush1.bf16.msra.mxu0 %v1475
  %2106 = vmatprep.subr.bf16.mxu0 %v1478
  %2107 = vmatpush1.bf16.msra.mxu0 %v1477
  %2108 = vmatprep.subr.bf16.mxu0 %v1480
  %2109 = vmatpush1.bf16.msra.mxu0 %v1479
  %2110 = vmatprep.mubr.bf16.mxu0 %v585
  %2111 = vmatmul.mubr.bf16.gmra.mrb[0].mxu0 %v584
  %v2112 = vpop.f32.mrb[0].mxu0
  %v2113 = vadd.f32 %v2012, %v2112
  %v2114 = vpop.f32.mrb[0].mxu0
  %v2115 = vadd.f32 %v2014, %v2114
  %v2116 = vpop.f32.mrb[0].mxu0
  %v2117 = vadd.f32 %v2016, %v2116
  %v2118 = vpop.f32.mrb[0].mxu0
  %v2119 = vadd.f32 %v2018, %v2118
  %2120 = vmatprep.mubr.bf16.mxu0 %v598
  %2121 = vmatmul.mubr.bf16.gmra.mrb[0].mxu0 %v597
  %v2122 = vpop.f32.mrb[0].mxu0
  %v2123 = vadd.f32 %v2022, %v2122
  %v2124 = vpop.f32.mrb[0].mxu0
  %v2125 = vadd.f32 %v2024, %v2124
  %v2126 = vpop.f32.mrb[0].mxu0
  %v2127 = vadd.f32 %v2026, %v2126
  %v2128 = vpop.f32.mrb[0].mxu0
  %v2129 = vadd.f32 %v2028, %v2128
  %2130 = vmatprep.mubr.bf16.mxu0 %v611
  %2131 = vmatmul.mubr.bf16.gmra.mrb[0].mxu0 %v610
  %v2132 = vpop.f32.mrb[0].mxu0
  %v2133 = vadd.f32 %v2032, %v2132
  %v2134 = vpop.f32.mrb[0].mxu0
  %v2135 = vadd.f32 %v2034, %v2134
  %v2136 = vpop.f32.mrb[0].mxu0
  %v2137 = vadd.f32 %v2036, %v2136
  %v2138 = vpop.f32.mrb[0].mxu0
  %v2139 = vadd.f32 %v2038, %v2138
  %2140 = vmatprep.mubr.bf16.mxu0 %v624
  %2141 = vmatmul.mubr.bf16.gmra.mrb[0].mxu0 %v623
  %v2142 = vpop.f32.mrb[0].mxu0
  %v2143 = vadd.f32 %v2042, %v2142
  %v2144 = vpop.f32.mrb[0].mxu0
  %v2145 = vadd.f32 %v2044, %v2144
  %v2146 = vpop.f32.mrb[0].mxu0
  %v2147 = vadd.f32 %v2046, %v2146
  %v2148 = vpop.f32.mrb[0].mxu0
  %v2149 = vadd.f32 %v2048, %v2148
  %2150 = vmatprep.mubr.bf16.mxu0 %v637
  %2151 = vmatmul.mubr.bf16.gmra.mrb[0].mxu0 %v636
  %v2152 = vpop.f32.mrb[0].mxu0
  %v2153 = vadd.f32 %v2052, %v2152
  %v2154 = vpop.f32.mrb[0].mxu0
  %v2155 = vadd.f32 %v2054, %v2154
  %v2156 = vpop.f32.mrb[0].mxu0
  %v2157 = vadd.f32 %v2056, %v2156
  %v2158 = vpop.f32.mrb[0].mxu0
  %v2159 = vadd.f32 %v2058, %v2158
  %2160 = vmatprep.mubr.bf16.mxu0 %v650
  %2161 = vmatmul.mubr.bf16.gmra.mrb[0].mxu0 %v649
  %v2162 = vpop.f32.mrb[0].mxu0
  %v2163 = vadd.f32 %v2062, %v2162
  %v2164 = vpop.f32.mrb[0].mxu0
  %v2165 = vadd.f32 %v2064, %v2164
  %v2166 = vpop.f32.mrb[0].mxu0
  %v2167 = vadd.f32 %v2066, %v2166
  %v2168 = vpop.f32.mrb[0].mxu0
  %v2169 = vadd.f32 %v2068, %v2168
  %2170 = vmatprep.mubr.bf16.mxu0 %v663
  %2171 = vmatmul.mubr.bf16.gmra.mrb[0].mxu0 %v662
  %v2172 = vpop.f32.mrb[0].mxu0
  %v2173 = vadd.f32 %v2072, %v2172
  %v2174 = vpop.f32.mrb[0].mxu0
  %v2175 = vadd.f32 %v2074, %v2174
  %v2176 = vpop.f32.mrb[0].mxu0
  %v2177 = vpop.f32.mrb[0].mxu0
  %2178 = vdwg.mxu0
  %2179 = vmatprep.subr.bf16.mxu0 %v1482
  %2180 = vmatpush1.bf16.msra.mxu0 %v1481
  %2181 = vmatprep.subr.bf16.mxu0 %v1484
  %2182 = vmatpush1.bf16.msra.mxu0 %v1483
  %2183 = vmatprep.subr.bf16.mxu0 %v1486
  %2184 = vmatpush1.bf16.msra.mxu0 %v1485
  %2185 = vmatprep.subr.bf16.mxu0 %v1488
  %2186 = vmatpush1.bf16.msra.mxu0 %v1487
  %2187 = vmatprep.subr.bf16.mxu0 %v1490
  %2188 = vmatpush1.bf16.msra.mxu0 %v1489
  %2189 = vmatprep.subr.bf16.mxu0 %v1492
  %2190 = vmatpush1.bf16.msra.mxu0 %v1491
  %2191 = vmatprep.subr.bf16.mxu0 %v1494
  %2192 = vmatpush1.bf16.msra.mxu0 %v1493
  %2193 = vmatprep.subr.bf16.mxu0 %v1496
  %2194 = vmatpush1.bf16.msra.mxu0 %v1495
  %2195 = vmatprep.subr.bf16.mxu0 %v1498
  %2196 = vmatpush1.bf16.msra.mxu0 %v1497
  %2197 = vmatprep.subr.bf16.mxu0 %v1500
  %2198 = vmatpush1.bf16.msra.mxu0 %v1499
  %2199 = vmatprep.subr.bf16.mxu0 %v1502
  %2200 = vmatpush1.bf16.msra.mxu0 %v1501
  %2201 = vmatprep.subr.bf16.mxu0 %v1504
  %2202 = vmatpush1.bf16.msra.mxu0 %v1503
  %2203 = vmatprep.subr.bf16.mxu0 %v1506
  %2204 = vmatpush1.bf16.msra.mxu0 %v1505
  %2205 = vmatprep.subr.bf16.mxu0 %v1508
  %2206 = vmatpush1.bf16.msra.mxu0 %v1507
  %2207 = vmatprep.subr.bf16.mxu0 %v1510
  %2208 = vmatpush1.bf16.msra.mxu0 %v1509
  %2209 = vmatprep.subr.bf16.mxu0 %v1512
  %2210 = vmatpush1.bf16.msra.mxu0 %v1511
  %2211 = vmatprep.mubr.bf16.mxu0 %v587
  %2212 = vmatmul.mubr.bf16.gmra.mrb[0].mxu0 %v586
  %v2213 = vpop.f32.mrb[0].mxu0
  %v2214 = vadd.f32 %v2113, %v2213
  %v2215 = vpop.f32.mrb[0].mxu0
  %v2216 = vadd.f32 %v2115, %v2215
  %v2217 = vpop.f32.mrb[0].mxu0
  %v2218 = vadd.f32 %v2117, %v2217
  %v2219 = vpop.f32.mrb[0].mxu0
  %v2220 = vadd.f32 %v2119, %v2219
  %2221 = vmatprep.mubr.bf16.mxu0 %v600
  %2222 = vmatmul.mubr.bf16.gmra.mrb[0].mxu0 %v599
  %v2223 = vpop.f32.mrb[0].mxu0
  %v2224 = vadd.f32 %v2123, %v2223
  %v2225 = vpop.f32.mrb[0].mxu0
  %v2226 = vadd.f32 %v2125, %v2225
  %v2227 = vpop.f32.mrb[0].mxu0
  %v2228 = vadd.f32 %v2127, %v2227
  %v2229 = vpop.f32.mrb[0].mxu0
  %v2230 = vadd.f32 %v2129, %v2229
  %2231 = vmatprep.mubr.bf16.mxu0 %v613
  %2232 = vmatmul.mubr.bf16.gmra.mrb[0].mxu0 %v612
  %v2233 = vpop.f32.mrb[0].mxu0
  %v2234 = vadd.f32 %v2133, %v2233
  %v2235 = vpop.f32.mrb[0].mxu0
  %v2236 = vadd.f32 %v2135, %v2235
  %v2237 = vpop.f32.mrb[0].mxu0
  %v2238 = vadd.f32 %v2137, %v2237
  %v2239 = vpop.f32.mrb[0].mxu0
  %v2240 = vadd.f32 %v2139, %v2239
  %2241 = vmatprep.mubr.bf16.mxu0 %v626
  %2242 = vmatmul.mubr.bf16.gmra.mrb[0].mxu0 %v625
  %v2243 = vpop.f32.mrb[0].mxu0
  %v2244 = vadd.f32 %v2143, %v2243
  %v2245 = vpop.f32.mrb[0].mxu0
  %v2246 = vadd.f32 %v2145, %v2245
  %v2247 = vpop.f32.mrb[0].mxu0
  %v2248 = vadd.f32 %v2147, %v2247
  %v2249 = vpop.f32.mrb[0].mxu0
  %v2250 = vadd.f32 %v2149, %v2249
  %2251 = vmatprep.mubr.bf16.mxu0 %v639
  %2252 = vmatmul.mubr.bf16.gmra.mrb[0].mxu0 %v638
  %v2253 = vpop.f32.mrb[0].mxu0
  %v2254 = vadd.f32 %v2153, %v2253
  %v2255 = vpop.f32.mrb[0].mxu0
  %v2256 = vadd.f32 %v2155, %v2255
  %v2257 = vpop.f32.mrb[0].mxu0
  %v2258 = vadd.f32 %v2157, %v2257
  %v2259 = vpop.f32.mrb[0].mxu0
  %v2260 = vadd.f32 %v2159, %v2259
  %2261 = vmatprep.mubr.bf16.mxu0 %v652
  %2262 = vmatmul.mubr.bf16.gmra.mrb[0].mxu0 %v651
  %v2263 = vpop.f32.mrb[0].mxu0
  %v2264 = vadd.f32 %v2163, %v2263
  %v2265 = vpop.f32.mrb[0].mxu0
  %v2266 = vadd.f32 %v2165, %v2265
  %v2267 = vpop.f32.mrb[0].mxu0
  %v2268 = vadd.f32 %v2167, %v2267
  %v2269 = vpop.f32.mrb[0].mxu0
  %v2270 = vadd.f32 %v2169, %v2269
  %2271 = vmatprep.mubr.bf16.mxu0 %v665
  %2272 = vmatmul.mubr.bf16.gmra.mrb[0].mxu0 %v664
  %v2273 = vpop.f32.mrb[0].mxu0
  %v2274 = vadd.f32 %v2173, %v2273
  %v2275 = vpop.f32.mrb[0].mxu0
  %v2276 = vadd.f32 %v2175, %v2275
  %v2277 = vpop.f32.mrb[0].mxu0
  %v2278 = vpop.f32.mrb[0].mxu0
  %2279 = vdwg.mxu0
  %2280 = vmatprep.subr.bf16.mxu0 %v1514
  %2281 = vmatpush1.bf16.msra.mxu0 %v1513
  %2282 = vmatprep.subr.bf16.mxu0 %v1516
  %2283 = vmatpush1.bf16.msra.mxu0 %v1515
  %2284 = vmatprep.subr.bf16.mxu0 %v1518
  %2285 = vmatpush1.bf16.msra.mxu0 %v1517
  %2286 = vmatprep.subr.bf16.mxu0 %v1520
  %2287 = vmatpush1.bf16.msra.mxu0 %v1519
  %2288 = vmatprep.subr.bf16.mxu0 %v1522
  %2289 = vmatpush1.bf16.msra.mxu0 %v1521
  %2290 = vmatprep.subr.bf16.mxu0 %v1524
  %2291 = vmatpush1.bf16.msra.mxu0 %v1523
  %2292 = vmatprep.subr.bf16.mxu0 %v1526
  %2293 = vmatpush1.bf16.msra.mxu0 %v1525
  %2294 = vmatprep.subr.bf16.mxu0 %v1528
  %2295 = vmatpush1.bf16.msra.mxu0 %v1527
  %2296 = vmatprep.subr.bf16.mxu0 %v1530
  %2297 = vmatpush1.bf16.msra.mxu0 %v1529
  %2298 = vmatprep.subr.bf16.mxu0 %v1532
  %2299 = vmatpush1.bf16.msra.mxu0 %v1531
  %2300 = vmatprep.subr.bf16.mxu0 %v1534
  %2301 = vmatpush1.bf16.msra.mxu0 %v1533
  %2302 = vmatprep.subr.bf16.mxu0 %v1536
  %2303 = vmatpush1.bf16.msra.mxu0 %v1535
  %2304 = vmatprep.subr.bf16.mxu0 %v1538
  %2305 = vmatpush1.bf16.msra.mxu0 %v1537
  %2306 = vmatprep.subr.bf16.mxu0 %v1540
  %2307 = vmatpush1.bf16.msra.mxu0 %v1539
  %2308 = vmatprep.subr.bf16.mxu0 %v1542
  %2309 = vmatpush1.bf16.msra.mxu0 %v1541
  %2310 = vmatprep.subr.bf16.mxu0 %v1544
  %2311 = vmatpush1.bf16.msra.mxu0 %v1543
  %2312 = vmatprep.mubr.bf16.mxu0 %v589
  %2313 = vmatmul.mubr.bf16.gmra.mrb[0].mxu0 %v588
  %v2314 = vpop.f32.mrb[0].mxu0
  %v2315 = vadd.f32 %v2214, %v2314
  %v2316 = vpop.f32.mrb[0].mxu0
  %v2317 = vadd.f32 %v2216, %v2316
  %v2318 = vpop.f32.mrb[0].mxu0
  %v2319 = vadd.f32 %v2218, %v2318
  %v2320 = vpop.f32.mrb[0].mxu0
  %v2321 = vadd.f32 %v2220, %v2320
  %2322 = vmatprep.mubr.bf16.mxu0 %v602
  %2323 = vmatmul.mubr.bf16.gmra.mrb[0].mxu0 %v601
  %v2324 = vpop.f32.mrb[0].mxu0
  %v2325 = vadd.f32 %v2224, %v2324
  %v2326 = vpop.f32.mrb[0].mxu0
  %v2327 = vadd.f32 %v2226, %v2326
  %v2328 = vpop.f32.mrb[0].mxu0
  %v2329 = vadd.f32 %v2228, %v2328
  %v2330 = vpop.f32.mrb[0].mxu0
  %v2331 = vadd.f32 %v2230, %v2330
  %2332 = vmatprep.mubr.bf16.mxu0 %v615
  %2333 = vmatmul.mubr.bf16.gmra.mrb[0].mxu0 %v614
  %v2334 = vpop.f32.mrb[0].mxu0
  %v2335 = vadd.f32 %v2234, %v2334
  %v2336 = vpop.f32.mrb[0].mxu0
  %v2337 = vadd.f32 %v2236, %v2336
  %v2338 = vpop.f32.mrb[0].mxu0
  %v2339 = vadd.f32 %v2238, %v2338
  %v2340 = vpop.f32.mrb[0].mxu0
  %v2341 = vadd.f32 %v2240, %v2340
  %2342 = vmatprep.mubr.bf16.mxu0 %v628
  %2343 = vmatmul.mubr.bf16.gmra.mrb[0].mxu0 %v627
  %v2344 = vpop.f32.mrb[0].mxu0
  %v2345 = vadd.f32 %v2244, %v2344
  %v2346 = vpop.f32.mrb[0].mxu0
  %v2347 = vadd.f32 %v2246, %v2346
  %v2348 = vpop.f32.mrb[0].mxu0
  %v2349 = vadd.f32 %v2248, %v2348
  %v2350 = vpop.f32.mrb[0].mxu0
  %v2351 = vadd.f32 %v2250, %v2350
  %2352 = vmatprep.mubr.bf16.mxu0 %v641
  %2353 = vmatmul.mubr.bf16.gmra.mrb[0].mxu0 %v640
  %v2354 = vpop.f32.mrb[0].mxu0
  %v2355 = vadd.f32 %v2254, %v2354
  %v2356 = vpop.f32.mrb[0].mxu0
  %v2357 = vadd.f32 %v2256, %v2356
  %v2358 = vpop.f32.mrb[0].mxu0
  %v2359 = vadd.f32 %v2258, %v2358
  %v2360 = vpop.f32.mrb[0].mxu0
  %v2361 = vadd.f32 %v2260, %v2360
  %2362 = vmatprep.mubr.bf16.mxu0 %v654
  %2363 = vmatmul.mubr.bf16.gmra.mrb[0].mxu0 %v653
  %v2364 = vpop.f32.mrb[0].mxu0
  %v2365 = vadd.f32 %v2264, %v2364
  %v2366 = vpop.f32.mrb[0].mxu0
  %v2367 = vadd.f32 %v2266, %v2366
  %v2368 = vpop.f32.mrb[0].mxu0
  %v2369 = vadd.f32 %v2268, %v2368
  %v2370 = vpop.f32.mrb[0].mxu0
  %v2371 = vadd.f32 %v2270, %v2370
  %2372 = vmatprep.mubr.bf16.mxu0 %v667
  %2373 = vmatmul.mubr.bf16.gmra.mrb[0].mxu0 %v666
  %v2374 = vpop.f32.mrb[0].mxu0
  %v2375 = vadd.f32 %v2274, %v2374
  %v2376 = vpop.f32.mrb[0].mxu0
  %v2377 = vadd.f32 %v2276, %v2376
  %v2378 = vpop.f32.mrb[0].mxu0
  %v2379 = vpop.f32.mrb[0].mxu0
  %2380 = vdwg.mxu0
  %2381 = vmatprep.subr.bf16.mxu0 %v1546
  %2382 = vmatpush1.bf16.msra.mxu0 %v1545
  %2383 = vmatprep.subr.bf16.mxu0 %v1548
  %2384 = vmatpush1.bf16.msra.mxu0 %v1547
  %2385 = vmatprep.subr.bf16.mxu0 %v1550
  %2386 = vmatpush1.bf16.msra.mxu0 %v1549
  %2387 = vmatprep.subr.bf16.mxu0 %v1552
  %2388 = vmatpush1.bf16.msra.mxu0 %v1551
  %2389 = vmatprep.subr.bf16.mxu0 0
  %2390 = vmatpush1.bf16.msra.mxu0 0
  %2391 = vmatprep.subr.bf16.mxu0 0
  %2392 = vmatpush1.bf16.msra.mxu0 0
  %2393 = vmatprep.subr.bf16.mxu0 0
  %2394 = vmatpush1.bf16.msra.mxu0 0
  %2395 = vmatprep.subr.bf16.mxu0 0
  %2396 = vmatpush1.bf16.msra.mxu0 0
  %2397 = vmatprep.subr.bf16.mxu0 0
  %2398 = vmatpush1.bf16.msra.mxu0 0
  %2399 = vmatprep.subr.bf16.mxu0 0
  %2400 = vmatpush1.bf16.msra.mxu0 0
  %2401 = vmatprep.subr.bf16.mxu0 0
  %2402 = vmatpush1.bf16.msra.mxu0 0
  %2403 = vmatprep.subr.bf16.mxu0 0
  %2404 = vmatpush1.bf16.msra.mxu0 0
  %2405 = vmatprep.subr.bf16.mxu0 0
  %2406 = vmatpush1.bf16.msra.mxu0 0
  %2407 = vmatprep.subr.bf16.mxu0 0
  %2408 = vmatpush1.bf16.msra.mxu0 0
  %2409 = vmatprep.subr.bf16.mxu0 0
  %2410 = vmatpush1.bf16.msra.mxu0 0
  %2411 = vmatprep.subr.bf16.mxu0 0
  %2412 = vmatpush1.bf16.msra.mxu0 0
  %2413 = vmatprep.mubr.bf16.mxu0 0
  %2414 = vmatmul.mubr.bf16.gmra.mrb[0].mxu0 %v1755
  %v2415 = vpop.f32.mrb[0].mxu0
  %v2416 = vadd.f32 %v2315, %v2415
  %v2417 = vpop.f32.mrb[0].mxu0
  %v2418 = vadd.f32 %v2317, %v2417
  %v2419 = vpop.f32.mrb[0].mxu0
  %v2420 = vadd.f32 %v2319, %v2419
  %v2421 = vpop.f32.mrb[0].mxu0
  %v2422 = vadd.f32 %v2321, %v2421
  %2423 = vmatprep.mubr.bf16.mxu0 0
  %2424 = vmatmul.mubr.bf16.gmra.mrb[0].mxu0 %v1758
  %v2425 = vpop.f32.mrb[0].mxu0
  %v2426 = vadd.f32 %v2325, %v2425
  %v2427 = vpop.f32.mrb[0].mxu0
  %v2428 = vadd.f32 %v2327, %v2427
  %v2429 = vpop.f32.mrb[0].mxu0
  %v2430 = vadd.f32 %v2329, %v2429
  %v2431 = vpop.f32.mrb[0].mxu0
  %v2432 = vadd.f32 %v2331, %v2431
  %2433 = vmatprep.mubr.bf16.mxu0 0
  %2434 = vmatmul.mubr.bf16.gmra.mrb[0].mxu0 %v1761
  %v2435 = vpop.f32.mrb[0].mxu0
  %v2436 = vadd.f32 %v2335, %v2435
  %v2437 = vpop.f32.mrb[0].mxu0
  %v2438 = vadd.f32 %v2337, %v2437
  %v2439 = vpop.f32.mrb[0].mxu0
  %v2440 = vadd.f32 %v2339, %v2439
  %v2441 = vpop.f32.mrb[0].mxu0
  %v2442 = vadd.f32 %v2341, %v2441
  %2443 = vmatprep.mubr.bf16.mxu0 0
  %2444 = vmatmul.mubr.bf16.gmra.mrb[0].mxu0 %v1764
  %v2445 = vpop.f32.mrb[0].mxu0
  %v2446 = vadd.f32 %v2345, %v2445
  %v2447 = vpop.f32.mrb[0].mxu0
  %v2448 = vadd.f32 %v2347, %v2447
  %v2449 = vpop.f32.mrb[0].mxu0
  %v2450 = vadd.f32 %v2349, %v2449
  %v2451 = vpop.f32.mrb[0].mxu0
  %v2452 = vadd.f32 %v2351, %v2451
  %2453 = vmatprep.mubr.bf16.mxu0 0
  %2454 = vmatmul.mubr.bf16.gmra.mrb[0].mxu0 %v1767
  %v2455 = vpop.f32.mrb[0].mxu0
  %v2456 = vadd.f32 %v2355, %v2455
  %v2457 = vpop.f32.mrb[0].mxu0
  %v2458 = vadd.f32 %v2357, %v2457
  %v2459 = vpop.f32.mrb[0].mxu0
  %v2460 = vadd.f32 %v2359, %v2459
  %v2461 = vpop.f32.mrb[0].mxu0
  %v2462 = vadd.f32 %v2361, %v2461
  %2463 = vmatprep.mubr.bf16.mxu0 0
  %2464 = vmatmul.mubr.bf16.gmra.mrb[0].mxu0 %v1770
  %v2465 = vpop.f32.mrb[0].mxu0
  %v2466 = vadd.f32 %v2365, %v2465
  %v2467 = vpop.f32.mrb[0].mxu0
  %v2468 = vadd.f32 %v2367, %v2467
  %v2469 = vpop.f32.mrb[0].mxu0
  %v2470 = vadd.f32 %v2369, %v2469
  %v2471 = vpop.f32.mrb[0].mxu0
  %v2472 = vadd.f32 %v2371, %v2471
  %2473 = vmatprep.mubr.bf16.mxu0 0
  %2474 = vmatmul.mubr.bf16.gmra.mrb[0].mxu0 %v1773
  %v2475 = vpop.f32.mrb[0].mxu0
  %v2476 = vadd.f32 %v2375, %v2475
  %v2477 = vpop.f32.mrb[0].mxu0
  %v2478 = vadd.f32 %v2377, %v2477
  %v2479 = vpop.f32.mrb[0].mxu0
  %v2480 = vpop.f32.mrb[0].mxu0
  %2481 = vdwg.mxu0
  %v2482 = vmax.f32 %v2416, 0.0
  %v2483 = vmax.f32 %v2418, 0.0
  %v2484 = vmax.f32 %v2420, 0.0
  %v2485 = vmax.f32 %v2422, 0.0
  %v2486 = vmax.f32 %v2426, 0.0
  %v2487 = vmax.f32 %v2428, 0.0
  %v2488 = vmax.f32 %v2430, 0.0
  %v2489 = vmax.f32 %v2432, 0.0
  %v2490 = vmax.f32 %v2436, 0.0
  %v2491 = vmax.f32 %v2438, 0.0
  %v2492 = vmax.f32 %v2440, 0.0
  %v2493 = vmax.f32 %v2442, 0.0
  %v2494 = vmax.f32 %v2446, 0.0
  %v2495 = vmax.f32 %v2448, 0.0
  %v2496 = vmax.f32 %v2450, 0.0
  %v2497 = vmax.f32 %v2452, 0.0
  %v2498 = vmax.f32 %v2456, 0.0
  %v2499 = vmax.f32 %v2458, 0.0
  %v2500 = vmax.f32 %v2460, 0.0
  %v2501 = vmax.f32 %v2462, 0.0
  %v2502 = vmax.f32 %v2466, 0.0
  %v2503 = vmax.f32 %v2468, 0.0
  %v2504 = vmax.f32 %v2470, 0.0
  %v2505 = vmax.f32 %v2472, 0.0
  %v2506 = vmax.f32 %v2476, 0.0
  %v2507 = vmax.f32 %v2478, 0.0
  %v2508 = vpack.c.bf16 %v2484, %v2482
  %v2509 = vpack.c.bf16 %v2485, %v2483
  %v2510 = vpack.c.bf16 %v2488, %v2486
  %v2511 = vpack.c.bf16 %v2489, %v2487
  %v2512 = vpack.c.bf16 %v2492, %v2490
  %v2513 = vpack.c.bf16 %v2493, %v2491
  %v2514 = vpack.c.bf16 %v2496, %v2494
  %v2515 = vpack.c.bf16 %v2497, %v2495
  %v2516 = vpack.c.bf16 %v2500, %v2498
  %v2517 = vpack.c.bf16 %v2501, %v2499
  %v2518 = vpack.c.bf16 %v2504, %v2502
  %v2519 = vpack.c.bf16 %v2505, %v2503
  %v2520 = vpack.c.bf16 %v2506, %v2506
  %v2521 = vpack.c.bf16 %v2507, %v2507
  %v2536 = vunpack.c.l.b16 %v2508
  %v2537 = vunpack.c.l.b16 %v2509
  %v2538 = vunpack.c.h.b16 %v2508
  %v2539 = vunpack.c.h.b16 %v2509
  %v2540 = vunpack.c.l.b16 %v2510
  %v2541 = vunpack.c.l.b16 %v2511
  %v2542 = vunpack.c.h.b16 %v2510
  %v2543 = vunpack.c.h.b16 %v2511
  %v2544 = vunpack.c.l.b16 %v2512
  %v2545 = vunpack.c.l.b16 %v2513
  %v2546 = vunpack.c.h.b16 %v2512
  %v2547 = vunpack.c.h.b16 %v2513
  %v2548 = vunpack.c.l.b16 %v2514
  %v2549 = vunpack.c.l.b16 %v2515
  %v2550 = vunpack.c.h.b16 %v2514
  %v2551 = vunpack.c.h.b16 %v2515
  %v2552 = vunpack.c.l.b16 %v2516
  %v2553 = vunpack.c.l.b16 %v2517
  %v2554 = vunpack.c.h.b16 %v2516
  %v2555 = vunpack.c.h.b16 %v2517
  %v2556 = vunpack.c.l.b16 %v2518
  %v2557 = vunpack.c.l.b16 %v2519
  %v2558 = vunpack.c.h.b16 %v2518
  %v2559 = vunpack.c.h.b16 %v2519
  %v2560 = vunpack.c.l.b16 %v2520
  %v2561 = vunpack.c.l.b16 %v2521
  %v2562 = vpack.c.b16 %v2537, %v2536
  %v2563 = vpack.c.b16 %v2539, %v2538
  %v2564 = vpack.c.b16 %v2541, %v2540
  %v2565 = vpack.c.b16 %v2543, %v2542
  %v2566 = vpack.c.b16 %v2545, %v2544
  %v2567 = vpack.c.b16 %v2547, %v2546
  %v2568 = vpack.c.b16 %v2549, %v2548
  %v2569 = vpack.c.b16 %v2551, %v2550
  %v2570 = vpack.c.b16 %v2553, %v2552
  %v2571 = vpack.c.b16 %v2555, %v2554
  %v2572 = vpack.c.b16 %v2557, %v2556
  %v2573 = vpack.c.b16 %v2559, %v2558
  %v2574 = vpack.c.b16 %v2561, %v2560
  %vm2588 = vcmask 1043456
  %vm2589 = vcmask 523268
  %vm2590 = vmor %vm2589, %vm2588
  %2591 = vst.msk [vmem:[%s3] sm:$0xff] %vm2590, %v2562
  %2592 = vst.msk [vmem:[%s3 + $0x8] sm:$0xff] %vm2590, %v2563
  %2593 = vst.msk [vmem:[%s3 + $0x10] sm:$0xff] %vm2590, %v2564
  %2594 = vst.msk [vmem:[%s3 + $0x18] sm:$0xff] %vm2590, %v2565
  %2595 = vst.msk [vmem:[%s3 + $0x20] sm:$0xff] %vm2590, %v2566
  %2596 = vst.msk [vmem:[%s3 + $0x28] sm:$0xff] %vm2590, %v2567
  %2597 = vst.msk [vmem:[%s3 + $0x30] sm:$0xff] %vm2590, %v2568
  %2598 = vst.msk [vmem:[%s3 + $0x38] sm:$0xff] %vm2590, %v2569
  %2599 = vst.msk [vmem:[%s3 + $0x40] sm:$0xff] %vm2590, %v2570
  %2600 = vst.msk [vmem:[%s3 + $0x48] sm:$0xff] %vm2590, %v2571
  %2601 = vst.msk [vmem:[%s3 + $0x50] sm:$0xff] %vm2590, %v2572
  %2602 = vst.msk [vmem:[%s3 + $0x58] sm:$0xff] %vm2590, %v2573
  %vm2603 = vcmask 1040384
  %vm2604 = vcmask 520196
  %vm2605 = vmor %vm2604, %vm2603
  %2606 = vst.msk [vmem:[%s3 + $0x60] sm:$0x11] %vm2605, %v2574
  // Predicated region
  $region14: #{cnn_model_forward.4} parent=0 // pred_check
    _
  $region15: #{cnn_model_forward.4} parent=0 // pred_check_branch
    %2608 = sbr.rel (0) target = $region17
  $region16: #{cnn_model_forward.4} parent=0 // pred_region
    _
  $region17: #{cnn_model_forward.4} parent=0 // pred_fallthru
    _
  // Predicated region
  $region18: #{cnn_model_forward.4} parent=0 // pred_check
    _
  $region19: #{cnn_model_forward.4} parent=0 // pred_check_branch
    %2610 = sbr.rel (0) target = $region21
  $region20: #{cnn_model_forward.4} parent=0 // pred_region
    _
  $region21: #{cnn_model_forward.4} parent=0 // pred_fallthru
    _

// kernel: cnn_model_forward.5
$region0: #{cnn_model_forward.5}
  #allocation0 [shape = 'u32[]', space=smem, size = 0x4, offset = 0x4, fixed_abs, tag = 'smem constant byte address 0x4 - core index']
  #allocation1 [shape = 'u32[144,128]{1,0:T(1,128)}', space=vmem, size = 0x12000, scoped, tag = 'internal scratch']
  #allocation2 [shape = 'f32[2,1024]{1,0:T(2,128)}', space=vmem, size = 0x2000, scoped, tag = 'scratch operand']
  %s0 = inlined_call_operand.vmem [shape: bf16[2,1728], index: 0, kind: input, shape index: {}]
  %s1 = inlined_call_operand.vmem [shape: bf16[1728,2048], index: 1, kind: input, shape index: {}]
  %s2 = inlined_call_operand.vmem [shape: f32[1,2048], index: 2, kind: input, shape index: {}]
  %s3 = inlined_call_operand.vmem [shape: bf16[2048,1024], index: 3, kind: input, shape index: {}]
  %s4 = inlined_call_operand.vmem [shape: f32[1,1024], index: 4, kind: input, shape index: {}]
  %s5 = inlined_call_operand.vmem [shape: bf16[1024,128], index: 5, kind: input, shape index: {}]
  %s6 = inlined_call_operand.vmem [shape: f32[1,128], index: 6, kind: input, shape index: {}]
  %s7 = inlined_call_operand.hbm [shape: f32[2,128], index: 7, kind: output, shape index: {}]
  %s8 = sld [smem:[#allocation0]]
  $region92: #{cnn_model_forward.5} parent=0
    _
  %s10 = ssub.s32 1, %s8
  %s11 = scalar_select 0, %s10, %s8
  $region1: #{cnn_model_forward.5} parent=0
    #allocation3 [shape = 'u8[3538944]{0}', space=vmem, size = 0x360000, scoped, tag = 'input window, operand 1']
    #allocation4 [shape = 'u8[1024]{0}', space=vmem, size = 0x400, scoped, tag = 'output window, operand 0, single buffered']
    #allocation5 [shape = 's32[2]{0}', space=sflag, size = 0x8, scoped, tag = 'scoped memory for cnn_model_forward.5']
    %12 = vsyncpa [#allocation5], 0
    loop: start=0, step=1, limit=6
    $region2: #{cnn_model_forward.5} parent=1 // loop_pre_header
      _
    $region3: #{cnn_model_forward.5} parent=1 // loop_header
      %s14 = sphi 0, %s18
      %p15 = scmp.ge.s32.totalorder %s14, 6
      %s22 = sphi 0, %s22
      %s24 = sphi 0, %s22
      %s25 = sphi 0, %s24
      %s39 = sphi 0, %s25
      %s45 = sphi 0, %s47
      %s48 = sphi 0, %s45
      %s49 = sphi 0, %s48
      %s65 = sphi 0, %s49
      %s71 = sphi 0, %s73
      %s74 = sphi 0, %s71
      %s75 = sphi 0, %s74
      %s91 = sphi 0, %s75
      %s97 = sphi 0, %s99
      %s100 = sphi 0, %s97
      %s101 = sphi 0, %s100
      %s117 = sphi 0, %s101
      %s121 = sphi 0, %s121
      %s123 = sphi 0, %s121
      %s124 = sphi 0, %s123
      %s138 = sphi 0, %s124
      %s142 = sphi 0, %s142
      %s144 = sphi 0, %s142
      %s145 = sphi 0, %s144
      %s159 = sphi 0, %s145
      %s163 = sphi 0, %s163
      %s165 = sphi 0, %s163
      %s166 = sphi 0, %s165
      %s180 = sphi 0, %s166
      %s184 = sphi 0, %s184
      %s186 = sphi 0, %s184
      %s187 = sphi 0, %s186
      %s201 = sphi 0, %s187
    $region4: #{cnn_model_forward.5} parent=1 // loop_header_branch
      %17 = sbr.rel (%p15) target = $region8
    $region5: #{cnn_model_forward.5} parent=1 // loop_body
      %s19 = ssub.s32 %s14, 1
      %s20 = ssub.s32 %s14, 2
      %s21 = sadd.s32 %s14, 1
      %s23 = sadd.s32 %s22, 1
      %p26 = scmp.eq.s32.totalorder %s14, 3
      %p27 = scmp.ne.s32.totalorder %s22, %s24
      %p28 = scmp.eq.s32.totalorder %s14, 0
      %p29 = por %p27, %p28
      %p30 = scmp.ne.s32.totalorder %s22, %s24
      %p31 = scmp.eq.s32.totalorder %s19, 3
      %p32 = por %p30, %p31
      %p33 = scmp.ne.s32.totalorder %s24, %s25
      %p34 = scmp.eq.s32.totalorder %s19, 0
      %p35 = por %p33, %p34
      %p36 = scmp.ne.s32.totalorder %s24, %s25
      %p37 = scmp.eq.s32.totalorder %s20, 3
      %p38 = por %p36, %p37
      %p40 = scmp.ne.s32.totalorder %s25, %s39
      %p41 = scmp.eq.s32.totalorder %s20, 0
      %p42 = por %p40, %p41
      %s43 = ssub.s32 %s14, %s21
      %p44 = scmp.eq.s32.totalorder %s43, 0
      %s46 = sadd.s32 %s45, 1
      %s47 = scalar_select %p44, %s45, %s46
      %p50 = pneg %p44
      %p51 = scmp.eq.s32.totalorder %s14, 3
      %p52 = por %p50, %p51
      %p53 = scmp.ne.s32.totalorder %s45, %s48
      %p54 = scmp.eq.s32.totalorder %s14, 0
      %p55 = por %p53, %p54
      %p56 = scmp.ne.s32.totalorder %s45, %s48
      %p57 = scmp.eq.s32.totalorder %s19, 3
      %p58 = por %p56, %p57
      %p59 = scmp.ne.s32.totalorder %s48, %s49
      %p60 = scmp.eq.s32.totalorder %s19, 0
      %p61 = por %p59, %p60
      %p62 = scmp.ne.s32.totalorder %s48, %s49
      %p63 = scmp.eq.s32.totalorder %s20, 3
      %p64 = por %p62, %p63
      %p66 = scmp.ne.s32.totalorder %s49, %s65
      %p67 = scmp.eq.s32.totalorder %s20, 0
      %p68 = por %p66, %p67
      %s69 = ssub.s32 %s14, %s21
      %p70 = scmp.eq.s32.totalorder %s69, 0
      %s72 = sadd.s32 %s71, 1
      %s73 = scalar_select %p70, %s71, %s72
      %p76 = pneg %p70
      %p77 = scmp.eq.s32.totalorder %s14, 3
      %p78 = por %p76, %p77
      %p79 = scmp.ne.s32.totalorder %s71, %s74
      %p80 = scmp.eq.s32.totalorder %s14, 0
      %p81 = por %p79, %p80
      %p82 = scmp.ne.s32.totalorder %s71, %s74
      %p83 = scmp.eq.s32.totalorder %s19, 3
      %p84 = por %p82, %p83
      %p85 = scmp.ne.s32.totalorder %s74, %s75
      %p86 = scmp.eq.s32.totalorder %s19, 0
      %p87 = por %p85, %p86
      %p88 = scmp.ne.s32.totalorder %s74, %s75
      %p89 = scmp.eq.s32.totalorder %s20, 3
      %p90 = por %p88, %p89
      %p92 = scmp.ne.s32.totalorder %s75, %s91
      %p93 = scmp.eq.s32.totalorder %s20, 0
      %p94 = por %p92, %p93
      %s95 = ssub.s32 %s14, %s21
      %p96 = scmp.eq.s32.totalorder %s95, 0
      %s98 = sadd.s32 %s97, 1
      %s99 = scalar_select %p96, %s97, %s98
      %p102 = pneg %p96
      %p103 = scmp.eq.s32.totalorder %s14, 3
      %p104 = por %p102, %p103
      %p105 = scmp.ne.s32.totalorder %s97, %s100
      %p106 = scmp.eq.s32.totalorder %s14, 0
      %p107 = por %p105, %p106
      %p108 = scmp.ne.s32.totalorder %s97, %s100
      %p109 = scmp.eq.s32.totalorder %s19, 3
      %p110 = por %p108, %p109
      %p111 = scmp.ne.s32.totalorder %s100, %s101
      %p112 = scmp.eq.s32.totalorder %s19, 0
      %p113 = por %p111, %p112
      %p114 = scmp.ne.s32.totalorder %s100, %s101
      %p115 = scmp.eq.s32.totalorder %s20, 3
      %p116 = por %p114, %p115
      %p118 = scmp.ne.s32.totalorder %s101, %s117
      %p119 = scmp.eq.s32.totalorder %s20, 0
      %p120 = por %p118, %p119
      %s122 = sadd.s32 %s121, 1
      %p125 = scmp.eq.s32.totalorder %s14, 3
      %p126 = scmp.ne.s32.totalorder %s121, %s123
      %p127 = scmp.eq.s32.totalorder %s14, 0
      %p128 = por %p126, %p127
      %p129 = scmp.ne.s32.totalorder %s121, %s123
      %p130 = scmp.eq.s32.totalorder %s19, 3
      %p131 = por %p129, %p130
      %p132 = scmp.ne.s32.totalorder %s123, %s124
      %p133 = scmp.eq.s32.totalorder %s19, 0
      %p134 = por %p132, %p133
      %p135 = scmp.ne.s32.totalorder %s123, %s124
      %p136 = scmp.eq.s32.totalorder %s20, 3
      %p137 = por %p135, %p136
      %p139 = scmp.ne.s32.totalorder %s124, %s138
      %p140 = scmp.eq.s32.totalorder %s20, 0
      %p141 = por %p139, %p140
      %s143 = sadd.s32 %s142, 1
      %p146 = scmp.eq.s32.totalorder %s14, 3
      %p147 = scmp.ne.s32.totalorder %s142, %s144
      %p148 = scmp.eq.s32.totalorder %s14, 0
      %p149 = por %p147, %p148
      %p150 = scmp.ne.s32.totalorder %s142, %s144
      %p151 = scmp.eq.s32.totalorder %s19, 3
      %p152 = por %p150, %p151
      %p153 = scmp.ne.s32.totalorder %s144, %s145
      %p154 = scmp.eq.s32.totalorder %s19, 0
      %p155 = por %p153, %p154
      %p156 = scmp.ne.s32.totalorder %s144, %s145
      %p157 = scmp.eq.s32.totalorder %s20, 3
      %p158 = por %p156, %p157
      %p160 = scmp.ne.s32.totalorder %s145, %s159
      %p161 = scmp.eq.s32.totalorder %s20, 0
      %p162 = por %p160, %p161
      %s164 = sadd.s32 %s163, 1
      %p167 = scmp.eq.s32.totalorder %s14, 3
      %p168 = scmp.ne.s32.totalorder %s163, %s165
      %p169 = scmp.eq.s32.totalorder %s14, 0
      %p170 = por %p168, %p169
      %p171 = scmp.ne.s32.totalorder %s163, %s165
      %p172 = scmp.eq.s32.totalorder %s19, 3
      %p173 = por %p171, %p172
      %p174 = scmp.ne.s32.totalorder %s165, %s166
      %p175 = scmp.eq.s32.totalorder %s19, 0
      %p176 = por %p174, %p175
      %p177 = scmp.ne.s32.totalorder %s165, %s166
      %p178 = scmp.eq.s32.totalorder %s20, 3
      %p179 = por %p177, %p178
      %p181 = scmp.ne.s32.totalorder %s166, %s180
      %p182 = scmp.eq.s32.totalorder %s20, 0
      %p183 = por %p181, %p182
      %s185 = sadd.s32 %s184, 1
      %p188 = scmp.eq.s32.totalorder %s14, 3
      %p189 = scmp.ne.s32.totalorder %s184, %s186
      %p190 = scmp.eq.s32.totalorder %s14, 0
      %p191 = por %p189, %p190
      %p192 = scmp.ne.s32.totalorder %s184, %s186
      %p193 = scmp.eq.s32.totalorder %s19, 3
      %p194 = por %p192, %p193
      %p195 = scmp.ne.s32.totalorder %s186, %s187
      %p196 = scmp.eq.s32.totalorder %s19, 0
      %p197 = por %p195, %p196
      %p198 = scmp.ne.s32.totalorder %s186, %s187
      %p199 = scmp.eq.s32.totalorder %s20, 3
      %p200 = por %p198, %p199
      %p202 = scmp.ne.s32.totalorder %s187, %s201
      %p203 = scmp.eq.s32.totalorder %s20, 0
      %p204 = por %p202, %p203
      %p205 = scmp.le.s32.totalorder 1, %s14
      %p206 = scmp.lt.s32.totalorder %s14, 5
      %p207 = pnand %p205, %p206
      %p208 = pneg %p207
      // Predicated region
      $region9: #{cnn_model_forward.5} parent=5 // pred_check
        _
      $region10: #{cnn_model_forward.5} parent=5 // pred_check_branch
        %210 = sbr.rel (%p207) target = $region12
      $region11: #{cnn_model_forward.5} parent=5 // pred_region
        %s211 = ssub.s32 %s14, 1
        // Predicated region
        $region13: #{cnn_model_forward.5} parent=11 // pred_check
          %p212 = pneg %p35
        $region14: #{cnn_model_forward.5} parent=11 // pred_check_branch
          %214 = sbr.rel (%p212) target = $region16
        $region15: #{cnn_model_forward.5} parent=11 // pred_region
          _
        $region16: #{cnn_model_forward.5} parent=11 // pred_fallthru
          _
        // Predicated region
        $region17: #{cnn_model_forward.5} parent=11 // pred_check
          %p215 = pneg %p134
        $region18: #{cnn_model_forward.5} parent=11 // pred_check_branch
          %217 = sbr.rel (%p215) target = $region20
        $region19: #{cnn_model_forward.5} parent=11 // pred_region
          _
        $region20: #{cnn_model_forward.5} parent=11 // pred_fallthru
          _
        // Predicated region
        $region21: #{cnn_model_forward.5} parent=11 // pred_check
          %p218 = pneg %p155
        $region22: #{cnn_model_forward.5} parent=11 // pred_check_branch
          %220 = sbr.rel (%p218) target = $region24
        $region23: #{cnn_model_forward.5} parent=11 // pred_region
          _
        $region24: #{cnn_model_forward.5} parent=11 // pred_fallthru
          _
        // Predicated region
        $region25: #{cnn_model_forward.5} parent=11 // pred_check
          %p221 = pneg %p176
        $region26: #{cnn_model_forward.5} parent=11 // pred_check_branch
          %223 = sbr.rel (%p221) target = $region28
        $region27: #{cnn_model_forward.5} parent=11 // pred_region
          _
        $region28: #{cnn_model_forward.5} parent=11 // pred_fallthru
          _
      $region12: #{cnn_model_forward.5} parent=5 // pred_fallthru
        _
      %p224 = scmp.lt.s32.totalorder %s14, 4
      // Predicated region
      $region29: #{cnn_model_forward.5} parent=5 // pred_check
        %p225 = pneg %p224
      $region30: #{cnn_model_forward.5} parent=5 // pred_check_branch
        %227 = sbr.rel (%p225) target = $region32
      $region31: #{cnn_model_forward.5} parent=5 // pred_region
        // Predicated region
        $region33: #{cnn_model_forward.5} parent=31 // pred_check
          %p228 = pneg %p55
        $region34: #{cnn_model_forward.5} parent=31 // pred_check_branch
          %230 = sbr.rel (%p228) target = $region36
        $region35: #{cnn_model_forward.5} parent=31 // pred_region
          %s231 = sand.u32 %s45, 1
          %s232 = sand.u32 %s45, 1
          %s233 = smul.addr %s232, 3456
          %s234 = scalar_lea.vmem [#allocation3], %s233
          %s235 = smul.u32 4, %s14
          %s236 = smul.addr %s235, 4
          %s237 = scalar_lea.vmem %s1, %s236
          // Predicated region
          $region37: #{cnn_model_forward.5} parent=35 // pred_check
            _
          $region38: #{cnn_model_forward.5} parent=35 // pred_check_branch
            %239 = sbr.rel (0) target = $region40
          $region39: #{cnn_model_forward.5} parent=35 // pred_region
            // Predicated region
            $region41: #{cnn_model_forward.5} parent=39 // pred_check
              _
            $region42: #{cnn_model_forward.5} parent=39 // pred_check_branch
              %241 = sbr.rel (0) target = $region44
            $region43: #{cnn_model_forward.5} parent=39 // pred_region
              loop: start=0, step=1, limit=1
              $region45: #{cnn_model_forward.5} parent=43 // loop_pre_header
                _
              $region46: #{cnn_model_forward.5} parent=43 // loop_header
                %s243 = sphi 0, %s247
                %p244 = scmp.ge.s32.totalorder %s243, 1
                %s248 = sphi %s237, %s237
                %s249 = sphi %s234, %s234
              $region47: #{cnn_model_forward.5} parent=43 // loop_header_branch
                %246 = sbr.rel (%p244) target = $region51
              $region48: #{cnn_model_forward.5} parent=43 // loop_body
                %v250 = vld [vmem:[%s248] sm:$0xff]
                %251 = vst [vmem:[%s249] sm:$0xff] %v250
                %v252 = vld [vmem:[%s248 + $0x8] sm:$0xff]
                %253 = vst [vmem:[%s249 + $0x8] sm:$0xff] %v252
                %v254 = vld [vmem:[%s248 + $0x40] sm:$0xff]
                %255 = vst [vmem:[%s249 + $0x10] sm:$0xff] %v254
                %v256 = vld [vmem:[%s248 + $0x48] sm:$0xff]
                %257 = vst [vmem:[%s249 + $0x18] sm:$0xff] %v256
                %v258 = vld [vmem:[%s248 + $0x80] sm:$0xff]
                %259 = vst [vmem:[%s249 + $0x20] sm:$0xff] %v258
                %v260 = vld [vmem:[%s248 + $0x88] sm:$0xff]
                %261 = vst [vmem:[%s249 + $0x28] sm:$0xff] %v260
                %v262 = vld [vmem:[%s248 + $0xc0] sm:$0xff]
                %263 = vst [vmem:[%s249 + $0x30] sm:$0xff] %v262
                %v264 = vld [vmem:[%s248 + $0xc8] sm:$0xff]
                %265 = vst [vmem:[%s249 + $0x38] sm:$0xff] %v264
                %v266 = vld [vmem:[%s248 + $0x100] sm:$0xff]
                %267 = vst [vmem:[%s249 + $0x40] sm:$0xff] %v266
                %v268 = vld [vmem:[%s248 + $0x108] sm:$0xff]
                %269 = vst [vmem:[%s249 + $0x48] sm:$0xff] %v268
                %v270 = vld [vmem:[%s248 + $0x140] sm:$0xff]
                %271 = vst [vmem:[%s249 + $0x50] sm:$0xff] %v270
                %v272 = vld [vmem:[%s248 + $0x148] sm:$0xff]
                %273 = vst [vmem:[%s249 + $0x58] sm:$0xff] %v272
                %v274 = vld [vmem:[%s248 + $0x180] sm:$0xff]
                %275 = vst [vmem:[%s249 + $0x60] sm:$0xff] %v274
                %v276 = vld [vmem:[%s248 + $0x188] sm:$0xff]
                %277 = vst [vmem:[%s249 + $0x68] sm:$0xff] %v276
                %v278 = vld [vmem:[%s248 + $0x1c0] sm:$0xff]
                %279 = vst [vmem:[%s249 + $0x70] sm:$0xff] %v278
                %v280 = vld [vmem:[%s248 + $0x1c8] sm:$0xff]
                %281 = vst [vmem:[%s249 + $0x78] sm:$0xff] %v280
                %v282 = vld [vmem:[%s248 + $0x200] sm:$0xff]
                %283 = vst [vmem:[%s249 + $0x80] sm:$0xff] %v282
                %v284 = vld [vmem:[%s248 + $0x208] sm:$0xff]
                %285 = vst [vmem:[%s249 + $0x88] sm:$0xff] %v284
                %v286 = vld [vmem:[%s248 + $0x240] sm:$0xff]
                %287 = vst [vmem:[%s249 + $0x90] sm:$0xff] %v286
                %v288 = vld [vmem:[%s248 + $0x248] sm:$0xff]
                %289 = vst [vmem:[%s249 + $0x98] sm:$0xff] %v288
                %v290 = vld [vmem:[%s248 + $0x280] sm:$0xff]
                %291 = vst [vmem:[%s249 + $0xa0] sm:$0xff] %v290
                %v292 = vld [vmem:[%s248 + $0x288] sm:$0xff]
                %293 = vst [vmem:[%s249 + $0xa8] sm:$0xff] %v292
                %v294 = vld [vmem:[%s248 + $0x2c0] sm:$0xff]
                %295 = vst [vmem:[%s249 + $0xb0] sm:$0xff] %v294
                %v296 = vld [vmem:[%s248 + $0x2c8] sm:$0xff]
                %297 = vst [vmem:[%s249 + $0xb8] sm:$0xff] %v296
                %v298 = vld [vmem:[%s248 + $0x300] sm:$0xff]
                %299 = vst [vmem:[%s249 + $0xc0] sm:$0xff] %v298
                %v300 = vld [vmem:[%s248 + $0x308] sm:$0xff]
                %301 = vst [vmem:[%s249 + $0xc8] sm:$0xff] %v300
                %v302 = vld [vmem:[%s248 + $0x340] sm:$0xff]
                %303 = vst [vmem:[%s249 + $0xd0] sm:$0xff] %v302
                %v304 = vld [vmem:[%s248 + $0x348] sm:$0xff]
                %305 = vst [vmem:[%s249 + $0xd8] sm:$0xff] %v304
                %v306 = vld [vmem:[%s248 + $0x380] sm:$0xff]
                %307 = vst [vmem:[%s249 + $0xe0] sm:$0xff] %v306
                %v308 = vld [vmem:[%s248 + $0x388] sm:$0xff]
                %309 = vst [vmem:[%s249 + $0xe8] sm:$0xff] %v308
                %v310 = vld [vmem:[%s248 + $0x3c0] sm:$0xff]
                %311 = vst [vmem:[%s249 + $0xf0] sm:$0xff] %v310
                %v312 = vld [vmem:[%s248 + $0x3c8] sm:$0xff]
                %313 = vst [vmem:[%s249 + $0xf8] sm:$0xff] %v312
                %v314 = vld [vmem:[%s248 + $0x400] sm:$0xff]
                %315 = vst [vmem:[%s249 + $0x100] sm:$0xff] %v314
                %v316 = vld [vmem:[%s248 + $0x408] sm:$0xff]
                %317 = vst [vmem:[%s249 + $0x108] sm:$0xff] %v316
                %v318 = vld [vmem:[%s248 + $0x440] sm:$0xff]
                %319 = vst [vmem:[%s249 + $0x110] sm:$0xff] %v318
                %v320 = vld [vmem:[%s248 + $0x448] sm:$0xff]
                %321 = vst [vmem:[%s249 + $0x118] sm:$0xff] %v320
                %v322 = vld [vmem:[%s248 + $0x480] sm:$0xff]
                %323 = vst [vmem:[%s249 + $0x120] sm:$0xff] %v322
                %v324 = vld [vmem:[%s248 + $0x488] sm:$0xff]
                %325 = vst [vmem:[%s249 + $0x128] sm:$0xff] %v324
                %v326 = vld [vmem:[%s248 + $0x4c0] sm:$0xff]
                %327 = vst [vmem:[%s249 + $0x130] sm:$0xff] %v326
                %v328 = vld [vmem:[%s248 + $0x4c8] sm:$0xff]
                %329 = vst [vmem:[%s249 + $0x138] sm:$0xff] %v328
                %v330 = vld [vmem:[%s248 + $0x500] sm:$0xff]
                %331 = vst [vmem:[%s249 + $0x140] sm:$0xff] %v330
                %v332 = vld [vmem:[%s248 + $0x508] sm:$0xff]
                %333 = vst [vmem:[%s249 + $0x148] sm:$0xff] %v332
                %v334 = vld [vmem:[%s248 + $0x540] sm:$0xff]
                %335 = vst [vmem:[%s249 + $0x150] sm:$0xff] %v334
                %v336 = vld [vmem:[%s248 + $0x548] sm:$0xff]
                %337 = vst [vmem:[%s249 + $0x158] sm:$0xff] %v336
                %v338 = vld [vmem:[%s248 + $0x580] sm:$0xff]
                %339 = vst [vmem:[%s249 + $0x160] sm:$0xff] %v338
                %v340 = vld [vmem:[%s248 + $0x588] sm:$0xff]
                %341 = vst [vmem:[%s249 + $0x168] sm:$0xff] %v340
                %v342 = vld [vmem:[%s248 + $0x5c0] sm:$0xff]
                %343 = vst [vmem:[%s249 + $0x170] sm:$0xff] %v342
                %v344 = vld [vmem:[%s248 + $0x5c8] sm:$0xff]
                %345 = vst [vmem:[%s249 + $0x178] sm:$0xff] %v344
                %v346 = vld [vmem:[%s248 + $0x600] sm:$0xff]
                %347 = vst [vmem:[%s249 + $0x180] sm:$0xff] %v346
                %v348 = vld [vmem:[%s248 + $0x608] sm:$0xff]
                %349 = vst [vmem:[%s249 + $0x188] sm:$0xff] %v348
                %v350 = vld [vmem:[%s248 + $0x640] sm:$0xff]
                %351 = vst [vmem:[%s249 + $0x190] sm:$0xff] %v350
                %v352 = vld [vmem:[%s248 + $0x648] sm:$0xff]
                %353 = vst [vmem:[%s249 + $0x198] sm:$0xff] %v352
                %v354 = vld [vmem:[%s248 + $0x680] sm:$0xff]
                %355 = vst [vmem:[%s249 + $0x1a0] sm:$0xff] %v354
                %v356 = vld [vmem:[%s248 + $0x688] sm:$0xff]
                %357 = vst [vmem:[%s249 + $0x1a8] sm:$0xff] %v356
                %v358 = vld [vmem:[%s248 + $0x6c0] sm:$0xff]
                %359 = vst [vmem:[%s249 + $0x1b0] sm:$0xff] %v358
                %v360 = vld [vmem:[%s248 + $0x6c8] sm:$0xff]
                %361 = vst [vmem:[%s249 + $0x1b8] sm:$0xff] %v360
                %v362 = vld [vmem:[%s248 + $0x700] sm:$0xff]
                %363 = vst [vmem:[%s249 + $0x1c0] sm:$0xff] %v362
                %v364 = vld [vmem:[%s248 + $0x708] sm:$0xff]
                %365 = vst [vmem:[%s249 + $0x1c8] sm:$0xff] %v364
                %v366 = vld [vmem:[%s248 + $0x740] sm:$0xff]
                %367 = vst [vmem:[%s249 + $0x1d0] sm:$0xff] %v366
                %v368 = vld [vmem:[%s248 + $0x748] sm:$0xff]
                %369 = vst [vmem:[%s249 + $0x1d8] sm:$0xff] %v368
                %v370 = vld [vmem:[%s248 + $0x780] sm:$0xff]
                %371 = vst [vmem:[%s249 + $0x1e0] sm:$0xff] %v370
                %v372 = vld [vmem:[%s248 + $0x788] sm:$0xff]
                %373 = vst [vmem:[%s249 + $0x1e8] sm:$0xff] %v372
                %v374 = vld [vmem:[%s248 + $0x7c0] sm:$0xff]
                %375 = vst [vmem:[%s249 + $0x1f0] sm:$0xff] %v374
                %v376 = vld [vmem:[%s248 + $0x7c8] sm:$0xff]
                %377 = vst [vmem:[%s249 + $0x1f8] sm:$0xff] %v376
                %v378 = vld [vmem:[%s248 + $0x800] sm:$0xff]
                %379 = vst [vmem:[%s249 + $0x200] sm:$0xff] %v378
                %v380 = vld [vmem:[%s248 + $0x808] sm:$0xff]
                %381 = vst [vmem:[%s249 + $0x208] sm:$0xff] %v380
                %v382 = vld [vmem:[%s248 + $0x840] sm:$0xff]
                %383 = vst [vmem:[%s249 + $0x210] sm:$0xff] %v382
                %v384 = vld [vmem:[%s248 + $0x848] sm:$0xff]
                %385 = vst [vmem:[%s249 + $0x218] sm:$0xff] %v384
                %v386 = vld [vmem:[%s248 + $0x880] sm:$0xff]
                %387 = vst [vmem:[%s249 + $0x220] sm:$0xff] %v386
                %v388 = vld [vmem:[%s248 + $0x888] sm:$0xff]
                %389 = vst [vmem:[%s249 + $0x228] sm:$0xff] %v388
                %v390 = vld [vmem:[%s248 + $0x8c0] sm:$0xff]
                %391 = vst [vmem:[%s249 + $0x230] sm:$0xff] %v390
                %v392 = vld [vmem:[%s248 + $0x8c8] sm:$0xff]
                %393 = vst [vmem:[%s249 + $0x238] sm:$0xff] %v392
                %v394 = vld [vmem:[%s248 + $0x900] sm:$0xff]
                %395 = vst [vmem:[%s249 + $0x240] sm:$0xff] %v394
                %v396 = vld [vmem:[%s248 + $0x908] sm:$0xff]
                %397 = vst [vmem:[%s249 + $0x248] sm:$0xff] %v396
                %v398 = vld [vmem:[%s248 + $0x940] sm:$0xff]
                %399 = vst [vmem:[%s249 + $0x250] sm:$0xff] %v398
                %v400 = vld [vmem:[%s248 + $0x948] sm:$0xff]
                %401 = vst [vmem:[%s249 + $0x258] sm:$0xff] %v400
                %v402 = vld [vmem:[%s248 + $0x980] sm:$0xff]
                %403 = vst [vmem:[%s249 + $0x260] sm:$0xff] %v402
                %v404 = vld [vmem:[%s248 + $0x988] sm:$0xff]
                %405 = vst [vmem:[%s249 + $0x268] sm:$0xff] %v404
                %v406 = vld [vmem:[%s248 + $0x9c0] sm:$0xff]
                %407 = vst [vmem:[%s249 + $0x270] sm:$0xff] %v406
                %v408 = vld [vmem:[%s248 + $0x9c8] sm:$0xff]
                %409 = vst [vmem:[%s249 + $0x278] sm:$0xff] %v408
                %v410 = vld [vmem:[%s248 + $0xa00] sm:$0xff]
                %411 = vst [vmem:[%s249 + $0x280] sm:$0xff] %v410
                %v412 = vld [vmem:[%s248 + $0xa08] sm:$0xff]
                %413 = vst [vmem:[%s249 + $0x288] sm:$0xff] %v412
                %v414 = vld [vmem:[%s248 + $0xa40] sm:$0xff]
                %415 = vst [vmem:[%s249 + $0x290] sm:$0xff] %v414
                %v416 = vld [vmem:[%s248 + $0xa48] sm:$0xff]
                %417 = vst [vmem:[%s249 + $0x298] sm:$0xff] %v416
                %v418 = vld [vmem:[%s248 + $0xa80] sm:$0xff]
                %419 = vst [vmem:[%s249 + $0x2a0] sm:$0xff] %v418
                %v420 = vld [vmem:[%s248 + $0xa88] sm:$0xff]
                %421 = vst [vmem:[%s249 + $0x2a8] sm:$0xff] %v420
                %v422 = vld [vmem:[%s248 + $0xac0] sm:$0xff]
                %423 = vst [vmem:[%s249 + $0x2b0] sm:$0xff] %v422
                %v424 = vld [vmem:[%s248 + $0xac8] sm:$0xff]
                %425 = vst [vmem:[%s249 + $0x2b8] sm:$0xff] %v424
                %v426 = vld [vmem:[%s248 + $0xb00] sm:$0xff]
                %427 = vst [vmem:[%s249 + $0x2c0] sm:$0xff] %v426
                %v428 = vld [vmem:[%s248 + $0xb08] sm:$0xff]
                %429 = vst [vmem:[%s249 + $0x2c8] sm:$0xff] %v428
                %v430 = vld [vmem:[%s248 + $0xb40] sm:$0xff]
                %431 = vst [vmem:[%s249 + $0x2d0] sm:$0xff] %v430
                %v432 = vld [vmem:[%s248 + $0xb48] sm:$0xff]
                %433 = vst [vmem:[%s249 + $0x2d8] sm:$0xff] %v432
                %v434 = vld [vmem:[%s248 + $0xb80] sm:$0xff]
                %435 = vst [vmem:[%s249 + $0x2e0] sm:$0xff] %v434
                %v436 = vld [vmem:[%s248 + $0xb88] sm:$0xff]
                %437 = vst [vmem:[%s249 + $0x2e8] sm:$0xff] %v436
                %v438 = vld [vmem:[%s248 + $0xbc0] sm:$0xff]
                %439 = vst [vmem:[%s249 + $0x2f0] sm:$0xff] %v438
                %v440 = vld [vmem:[%s248 + $0xbc8] sm:$0xff]
                %441 = vst [vmem:[%s249 + $0x2f8] sm:$0xff] %v440
                %v442 = vld [vmem:[%s248 + $0xc00] sm:$0xff]
                %443 = vst [vmem:[%s249 + $0x300] sm:$0xff] %v442
                %v444 = vld [vmem:[%s248 + $0xc08] sm:$0xff]
                %445 = vst [vmem:[%s249 + $0x308] sm:$0xff] %v444
                %v446 = vld [vmem:[%s248 + $0xc40] sm:$0xff]
                %447 = vst [vmem:[%s249 + $0x310] sm:$0xff] %v446
                %v448 = vld [vmem:[%s248 + $0xc48] sm:$0xff]
                %449 = vst [vmem:[%s249 + $0x318] sm:$0xff] %v448
                %v450 = vld [vmem:[%s248 + $0xc80] sm:$0xff]
                %451 = vst [vmem:[%s249 + $0x320] sm:$0xff] %v450
                %v452 = vld [vmem:[%s248 + $0xc88] sm:$0xff]
                %453 = vst [vmem:[%s249 + $0x328] sm:$0xff] %v452
                %v454 = vld [vmem:[%s248 + $0xcc0] sm:$0xff]
                %455 = vst [vmem:[%s249 + $0x330] sm:$0xff] %v454
                %v456 = vld [vmem:[%s248 + $0xcc8] sm:$0xff]
                %457 = vst [vmem:[%s249 + $0x338] sm:$0xff] %v456
                %v458 = vld [vmem:[%s248 + $0xd00] sm:$0xff]
                %459 = vst [vmem:[%s249 + $0x340] sm:$0xff] %v458
                %v460 = vld [vmem:[%s248 + $0xd08] sm:$0xff]
                %461 = vst [vmem:[%s249 + $0x348] sm:$0xff] %v460
                %v462 = vld [vmem:[%s248 + $0xd40] sm:$0xff]
                %463 = vst [vmem:[%s249 + $0x350] sm:$0xff] %v462
                %v464 = vld [vmem:[%s248 + $0xd48] sm:$0xff]
                %465 = vst [vmem:[%s249 + $0x358] sm:$0xff] %v464
                %v466 = vld [vmem:[%s248 + $0xd80] sm:$0xff]
                %467 = vst [vmem:[%s249 + $0x360] sm:$0xff] %v466
                %v468 = vld [vmem:[%s248 + $0xd88] sm:$0xff]
                %469 = vst [vmem:[%s249 + $0x368] sm:$0xff] %v468
                %v470 = vld [vmem:[%s248 + $0xdc0] sm:$0xff]
                %471 = vst [vmem:[%s249 + $0x370] sm:$0xff] %v470
                %v472 = vld [vmem:[%s248 + $0xdc8] sm:$0xff]
                %473 = vst [vmem:[%s249 + $0x378] sm:$0xff] %v472
                %v474 = vld [vmem:[%s248 + $0xe00] sm:$0xff]
                %475 = vst [vmem:[%s249 + $0x380] sm:$0xff] %v474
                %v476 = vld [vmem:[%s248 + $0xe08] sm:$0xff]
                %477 = vst [vmem:[%s249 + $0x388] sm:$0xff] %v476
                %v478 = vld [vmem:[%s248 + $0xe40] sm:$0xff]
                %479 = vst [vmem:[%s249 + $0x390] sm:$0xff] %v478
                %v480 = vld [vmem:[%s248 + $0xe48] sm:$0xff]
                %481 = vst [vmem:[%s249 + $0x398] sm:$0xff] %v480
                %v482 = vld [vmem:[%s248 + $0xe80] sm:$0xff]
                %483 = vst [vmem:[%s249 + $0x3a0] sm:$0xff] %v482
                %v484 = vld [vmem:[%s248 + $0xe88] sm:$0xff]
                %485 = vst [vmem:[%s249 + $0x3a8] sm:$0xff] %v484
                %v486 = vld [vmem:[%s248 + $0xec0] sm:$0xff]
                %487 = vst [vmem:[%s249 + $0x3b0] sm:$0xff] %v486
                %v488 = vld [vmem:[%s248 + $0xec8] sm:$0xff]
                %489 = vst [vmem:[%s249 + $0x3b8] sm:$0xff] %v488
                %v490 = vld [vmem:[%s248 + $0xf00] sm:$0xff]
                %491 = vst [vmem:[%s249 + $0x3c0] sm:$0xff] %v490
                %v492 = vld [vmem:[%s248 + $0xf08] sm:$0xff]
                %493 = vst [vmem:[%s249 + $0x3c8] sm:$0xff] %v492
                %v494 = vld [vmem:[%s248 + $0xf40] sm:$0xff]
                %495 = vst [vmem:[%s249 + $0x3d0] sm:$0xff] %v494
                %v496 = vld [vmem:[%s248 + $0xf48] sm:$0xff]
                %497 = vst [vmem:[%s249 + $0x3d8] sm:$0xff] %v496
                %v498 = vld [vmem:[%s248 + $0xf80] sm:$0xff]
                %499 = vst [vmem:[%s249 + $0x3e0] sm:$0xff] %v498
                %v500 = vld [vmem:[%s248 + $0xf88] sm:$0xff]
                %501 = vst [vmem:[%s249 + $0x3e8] sm:$0xff] %v500
                %v502 = vld [vmem:[%s248 + $0xfc0] sm:$0xff]
                %503 = vst [vmem:[%s249 + $0x3f0] sm:$0xff] %v502
                %v504 = vld [vmem:[%s248 + $0xfc8] sm:$0xff]
                %505 = vst [vmem:[%s249 + $0x3f8] sm:$0xff] %v504
                %v506 = vld [vmem:[%s248 + $0x1000] sm:$0xff]
                %507 = vst [vmem:[%s249 + $0x400] sm:$0xff] %v506
                %v508 = vld [vmem:[%s248 + $0x1008] sm:$0xff]
                %509 = vst [vmem:[%s249 + $0x408] sm:$0xff] %v508
                %v510 = vld [vmem:[%s248 + $0x1040] sm:$0xff]
                %511 = vst [vmem:[%s249 + $0x410] sm:$0xff] %v510
                %v512 = vld [vmem:[%s248 + $0x1048] sm:$0xff]
                %513 = vst [vmem:[%s249 + $0x418] sm:$0xff] %v512
                %v514 = vld [vmem:[%s248 + $0x1080] sm:$0xff]
                %515 = vst [vmem:[%s249 + $0x420] sm:$0xff] %v514
                %v516 = vld [vmem:[%s248 + $0x1088] sm:$0xff]
                %517 = vst [vmem:[%s249 + $0x428] sm:$0xff] %v516
                %v518 = vld [vmem:[%s248 + $0x10c0] sm:$0xff]
                %519 = vst [vmem:[%s249 + $0x430] sm:$0xff] %v518
                %v520 = vld [vmem:[%s248 + $0x10c8] sm:$0xff]
                %521 = vst [vmem:[%s249 + $0x438] sm:$0xff] %v520
                %v522 = vld [vmem:[%s248 + $0x1100] sm:$0xff]
                %523 = vst [vmem:[%s249 + $0x440] sm:$0xff] %v522
                %v524 = vld [vmem:[%s248 + $0x1108] sm:$0xff]
                %525 = vst [vmem:[%s249 + $0x448] sm:$0xff] %v524
                %v526 = vld [vmem:[%s248 + $0x1140] sm:$0xff]
                %527 = vst [vmem:[%s249 + $0x450] sm:$0xff] %v526
                %v528 = vld [vmem:[%s248 + $0x1148] sm:$0xff]
                %529 = vst [vmem:[%s249 + $0x458] sm:$0xff] %v528
                %v530 = vld [vmem:[%s248 + $0x1180] sm:$0xff]
                %531 = vst [vmem:[%s249 + $0x460] sm:$0xff] %v530
                %v532 = vld [vmem:[%s248 + $0x1188] sm:$0xff]
                %533 = vst [vmem:[%s249 + $0x468] sm:$0xff] %v532
                %v534 = vld [vmem:[%s248 + $0x11c0] sm:$0xff]
                %535 = vst [vmem:[%s249 + $0x470] sm:$0xff] %v534
                %v536 = vld [vmem:[%s248 + $0x11c8] sm:$0xff]
                %537 = vst [vmem:[%s249 + $0x478] sm:$0xff] %v536
                %v538 = vld [vmem:[%s248 + $0x1200] sm:$0xff]
                %539 = vst [vmem:[%s249 + $0x480] sm:$0xff] %v538
                %v540 = vld [vmem:[%s248 + $0x1208] sm:$0xff]
                %541 = vst [vmem:[%s249 + $0x488] sm:$0xff] %v540
                %v542 = vld [vmem:[%s248 + $0x1240] sm:$0xff]
                %543 = vst [vmem:[%s249 + $0x490] sm:$0xff] %v542
                %v544 = vld [vmem:[%s248 + $0x1248] sm:$0xff]
                %545 = vst [vmem:[%s249 + $0x498] sm:$0xff] %v544
                %v546 = vld [vmem:[%s248 + $0x1280] sm:$0xff]
                %547 = vst [vmem:[%s249 + $0x4a0] sm:$0xff] %v546
                %v548 = vld [vmem:[%s248 + $0x1288] sm:$0xff]
                %549 = vst [vmem:[%s249 + $0x4a8] sm:$0xff] %v548
                %v550 = vld [vmem:[%s248 + $0x12c0] sm:$0xff]
                %551 = vst [vmem:[%s249 + $0x4b0] sm:$0xff] %v550
                %v552 = vld [vmem:[%s248 + $0x12c8] sm:$0xff]
                %553 = vst [vmem:[%s249 + $0x4b8] sm:$0xff] %v552
                %v554 = vld [vmem:[%s248 + $0x1300] sm:$0xff]
                %555 = vst [vmem:[%s249 + $0x4c0] sm:$0xff] %v554
                %v556 = vld [vmem:[%s248 + $0x1308] sm:$0xff]
                %557 = vst [vmem:[%s249 + $0x4c8] sm:$0xff] %v556
                %v558 = vld [vmem:[%s248 + $0x1340] sm:$0xff]
                %559 = vst [vmem:[%s249 + $0x4d0] sm:$0xff] %v558
                %v560 = vld [vmem:[%s248 + $0x1348] sm:$0xff]
                %561 = vst [vmem:[%s249 + $0x4d8] sm:$0xff] %v560
                %v562 = vld [vmem:[%s248 + $0x1380] sm:$0xff]
                %563 = vst [vmem:[%s249 + $0x4e0] sm:$0xff] %v562
                %v564 = vld [vmem:[%s248 + $0x1388] sm:$0xff]
                %565 = vst [vmem:[%s249 + $0x4e8] sm:$0xff] %v564
                %v566 = vld [vmem:[%s248 + $0x13c0] sm:$0xff]
                %567 = vst [vmem:[%s249 + $0x4f0] sm:$0xff] %v566
                %v568 = vld [vmem:[%s248 + $0x13c8] sm:$0xff]
                %569 = vst [vmem:[%s249 + $0x4f8] sm:$0xff] %v568
                %v570 = vld [vmem:[%s248 + $0x1400] sm:$0xff]
                %571 = vst [vmem:[%s249 + $0x500] sm:$0xff] %v570
                %v572 = vld [vmem:[%s248 + $0x1408] sm:$0xff]
                %573 = vst [vmem:[%s249 + $0x508] sm:$0xff] %v572
                %v574 = vld [vmem:[%s248 + $0x1440] sm:$0xff]
                %575 = vst [vmem:[%s249 + $0x510] sm:$0xff] %v574
                %v576 = vld [vmem:[%s248 + $0x1448] sm:$0xff]
                %577 = vst [vmem:[%s249 + $0x518] sm:$0xff] %v576
                %v578 = vld [vmem:[%s248 + $0x1480] sm:$0xff]
                %579 = vst [vmem:[%s249 + $0x520] sm:$0xff] %v578
                %v580 = vld [vmem:[%s248 + $0x1488] sm:$0xff]
                %581 = vst [vmem:[%s249 + $0x528] sm:$0xff] %v580
                %v582 = vld [vmem:[%s248 + $0x14c0] sm:$0xff]
                %583 = vst [vmem:[%s249 + $0x530] sm:$0xff] %v582
                %v584 = vld [vmem:[%s248 + $0x14c8] sm:$0xff]
                %585 = vst [vmem:[%s249 + $0x538] sm:$0xff] %v584
                %v586 = vld [vmem:[%s248 + $0x1500] sm:$0xff]
                %587 = vst [vmem:[%s249 + $0x540] sm:$0xff] %v586
                %v588 = vld [vmem:[%s248 + $0x1508] sm:$0xff]
                %589 = vst [vmem:[%s249 + $0x548] sm:$0xff] %v588
                %v590 = vld [vmem:[%s248 + $0x1540] sm:$0xff]
                %591 = vst [vmem:[%s249 + $0x550] sm:$0xff] %v590
                %v592 = vld [vmem:[%s248 + $0x1548] sm:$0xff]
                %593 = vst [vmem:[%s249 + $0x558] sm:$0xff] %v592
                %v594 = vld [vmem:[%s248 + $0x1580] sm:$0xff]
                %595 = vst [vmem:[%s249 + $0x560] sm:$0xff] %v594
                %v596 = vld [vmem:[%s248 + $0x1588] sm:$0xff]
                %597 = vst [vmem:[%s249 + $0x568] sm:$0xff] %v596
                %v598 = vld [vmem:[%s248 + $0x15c0] sm:$0xff]
                %599 = vst [vmem:[%s249 + $0x570] sm:$0xff] %v598
                %v600 = vld [vmem:[%s248 + $0x15c8] sm:$0xff]
                %601 = vst [vmem:[%s249 + $0x578] sm:$0xff] %v600
                %v602 = vld [vmem:[%s248 + $0x1600] sm:$0xff]
                %603 = vst [vmem:[%s249 + $0x580] sm:$0xff] %v602
                %v604 = vld [vmem:[%s248 + $0x1608] sm:$0xff]
                %605 = vst [vmem:[%s249 + $0x588] sm:$0xff] %v604
                %v606 = vld [vmem:[%s248 + $0x1640] sm:$0xff]
                %607 = vst [vmem:[%s249 + $0x590] sm:$0xff] %v606
                %v608 = vld [vmem:[%s248 + $0x1648] sm:$0xff]
                %609 = vst [vmem:[%s249 + $0x598] sm:$0xff] %v608
                %v610 = vld [vmem:[%s248 + $0x1680] sm:$0xff]
                %611 = vst [vmem:[%s249 + $0x5a0] sm:$0xff] %v610
                %v612 = vld [vmem:[%s248 + $0x1688] sm:$0xff]
                %613 = vst [vmem:[%s249 + $0x5a8] sm:$0xff] %v612
                %v614 = vld [vmem:[%s248 + $0x16c0] sm:$0xff]
                %615 = vst [vmem:[%s249 + $0x5b0] sm:$0xff] %v614
                %v616 = vld [vmem:[%s248 + $0x16c8] sm:$0xff]
                %617 = vst [vmem:[%s249 + $0x5b8] sm:$0xff] %v616
                %v618 = vld [vmem:[%s248 + $0x1700] sm:$0xff]
                %619 = vst [vmem:[%s249 + $0x5c0] sm:$0xff] %v618
                %v620 = vld [vmem:[%s248 + $0x1708] sm:$0xff]
                %621 = vst [vmem:[%s249 + $0x5c8] sm:$0xff] %v620
                %v622 = vld [vmem:[%s248 + $0x1740] sm:$0xff]
                %623 = vst [vmem:[%s249 + $0x5d0] sm:$0xff] %v622
                %v624 = vld [vmem:[%s248 + $0x1748] sm:$0xff]
                %625 = vst [vmem:[%s249 + $0x5d8] sm:$0xff] %v624
                %v626 = vld [vmem:[%s248 + $0x1780] sm:$0xff]
                %627 = vst [vmem:[%s249 + $0x5e0] sm:$0xff] %v626
                %v628 = vld [vmem:[%s248 + $0x1788] sm:$0xff]
                %629 = vst [vmem:[%s249 + $0x5e8] sm:$0xff] %v628
                %v630 = vld [vmem:[%s248 + $0x17c0] sm:$0xff]
                %631 = vst [vmem:[%s249 + $0x5f0] sm:$0xff] %v630
                %v632 = vld [vmem:[%s248 + $0x17c8] sm:$0xff]
                %633 = vst [vmem:[%s249 + $0x5f8] sm:$0xff] %v632
                %v634 = vld [vmem:[%s248 + $0x1800] sm:$0xff]
                %635 = vst [vmem:[%s249 + $0x600] sm:$0xff] %v634
                %v636 = vld [vmem:[%s248 + $0x1808] sm:$0xff]
                %637 = vst [vmem:[%s249 + $0x608] sm:$0xff] %v636
                %v638 = vld [vmem:[%s248 + $0x1840] sm:$0xff]
                %639 = vst [vmem:[%s249 + $0x610] sm:$0xff] %v638
                %v640 = vld [vmem:[%s248 + $0x1848] sm:$0xff]
                %641 = vst [vmem:[%s249 + $0x618] sm:$0xff] %v640
                %v642 = vld [vmem:[%s248 + $0x1880] sm:$0xff]
                %643 = vst [vmem:[%s249 + $0x620] sm:$0xff] %v642
                %v644 = vld [vmem:[%s248 + $0x1888] sm:$0xff]
                %645 = vst [vmem:[%s249 + $0x628] sm:$0xff] %v644
                %v646 = vld [vmem:[%s248 + $0x18c0] sm:$0xff]
                %647 = vst [vmem:[%s249 + $0x630] sm:$0xff] %v646
                %v648 = vld [vmem:[%s248 + $0x18c8] sm:$0xff]
                %649 = vst [vmem:[%s249 + $0x638] sm:$0xff] %v648
                %v650 = vld [vmem:[%s248 + $0x1900] sm:$0xff]
                %651 = vst [vmem:[%s249 + $0x640] sm:$0xff] %v650
                %v652 = vld [vmem:[%s248 + $0x1908] sm:$0xff]
                %653 = vst [vmem:[%s249 + $0x648] sm:$0xff] %v652
                %v654 = vld [vmem:[%s248 + $0x1940] sm:$0xff]
                %655 = vst [vmem:[%s249 + $0x650] sm:$0xff] %v654
                %v656 = vld [vmem:[%s248 + $0x1948] sm:$0xff]
                %657 = vst [vmem:[%s249 + $0x658] sm:$0xff] %v656
                %v658 = vld [vmem:[%s248 + $0x1980] sm:$0xff]
                %659 = vst [vmem:[%s249 + $0x660] sm:$0xff] %v658
                %v660 = vld [vmem:[%s248 + $0x1988] sm:$0xff]
                %661 = vst [vmem:[%s249 + $0x668] sm:$0xff] %v660
                %v662 = vld [vmem:[%s248 + $0x19c0] sm:$0xff]
                %663 = vst [vmem:[%s249 + $0x670] sm:$0xff] %v662
                %v664 = vld [vmem:[%s248 + $0x19c8] sm:$0xff]
                %665 = vst [vmem:[%s249 + $0x678] sm:$0xff] %v664
                %v666 = vld [vmem:[%s248 + $0x1a00] sm:$0xff]
                %667 = vst [vmem:[%s249 + $0x680] sm:$0xff] %v666
                %v668 = vld [vmem:[%s248 + $0x1a08] sm:$0xff]
                %669 = vst [vmem:[%s249 + $0x688] sm:$0xff] %v668
                %v670 = vld [vmem:[%s248 + $0x1a40] sm:$0xff]
                %671 = vst [vmem:[%s249 + $0x690] sm:$0xff] %v670
                %v672 = vld [vmem:[%s248 + $0x1a48] sm:$0xff]
                %673 = vst [vmem:[%s249 + $0x698] sm:$0xff] %v672
                %v674 = vld [vmem:[%s248 + $0x1a80] sm:$0xff]
                %675 = vst [vmem:[%s249 + $0x6a0] sm:$0xff] %v674
                %v676 = vld [vmem:[%s248 + $0x1a88] sm:$0xff]
                %677 = vst [vmem:[%s249 + $0x6a8] sm:$0xff] %v676
                %v678 = vld [vmem:[%s248 + $0x1ac0] sm:$0xff]
                %679 = vst [vmem:[%s249 + $0x6b0] sm:$0xff] %v678
                %v680 = vld [vmem:[%s248 + $0x1ac8] sm:$0xff]
                %681 = vst [vmem:[%s249 + $0x6b8] sm:$0xff] %v680
                %v682 = vld [vmem:[%s248 + $0x1b00] sm:$0xff]
                %683 = vst [vmem:[%s249 + $0x6c0] sm:$0xff] %v682
                %v684 = vld [vmem:[%s248 + $0x1b08] sm:$0xff]
                %685 = vst [vmem:[%s249 + $0x6c8] sm:$0xff] %v684
                %v686 = vld [vmem:[%s248 + $0x1b40] sm:$0xff]
                %687 = vst [vmem:[%s249 + $0x6d0] sm:$0xff] %v686
                %v688 = vld [vmem:[%s248 + $0x1b48] sm:$0xff]
                %689 = vst [vmem:[%s249 + $0x6d8] sm:$0xff] %v688
                %v690 = vld [vmem:[%s248 + $0x1b80] sm:$0xff]
                %691 = vst [vmem:[%s249 + $0x6e0] sm:$0xff] %v690
                %v692 = vld [vmem:[%s248 + $0x1b88] sm:$0xff]
                %693 = vst [vmem:[%s249 + $0x6e8] sm:$0xff] %v692
                %v694 = vld [vmem:[%s248 + $0x1bc0] sm:$0xff]
                %695 = vst [vmem:[%s249 + $0x6f0] sm:$0xff] %v694
                %v696 = vld [vmem:[%s248 + $0x1bc8] sm:$0xff]
                %697 = vst [vmem:[%s249 + $0x6f8] sm:$0xff] %v696
                %v698 = vld [vmem:[%s248 + $0x1c00] sm:$0xff]
                %699 = vst [vmem:[%s249 + $0x700] sm:$0xff] %v698
                %v700 = vld [vmem:[%s248 + $0x1c08] sm:$0xff]
                %701 = vst [vmem:[%s249 + $0x708] sm:$0xff] %v700
                %v702 = vld [vmem:[%s248 + $0x1c40] sm:$0xff]
                %703 = vst [vmem:[%s249 + $0x710] sm:$0xff] %v702
                %v704 = vld [vmem:[%s248 + $0x1c48] sm:$0xff]
                %705 = vst [vmem:[%s249 + $0x718] sm:$0xff] %v704
                %v706 = vld [vmem:[%s248 + $0x1c80] sm:$0xff]
                %707 = vst [vmem:[%s249 + $0x720] sm:$0xff] %v706
                %v708 = vld [vmem:[%s248 + $0x1c88] sm:$0xff]
                %709 = vst [vmem:[%s249 + $0x728] sm:$0xff] %v708
                %v710 = vld [vmem:[%s248 + $0x1cc0] sm:$0xff]
                %711 = vst [vmem:[%s249 + $0x730] sm:$0xff] %v710
                %v712 = vld [vmem:[%s248 + $0x1cc8] sm:$0xff]
                %713 = vst [vmem:[%s249 + $0x738] sm:$0xff] %v712
                %v714 = vld [vmem:[%s248 + $0x1d00] sm:$0xff]
                %715 = vst [vmem:[%s249 + $0x740] sm:$0xff] %v714
                %v716 = vld [vmem:[%s248 + $0x1d08] sm:$0xff]
                %717 = vst [vmem:[%s249 + $0x748] sm:$0xff] %v716
                %v718 = vld [vmem:[%s248 + $0x1d40] sm:$0xff]
                %719 = vst [vmem:[%s249 + $0x750] sm:$0xff] %v718
                %v720 = vld [vmem:[%s248 + $0x1d48] sm:$0xff]
                %721 = vst [vmem:[%s249 + $0x758] sm:$0xff] %v720
                %v722 = vld [vmem:[%s248 + $0x1d80] sm:$0xff]
                %723 = vst [vmem:[%s249 + $0x760] sm:$0xff] %v722
                %v724 = vld [vmem:[%s248 + $0x1d88] sm:$0xff]
                %725 = vst [vmem:[%s249 + $0x768] sm:$0xff] %v724
                %v726 = vld [vmem:[%s248 + $0x1dc0] sm:$0xff]
                %727 = vst [vmem:[%s249 + $0x770] sm:$0xff] %v726
                %v728 = vld [vmem:[%s248 + $0x1dc8] sm:$0xff]
                %729 = vst [vmem:[%s249 + $0x778] sm:$0xff] %v728
                %v730 = vld [vmem:[%s248 + $0x1e00] sm:$0xff]
                %731 = vst [vmem:[%s249 + $0x780] sm:$0xff] %v730
                %v732 = vld [vmem:[%s248 + $0x1e08] sm:$0xff]
                %733 = vst [vmem:[%s249 + $0x788] sm:$0xff] %v732
                %v734 = vld [vmem:[%s248 + $0x1e40] sm:$0xff]
                %735 = vst [vmem:[%s249 + $0x790] sm:$0xff] %v734
                %v736 = vld [vmem:[%s248 + $0x1e48] sm:$0xff]
                %737 = vst [vmem:[%s249 + $0x798] sm:$0xff] %v736
                %v738 = vld [vmem:[%s248 + $0x1e80] sm:$0xff]
                %739 = vst [vmem:[%s249 + $0x7a0] sm:$0xff] %v738
                %v740 = vld [vmem:[%s248 + $0x1e88] sm:$0xff]
                %741 = vst [vmem:[%s249 + $0x7a8] sm:$0xff] %v740
                %v742 = vld [vmem:[%s248 + $0x1ec0] sm:$0xff]
                %743 = vst [vmem:[%s249 + $0x7b0] sm:$0xff] %v742
                %v744 = vld [vmem:[%s248 + $0x1ec8] sm:$0xff]
                %745 = vst [vmem:[%s249 + $0x7b8] sm:$0xff] %v744
                %v746 = vld [vmem:[%s248 + $0x1f00] sm:$0xff]
                %747 = vst [vmem:[%s249 + $0x7c0] sm:$0xff] %v746
                %v748 = vld [vmem:[%s248 + $0x1f08] sm:$0xff]
                %749 = vst [vmem:[%s249 + $0x7c8] sm:$0xff] %v748
                %v750 = vld [vmem:[%s248 + $0x1f40] sm:$0xff]
                %751 = vst [vmem:[%s249 + $0x7d0] sm:$0xff] %v750
                %v752 = vld [vmem:[%s248 + $0x1f48] sm:$0xff]
                %753 = vst [vmem:[%s249 + $0x7d8] sm:$0xff] %v752
                %v754 = vld [vmem:[%s248 + $0x1f80] sm:$0xff]
                %755 = vst [vmem:[%s249 + $0x7e0] sm:$0xff] %v754
                %v756 = vld [vmem:[%s248 + $0x1f88] sm:$0xff]
                %757 = vst [vmem:[%s249 + $0x7e8] sm:$0xff] %v756
                %v758 = vld [vmem:[%s248 + $0x1fc0] sm:$0xff]
                %759 = vst [vmem:[%s249 + $0x7f0] sm:$0xff] %v758
                %v760 = vld [vmem:[%s248 + $0x1fc8] sm:$0xff]
                %761 = vst [vmem:[%s249 + $0x7f8] sm:$0xff] %v760
                %v762 = vld [vmem:[%s248 + $0x2000] sm:$0xff]
                %763 = vst [vmem:[%s249 + $0x800] sm:$0xff] %v762
                %v764 = vld [vmem:[%s248 + $0x2008] sm:$0xff]
                %765 = vst [vmem:[%s249 + $0x808] sm:$0xff] %v764
                %v766 = vld [vmem:[%s248 + $0x2040] sm:$0xff]
                %767 = vst [vmem:[%s249 + $0x810] sm:$0xff] %v766
                %v768 = vld [vmem:[%s248 + $0x2048] sm:$0xff]
                %769 = vst [vmem:[%s249 + $0x818] sm:$0xff] %v768
                %v770 = vld [vmem:[%s248 + $0x2080] sm:$0xff]
                %771 = vst [vmem:[%s249 + $0x820] sm:$0xff] %v770
                %v772 = vld [vmem:[%s248 + $0x2088] sm:$0xff]
                %773 = vst [vmem:[%s249 + $0x828] sm:$0xff] %v772
                %v774 = vld [vmem:[%s248 + $0x20c0] sm:$0xff]
                %775 = vst [vmem:[%s249 + $0x830] sm:$0xff] %v774
                %v776 = vld [vmem:[%s248 + $0x20c8] sm:$0xff]
                %777 = vst [vmem:[%s249 + $0x838] sm:$0xff] %v776
                %v778 = vld [vmem:[%s248 + $0x2100] sm:$0xff]
                %779 = vst [vmem:[%s249 + $0x840] sm:$0xff] %v778
                %v780 = vld [vmem:[%s248 + $0x2108] sm:$0xff]
                %781 = vst [vmem:[%s249 + $0x848] sm:$0xff] %v780
                %v782 = vld [vmem:[%s248 + $0x2140] sm:$0xff]
                %783 = vst [vmem:[%s249 + $0x850] sm:$0xff] %v782
                %v784 = vld [vmem:[%s248 + $0x2148] sm:$0xff]
                %785 = vst [vmem:[%s249 + $0x858] sm:$0xff] %v784
                %v786 = vld [vmem:[%s248 + $0x2180] sm:$0xff]
                %787 = vst [vmem:[%s249 + $0x860] sm:$0xff] %v786
                %v788 = vld [vmem:[%s248 + $0x2188] sm:$0xff]
                %789 = vst [vmem:[%s249 + $0x868] sm:$0xff] %v788
                %v790 = vld [vmem:[%s248 + $0x21c0] sm:$0xff]
                %791 = vst [vmem:[%s249 + $0x870] sm:$0xff] %v790
                %v792 = vld [vmem:[%s248 + $0x21c8] sm:$0xff]
                %793 = vst [vmem:[%s249 + $0x878] sm:$0xff] %v792
                %v794 = vld [vmem:[%s248 + $0x2200] sm:$0xff]
                %795 = vst [vmem:[%s249 + $0x880] sm:$0xff] %v794
                %v796 = vld [vmem:[%s248 + $0x2208] sm:$0xff]
                %797 = vst [vmem:[%s249 + $0x888] sm:$0xff] %v796
                %v798 = vld [vmem:[%s248 + $0x2240] sm:$0xff]
                %799 = vst [vmem:[%s249 + $0x890] sm:$0xff] %v798
                %v800 = vld [vmem:[%s248 + $0x2248] sm:$0xff]
                %801 = vst [vmem:[%s249 + $0x898] sm:$0xff] %v800
                %v802 = vld [vmem:[%s248 + $0x2280] sm:$0xff]
                %803 = vst [vmem:[%s249 + $0x8a0] sm:$0xff] %v802
                %v804 = vld [vmem:[%s248 + $0x2288] sm:$0xff]
                %805 = vst [vmem:[%s249 + $0x8a8] sm:$0xff] %v804
                %v806 = vld [vmem:[%s248 + $0x22c0] sm:$0xff]
                %807 = vst [vmem:[%s249 + $0x8b0] sm:$0xff] %v806
                %v808 = vld [vmem:[%s248 + $0x22c8] sm:$0xff]
                %809 = vst [vmem:[%s249 + $0x8b8] sm:$0xff] %v808
                %v810 = vld [vmem:[%s248 + $0x2300] sm:$0xff]
                %811 = vst [vmem:[%s249 + $0x8c0] sm:$0xff] %v810
                %v812 = vld [vmem:[%s248 + $0x2308] sm:$0xff]
                %813 = vst [vmem:[%s249 + $0x8c8] sm:$0xff] %v812
                %v814 = vld [vmem:[%s248 + $0x2340] sm:$0xff]
                %815 = vst [vmem:[%s249 + $0x8d0] sm:$0xff] %v814
                %v816 = vld [vmem:[%s248 + $0x2348] sm:$0xff]
                %817 = vst [vmem:[%s249 + $0x8d8] sm:$0xff] %v816
                %v818 = vld [vmem:[%s248 + $0x2380] sm:$0xff]
                %819 = vst [vmem:[%s249 + $0x8e0] sm:$0xff] %v818
                %v820 = vld [vmem:[%s248 + $0x2388] sm:$0xff]
                %821 = vst [vmem:[%s249 + $0x8e8] sm:$0xff] %v820
                %v822 = vld [vmem:[%s248 + $0x23c0] sm:$0xff]
                %823 = vst [vmem:[%s249 + $0x8f0] sm:$0xff] %v822
                %v824 = vld [vmem:[%s248 + $0x23c8] sm:$0xff]
                %825 = vst [vmem:[%s249 + $0x8f8] sm:$0xff] %v824
                %v826 = vld [vmem:[%s248 + $0x2400] sm:$0xff]
                %827 = vst [vmem:[%s249 + $0x900] sm:$0xff] %v826
                %v828 = vld [vmem:[%s248 + $0x2408] sm:$0xff]
                %829 = vst [vmem:[%s249 + $0x908] sm:$0xff] %v828
                %v830 = vld [vmem:[%s248 + $0x2440] sm:$0xff]
                %831 = vst [vmem:[%s249 + $0x910] sm:$0xff] %v830
                %v832 = vld [vmem:[%s248 + $0x2448] sm:$0xff]
                %833 = vst [vmem:[%s249 + $0x918] sm:$0xff] %v832
                %v834 = vld [vmem:[%s248 + $0x2480] sm:$0xff]
                %835 = vst [vmem:[%s249 + $0x920] sm:$0xff] %v834
                %v836 = vld [vmem:[%s248 + $0x2488] sm:$0xff]
                %837 = vst [vmem:[%s249 + $0x928] sm:$0xff] %v836
                %v838 = vld [vmem:[%s248 + $0x24c0] sm:$0xff]
                %839 = vst [vmem:[%s249 + $0x930] sm:$0xff] %v838
                %v840 = vld [vmem:[%s248 + $0x24c8] sm:$0xff]
                %841 = vst [vmem:[%s249 + $0x938] sm:$0xff] %v840
                %v842 = vld [vmem:[%s248 + $0x2500] sm:$0xff]
                %843 = vst [vmem:[%s249 + $0x940] sm:$0xff] %v842
                %v844 = vld [vmem:[%s248 + $0x2508] sm:$0xff]
                %845 = vst [vmem:[%s249 + $0x948] sm:$0xff] %v844
                %v846 = vld [vmem:[%s248 + $0x2540] sm:$0xff]
                %847 = vst [vmem:[%s249 + $0x950] sm:$0xff] %v846
                %v848 = vld [vmem:[%s248 + $0x2548] sm:$0xff]
                %849 = vst [vmem:[%s249 + $0x958] sm:$0xff] %v848
                %v850 = vld [vmem:[%s248 + $0x2580] sm:$0xff]
                %851 = vst [vmem:[%s249 + $0x960] sm:$0xff] %v850
                %v852 = vld [vmem:[%s248 + $0x2588] sm:$0xff]
                %853 = vst [vmem:[%s249 + $0x968] sm:$0xff] %v852
                %v854 = vld [vmem:[%s248 + $0x25c0] sm:$0xff]
                %855 = vst [vmem:[%s249 + $0x970] sm:$0xff] %v854
                %v856 = vld [vmem:[%s248 + $0x25c8] sm:$0xff]
                %857 = vst [vmem:[%s249 + $0x978] sm:$0xff] %v856
                %v858 = vld [vmem:[%s248 + $0x2600] sm:$0xff]
                %859 = vst [vmem:[%s249 + $0x980] sm:$0xff] %v858
                %v860 = vld [vmem:[%s248 + $0x2608] sm:$0xff]
                %861 = vst [vmem:[%s249 + $0x988] sm:$0xff] %v860
                %v862 = vld [vmem:[%s248 + $0x2640] sm:$0xff]
                %863 = vst [vmem:[%s249 + $0x990] sm:$0xff] %v862
                %v864 = vld [vmem:[%s248 + $0x2648] sm:$0xff]
                %865 = vst [vmem:[%s249 + $0x998] sm:$0xff] %v864
                %v866 = vld [vmem:[%s248 + $0x2680] sm:$0xff]
                %867 = vst [vmem:[%s249 + $0x9a0] sm:$0xff] %v866
                %v868 = vld [vmem:[%s248 + $0x2688] sm:$0xff]
                %869 = vst [vmem:[%s249 + $0x9a8] sm:$0xff] %v868
                %v870 = vld [vmem:[%s248 + $0x26c0] sm:$0xff]
                %871 = vst [vmem:[%s249 + $0x9b0] sm:$0xff] %v870
                %v872 = vld [vmem:[%s248 + $0x26c8] sm:$0xff]
                %873 = vst [vmem:[%s249 + $0x9b8] sm:$0xff] %v872
                %v874 = vld [vmem:[%s248 + $0x2700] sm:$0xff]
                %875 = vst [vmem:[%s249 + $0x9c0] sm:$0xff] %v874
                %v876 = vld [vmem:[%s248 + $0x2708] sm:$0xff]
                %877 = vst [vmem:[%s249 + $0x9c8] sm:$0xff] %v876
                %v878 = vld [vmem:[%s248 + $0x2740] sm:$0xff]
                %879 = vst [vmem:[%s249 + $0x9d0] sm:$0xff] %v878
                %v880 = vld [vmem:[%s248 + $0x2748] sm:$0xff]
                %881 = vst [vmem:[%s249 + $0x9d8] sm:$0xff] %v880
                %v882 = vld [vmem:[%s248 + $0x2780] sm:$0xff]
                %883 = vst [vmem:[%s249 + $0x9e0] sm:$0xff] %v882
                %v884 = vld [vmem:[%s248 + $0x2788] sm:$0xff]
                %885 = vst [vmem:[%s249 + $0x9e8] sm:$0xff] %v884
                %v886 = vld [vmem:[%s248 + $0x27c0] sm:$0xff]
                %887 = vst [vmem:[%s249 + $0x9f0] sm:$0xff] %v886
                %v888 = vld [vmem:[%s248 + $0x27c8] sm:$0xff]
                %889 = vst [vmem:[%s249 + $0x9f8] sm:$0xff] %v888
                %v890 = vld [vmem:[%s248 + $0x2800] sm:$0xff]
                %891 = vst [vmem:[%s249 + $0xa00] sm:$0xff] %v890
                %v892 = vld [vmem:[%s248 + $0x2808] sm:$0xff]
                %893 = vst [vmem:[%s249 + $0xa08] sm:$0xff] %v892
                %v894 = vld [vmem:[%s248 + $0x2840] sm:$0xff]
                %895 = vst [vmem:[%s249 + $0xa10] sm:$0xff] %v894
                %v896 = vld [vmem:[%s248 + $0x2848] sm:$0xff]
                %897 = vst [vmem:[%s249 + $0xa18] sm:$0xff] %v896
                %v898 = vld [vmem:[%s248 + $0x2880] sm:$0xff]
                %899 = vst [vmem:[%s249 + $0xa20] sm:$0xff] %v898
                %v900 = vld [vmem:[%s248 + $0x2888] sm:$0xff]
                %901 = vst [vmem:[%s249 + $0xa28] sm:$0xff] %v900
                %v902 = vld [vmem:[%s248 + $0x28c0] sm:$0xff]
                %903 = vst [vmem:[%s249 + $0xa30] sm:$0xff] %v902
                %v904 = vld [vmem:[%s248 + $0x28c8] sm:$0xff]
                %905 = vst [vmem:[%s249 + $0xa38] sm:$0xff] %v904
                %v906 = vld [vmem:[%s248 + $0x2900] sm:$0xff]
                %907 = vst [vmem:[%s249 + $0xa40] sm:$0xff] %v906
                %v908 = vld [vmem:[%s248 + $0x2908] sm:$0xff]
                %909 = vst [vmem:[%s249 + $0xa48] sm:$0xff] %v908
                %v910 = vld [vmem:[%s248 + $0x2940] sm:$0xff]
                %911 = vst [vmem:[%s249 + $0xa50] sm:$0xff] %v910
                %v912 = vld [vmem:[%s248 + $0x2948] sm:$0xff]
                %913 = vst [vmem:[%s249 + $0xa58] sm:$0xff] %v912
                %v914 = vld [vmem:[%s248 + $0x2980] sm:$0xff]
                %915 = vst [vmem:[%s249 + $0xa60] sm:$0xff] %v914
                %v916 = vld [vmem:[%s248 + $0x2988] sm:$0xff]
                %917 = vst [vmem:[%s249 + $0xa68] sm:$0xff] %v916
                %v918 = vld [vmem:[%s248 + $0x29c0] sm:$0xff]
                %919 = vst [vmem:[%s249 + $0xa70] sm:$0xff] %v918
                %v920 = vld [vmem:[%s248 + $0x29c8] sm:$0xff]
                %921 = vst [vmem:[%s249 + $0xa78] sm:$0xff] %v920
                %v922 = vld [vmem:[%s248 + $0x2a00] sm:$0xff]
                %923 = vst [vmem:[%s249 + $0xa80] sm:$0xff] %v922
                %v924 = vld [vmem:[%s248 + $0x2a08] sm:$0xff]
                %925 = vst [vmem:[%s249 + $0xa88] sm:$0xff] %v924
                %v926 = vld [vmem:[%s248 + $0x2a40] sm:$0xff]
                %927 = vst [vmem:[%s249 + $0xa90] sm:$0xff] %v926
                %v928 = vld [vmem:[%s248 + $0x2a48] sm:$0xff]
                %929 = vst [vmem:[%s249 + $0xa98] sm:$0xff] %v928
                %v930 = vld [vmem:[%s248 + $0x2a80] sm:$0xff]
                %931 = vst [vmem:[%s249 + $0xaa0] sm:$0xff] %v930
                %v932 = vld [vmem:[%s248 + $0x2a88] sm:$0xff]
                %933 = vst [vmem:[%s249 + $0xaa8] sm:$0xff] %v932
                %v934 = vld [vmem:[%s248 + $0x2ac0] sm:$0xff]
                %935 = vst [vmem:[%s249 + $0xab0] sm:$0xff] %v934
                %v936 = vld [vmem:[%s248 + $0x2ac8] sm:$0xff]
                %937 = vst [vmem:[%s249 + $0xab8] sm:$0xff] %v936
                %v938 = vld [vmem:[%s248 + $0x2b00] sm:$0xff]
                %939 = vst [vmem:[%s249 + $0xac0] sm:$0xff] %v938
                %v940 = vld [vmem:[%s248 + $0x2b08] sm:$0xff]
                %941 = vst [vmem:[%s249 + $0xac8] sm:$0xff] %v940
                %v942 = vld [vmem:[%s248 + $0x2b40] sm:$0xff]
                %943 = vst [vmem:[%s249 + $0xad0] sm:$0xff] %v942
                %v944 = vld [vmem:[%s248 + $0x2b48] sm:$0xff]
                %945 = vst [vmem:[%s249 + $0xad8] sm:$0xff] %v944
                %v946 = vld [vmem:[%s248 + $0x2b80] sm:$0xff]
                %947 = vst [vmem:[%s249 + $0xae0] sm:$0xff] %v946
                %v948 = vld [vmem:[%s248 + $0x2b88] sm:$0xff]
                %949 = vst [vmem:[%s249 + $0xae8] sm:$0xff] %v948
                %v950 = vld [vmem:[%s248 + $0x2bc0] sm:$0xff]
                %951 = vst [vmem:[%s249 + $0xaf0] sm:$0xff] %v950
                %v952 = vld [vmem:[%s248 + $0x2bc8] sm:$0xff]
                %953 = vst [vmem:[%s249 + $0xaf8] sm:$0xff] %v952
                %v954 = vld [vmem:[%s248 + $0x2c00] sm:$0xff]
                %955 = vst [vmem:[%s249 + $0xb00] sm:$0xff] %v954
                %v956 = vld [vmem:[%s248 + $0x2c08] sm:$0xff]
                %957 = vst [vmem:[%s249 + $0xb08] sm:$0xff] %v956
                %v958 = vld [vmem:[%s248 + $0x2c40] sm:$0xff]
                %959 = vst [vmem:[%s249 + $0xb10] sm:$0xff] %v958
                %v960 = vld [vmem:[%s248 + $0x2c48] sm:$0xff]
                %961 = vst [vmem:[%s249 + $0xb18] sm:$0xff] %v960
                %v962 = vld [vmem:[%s248 + $0x2c80] sm:$0xff]
                %963 = vst [vmem:[%s249 + $0xb20] sm:$0xff] %v962
                %v964 = vld [vmem:[%s248 + $0x2c88] sm:$0xff]
                %965 = vst [vmem:[%s249 + $0xb28] sm:$0xff] %v964
                %v966 = vld [vmem:[%s248 + $0x2cc0] sm:$0xff]
                %967 = vst [vmem:[%s249 + $0xb30] sm:$0xff] %v966
                %v968 = vld [vmem:[%s248 + $0x2cc8] sm:$0xff]
                %969 = vst [vmem:[%s249 + $0xb38] sm:$0xff] %v968
                %v970 = vld [vmem:[%s248 + $0x2d00] sm:$0xff]
                %971 = vst [vmem:[%s249 + $0xb40] sm:$0xff] %v970
                %v972 = vld [vmem:[%s248 + $0x2d08] sm:$0xff]
                %973 = vst [vmem:[%s249 + $0xb48] sm:$0xff] %v972
                %v974 = vld [vmem:[%s248 + $0x2d40] sm:$0xff]
                %975 = vst [vmem:[%s249 + $0xb50] sm:$0xff] %v974
                %v976 = vld [vmem:[%s248 + $0x2d48] sm:$0xff]
                %977 = vst [vmem:[%s249 + $0xb58] sm:$0xff] %v976
                %v978 = vld [vmem:[%s248 + $0x2d80] sm:$0xff]
                %979 = vst [vmem:[%s249 + $0xb60] sm:$0xff] %v978
                %v980 = vld [vmem:[%s248 + $0x2d88] sm:$0xff]
                %981 = vst [vmem:[%s249 + $0xb68] sm:$0xff] %v980
                %v982 = vld [vmem:[%s248 + $0x2dc0] sm:$0xff]
                %983 = vst [vmem:[%s249 + $0xb70] sm:$0xff] %v982
                %v984 = vld [vmem:[%s248 + $0x2dc8] sm:$0xff]
                %985 = vst [vmem:[%s249 + $0xb78] sm:$0xff] %v984
                %v986 = vld [vmem:[%s248 + $0x2e00] sm:$0xff]
                %987 = vst [vmem:[%s249 + $0xb80] sm:$0xff] %v986
                %v988 = vld [vmem:[%s248 + $0x2e08] sm:$0xff]
                %989 = vst [vmem:[%s249 + $0xb88] sm:$0xff] %v988
                %v990 = vld [vmem:[%s248 + $0x2e40] sm:$0xff]
                %991 = vst [vmem:[%s249 + $0xb90] sm:$0xff] %v990
                %v992 = vld [vmem:[%s248 + $0x2e48] sm:$0xff]
                %993 = vst [vmem:[%s249 + $0xb98] sm:$0xff] %v992
                %v994 = vld [vmem:[%s248 + $0x2e80] sm:$0xff]
                %995 = vst [vmem:[%s249 + $0xba0] sm:$0xff] %v994
                %v996 = vld [vmem:[%s248 + $0x2e88] sm:$0xff]
                %997 = vst [vmem:[%s249 + $0xba8] sm:$0xff] %v996
                %v998 = vld [vmem:[%s248 + $0x2ec0] sm:$0xff]
                %999 = vst [vmem:[%s249 + $0xbb0] sm:$0xff] %v998
                %v1000 = vld [vmem:[%s248 + $0x2ec8] sm:$0xff]
                %1001 = vst [vmem:[%s249 + $0xbb8] sm:$0xff] %v1000
                %v1002 = vld [vmem:[%s248 + $0x2f00] sm:$0xff]
                %1003 = vst [vmem:[%s249 + $0xbc0] sm:$0xff] %v1002
                %v1004 = vld [vmem:[%s248 + $0x2f08] sm:$0xff]
                %1005 = vst [vmem:[%s249 + $0xbc8] sm:$0xff] %v1004
                %v1006 = vld [vmem:[%s248 + $0x2f40] sm:$0xff]
                %1007 = vst [vmem:[%s249 + $0xbd0] sm:$0xff] %v1006
                %v1008 = vld [vmem:[%s248 + $0x2f48] sm:$0xff]
                %1009 = vst [vmem:[%s249 + $0xbd8] sm:$0xff] %v1008
                %v1010 = vld [vmem:[%s248 + $0x2f80] sm:$0xff]
                %1011 = vst [vmem:[%s249 + $0xbe0] sm:$0xff] %v1010
                %v1012 = vld [vmem:[%s248 + $0x2f88] sm:$0xff]
                %1013 = vst [vmem:[%s249 + $0xbe8] sm:$0xff] %v1012
                %v1014 = vld [vmem:[%s248 + $0x2fc0] sm:$0xff]
                %1015 = vst [vmem:[%s249 + $0xbf0] sm:$0xff] %v1014
                %v1016 = vld [vmem:[%s248 + $0x2fc8] sm:$0xff]
                %1017 = vst [vmem:[%s249 + $0xbf8] sm:$0xff] %v1016
                %v1018 = vld [vmem:[%s248 + $0x3000] sm:$0xff]
                %1019 = vst [vmem:[%s249 + $0xc00] sm:$0xff] %v1018
                %v1020 = vld [vmem:[%s248 + $0x3008] sm:$0xff]
                %1021 = vst [vmem:[%s249 + $0xc08] sm:$0xff] %v1020
                %v1022 = vld [vmem:[%s248 + $0x3040] sm:$0xff]
                %1023 = vst [vmem:[%s249 + $0xc10] sm:$0xff] %v1022
                %v1024 = vld [vmem:[%s248 + $0x3048] sm:$0xff]
                %1025 = vst [vmem:[%s249 + $0xc18] sm:$0xff] %v1024
                %v1026 = vld [vmem:[%s248 + $0x3080] sm:$0xff]
                %1027 = vst [vmem:[%s249 + $0xc20] sm:$0xff] %v1026
                %v1028 = vld [vmem:[%s248 + $0x3088] sm:$0xff]
                %1029 = vst [vmem:[%s249 + $0xc28] sm:$0xff] %v1028
                %v1030 = vld [vmem:[%s248 + $0x30c0] sm:$0xff]
                %1031 = vst [vmem:[%s249 + $0xc30] sm:$0xff] %v1030
                %v1032 = vld [vmem:[%s248 + $0x30c8] sm:$0xff]
                %1033 = vst [vmem:[%s249 + $0xc38] sm:$0xff] %v1032
                %v1034 = vld [vmem:[%s248 + $0x3100] sm:$0xff]
                %1035 = vst [vmem:[%s249 + $0xc40] sm:$0xff] %v1034
                %v1036 = vld [vmem:[%s248 + $0x3108] sm:$0xff]
                %1037 = vst [vmem:[%s249 + $0xc48] sm:$0xff] %v1036
                %v1038 = vld [vmem:[%s248 + $0x3140] sm:$0xff]
                %1039 = vst [vmem:[%s249 + $0xc50] sm:$0xff] %v1038
                %v1040 = vld [vmem:[%s248 + $0x3148] sm:$0xff]
                %1041 = vst [vmem:[%s249 + $0xc58] sm:$0xff] %v1040
                %v1042 = vld [vmem:[%s248 + $0x3180] sm:$0xff]
                %1043 = vst [vmem:[%s249 + $0xc60] sm:$0xff] %v1042
                %v1044 = vld [vmem:[%s248 + $0x3188] sm:$0xff]
                %1045 = vst [vmem:[%s249 + $0xc68] sm:$0xff] %v1044
                %v1046 = vld [vmem:[%s248 + $0x31c0] sm:$0xff]
                %1047 = vst [vmem:[%s249 + $0xc70] sm:$0xff] %v1046
                %v1048 = vld [vmem:[%s248 + $0x31c8] sm:$0xff]
                %1049 = vst [vmem:[%s249 + $0xc78] sm:$0xff] %v1048
                %v1050 = vld [vmem:[%s248 + $0x3200] sm:$0xff]
                %1051 = vst [vmem:[%s249 + $0xc80] sm:$0xff] %v1050
                %v1052 = vld [vmem:[%s248 + $0x3208] sm:$0xff]
                %1053 = vst [vmem:[%s249 + $0xc88] sm:$0xff] %v1052
                %v1054 = vld [vmem:[%s248 + $0x3240] sm:$0xff]
                %1055 = vst [vmem:[%s249 + $0xc90] sm:$0xff] %v1054
                %v1056 = vld [vmem:[%s248 + $0x3248] sm:$0xff]
                %1057 = vst [vmem:[%s249 + $0xc98] sm:$0xff] %v1056
                %v1058 = vld [vmem:[%s248 + $0x3280] sm:$0xff]
                %1059 = vst [vmem:[%s249 + $0xca0] sm:$0xff] %v1058
                %v1060 = vld [vmem:[%s248 + $0x3288] sm:$0xff]
                %1061 = vst [vmem:[%s249 + $0xca8] sm:$0xff] %v1060
                %v1062 = vld [vmem:[%s248 + $0x32c0] sm:$0xff]
                %1063 = vst [vmem:[%s249 + $0xcb0] sm:$0xff] %v1062
                %v1064 = vld [vmem:[%s248 + $0x32c8] sm:$0xff]
                %1065 = vst [vmem:[%s249 + $0xcb8] sm:$0xff] %v1064
                %v1066 = vld [vmem:[%s248 + $0x3300] sm:$0xff]
                %1067 = vst [vmem:[%s249 + $0xcc0] sm:$0xff] %v1066
                %v1068 = vld [vmem:[%s248 + $0x3308] sm:$0xff]
                %1069 = vst [vmem:[%s249 + $0xcc8] sm:$0xff] %v1068
                %v1070 = vld [vmem:[%s248 + $0x3340] sm:$0xff]
                %1071 = vst [vmem:[%s249 + $0xcd0] sm:$0xff] %v1070
                %v1072 = vld [vmem:[%s248 + $0x3348] sm:$0xff]
                %1073 = vst [vmem:[%s249 + $0xcd8] sm:$0xff] %v1072
                %v1074 = vld [vmem:[%s248 + $0x3380] sm:$0xff]
                %1075 = vst [vmem:[%s249 + $0xce0] sm:$0xff] %v1074
                %v1076 = vld [vmem:[%s248 + $0x3388] sm:$0xff]
                %1077 = vst [vmem:[%s249 + $0xce8] sm:$0xff] %v1076
                %v1078 = vld [vmem:[%s248 + $0x33c0] sm:$0xff]
                %1079 = vst [vmem:[%s249 + $0xcf0] sm:$0xff] %v1078
                %v1080 = vld [vmem:[%s248 + $0x33c8] sm:$0xff]
                %1081 = vst [vmem:[%s249 + $0xcf8] sm:$0xff] %v1080
                %v1082 = vld [vmem:[%s248 + $0x3400] sm:$0xff]
                %1083 = vst [vmem:[%s249 + $0xd00] sm:$0xff] %v1082
                %v1084 = vld [vmem:[%s248 + $0x3408] sm:$0xff]
                %1085 = vst [vmem:[%s249 + $0xd08] sm:$0xff] %v1084
                %v1086 = vld [vmem:[%s248 + $0x3440] sm:$0xff]
                %1087 = vst [vmem:[%s249 + $0xd10] sm:$0xff] %v1086
                %v1088 = vld [vmem:[%s248 + $0x3448] sm:$0xff]
                %1089 = vst [vmem:[%s249 + $0xd18] sm:$0xff] %v1088
                %v1090 = vld [vmem:[%s248 + $0x3480] sm:$0xff]
                %1091 = vst [vmem:[%s249 + $0xd20] sm:$0xff] %v1090
                %v1092 = vld [vmem:[%s248 + $0x3488] sm:$0xff]
                %1093 = vst [vmem:[%s249 + $0xd28] sm:$0xff] %v1092
                %v1094 = vld [vmem:[%s248 + $0x34c0] sm:$0xff]
                %1095 = vst [vmem:[%s249 + $0xd30] sm:$0xff] %v1094
                %v1096 = vld [vmem:[%s248 + $0x34c8] sm:$0xff]
                %1097 = vst [vmem:[%s249 + $0xd38] sm:$0xff] %v1096
                %v1098 = vld [vmem:[%s248 + $0x3500] sm:$0xff]
                %1099 = vst [vmem:[%s249 + $0xd40] sm:$0xff] %v1098
                %v1100 = vld [vmem:[%s248 + $0x3508] sm:$0xff]
                %1101 = vst [vmem:[%s249 + $0xd48] sm:$0xff] %v1100
                %v1102 = vld [vmem:[%s248 + $0x3540] sm:$0xff]
                %1103 = vst [vmem:[%s249 + $0xd50] sm:$0xff] %v1102
                %v1104 = vld [vmem:[%s248 + $0x3548] sm:$0xff]
                %1105 = vst [vmem:[%s249 + $0xd58] sm:$0xff] %v1104
                %v1106 = vld [vmem:[%s248 + $0x3580] sm:$0xff]
                %1107 = vst [vmem:[%s249 + $0xd60] sm:$0xff] %v1106
                %v1108 = vld [vmem:[%s248 + $0x3588] sm:$0xff]
                %1109 = vst [vmem:[%s249 + $0xd68] sm:$0xff] %v1108
                %v1110 = vld [vmem:[%s248 + $0x35c0] sm:$0xff]
                %1111 = vst [vmem:[%s249 + $0xd70] sm:$0xff] %v1110
                %v1112 = vld [vmem:[%s248 + $0x35c8] sm:$0xff]
                %1113 = vst [vmem:[%s249 + $0xd78] sm:$0xff] %v1112
              $region49: #{cnn_model_forward.5} parent=43 // loop_footer
                %s247 = sadd.s32 1, %s243
              $region50: #{cnn_model_forward.5} parent=43 // loop_footer_branch
                %242 = sbr.rel target = $region46
              $region51: #{cnn_model_forward.5} parent=43 // loop_exit
                _
            $region44: #{cnn_model_forward.5} parent=39 // pred_fallthru
              _
            // Predicated region
            $region52: #{cnn_model_forward.5} parent=39 // pred_check
              _
            $region53: #{cnn_model_forward.5} parent=39 // pred_check_branch
              %1115 = sbr.rel target = $region55
            $region54: #{cnn_model_forward.5} parent=39 // pred_region
              _
            $region55: #{cnn_model_forward.5} parent=39 // pred_fallthru
              _
          $region40: #{cnn_model_forward.5} parent=35 // pred_fallthru
            _
          %1116 = vnop
        $region36: #{cnn_model_forward.5} parent=31 // pred_fallthru
          _
        // Predicated region
        $region56: #{cnn_model_forward.5} parent=31 // pred_check
          %p1117 = pneg %p81
        $region57: #{cnn_model_forward.5} parent=31 // pred_check_branch
          %1119 = sbr.rel (%p1117) target = $region59
        $region58: #{cnn_model_forward.5} parent=31 // pred_region
          %s1120 = smul.u32 4, %s14
          %p1121 = scmp.lt.s32.totalorder %s1120, 15
          %s1122 = scalar_select %p1121, %s1120, 15
          %s1123 = scalar_lea.vmem %s2, %s1122
          %s1124 = smul.u32 4, %s14
        $region59: #{cnn_model_forward.5} parent=31 // pred_fallthru
          _
        // Predicated region
        $region60: #{cnn_model_forward.5} parent=31 // pred_check
          %p1125 = pneg %p107
        $region61: #{cnn_model_forward.5} parent=31 // pred_check_branch
          %1127 = sbr.rel (%p1125) target = $region63
        $region62: #{cnn_model_forward.5} parent=31 // pred_region
          %s1128 = smul.u32 64, %s14
          %p1129 = scmp.lt.s32.totalorder %s1128, 255
          %s1130 = scalar_select %p1129, %s1128, 255
          %s1131 = smul.addr %s1130, 8
          %s1132 = smul.addr %s1131, 4
          %s1133 = scalar_lea.vmem %s3, %s1132
          %s1134 = smul.u32 64, %s14
        $region63: #{cnn_model_forward.5} parent=31 // pred_fallthru
          _
      $region32: #{cnn_model_forward.5} parent=5 // pred_fallthru
        _
      %p1135 = scmp.le.s32.totalorder 1, %s14
      %p1136 = scmp.lt.s32.totalorder %s14, 5
      %p1137 = pnand %p1135, %p1136
      %p1138 = pneg %p1137
      // Predicated region
      $region64: #{cnn_model_forward.5} parent=5 // pred_check
        _
      $region65: #{cnn_model_forward.5} parent=5 // pred_check_branch
        %1140 = sbr.rel (%p1137) target = $region67
      $region66: #{cnn_model_forward.5} parent=5 // pred_region
        %s1141 = ssub.s32 %s14, 1
        %s1142 = sand.u32 %s48, 1
        %s1143 = sand.u32 %s48, 1
        %s1144 = smul.addr %s1143, 3456
        %s1145 = scalar_lea.vmem [#allocation3], %s1144
        // Predicated region
        $region68: #{cnn_model_forward.5} parent=66 // pred_check
          %p1146 = pneg %p61
        $region69: #{cnn_model_forward.5} parent=66 // pred_check_branch
          %1148 = sbr.rel (%p1146) target = $region71
        $region70: #{cnn_model_forward.5} parent=66 // pred_region
          _
        $region71: #{cnn_model_forward.5} parent=66 // pred_fallthru
          _
        %p1149 = pneg %p35
        %p1150 = pneg %p32
        %s1151 = sand.u32 %s48, 1
        %s1152 = sand.u32 %s48, 1
        %s1153 = smul.addr %s1152, 3456
        %s1154 = scalar_lea.vmem [#allocation3], %s1153
        %p1155 = pneg %p61
        %p1156 = pneg %p58
        %s1157 = smul.u32 4, %s19
        %p1158 = scmp.lt.s32.totalorder %s1157, 15
        %s1159 = scalar_select %p1158, %s1157, 15
        %s1160 = scalar_lea.vmem %s2, %s1159
        %p1161 = pneg %p87
        %p1162 = pneg %p84
        %s1163 = smul.u32 64, %s19
        %p1164 = scmp.lt.s32.totalorder %s1163, 255
        %s1165 = scalar_select %p1164, %s1163, 255
        %s1166 = smul.addr %s1165, 8
        %s1167 = smul.addr %s1166, 4
        %s1168 = scalar_lea.vmem %s3, %s1167
        %p1169 = pneg %p113
        %p1170 = pneg %p110
        %p1171 = pneg %p134
        %p1172 = pneg %p131
        %p1173 = pneg %p155
        %p1174 = pneg %p152
        %p1175 = pneg %p176
        %p1176 = pneg %p173
        %p1177 = pneg %p197
        %p1178 = pneg %p194
        %s1179 = smul.u32 4, %s19
        %s1180 = smul.u32 4, %s19
        %p1181 = scmp.lt.s32.totalorder %s1180, 15
        %s1182 = scalar_select %p1181, %s1180, 15
        %s1183 = scalar_lea.vmem %s2, %s1182
        %s1184 = smul.u32 4, %s19
        %s1185 = smul.u32 64, %s19
        %p1186 = scmp.lt.s32.totalorder %s1185, 255
        %s1187 = scalar_select %p1186, %s1185, 255
        %s1188 = smul.addr %s1187, 8
        %s1189 = smul.addr %s1188, 4
        %s1190 = scalar_lea.vmem %s3, %s1189
        %s1191 = smul.u32 64, %s19
        %p1193 = scmp.eq.s32.totalorder %s19, 0
        // Predicated region
        $region72: #{cnn_model_forward.5} parent=66 // pred_check
          %p1194 = pneg %p1193
        $region73: #{cnn_model_forward.5} parent=66 // pred_check_branch
          %1196 = sbr.rel (%p1194) target = $region75
        $region74: #{cnn_model_forward.5} parent=66 // pred_region
          %1197 = vst [vmem:[#allocation2] sm:$0xff] 0.0
          %1198 = vst [vmem:[#allocation2 + $0x8] sm:$0xff] 0.0
        $region75: #{cnn_model_forward.5} parent=66 // pred_fallthru
          _
        %v1199 = vld [vmem:[%s0] sm:$0xff]
        %v1200 = vld [vmem:[%s0 + $0x8] sm:$0x3f]
        %v1201 = vld [vmem:[%s1145] sm:$0xff]
        %v1202 = vld [vmem:[%s1145 + $0x8] sm:$0xff]
        %v1203 = vld [vmem:[%s1145 + $0x10] sm:$0xff]
        %v1204 = vld [vmem:[%s1145 + $0x18] sm:$0xff]
        %v1205 = vld [vmem:[%s1145 + $0x20] sm:$0xff]
        %v1206 = vld [vmem:[%s1145 + $0x28] sm:$0xff]
        %v1207 = vld [vmem:[%s1145 + $0x30] sm:$0xff]
        %v1208 = vld [vmem:[%s1145 + $0x38] sm:$0xff]
        %v1209 = vld [vmem:[%s1145 + $0x40] sm:$0xff]
        %v1210 = vld [vmem:[%s1145 + $0x48] sm:$0xff]
        %v1211 = vld [vmem:[%s1145 + $0x50] sm:$0xff]
        %v1212 = vld [vmem:[%s1145 + $0x58] sm:$0xff]
        %v1213 = vld [vmem:[%s1145 + $0x60] sm:$0xff]
        %v1214 = vld [vmem:[%s1145 + $0x68] sm:$0xff]
        %v1215 = vld [vmem:[%s1145 + $0x70] sm:$0xff]
        %v1216 = vld [vmem:[%s1145 + $0x78] sm:$0xff]
        %v1217 = vld [vmem:[%s1145 + $0x80] sm:$0xff]
        %v1218 = vld [vmem:[%s1145 + $0x88] sm:$0xff]
        %v1219 = vld [vmem:[%s1145 + $0x90] sm:$0xff]
        %v1220 = vld [vmem:[%s1145 + $0x98] sm:$0xff]
        %v1221 = vld [vmem:[%s1145 + $0xa0] sm:$0xff]
        %v1222 = vld [vmem:[%s1145 + $0xa8] sm:$0xff]
        %v1223 = vld [vmem:[%s1145 + $0xb0] sm:$0xff]
        %v1224 = vld [vmem:[%s1145 + $0xb8] sm:$0xff]
        %v1225 = vld [vmem:[%s1145 + $0xc0] sm:$0xff]
        %v1226 = vld [vmem:[%s1145 + $0xc8] sm:$0xff]
        %v1227 = vld [vmem:[%s1145 + $0xd0] sm:$0xff]
        %v1228 = vld [vmem:[%s1145 + $0xd8] sm:$0xff]
        %v1229 = vld [vmem:[%s1145 + $0xe0] sm:$0xff]
        %v1230 = vld [vmem:[%s1145 + $0xe8] sm:$0xff]
        %v1231 = vld [vmem:[%s1145 + $0xf0] sm:$0xff]
        %v1232 = vld [vmem:[%s1145 + $0xf8] sm:$0xff]
        %v1233 = vld [vmem:[%s1145 + $0x100] sm:$0xff]
        %v1234 = vld [vmem:[%s1145 + $0x108] sm:$0xff]
        %v1235 = vld [vmem:[%s1145 + $0x110] sm:$0xff]
        %v1236 = vld [vmem:[%s1145 + $0x118] sm:$0xff]
        %v1237 = vld [vmem:[%s1145 + $0x120] sm:$0xff]
        %v1238 = vld [vmem:[%s1145 + $0x128] sm:$0xff]
        %v1239 = vld [vmem:[%s1145 + $0x130] sm:$0xff]
        %v1240 = vld [vmem:[%s1145 + $0x138] sm:$0xff]
        %v1241 = vld [vmem:[%s1145 + $0x140] sm:$0xff]
        %v1242 = vld [vmem:[%s1145 + $0x148] sm:$0xff]
        %v1243 = vld [vmem:[%s1145 + $0x150] sm:$0xff]
        %v1244 = vld [vmem:[%s1145 + $0x158] sm:$0xff]
        %v1245 = vld [vmem:[%s1145 + $0x160] sm:$0xff]
        %v1246 = vld [vmem:[%s1145 + $0x168] sm:$0xff]
        %v1247 = vld [vmem:[%s1145 + $0x170] sm:$0xff]
        %v1248 = vld [vmem:[%s1145 + $0x178] sm:$0xff]
        %v1249 = vld [vmem:[%s1145 + $0x180] sm:$0xff]
        %v1250 = vld [vmem:[%s1145 + $0x188] sm:$0xff]
        %v1251 = vld [vmem:[%s1145 + $0x190] sm:$0xff]
        %v1252 = vld [vmem:[%s1145 + $0x198] sm:$0xff]
        %v1253 = vld [vmem:[%s1145 + $0x1a0] sm:$0xff]
        %v1254 = vld [vmem:[%s1145 + $0x1a8] sm:$0xff]
        %v1255 = vld [vmem:[%s1145 + $0x1b0] sm:$0xff]
        %v1256 = vld [vmem:[%s1145 + $0x1b8] sm:$0xff]
        %v1257 = vld [vmem:[%s1145 + $0x1c0] sm:$0xff]
        %v1258 = vld [vmem:[%s1145 + $0x1c8] sm:$0xff]
        %v1259 = vld [vmem:[%s1145 + $0x1d0] sm:$0xff]
        %v1260 = vld [vmem:[%s1145 + $0x1d8] sm:$0xff]
        %v1261 = vld [vmem:[%s1145 + $0x1e0] sm:$0xff]
        %v1262 = vld [vmem:[%s1145 + $0x1e8] sm:$0xff]
        %v1263 = vld [vmem:[%s1145 + $0x1f0] sm:$0xff]
        %v1264 = vld [vmem:[%s1145 + $0x1f8] sm:$0xff]
        %v1265 = vld [vmem:[%s1145 + $0x200] sm:$0xff]
        %v1266 = vld [vmem:[%s1145 + $0x208] sm:$0xff]
        %v1267 = vld [vmem:[%s1145 + $0x210] sm:$0xff]
        %v1268 = vld [vmem:[%s1145 + $0x218] sm:$0xff]
        %v1269 = vld [vmem:[%s1145 + $0x220] sm:$0xff]
        %v1270 = vld [vmem:[%s1145 + $0x228] sm:$0xff]
        %v1271 = vld [vmem:[%s1145 + $0x230] sm:$0xff]
        %v1272 = vld [vmem:[%s1145 + $0x238] sm:$0xff]
        %v1273 = vld [vmem:[%s1145 + $0x240] sm:$0xff]
        %v1274 = vld [vmem:[%s1145 + $0x248] sm:$0xff]
        %v1275 = vld [vmem:[%s1145 + $0x250] sm:$0xff]
        %v1276 = vld [vmem:[%s1145 + $0x258] sm:$0xff]
        %v1277 = vld [vmem:[%s1145 + $0x260] sm:$0xff]
        %v1278 = vld [vmem:[%s1145 + $0x268] sm:$0xff]
        %v1279 = vld [vmem:[%s1145 + $0x270] sm:$0xff]
        %v1280 = vld [vmem:[%s1145 + $0x278] sm:$0xff]
        %v1281 = vld [vmem:[%s1145 + $0x280] sm:$0xff]
        %v1282 = vld [vmem:[%s1145 + $0x288] sm:$0xff]
        %v1283 = vld [vmem:[%s1145 + $0x290] sm:$0xff]
        %v1284 = vld [vmem:[%s1145 + $0x298] sm:$0xff]
        %v1285 = vld [vmem:[%s1145 + $0x2a0] sm:$0xff]
        %v1286 = vld [vmem:[%s1145 + $0x2a8] sm:$0xff]
        %v1287 = vld [vmem:[%s1145 + $0x2b0] sm:$0xff]
        %v1288 = vld [vmem:[%s1145 + $0x2b8] sm:$0xff]
        %v1289 = vld [vmem:[%s1145 + $0x2c0] sm:$0xff]
        %v1290 = vld [vmem:[%s1145 + $0x2c8] sm:$0xff]
        %v1291 = vld [vmem:[%s1145 + $0x2d0] sm:$0xff]
        %v1292 = vld [vmem:[%s1145 + $0x2d8] sm:$0xff]
        %v1293 = vld [vmem:[%s1145 + $0x2e0] sm:$0xff]
        %v1294 = vld [vmem:[%s1145 + $0x2e8] sm:$0xff]
        %v1295 = vld [vmem:[%s1145 + $0x2f0] sm:$0xff]
        %v1296 = vld [vmem:[%s1145 + $0x2f8] sm:$0xff]
        %v1297 = vld [vmem:[%s1145 + $0x300] sm:$0xff]
        %v1298 = vld [vmem:[%s1145 + $0x308] sm:$0xff]
        %v1299 = vld [vmem:[%s1145 + $0x310] sm:$0xff]
        %v1300 = vld [vmem:[%s1145 + $0x318] sm:$0xff]
        %v1301 = vld [vmem:[%s1145 + $0x320] sm:$0xff]
        %v1302 = vld [vmem:[%s1145 + $0x328] sm:$0xff]
        %v1303 = vld [vmem:[%s1145 + $0x330] sm:$0xff]
        %v1304 = vld [vmem:[%s1145 + $0x338] sm:$0xff]
        %v1305 = vld [vmem:[%s1145 + $0x340] sm:$0xff]
        %v1306 = vld [vmem:[%s1145 + $0x348] sm:$0xff]
        %v1307 = vld [vmem:[%s1145 + $0x350] sm:$0xff]
        %v1308 = vld [vmem:[%s1145 + $0x358] sm:$0xff]
        %v1309 = vld [vmem:[%s1145 + $0x360] sm:$0xff]
        %v1310 = vld [vmem:[%s1145 + $0x368] sm:$0xff]
        %v1311 = vld [vmem:[%s1145 + $0x370] sm:$0xff]
        %v1312 = vld [vmem:[%s1145 + $0x378] sm:$0xff]
        %v1313 = vld [vmem:[%s1145 + $0x380] sm:$0xff]
        %v1314 = vld [vmem:[%s1145 + $0x388] sm:$0xff]
        %v1315 = vld [vmem:[%s1145 + $0x390] sm:$0xff]
        %v1316 = vld [vmem:[%s1145 + $0x398] sm:$0xff]
        %v1317 = vld [vmem:[%s1145 + $0x3a0] sm:$0xff]
        %v1318 = vld [vmem:[%s1145 + $0x3a8] sm:$0xff]
        %v1319 = vld [vmem:[%s1145 + $0x3b0] sm:$0xff]
        %v1320 = vld [vmem:[%s1145 + $0x3b8] sm:$0xff]
        %v1321 = vld [vmem:[%s1145 + $0x3c0] sm:$0xff]
        %v1322 = vld [vmem:[%s1145 + $0x3c8] sm:$0xff]
        %v1323 = vld [vmem:[%s1145 + $0x3d0] sm:$0xff]
        %v1324 = vld [vmem:[%s1145 + $0x3d8] sm:$0xff]
        %v1325 = vld [vmem:[%s1145 + $0x3e0] sm:$0xff]
        %v1326 = vld [vmem:[%s1145 + $0x3e8] sm:$0xff]
        %v1327 = vld [vmem:[%s1145 + $0x3f0] sm:$0xff]
        %v1328 = vld [vmem:[%s1145 + $0x3f8] sm:$0xff]
        %v1329 = vld [vmem:[%s1145 + $0x400] sm:$0xff]
        %v1330 = vld [vmem:[%s1145 + $0x408] sm:$0xff]
        %v1331 = vld [vmem:[%s1145 + $0x410] sm:$0xff]
        %v1332 = vld [vmem:[%s1145 + $0x418] sm:$0xff]
        %v1333 = vld [vmem:[%s1145 + $0x420] sm:$0xff]
        %v1334 = vld [vmem:[%s1145 + $0x428] sm:$0xff]
        %v1335 = vld [vmem:[%s1145 + $0x430] sm:$0xff]
        %v1336 = vld [vmem:[%s1145 + $0x438] sm:$0xff]
        %v1337 = vld [vmem:[%s1145 + $0x440] sm:$0xff]
        %v1338 = vld [vmem:[%s1145 + $0x448] sm:$0xff]
        %v1339 = vld [vmem:[%s1145 + $0x450] sm:$0xff]
        %v1340 = vld [vmem:[%s1145 + $0x458] sm:$0xff]
        %v1341 = vld [vmem:[%s1145 + $0x460] sm:$0xff]
        %v1342 = vld [vmem:[%s1145 + $0x468] sm:$0xff]
        %v1343 = vld [vmem:[%s1145 + $0x470] sm:$0xff]
        %v1344 = vld [vmem:[%s1145 + $0x478] sm:$0xff]
        %v1345 = vld [vmem:[%s1145 + $0x480] sm:$0xff]
        %v1346 = vld [vmem:[%s1145 + $0x488] sm:$0xff]
        %v1347 = vld [vmem:[%s1145 + $0x490] sm:$0xff]
        %v1348 = vld [vmem:[%s1145 + $0x498] sm:$0xff]
        %v1349 = vld [vmem:[%s1145 + $0x4a0] sm:$0xff]
        %v1350 = vld [vmem:[%s1145 + $0x4a8] sm:$0xff]
        %v1351 = vld [vmem:[%s1145 + $0x4b0] sm:$0xff]
        %v1352 = vld [vmem:[%s1145 + $0x4b8] sm:$0xff]
        %v1353 = vld [vmem:[%s1145 + $0x4c0] sm:$0xff]
        %v1354 = vld [vmem:[%s1145 + $0x4c8] sm:$0xff]
        %v1355 = vld [vmem:[%s1145 + $0x4d0] sm:$0xff]
        %v1356 = vld [vmem:[%s1145 + $0x4d8] sm:$0xff]
        %v1357 = vld [vmem:[%s1145 + $0x4e0] sm:$0xff]
        %v1358 = vld [vmem:[%s1145 + $0x4e8] sm:$0xff]
        %v1359 = vld [vmem:[%s1145 + $0x4f0] sm:$0xff]
        %v1360 = vld [vmem:[%s1145 + $0x4f8] sm:$0xff]
        %v1361 = vld [vmem:[%s1145 + $0x500] sm:$0xff]
        %v1362 = vld [vmem:[%s1145 + $0x508] sm:$0xff]
        %v1363 = vld [vmem:[%s1145 + $0x510] sm:$0xff]
        %v1364 = vld [vmem:[%s1145 + $0x518] sm:$0xff]
        %v1365 = vld [vmem:[%s1145 + $0x520] sm:$0xff]
        %v1366 = vld [vmem:[%s1145 + $0x528] sm:$0xff]
        %v1367 = vld [vmem:[%s1145 + $0x530] sm:$0xff]
        %v1368 = vld [vmem:[%s1145 + $0x538] sm:$0xff]
        %v1369 = vld [vmem:[%s1145 + $0x540] sm:$0xff]
        %v1370 = vld [vmem:[%s1145 + $0x548] sm:$0xff]
        %v1371 = vld [vmem:[%s1145 + $0x550] sm:$0xff]
        %v1372 = vld [vmem:[%s1145 + $0x558] sm:$0xff]
        %v1373 = vld [vmem:[%s1145 + $0x560] sm:$0xff]
        %v1374 = vld [vmem:[%s1145 + $0x568] sm:$0xff]
        %v1375 = vld [vmem:[%s1145 + $0x570] sm:$0xff]
        %v1376 = vld [vmem:[%s1145 + $0x578] sm:$0xff]
        %v1377 = vld [vmem:[%s1145 + $0x580] sm:$0xff]
        %v1378 = vld [vmem:[%s1145 + $0x588] sm:$0xff]
        %v1379 = vld [vmem:[%s1145 + $0x590] sm:$0xff]
        %v1380 = vld [vmem:[%s1145 + $0x598] sm:$0xff]
        %v1381 = vld [vmem:[%s1145 + $0x5a0] sm:$0xff]
        %v1382 = vld [vmem:[%s1145 + $0x5a8] sm:$0xff]
        %v1383 = vld [vmem:[%s1145 + $0x5b0] sm:$0xff]
        %v1384 = vld [vmem:[%s1145 + $0x5b8] sm:$0xff]
        %v1385 = vld [vmem:[%s1145 + $0x5c0] sm:$0xff]
        %v1386 = vld [vmem:[%s1145 + $0x5c8] sm:$0xff]
        %v1387 = vld [vmem:[%s1145 + $0x5d0] sm:$0xff]
        %v1388 = vld [vmem:[%s1145 + $0x5d8] sm:$0xff]
        %v1389 = vld [vmem:[%s1145 + $0x5e0] sm:$0xff]
        %v1390 = vld [vmem:[%s1145 + $0x5e8] sm:$0xff]
        %v1391 = vld [vmem:[%s1145 + $0x5f0] sm:$0xff]
        %v1392 = vld [vmem:[%s1145 + $0x5f8] sm:$0xff]
        %v1393 = vld [vmem:[%s1145 + $0x600] sm:$0xff]
        %v1394 = vld [vmem:[%s1145 + $0x608] sm:$0xff]
        %v1395 = vld [vmem:[%s1145 + $0x610] sm:$0xff]
        %v1396 = vld [vmem:[%s1145 + $0x618] sm:$0xff]
        %v1397 = vld [vmem:[%s1145 + $0x620] sm:$0xff]
        %v1398 = vld [vmem:[%s1145 + $0x628] sm:$0xff]
        %v1399 = vld [vmem:[%s1145 + $0x630] sm:$0xff]
        %v1400 = vld [vmem:[%s1145 + $0x638] sm:$0xff]
        %v1401 = vld [vmem:[%s1145 + $0x640] sm:$0xff]
        %v1402 = vld [vmem:[%s1145 + $0x648] sm:$0xff]
        %v1403 = vld [vmem:[%s1145 + $0x650] sm:$0xff]
        %v1404 = vld [vmem:[%s1145 + $0x658] sm:$0xff]
        %v1405 = vld [vmem:[%s1145 + $0x660] sm:$0xff]
        %v1406 = vld [vmem:[%s1145 + $0x668] sm:$0xff]
        %v1407 = vld [vmem:[%s1145 + $0x670] sm:$0xff]
        %v1408 = vld [vmem:[%s1145 + $0x678] sm:$0xff]
        %v1409 = vld [vmem:[%s1145 + $0x680] sm:$0xff]
        %v1410 = vld [vmem:[%s1145 + $0x688] sm:$0xff]
        %v1411 = vld [vmem:[%s1145 + $0x690] sm:$0xff]
        %v1412 = vld [vmem:[%s1145 + $0x698] sm:$0xff]
        %v1413 = vld [vmem:[%s1145 + $0x6a0] sm:$0xff]
        %v1414 = vld [vmem:[%s1145 + $0x6a8] sm:$0xff]
        %v1415 = vld [vmem:[%s1145 + $0x6b0] sm:$0xff]
        %v1416 = vld [vmem:[%s1145 + $0x6b8] sm:$0xff]
        %v1417 = vld [vmem:[%s1145 + $0x6c0] sm:$0xff]
        %v1418 = vld [vmem:[%s1145 + $0x6c8] sm:$0xff]
        %v1419 = vld [vmem:[%s1145 + $0x6d0] sm:$0xff]
        %v1420 = vld [vmem:[%s1145 + $0x6d8] sm:$0xff]
        %v1421 = vld [vmem:[%s1145 + $0x6e0] sm:$0xff]
        %v1422 = vld [vmem:[%s1145 + $0x6e8] sm:$0xff]
        %v1423 = vld [vmem:[%s1145 + $0x6f0] sm:$0xff]
        %v1424 = vld [vmem:[%s1145 + $0x6f8] sm:$0xff]
        %v1425 = vld [vmem:[%s1145 + $0x700] sm:$0xff]
        %v1426 = vld [vmem:[%s1145 + $0x708] sm:$0xff]
        %v1427 = vld [vmem:[%s1145 + $0x710] sm:$0xff]
        %v1428 = vld [vmem:[%s1145 + $0x718] sm:$0xff]
        %v1429 = vld [vmem:[%s1145 + $0x720] sm:$0xff]
        %v1430 = vld [vmem:[%s1145 + $0x728] sm:$0xff]
        %v1431 = vld [vmem:[%s1145 + $0x730] sm:$0xff]
        %v1432 = vld [vmem:[%s1145 + $0x738] sm:$0xff]
        %v1433 = vld [vmem:[%s1145 + $0x740] sm:$0xff]
        %v1434 = vld [vmem:[%s1145 + $0x748] sm:$0xff]
        %v1435 = vld [vmem:[%s1145 + $0x750] sm:$0xff]
        %v1436 = vld [vmem:[%s1145 + $0x758] sm:$0xff]
        %v1437 = vld [vmem:[%s1145 + $0x760] sm:$0xff]
        %v1438 = vld [vmem:[%s1145 + $0x768] sm:$0xff]
        %v1439 = vld [vmem:[%s1145 + $0x770] sm:$0xff]
        %v1440 = vld [vmem:[%s1145 + $0x778] sm:$0xff]
        %v1441 = vld [vmem:[%s1145 + $0x780] sm:$0xff]
        %v1442 = vld [vmem:[%s1145 + $0x788] sm:$0xff]
        %v1443 = vld [vmem:[%s1145 + $0x790] sm:$0xff]
        %v1444 = vld [vmem:[%s1145 + $0x798] sm:$0xff]
        %v1445 = vld [vmem:[%s1145 + $0x7a0] sm:$0xff]
        %v1446 = vld [vmem:[%s1145 + $0x7a8] sm:$0xff]
        %v1447 = vld [vmem:[%s1145 + $0x7b0] sm:$0xff]
        %v1448 = vld [vmem:[%s1145 + $0x7b8] sm:$0xff]
        %v1449 = vld [vmem:[%s1145 + $0x7c0] sm:$0xff]
        %v1450 = vld [vmem:[%s1145 + $0x7c8] sm:$0xff]
        %v1451 = vld [vmem:[%s1145 + $0x7d0] sm:$0xff]
        %v1452 = vld [vmem:[%s1145 + $0x7d8] sm:$0xff]
        %v1453 = vld [vmem:[%s1145 + $0x7e0] sm:$0xff]
        %v1454 = vld [vmem:[%s1145 + $0x7e8] sm:$0xff]
        %v1455 = vld [vmem:[%s1145 + $0x7f0] sm:$0xff]
        %v1456 = vld [vmem:[%s1145 + $0x7f8] sm:$0xff]
        %v1457 = vld [vmem:[%s1145 + $0x800] sm:$0xff]
        %v1458 = vld [vmem:[%s1145 + $0x808] sm:$0xff]
        %v1459 = vld [vmem:[%s1145 + $0x810] sm:$0xff]
        %v1460 = vld [vmem:[%s1145 + $0x818] sm:$0xff]
        %v1461 = vld [vmem:[%s1145 + $0x820] sm:$0xff]
        %v1462 = vld [vmem:[%s1145 + $0x828] sm:$0xff]
        %v1463 = vld [vmem:[%s1145 + $0x830] sm:$0xff]
        %v1464 = vld [vmem:[%s1145 + $0x838] sm:$0xff]
        %v1465 = vld [vmem:[%s1145 + $0x840] sm:$0xff]
        %v1466 = vld [vmem:[%s1145 + $0x848] sm:$0xff]
        %v1467 = vld [vmem:[%s1145 + $0x850] sm:$0xff]
        %v1468 = vld [vmem:[%s1145 + $0x858] sm:$0xff]
        %v1469 = vld [vmem:[%s1145 + $0x860] sm:$0xff]
        %v1470 = vld [vmem:[%s1145 + $0x868] sm:$0xff]
        %v1471 = vld [vmem:[%s1145 + $0x870] sm:$0xff]
        %v1472 = vld [vmem:[%s1145 + $0x878] sm:$0xff]
        %v1473 = vld [vmem:[%s1145 + $0x880] sm:$0xff]
        %v1474 = vld [vmem:[%s1145 + $0x888] sm:$0xff]
        %v1475 = vld [vmem:[%s1145 + $0x890] sm:$0xff]
        %v1476 = vld [vmem:[%s1145 + $0x898] sm:$0xff]
        %v1477 = vld [vmem:[%s1145 + $0x8a0] sm:$0xff]
        %v1478 = vld [vmem:[%s1145 + $0x8a8] sm:$0xff]
        %v1479 = vld [vmem:[%s1145 + $0x8b0] sm:$0xff]
        %v1480 = vld [vmem:[%s1145 + $0x8b8] sm:$0xff]
        %v1481 = vld [vmem:[%s1145 + $0x8c0] sm:$0xff]
        %v1482 = vld [vmem:[%s1145 + $0x8c8] sm:$0xff]
        %v1483 = vld [vmem:[%s1145 + $0x8d0] sm:$0xff]
        %v1484 = vld [vmem:[%s1145 + $0x8d8] sm:$0xff]
        %v1485 = vld [vmem:[%s1145 + $0x8e0] sm:$0xff]
        %v1486 = vld [vmem:[%s1145 + $0x8e8] sm:$0xff]
        %v1487 = vld [vmem:[%s1145 + $0x8f0] sm:$0xff]
        %v1488 = vld [vmem:[%s1145 + $0x8f8] sm:$0xff]
        %v1489 = vld [vmem:[%s1145 + $0x900] sm:$0xff]
        %v1490 = vld [vmem:[%s1145 + $0x908] sm:$0xff]
        %v1491 = vld [vmem:[%s1145 + $0x910] sm:$0xff]
        %v1492 = vld [vmem:[%s1145 + $0x918] sm:$0xff]
        %v1493 = vld [vmem:[%s1145 + $0x920] sm:$0xff]
        %v1494 = vld [vmem:[%s1145 + $0x928] sm:$0xff]
        %v1495 = vld [vmem:[%s1145 + $0x930] sm:$0xff]
        %v1496 = vld [vmem:[%s1145 + $0x938] sm:$0xff]
        %v1497 = vld [vmem:[%s1145 + $0x940] sm:$0xff]
        %v1498 = vld [vmem:[%s1145 + $0x948] sm:$0xff]
        %v1499 = vld [vmem:[%s1145 + $0x950] sm:$0xff]
        %v1500 = vld [vmem:[%s1145 + $0x958] sm:$0xff]
        %v1501 = vld [vmem:[%s1145 + $0x960] sm:$0xff]
        %v1502 = vld [vmem:[%s1145 + $0x968] sm:$0xff]
        %v1503 = vld [vmem:[%s1145 + $0x970] sm:$0xff]
        %v1504 = vld [vmem:[%s1145 + $0x978] sm:$0xff]
        %v1505 = vld [vmem:[%s1145 + $0x980] sm:$0xff]
        %v1506 = vld [vmem:[%s1145 + $0x988] sm:$0xff]
        %v1507 = vld [vmem:[%s1145 + $0x990] sm:$0xff]
        %v1508 = vld [vmem:[%s1145 + $0x998] sm:$0xff]
        %v1509 = vld [vmem:[%s1145 + $0x9a0] sm:$0xff]
        %v1510 = vld [vmem:[%s1145 + $0x9a8] sm:$0xff]
        %v1511 = vld [vmem:[%s1145 + $0x9b0] sm:$0xff]
        %v1512 = vld [vmem:[%s1145 + $0x9b8] sm:$0xff]
        %v1513 = vld [vmem:[%s1145 + $0x9c0] sm:$0xff]
        %v1514 = vld [vmem:[%s1145 + $0x9c8] sm:$0xff]
        %v1515 = vld [vmem:[%s1145 + $0x9d0] sm:$0xff]
        %v1516 = vld [vmem:[%s1145 + $0x9d8] sm:$0xff]
        %v1517 = vld [vmem:[%s1145 + $0x9e0] sm:$0xff]
        %v1518 = vld [vmem:[%s1145 + $0x9e8] sm:$0xff]
        %v1519 = vld [vmem:[%s1145 + $0x9f0] sm:$0xff]
        %v1520 = vld [vmem:[%s1145 + $0x9f8] sm:$0xff]
        %v1521 = vld [vmem:[%s1145 + $0xa00] sm:$0xff]
        %v1522 = vld [vmem:[%s1145 + $0xa08] sm:$0xff]
        %v1523 = vld [vmem:[%s1145 + $0xa10] sm:$0xff]
        %v1524 = vld [vmem:[%s1145 + $0xa18] sm:$0xff]
        %v1525 = vld [vmem:[%s1145 + $0xa20] sm:$0xff]
        %v1526 = vld [vmem:[%s1145 + $0xa28] sm:$0xff]
        %v1527 = vld [vmem:[%s1145 + $0xa30] sm:$0xff]
        %v1528 = vld [vmem:[%s1145 + $0xa38] sm:$0xff]
        %v1529 = vld [vmem:[%s1145 + $0xa40] sm:$0xff]
        %v1530 = vld [vmem:[%s1145 + $0xa48] sm:$0xff]
        %v1531 = vld [vmem:[%s1145 + $0xa50] sm:$0xff]
        %v1532 = vld [vmem:[%s1145 + $0xa58] sm:$0xff]
        %v1533 = vld [vmem:[%s1145 + $0xa60] sm:$0xff]
        %v1534 = vld [vmem:[%s1145 + $0xa68] sm:$0xff]
        %v1535 = vld [vmem:[%s1145 + $0xa70] sm:$0xff]
        %v1536 = vld [vmem:[%s1145 + $0xa78] sm:$0xff]
        %v1537 = vld [vmem:[%s1145 + $0xa80] sm:$0xff]
        %v1538 = vld [vmem:[%s1145 + $0xa88] sm:$0xff]
        %v1539 = vld [vmem:[%s1145 + $0xa90] sm:$0xff]
        %v1540 = vld [vmem:[%s1145 + $0xa98] sm:$0xff]
        %v1541 = vld [vmem:[%s1145 + $0xaa0] sm:$0xff]
        %v1542 = vld [vmem:[%s1145 + $0xaa8] sm:$0xff]
        %v1543 = vld [vmem:[%s1145 + $0xab0] sm:$0xff]
        %v1544 = vld [vmem:[%s1145 + $0xab8] sm:$0xff]
        %v1545 = vld [vmem:[%s1145 + $0xac0] sm:$0xff]
        %v1546 = vld [vmem:[%s1145 + $0xac8] sm:$0xff]
        %v1547 = vld [vmem:[%s1145 + $0xad0] sm:$0xff]
        %v1548 = vld [vmem:[%s1145 + $0xad8] sm:$0xff]
        %v1549 = vld [vmem:[%s1145 + $0xae0] sm:$0xff]
        %v1550 = vld [vmem:[%s1145 + $0xae8] sm:$0xff]
        %v1551 = vld [vmem:[%s1145 + $0xaf0] sm:$0xff]
        %v1552 = vld [vmem:[%s1145 + $0xaf8] sm:$0xff]
        %v1553 = vld [vmem:[%s1145 + $0xb00] sm:$0xff]
        %v1554 = vld [vmem:[%s1145 + $0xb08] sm:$0xff]
        %v1555 = vld [vmem:[%s1145 + $0xb10] sm:$0xff]
        %v1556 = vld [vmem:[%s1145 + $0xb18] sm:$0xff]
        %v1557 = vld [vmem:[%s1145 + $0xb20] sm:$0xff]
        %v1558 = vld [vmem:[%s1145 + $0xb28] sm:$0xff]
        %v1559 = vld [vmem:[%s1145 + $0xb30] sm:$0xff]
        %v1560 = vld [vmem:[%s1145 + $0xb38] sm:$0xff]
        %v1561 = vld [vmem:[%s1145 + $0xb40] sm:$0xff]
        %v1562 = vld [vmem:[%s1145 + $0xb48] sm:$0xff]
        %v1563 = vld [vmem:[%s1145 + $0xb50] sm:$0xff]
        %v1564 = vld [vmem:[%s1145 + $0xb58] sm:$0xff]
        %v1565 = vld [vmem:[%s1145 + $0xb60] sm:$0xff]
        %v1566 = vld [vmem:[%s1145 + $0xb68] sm:$0xff]
        %v1567 = vld [vmem:[%s1145 + $0xb70] sm:$0xff]
        %v1568 = vld [vmem:[%s1145 + $0xb78] sm:$0xff]
        %v1569 = vld [vmem:[%s1145 + $0xb80] sm:$0xff]
        %v1570 = vld [vmem:[%s1145 + $0xb88] sm:$0xff]
        %v1571 = vld [vmem:[%s1145 + $0xb90] sm:$0xff]
        %v1572 = vld [vmem:[%s1145 + $0xb98] sm:$0xff]
        %v1573 = vld [vmem:[%s1145 + $0xba0] sm:$0xff]
        %v1574 = vld [vmem:[%s1145 + $0xba8] sm:$0xff]
        %v1575 = vld [vmem:[%s1145 + $0xbb0] sm:$0xff]
        %v1576 = vld [vmem:[%s1145 + $0xbb8] sm:$0xff]
        %v1577 = vld [vmem:[%s1145 + $0xbc0] sm:$0xff]
        %v1578 = vld [vmem:[%s1145 + $0xbc8] sm:$0xff]
        %v1579 = vld [vmem:[%s1145 + $0xbd0] sm:$0xff]
        %v1580 = vld [vmem:[%s1145 + $0xbd8] sm:$0xff]
        %v1581 = vld [vmem:[%s1145 + $0xbe0] sm:$0xff]
        %v1582 = vld [vmem:[%s1145 + $0xbe8] sm:$0xff]
        %v1583 = vld [vmem:[%s1145 + $0xbf0] sm:$0xff]
        %v1584 = vld [vmem:[%s1145 + $0xbf8] sm:$0xff]
        %v1585 = vld [vmem:[%s1145 + $0xc00] sm:$0xff]
        %v1586 = vld [vmem:[%s1145 + $0xc08] sm:$0xff]
        %v1587 = vld [vmem:[%s1145 + $0xc10] sm:$0xff]
        %v1588 = vld [vmem:[%s1145 + $0xc18] sm:$0xff]
        %v1589 = vld [vmem:[%s1145 + $0xc20] sm:$0xff]
        %v1590 = vld [vmem:[%s1145 + $0xc28] sm:$0xff]
        %v1591 = vld [vmem:[%s1145 + $0xc30] sm:$0xff]
        %v1592 = vld [vmem:[%s1145 + $0xc38] sm:$0xff]
        %v1593 = vld [vmem:[%s1145 + $0xc40] sm:$0xff]
        %v1594 = vld [vmem:[%s1145 + $0xc48] sm:$0xff]
        %v1595 = vld [vmem:[%s1145 + $0xc50] sm:$0xff]
        %v1596 = vld [vmem:[%s1145 + $0xc58] sm:$0xff]
        %v1597 = vld [vmem:[%s1145 + $0xc60] sm:$0xff]
        %v1598 = vld [vmem:[%s1145 + $0xc68] sm:$0xff]
        %v1599 = vld [vmem:[%s1145 + $0xc70] sm:$0xff]
        %v1600 = vld [vmem:[%s1145 + $0xc78] sm:$0xff]
        %v1601 = vld [vmem:[%s1145 + $0xc80] sm:$0xff]
        %v1602 = vld [vmem:[%s1145 + $0xc88] sm:$0xff]
        %v1603 = vld [vmem:[%s1145 + $0xc90] sm:$0xff]
        %v1604 = vld [vmem:[%s1145 + $0xc98] sm:$0xff]
        %v1605 = vld [vmem:[%s1145 + $0xca0] sm:$0xff]
        %v1606 = vld [vmem:[%s1145 + $0xca8] sm:$0xff]
        %v1607 = vld [vmem:[%s1145 + $0xcb0] sm:$0xff]
        %v1608 = vld [vmem:[%s1145 + $0xcb8] sm:$0xff]
        %v1609 = vld [vmem:[%s1145 + $0xcc0] sm:$0xff]
        %v1610 = vld [vmem:[%s1145 + $0xcc8] sm:$0xff]
        %v1611 = vld [vmem:[%s1145 + $0xcd0] sm:$0xff]
        %v1612 = vld [vmem:[%s1145 + $0xcd8] sm:$0xff]
        %v1613 = vld [vmem:[%s1145 + $0xce0] sm:$0xff]
        %v1614 = vld [vmem:[%s1145 + $0xce8] sm:$0xff]
        %v1615 = vld [vmem:[%s1145 + $0xcf0] sm:$0xff]
        %v1616 = vld [vmem:[%s1145 + $0xcf8] sm:$0xff]
        %v1617 = vld [vmem:[%s1145 + $0xd00] sm:$0xff]
        %v1618 = vld [vmem:[%s1145 + $0xd08] sm:$0xff]
        %v1619 = vld [vmem:[%s1145 + $0xd10] sm:$0xff]
        %v1620 = vld [vmem:[%s1145 + $0xd18] sm:$0xff]
        %v1621 = vld [vmem:[%s1145 + $0xd20] sm:$0xff]
        %v1622 = vld [vmem:[%s1145 + $0xd28] sm:$0xff]
        %v1623 = vld [vmem:[%s1145 + $0xd30] sm:$0xff]
        %v1624 = vld [vmem:[%s1145 + $0xd38] sm:$0xff]
        %v1625 = vld [vmem:[%s1145 + $0xd40] sm:$0xff]
        %v1626 = vld [vmem:[%s1145 + $0xd48] sm:$0xff]
        %v1627 = vld [vmem:[%s1145 + $0xd50] sm:$0xff]
        %v1628 = vld [vmem:[%s1145 + $0xd58] sm:$0xff]
        %v1629 = vld [vmem:[%s1145 + $0xd60] sm:$0xff]
        %v1630 = vld [vmem:[%s1145 + $0xd68] sm:$0xff]
        %v1631 = vld [vmem:[%s1145 + $0xd70] sm:$0xff]
        %v1632 = vld [vmem:[%s1145 + $0xd78] sm:$0xff]
        %v1633 = vld [vmem:[%s1183] sm:$0xf]
        %v1635 = vlaneseq
        %v1636 = vshrl.u32 %v1635, 7
        %v1637 = vsub.s32 0, %v1636
        %v1638 = vrot.slane %v1633, %v1637
        %v1639 = vlaneseq
        %v1640 = vshrl.u32 %v1639, 7
        %v1641 = vsub.s32 1, %v1640
        %v1642 = vrot.slane %v1633, %v1641
        %v1643 = vlaneseq
        %v1644 = vshrl.u32 %v1643, 7
        %v1645 = vsub.s32 2, %v1644
        %v1646 = vrot.slane %v1633, %v1645
        %v1647 = vlaneseq
        %v1648 = vshrl.u32 %v1647, 7
        %v1649 = vsub.s32 3, %v1648
        %v1650 = vrot.slane %v1633, %v1649
        %v1657 = vcombine.high %v1199, %v1199
        %v1659 = vunpack.c.l.s4 1966171168
        %v1660 = vunpack.c.0.s8 %v1659
        %v1661 = vlaneseq
        %v1662 = vshrl.u32 %v1661, 7
        %v1663 = vsub.s32 %v1660, %v1662
        %v1664 = vrot.slane %v1199, %v1663
        %v1666 = vunpack.c.l.s4 1966171168
        %v1667 = vunpack.c.0.s8 %v1666
        %v1668 = vlaneseq
        %v1669 = vshrl.u32 %v1668, 7
        %v1670 = vsub.s32 %v1667, %v1669
        %v1671 = vrot.slane %v1657, %v1670
        %v1672 = vcombine.high %v1664, %v1664
        %v1673 = vcombine.high %v1671, %v1671
        %v1675 = vunpack.c.l.s4 1966171168
        %v1676 = vunpack.c.0.s8 %v1675
        %v1677 = vlaneseq
        %v1678 = vshrl.u32 %v1677, 7
        %v1679 = vsub.s32 %v1676, %v1678
        %v1680 = vrot.slane %v1664, %v1679
        %v1682 = vunpack.c.l.s4 1966171168
        %v1683 = vunpack.c.0.s8 %v1682
        %v1684 = vlaneseq
        %v1685 = vshrl.u32 %v1684, 7
        %v1686 = vsub.s32 %v1683, %v1685
        %v1687 = vrot.slane %v1671, %v1686
        %v1689 = vunpack.c.l.s4 1966171168
        %v1690 = vunpack.c.0.s8 %v1689
        %v1691 = vlaneseq
        %v1692 = vshrl.u32 %v1691, 7
        %v1693 = vsub.s32 %v1690, %v1692
        %v1694 = vrot.slane %v1672, %v1693
        %v1696 = vunpack.c.l.s4 1966171168
        %v1697 = vunpack.c.0.s8 %v1696
        %v1698 = vlaneseq
        %v1699 = vshrl.u32 %v1698, 7
        %v1700 = vsub.s32 %v1697, %v1699
        %v1701 = vrot.slane %v1673, %v1700
        %v1702 = vcombine.high %v1680, %v1680
        %v1703 = vcombine.high %v1687, %v1687
        %v1704 = vcombine.high %v1694, %v1694
        %v1705 = vcombine.high %v1701, %v1701
        %v1706 = vcombine.high %v1200, %v1200
        %v1708 = vunpack.c.l.s4 1966171168
        %v1709 = vunpack.c.0.s8 %v1708
        %v1710 = vlaneseq
        %v1711 = vshrl.u32 %v1710, 7
        %v1712 = vsub.s32 %v1709, %v1711
        %v1713 = vrot.slane %v1200, %v1712
        %v1715 = vunpack.c.l.s4 1966171168
        %v1716 = vunpack.c.0.s8 %v1715
        %v1717 = vlaneseq
        %v1718 = vshrl.u32 %v1717, 7
        %v1719 = vsub.s32 %v1716, %v1718
        %v1720 = vrot.slane %v1706, %v1719
        %v1721 = vcombine.high %v1713, %v1713
        %v1722 = vcombine.high %v1720, %v1720
        %v1724 = vunpack.c.l.s4 1966171168
        %v1725 = vunpack.c.0.s8 %v1724
        %v1726 = vlaneseq
        %v1727 = vshrl.u32 %v1726, 7
        %v1728 = vsub.s32 %v1725, %v1727
        %v1729 = vrot.slane %v1713, %v1728
        %v1731 = vunpack.c.l.s4 1966171168
        %v1732 = vunpack.c.0.s8 %v1731
        %v1733 = vlaneseq
        %v1734 = vshrl.u32 %v1733, 7
        %v1735 = vsub.s32 %v1732, %v1734
        %v1736 = vrot.slane %v1720, %v1735
        %v1738 = vunpack.c.l.s4 1966171168
        %v1739 = vunpack.c.0.s8 %v1738
        %v1740 = vlaneseq
        %v1741 = vshrl.u32 %v1740, 7
        %v1742 = vsub.s32 %v1739, %v1741
        %v1743 = vrot.slane %v1721, %v1742
        %v1745 = vunpack.c.l.s4 1966171168
        %v1746 = vunpack.c.0.s8 %v1745
        %v1747 = vlaneseq
        %v1748 = vshrl.u32 %v1747, 7
        %v1749 = vsub.s32 %v1746, %v1748
        %v1750 = vrot.slane %v1722, %v1749
        %v1751 = vcombine.high %v1729, %v1729
        %v1752 = vcombine.high %v1743, %v1743
        %v2198 = vunpack.c.l.b16 %v1201
        %v2199 = vunpack.c.h.b16 %v1201
        %v2200 = vunpack.c.l.b16 %v1202
        %v2201 = vunpack.c.h.b16 %v1202
        %v2202 = vunpack.c.l.b16 %v1203
        %v2203 = vunpack.c.h.b16 %v1203
        %v2204 = vunpack.c.l.b16 %v1204
        %v2205 = vunpack.c.h.b16 %v1204
        %v2206 = vunpack.c.l.b16 %v1205
        %v2207 = vunpack.c.h.b16 %v1205
        %v2208 = vunpack.c.l.b16 %v1206
        %v2209 = vunpack.c.h.b16 %v1206
        %v2210 = vunpack.c.l.b16 %v1207
        %v2211 = vunpack.c.h.b16 %v1207
        %v2212 = vunpack.c.l.b16 %v1208
        %v2213 = vunpack.c.h.b16 %v1208
        %v2214 = vunpack.c.l.b16 %v1209
        %v2215 = vunpack.c.h.b16 %v1209
        %v2216 = vunpack.c.l.b16 %v1210
        %v2217 = vunpack.c.h.b16 %v1210
        %v2218 = vunpack.c.l.b16 %v1211
        %v2219 = vunpack.c.h.b16 %v1211
        %v2220 = vunpack.c.l.b16 %v1212
        %v2221 = vunpack.c.h.b16 %v1212
        %v2222 = vunpack.c.l.b16 %v1213
        %v2223 = vunpack.c.h.b16 %v1213
        %v2224 = vunpack.c.l.b16 %v1214
        %v2225 = vunpack.c.h.b16 %v1214
        %v2226 = vunpack.c.l.b16 %v1215
        %v2227 = vunpack.c.h.b16 %v1215
        %v2228 = vunpack.c.l.b16 %v1216
        %v2229 = vunpack.c.h.b16 %v1216
        %v2230 = vunpack.c.l.b16 %v1217
        %v2231 = vunpack.c.h.b16 %v1217
        %v2232 = vunpack.c.l.b16 %v1218
        %v2233 = vunpack.c.h.b16 %v1218
        %v2234 = vunpack.c.l.b16 %v1219
        %v2235 = vunpack.c.h.b16 %v1219
        %v2236 = vunpack.c.l.b16 %v1220
        %v2237 = vunpack.c.h.b16 %v1220
        %v2238 = vunpack.c.l.b16 %v1221
        %v2239 = vunpack.c.h.b16 %v1221
        %v2240 = vunpack.c.l.b16 %v1222
        %v2241 = vunpack.c.h.b16 %v1222
        %v2242 = vunpack.c.l.b16 %v1223
        %v2243 = vunpack.c.h.b16 %v1223
        %v2244 = vunpack.c.l.b16 %v1224
        %v2245 = vunpack.c.h.b16 %v1224
        %v2246 = vunpack.c.l.b16 %v1225
        %v2247 = vunpack.c.h.b16 %v1225
        %v2248 = vunpack.c.l.b16 %v1226
        %v2249 = vunpack.c.h.b16 %v1226
        %v2250 = vunpack.c.l.b16 %v1227
        %v2251 = vunpack.c.h.b16 %v1227
        %v2252 = vunpack.c.l.b16 %v1228
        %v2253 = vunpack.c.h.b16 %v1228
        %v2254 = vunpack.c.l.b16 %v1229
        %v2255 = vunpack.c.h.b16 %v1229
        %v2256 = vunpack.c.l.b16 %v1230
        %v2257 = vunpack.c.h.b16 %v1230
        %v2258 = vunpack.c.l.b16 %v1231
        %v2259 = vunpack.c.h.b16 %v1231
        %v2260 = vunpack.c.l.b16 %v1232
        %v2261 = vunpack.c.h.b16 %v1232
        %v2262 = vunpack.c.l.b16 %v1233
        %v2263 = vunpack.c.h.b16 %v1233
        %v2264 = vunpack.c.l.b16 %v1234
        %v2265 = vunpack.c.h.b16 %v1234
        %v2266 = vunpack.c.l.b16 %v1235
        %v2267 = vunpack.c.h.b16 %v1235
        %v2268 = vunpack.c.l.b16 %v1236
        %v2269 = vunpack.c.h.b16 %v1236
        %v2270 = vunpack.c.l.b16 %v1237
        %v2271 = vunpack.c.h.b16 %v1237
        %v2272 = vunpack.c.l.b16 %v1238
        %v2273 = vunpack.c.h.b16 %v1238
        %v2274 = vunpack.c.l.b16 %v1239
        %v2275 = vunpack.c.h.b16 %v1239
        %v2276 = vunpack.c.l.b16 %v1240
        %v2277 = vunpack.c.h.b16 %v1240
        %v2278 = vunpack.c.l.b16 %v1241
        %v2279 = vunpack.c.h.b16 %v1241
        %v2280 = vunpack.c.l.b16 %v1242
        %v2281 = vunpack.c.h.b16 %v1242
        %v2282 = vunpack.c.l.b16 %v1243
        %v2283 = vunpack.c.h.b16 %v1243
        %v2284 = vunpack.c.l.b16 %v1244
        %v2285 = vunpack.c.h.b16 %v1244
        %v2286 = vunpack.c.l.b16 %v1245
        %v2287 = vunpack.c.h.b16 %v1245
        %v2288 = vunpack.c.l.b16 %v1246
        %v2289 = vunpack.c.h.b16 %v1246
        %v2290 = vunpack.c.l.b16 %v1247
        %v2291 = vunpack.c.h.b16 %v1247
        %v2292 = vunpack.c.l.b16 %v1248
        %v2293 = vunpack.c.h.b16 %v1248
        %v2294 = vunpack.c.l.b16 %v1249
        %v2295 = vunpack.c.h.b16 %v1249
        %v2296 = vunpack.c.l.b16 %v1250
        %v2297 = vunpack.c.h.b16 %v1250
        %v2298 = vunpack.c.l.b16 %v1251
        %v2299 = vunpack.c.h.b16 %v1251
        %v2300 = vunpack.c.l.b16 %v1252
        %v2301 = vunpack.c.h.b16 %v1252
        %v2302 = vunpack.c.l.b16 %v1253
        %v2303 = vunpack.c.h.b16 %v1253
        %v2304 = vunpack.c.l.b16 %v1254
        %v2305 = vunpack.c.h.b16 %v1254
        %v2306 = vunpack.c.l.b16 %v1255
        %v2307 = vunpack.c.h.b16 %v1255
        %v2308 = vunpack.c.l.b16 %v1256
        %v2309 = vunpack.c.h.b16 %v1256
        %v2310 = vunpack.c.l.b16 %v1257
        %v2311 = vunpack.c.h.b16 %v1257
        %v2312 = vunpack.c.l.b16 %v1258
        %v2313 = vunpack.c.h.b16 %v1258
        %v2314 = vunpack.c.l.b16 %v1259
        %v2315 = vunpack.c.h.b16 %v1259
        %v2316 = vunpack.c.l.b16 %v1260
        %v2317 = vunpack.c.h.b16 %v1260
        %v2318 = vunpack.c.l.b16 %v1261
        %v2319 = vunpack.c.h.b16 %v1261
        %v2320 = vunpack.c.l.b16 %v1262
        %v2321 = vunpack.c.h.b16 %v1262
        %v2322 = vunpack.c.l.b16 %v1263
        %v2323 = vunpack.c.h.b16 %v1263
        %v2324 = vunpack.c.l.b16 %v1264
        %v2325 = vunpack.c.h.b16 %v1264
        %v2326 = vunpack.c.l.b16 %v1265
        %v2327 = vunpack.c.h.b16 %v1265
        %v2328 = vunpack.c.l.b16 %v1266
        %v2329 = vunpack.c.h.b16 %v1266
        %v2330 = vunpack.c.l.b16 %v1267
        %v2331 = vunpack.c.h.b16 %v1267
        %v2332 = vunpack.c.l.b16 %v1268
        %v2333 = vunpack.c.h.b16 %v1268
        %v2334 = vunpack.c.l.b16 %v1269
        %v2335 = vunpack.c.h.b16 %v1269
        %v2336 = vunpack.c.l.b16 %v1270
        %v2337 = vunpack.c.h.b16 %v1270
        %v2338 = vunpack.c.l.b16 %v1271
        %v2339 = vunpack.c.h.b16 %v1271
        %v2340 = vunpack.c.l.b16 %v1272
        %v2341 = vunpack.c.h.b16 %v1272
        %v2342 = vunpack.c.l.b16 %v1273
        %v2343 = vunpack.c.h.b16 %v1273
        %v2344 = vunpack.c.l.b16 %v1274
        %v2345 = vunpack.c.h.b16 %v1274
        %v2346 = vunpack.c.l.b16 %v1275
        %v2347 = vunpack.c.h.b16 %v1275
        %v2348 = vunpack.c.l.b16 %v1276
        %v2349 = vunpack.c.h.b16 %v1276
        %v2350 = vunpack.c.l.b16 %v1277
        %v2351 = vunpack.c.h.b16 %v1277
        %v2352 = vunpack.c.l.b16 %v1278
        %v2353 = vunpack.c.h.b16 %v1278
        %v2354 = vunpack.c.l.b16 %v1279
        %v2355 = vunpack.c.h.b16 %v1279
        %v2356 = vunpack.c.l.b16 %v1280
        %v2357 = vunpack.c.h.b16 %v1280
        %v2358 = vunpack.c.l.b16 %v1281
        %v2359 = vunpack.c.h.b16 %v1281
        %v2360 = vunpack.c.l.b16 %v1282
        %v2361 = vunpack.c.h.b16 %v1282
        %v2362 = vunpack.c.l.b16 %v1283
        %v2363 = vunpack.c.h.b16 %v1283
        %v2364 = vunpack.c.l.b16 %v1284
        %v2365 = vunpack.c.h.b16 %v1284
        %v2366 = vunpack.c.l.b16 %v1285
        %v2367 = vunpack.c.h.b16 %v1285
        %v2368 = vunpack.c.l.b16 %v1286
        %v2369 = vunpack.c.h.b16 %v1286
        %v2370 = vunpack.c.l.b16 %v1287
        %v2371 = vunpack.c.h.b16 %v1287
        %v2372 = vunpack.c.l.b16 %v1288
        %v2373 = vunpack.c.h.b16 %v1288
        %v2374 = vunpack.c.l.b16 %v1289
        %v2375 = vunpack.c.h.b16 %v1289
        %v2376 = vunpack.c.l.b16 %v1290
        %v2377 = vunpack.c.h.b16 %v1290
        %v2378 = vunpack.c.l.b16 %v1291
        %v2379 = vunpack.c.h.b16 %v1291
        %v2380 = vunpack.c.l.b16 %v1292
        %v2381 = vunpack.c.h.b16 %v1292
        %v2382 = vunpack.c.l.b16 %v1293
        %v2383 = vunpack.c.h.b16 %v1293
        %v2384 = vunpack.c.l.b16 %v1294
        %v2385 = vunpack.c.h.b16 %v1294
        %v2386 = vunpack.c.l.b16 %v1295
        %v2387 = vunpack.c.h.b16 %v1295
        %v2388 = vunpack.c.l.b16 %v1296
        %v2389 = vunpack.c.h.b16 %v1296
        %v2390 = vunpack.c.l.b16 %v1297
        %v2391 = vunpack.c.h.b16 %v1297
        %v2392 = vunpack.c.l.b16 %v1298
        %v2393 = vunpack.c.h.b16 %v1298
        %v2394 = vunpack.c.l.b16 %v1299
        %v2395 = vunpack.c.h.b16 %v1299
        %v2396 = vunpack.c.l.b16 %v1300
        %v2397 = vunpack.c.h.b16 %v1300
        %v2398 = vunpack.c.l.b16 %v1301
        %v2399 = vunpack.c.h.b16 %v1301
        %v2400 = vunpack.c.l.b16 %v1302
        %v2401 = vunpack.c.h.b16 %v1302
        %v2402 = vunpack.c.l.b16 %v1303
        %v2403 = vunpack.c.h.b16 %v1303
        %v2404 = vunpack.c.l.b16 %v1304
        %v2405 = vunpack.c.h.b16 %v1304
        %v2406 = vunpack.c.l.b16 %v1305
        %v2407 = vunpack.c.h.b16 %v1305
        %v2408 = vunpack.c.l.b16 %v1306
        %v2409 = vunpack.c.h.b16 %v1306
        %v2410 = vunpack.c.l.b16 %v1307
        %v2411 = vunpack.c.h.b16 %v1307
        %v2412 = vunpack.c.l.b16 %v1308
        %v2413 = vunpack.c.h.b16 %v1308
        %v2414 = vunpack.c.l.b16 %v1309
        %v2415 = vunpack.c.h.b16 %v1309
        %v2416 = vunpack.c.l.b16 %v1310
        %v2417 = vunpack.c.h.b16 %v1310
        %v2418 = vunpack.c.l.b16 %v1311
        %v2419 = vunpack.c.h.b16 %v1311
        %v2420 = vunpack.c.l.b16 %v1312
        %v2421 = vunpack.c.h.b16 %v1312
        %v2422 = vunpack.c.l.b16 %v1313
        %v2423 = vunpack.c.h.b16 %v1313
        %v2424 = vunpack.c.l.b16 %v1314
        %v2425 = vunpack.c.h.b16 %v1314
        %v2426 = vunpack.c.l.b16 %v1315
        %v2427 = vunpack.c.h.b16 %v1315
        %v2428 = vunpack.c.l.b16 %v1316
        %v2429 = vunpack.c.h.b16 %v1316
        %v2430 = vunpack.c.l.b16 %v1317
        %v2431 = vunpack.c.h.b16 %v1317
        %v2432 = vunpack.c.l.b16 %v1318
        %v2433 = vunpack.c.h.b16 %v1318
        %v2434 = vunpack.c.l.b16 %v1319
        %v2435 = vunpack.c.h.b16 %v1319
        %v2436 = vunpack.c.l.b16 %v1320
        %v2437 = vunpack.c.h.b16 %v1320
        %v2438 = vunpack.c.l.b16 %v1321
        %v2439 = vunpack.c.h.b16 %v1321
        %v2440 = vunpack.c.l.b16 %v1322
        %v2441 = vunpack.c.h.b16 %v1322
        %v2442 = vunpack.c.l.b16 %v1323
        %v2443 = vunpack.c.h.b16 %v1323
        %v2444 = vunpack.c.l.b16 %v1324
        %v2445 = vunpack.c.h.b16 %v1324
        %v2446 = vunpack.c.l.b16 %v1325
        %v2447 = vunpack.c.h.b16 %v1325
        %v2448 = vunpack.c.l.b16 %v1326
        %v2449 = vunpack.c.h.b16 %v1326
        %v2450 = vunpack.c.l.b16 %v1327
        %v2451 = vunpack.c.h.b16 %v1327
        %v2452 = vunpack.c.l.b16 %v1328
        %v2453 = vunpack.c.h.b16 %v1328
        %v2454 = vunpack.c.l.b16 %v1329
        %v2455 = vunpack.c.h.b16 %v1329
        %v2456 = vunpack.c.l.b16 %v1330
        %v2457 = vunpack.c.h.b16 %v1330
        %v2458 = vunpack.c.l.b16 %v1331
        %v2459 = vunpack.c.h.b16 %v1331
        %v2460 = vunpack.c.l.b16 %v1332
        %v2461 = vunpack.c.h.b16 %v1332
        %v2462 = vunpack.c.l.b16 %v1333
        %v2463 = vunpack.c.h.b16 %v1333
        %v2464 = vunpack.c.l.b16 %v1334
        %v2465 = vunpack.c.h.b16 %v1334
        %v2466 = vunpack.c.l.b16 %v1335
        %v2467 = vunpack.c.h.b16 %v1335
        %v2468 = vunpack.c.l.b16 %v1336
        %v2469 = vunpack.c.h.b16 %v1336
        %v2470 = vunpack.c.l.b16 %v1337
        %v2471 = vunpack.c.h.b16 %v1337
        %v2472 = vunpack.c.l.b16 %v1338
        %v2473 = vunpack.c.h.b16 %v1338
        %v2474 = vunpack.c.l.b16 %v1339
        %v2475 = vunpack.c.h.b16 %v1339
        %v2476 = vunpack.c.l.b16 %v1340
        %v2477 = vunpack.c.h.b16 %v1340
        %v2478 = vunpack.c.l.b16 %v1341
        %v2479 = vunpack.c.h.b16 %v1341
        %v2480 = vunpack.c.l.b16 %v1342
        %v2481 = vunpack.c.h.b16 %v1342
        %v2482 = vunpack.c.l.b16 %v1343
        %v2483 = vunpack.c.h.b16 %v1343
        %v2484 = vunpack.c.l.b16 %v1344
        %v2485 = vunpack.c.h.b16 %v1344
        %v2486 = vunpack.c.l.b16 %v1345
        %v2487 = vunpack.c.h.b16 %v1345
        %v2488 = vunpack.c.l.b16 %v1346
        %v2489 = vunpack.c.h.b16 %v1346
        %v2490 = vunpack.c.l.b16 %v1347
        %v2491 = vunpack.c.h.b16 %v1347
        %v2492 = vunpack.c.l.b16 %v1348
        %v2493 = vunpack.c.h.b16 %v1348
        %v2494 = vunpack.c.l.b16 %v1349
        %v2495 = vunpack.c.h.b16 %v1349
        %v2496 = vunpack.c.l.b16 %v1350
        %v2497 = vunpack.c.h.b16 %v1350
        %v2498 = vunpack.c.l.b16 %v1351
        %v2499 = vunpack.c.h.b16 %v1351
        %v2500 = vunpack.c.l.b16 %v1352
        %v2501 = vunpack.c.h.b16 %v1352
        %v2502 = vunpack.c.l.b16 %v1353
        %v2503 = vunpack.c.h.b16 %v1353
        %v2504 = vunpack.c.l.b16 %v1354
        %v2505 = vunpack.c.h.b16 %v1354
        %v2506 = vunpack.c.l.b16 %v1355
        %v2507 = vunpack.c.h.b16 %v1355
        %v2508 = vunpack.c.l.b16 %v1356
        %v2509 = vunpack.c.h.b16 %v1356
        %v2510 = vunpack.c.l.b16 %v1357
        %v2511 = vunpack.c.h.b16 %v1357
        %v2512 = vunpack.c.l.b16 %v1358
        %v2513 = vunpack.c.h.b16 %v1358
        %v2514 = vunpack.c.l.b16 %v1359
        %v2515 = vunpack.c.h.b16 %v1359
        %v2516 = vunpack.c.l.b16 %v1360
        %v2517 = vunpack.c.h.b16 %v1360
        %v2518 = vunpack.c.l.b16 %v1361
        %v2519 = vunpack.c.h.b16 %v1361
        %v2520 = vunpack.c.l.b16 %v1362
        %v2521 = vunpack.c.h.b16 %v1362
        %v2522 = vunpack.c.l.b16 %v1363
        %v2523 = vunpack.c.h.b16 %v1363
        %v2524 = vunpack.c.l.b16 %v1364
        %v2525 = vunpack.c.h.b16 %v1364
        %v2526 = vunpack.c.l.b16 %v1365
        %v2527 = vunpack.c.h.b16 %v1365
        %v2528 = vunpack.c.l.b16 %v1366
        %v2529 = vunpack.c.h.b16 %v1366
        %v2530 = vunpack.c.l.b16 %v1367
        %v2531 = vunpack.c.h.b16 %v1367
        %v2532 = vunpack.c.l.b16 %v1368
        %v2533 = vunpack.c.h.b16 %v1368
        %v2534 = vunpack.c.l.b16 %v1369
        %v2535 = vunpack.c.h.b16 %v1369
        %v2536 = vunpack.c.l.b16 %v1370
        %v2537 = vunpack.c.h.b16 %v1370
        %v2538 = vunpack.c.l.b16 %v1371
        %v2539 = vunpack.c.h.b16 %v1371
        %v2540 = vunpack.c.l.b16 %v1372
        %v2541 = vunpack.c.h.b16 %v1372
        %v2542 = vunpack.c.l.b16 %v1373
        %v2543 = vunpack.c.h.b16 %v1373
        %v2544 = vunpack.c.l.b16 %v1374
        %v2545 = vunpack.c.h.b16 %v1374
        %v2546 = vunpack.c.l.b16 %v1375
        %v2547 = vunpack.c.h.b16 %v1375
        %v2548 = vunpack.c.l.b16 %v1376
        %v2549 = vunpack.c.h.b16 %v1376
        %v2550 = vunpack.c.l.b16 %v1377
        %v2551 = vunpack.c.h.b16 %v1377
        %v2552 = vunpack.c.l.b16 %v1378
        %v2553 = vunpack.c.h.b16 %v1378
        %v2554 = vunpack.c.l.b16 %v1379
        %v2555 = vunpack.c.h.b16 %v1379
        %v2556 = vunpack.c.l.b16 %v1380
        %v2557 = vunpack.c.h.b16 %v1380
        %v2558 = vunpack.c.l.b16 %v1381
        %v2559 = vunpack.c.h.b16 %v1381
        %v2560 = vunpack.c.l.b16 %v1382
        %v2561 = vunpack.c.h.b16 %v1382
        %v2562 = vunpack.c.l.b16 %v1383
        %v2563 = vunpack.c.h.b16 %v1383
        %v2564 = vunpack.c.l.b16 %v1384
        %v2565 = vunpack.c.h.b16 %v1384
        %v2566 = vunpack.c.l.b16 %v1385
        %v2567 = vunpack.c.h.b16 %v1385
        %v2568 = vunpack.c.l.b16 %v1386
        %v2569 = vunpack.c.h.b16 %v1386
        %v2570 = vunpack.c.l.b16 %v1387
        %v2571 = vunpack.c.h.b16 %v1387
        %v2572 = vunpack.c.l.b16 %v1388
        %v2573 = vunpack.c.h.b16 %v1388
        %v2574 = vunpack.c.l.b16 %v1389
        %v2575 = vunpack.c.h.b16 %v1389
        %v2576 = vunpack.c.l.b16 %v1390
        %v2577 = vunpack.c.h.b16 %v1390
        %v2578 = vunpack.c.l.b16 %v1391
        %v2579 = vunpack.c.h.b16 %v1391
        %v2580 = vunpack.c.l.b16 %v1392
        %v2581 = vunpack.c.h.b16 %v1392
        %v2582 = vunpack.c.l.b16 %v1393
        %v2583 = vunpack.c.h.b16 %v1393
        %v2584 = vunpack.c.l.b16 %v1394
        %v2585 = vunpack.c.h.b16 %v1394
        %v2586 = vunpack.c.l.b16 %v1395
        %v2587 = vunpack.c.h.b16 %v1395
        %v2588 = vunpack.c.l.b16 %v1396
        %v2589 = vunpack.c.h.b16 %v1396
        %v2590 = vunpack.c.l.b16 %v1397
        %v2591 = vunpack.c.h.b16 %v1397
        %v2592 = vunpack.c.l.b16 %v1398
        %v2593 = vunpack.c.h.b16 %v1398
        %v2594 = vunpack.c.l.b16 %v1399
        %v2595 = vunpack.c.h.b16 %v1399
        %v2596 = vunpack.c.l.b16 %v1400
        %v2597 = vunpack.c.h.b16 %v1400
        %v2598 = vunpack.c.l.b16 %v1401
        %v2599 = vunpack.c.h.b16 %v1401
        %v2600 = vunpack.c.l.b16 %v1402
        %v2601 = vunpack.c.h.b16 %v1402
        %v2602 = vunpack.c.l.b16 %v1403
        %v2603 = vunpack.c.h.b16 %v1403
        %v2604 = vunpack.c.l.b16 %v1404
        %v2605 = vunpack.c.h.b16 %v1404
        %v2606 = vunpack.c.l.b16 %v1405
        %v2607 = vunpack.c.h.b16 %v1405
        %v2608 = vunpack.c.l.b16 %v1406
        %v2609 = vunpack.c.h.b16 %v1406
        %v2610 = vunpack.c.l.b16 %v1407
        %v2611 = vunpack.c.h.b16 %v1407
        %v2612 = vunpack.c.l.b16 %v1408
        %v2613 = vunpack.c.h.b16 %v1408
        %v2614 = vunpack.c.l.b16 %v1409
        %v2615 = vunpack.c.h.b16 %v1409
        %v2616 = vunpack.c.l.b16 %v1410
        %v2617 = vunpack.c.h.b16 %v1410
        %v2618 = vunpack.c.l.b16 %v1411
        %v2619 = vunpack.c.h.b16 %v1411
        %v2620 = vunpack.c.l.b16 %v1412
        %v2621 = vunpack.c.h.b16 %v1412
        %v2622 = vunpack.c.l.b16 %v1413
        %v2623 = vunpack.c.h.b16 %v1413
        %v2624 = vunpack.c.l.b16 %v1414
        %v2625 = vunpack.c.h.b16 %v1414
        %v2626 = vunpack.c.l.b16 %v1415
        %v2627 = vunpack.c.h.b16 %v1415
        %v2628 = vunpack.c.l.b16 %v1416
        %v2629 = vunpack.c.h.b16 %v1416
        %v2630 = vunpack.c.l.b16 %v1417
        %v2631 = vunpack.c.h.b16 %v1417
        %v2632 = vunpack.c.l.b16 %v1418
        %v2633 = vunpack.c.h.b16 %v1418
        %v2634 = vunpack.c.l.b16 %v1419
        %v2635 = vunpack.c.h.b16 %v1419
        %v2636 = vunpack.c.l.b16 %v1420
        %v2637 = vunpack.c.h.b16 %v1420
        %v2638 = vunpack.c.l.b16 %v1421
        %v2639 = vunpack.c.h.b16 %v1421
        %v2640 = vunpack.c.l.b16 %v1422
        %v2641 = vunpack.c.h.b16 %v1422
        %v2642 = vunpack.c.l.b16 %v1423
        %v2643 = vunpack.c.h.b16 %v1423
        %v2644 = vunpack.c.l.b16 %v1424
        %v2645 = vunpack.c.h.b16 %v1424
        %v2646 = vunpack.c.l.b16 %v1425
        %v2647 = vunpack.c.h.b16 %v1425
        %v2648 = vunpack.c.l.b16 %v1426
        %v2649 = vunpack.c.h.b16 %v1426
        %v2650 = vunpack.c.l.b16 %v1427
        %v2651 = vunpack.c.h.b16 %v1427
        %v2652 = vunpack.c.l.b16 %v1428
        %v2653 = vunpack.c.h.b16 %v1428
        %v2654 = vunpack.c.l.b16 %v1429
        %v2655 = vunpack.c.h.b16 %v1429
        %v2656 = vunpack.c.l.b16 %v1430
        %v2657 = vunpack.c.h.b16 %v1430
        %v2658 = vunpack.c.l.b16 %v1431
        %v2659 = vunpack.c.h.b16 %v1431
        %v2660 = vunpack.c.l.b16 %v1432
        %v2661 = vunpack.c.h.b16 %v1432
        %v2662 = vunpack.c.l.b16 %v1433
        %v2663 = vunpack.c.h.b16 %v1433
        %v2664 = vunpack.c.l.b16 %v1434
        %v2665 = vunpack.c.h.b16 %v1434
        %v2666 = vunpack.c.l.b16 %v1435
        %v2667 = vunpack.c.h.b16 %v1435
        %v2668 = vunpack.c.l.b16 %v1436
        %v2669 = vunpack.c.h.b16 %v1436
        %v2670 = vunpack.c.l.b16 %v1437
        %v2671 = vunpack.c.h.b16 %v1437
        %v2672 = vunpack.c.l.b16 %v1438
        %v2673 = vunpack.c.h.b16 %v1438
        %v2674 = vunpack.c.l.b16 %v1439
        %v2675 = vunpack.c.h.b16 %v1439
        %v2676 = vunpack.c.l.b16 %v1440
        %v2677 = vunpack.c.h.b16 %v1440
        %v2678 = vunpack.c.l.b16 %v1441
        %v2679 = vunpack.c.h.b16 %v1441
        %v2680 = vunpack.c.l.b16 %v1442
        %v2681 = vunpack.c.h.b16 %v1442
        %v2682 = vunpack.c.l.b16 %v1443
        %v2683 = vunpack.c.h.b16 %v1443
        %v2684 = vunpack.c.l.b16 %v1444
        %v2685 = vunpack.c.h.b16 %v1444
        %v2686 = vunpack.c.l.b16 %v1445
        %v2687 = vunpack.c.h.b16 %v1445
        %v2688 = vunpack.c.l.b16 %v1446
        %v2689 = vunpack.c.h.b16 %v1446
        %v2690 = vunpack.c.l.b16 %v1447
        %v2691 = vunpack.c.h.b16 %v1447
        %v2692 = vunpack.c.l.b16 %v1448
        %v2693 = vunpack.c.h.b16 %v1448
        %v2694 = vunpack.c.l.b16 %v1449
        %v2695 = vunpack.c.h.b16 %v1449
        %v2696 = vunpack.c.l.b16 %v1450
        %v2697 = vunpack.c.h.b16 %v1450
        %v2698 = vunpack.c.l.b16 %v1451
        %v2699 = vunpack.c.h.b16 %v1451
        %v2700 = vunpack.c.l.b16 %v1452
        %v2701 = vunpack.c.h.b16 %v1452
        %v2702 = vunpack.c.l.b16 %v1453
        %v2703 = vunpack.c.h.b16 %v1453
        %v2704 = vunpack.c.l.b16 %v1454
        %v2705 = vunpack.c.h.b16 %v1454
        %v2706 = vunpack.c.l.b16 %v1455
        %v2707 = vunpack.c.h.b16 %v1455
        %v2708 = vunpack.c.l.b16 %v1456
        %v2709 = vunpack.c.h.b16 %v1456
        %v2710 = vunpack.c.l.b16 %v1457
        %v2711 = vunpack.c.h.b16 %v1457
        %v2712 = vunpack.c.l.b16 %v1458
        %v2713 = vunpack.c.h.b16 %v1458
        %v2714 = vunpack.c.l.b16 %v1459
        %v2715 = vunpack.c.h.b16 %v1459
        %v2716 = vunpack.c.l.b16 %v1460
        %v2717 = vunpack.c.h.b16 %v1460
        %v2718 = vunpack.c.l.b16 %v1461
        %v2719 = vunpack.c.h.b16 %v1461
        %v2720 = vunpack.c.l.b16 %v1462
        %v2721 = vunpack.c.h.b16 %v1462
        %v2722 = vunpack.c.l.b16 %v1463
        %v2723 = vunpack.c.h.b16 %v1463
        %v2724 = vunpack.c.l.b16 %v1464
        %v2725 = vunpack.c.h.b16 %v1464
        %v2726 = vunpack.c.l.b16 %v1465
        %v2727 = vunpack.c.h.b16 %v1465
        %v2728 = vunpack.c.l.b16 %v1466
        %v2729 = vunpack.c.h.b16 %v1466
        %v2730 = vunpack.c.l.b16 %v1467
        %v2731 = vunpack.c.h.b16 %v1467
        %v2732 = vunpack.c.l.b16 %v1468
        %v2733 = vunpack.c.h.b16 %v1468
        %v2734 = vunpack.c.l.b16 %v1469
        %v2735 = vunpack.c.h.b16 %v1469
        %v2736 = vunpack.c.l.b16 %v1470
        %v2737 = vunpack.c.h.b16 %v1470
        %v2738 = vunpack.c.l.b16 %v1471
        %v2739 = vunpack.c.h.b16 %v1471
        %v2740 = vunpack.c.l.b16 %v1472
        %v2741 = vunpack.c.h.b16 %v1472
        %v2742 = vunpack.c.l.b16 %v1473
        %v2743 = vunpack.c.h.b16 %v1473
        %v2744 = vunpack.c.l.b16 %v1474
        %v2745 = vunpack.c.h.b16 %v1474
        %v2746 = vunpack.c.l.b16 %v1475
        %v2747 = vunpack.c.h.b16 %v1475
        %v2748 = vunpack.c.l.b16 %v1476
        %v2749 = vunpack.c.h.b16 %v1476
        %v2750 = vunpack.c.l.b16 %v1477
        %v2751 = vunpack.c.h.b16 %v1477
        %v2752 = vunpack.c.l.b16 %v1478
        %v2753 = vunpack.c.h.b16 %v1478
        %v2754 = vunpack.c.l.b16 %v1479
        %v2755 = vunpack.c.h.b16 %v1479
        %v2756 = vunpack.c.l.b16 %v1480
        %v2757 = vunpack.c.h.b16 %v1480
        %v2758 = vunpack.c.l.b16 %v1481
        %v2759 = vunpack.c.h.b16 %v1481
        %v2760 = vunpack.c.l.b16 %v1482
        %v2761 = vunpack.c.h.b16 %v1482
        %v2762 = vunpack.c.l.b16 %v1483
        %v2763 = vunpack.c.h.b16 %v1483
        %v2764 = vunpack.c.l.b16 %v1484
        %v2765 = vunpack.c.h.b16 %v1484
        %v2766 = vunpack.c.l.b16 %v1485
        %v2767 = vunpack.c.h.b16 %v1485
        %v2768 = vunpack.c.l.b16 %v1486
        %v2769 = vunpack.c.h.b16 %v1486
        %v2770 = vunpack.c.l.b16 %v1487
        %v2771 = vunpack.c.h.b16 %v1487
        %v2772 = vunpack.c.l.b16 %v1488
        %v2773 = vunpack.c.h.b16 %v1488
        %v2774 = vunpack.c.l.b16 %v1489
        %v2775 = vunpack.c.h.b16 %v1489
        %v2776 = vunpack.c.l.b16 %v1490
        %v2777 = vunpack.c.h.b16 %v1490
        %v2778 = vunpack.c.l.b16 %v1491
        %v2779 = vunpack.c.h.b16 %v1491
        %v2780 = vunpack.c.l.b16 %v1492
        %v2781 = vunpack.c.h.b16 %v1492
        %v2782 = vunpack.c.l.b16 %v1493
        %v2783 = vunpack.c.h.b16 %v1493
        %v2784 = vunpack.c.l.b16 %v1494
        %v2785 = vunpack.c.h.b16 %v1494
        %v2786 = vunpack.c.l.b16 %v1495
        %v2787 = vunpack.c.h.b16 %v1495
        %v2788 = vunpack.c.l.b16 %v1496
        %v2789 = vunpack.c.h.b16 %v1496
        %v2790 = vunpack.c.l.b16 %v1497
        %v2791 = vunpack.c.h.b16 %v1497
        %v2792 = vunpack.c.l.b16 %v1498
        %v2793 = vunpack.c.h.b16 %v1498
        %v2794 = vunpack.c.l.b16 %v1499
        %v2795 = vunpack.c.h.b16 %v1499
        %v2796 = vunpack.c.l.b16 %v1500
        %v2797 = vunpack.c.h.b16 %v1500
        %v2798 = vunpack.c.l.b16 %v1501
        %v2799 = vunpack.c.h.b16 %v1501
        %v2800 = vunpack.c.l.b16 %v1502
        %v2801 = vunpack.c.h.b16 %v1502
        %v2802 = vunpack.c.l.b16 %v1503
        %v2803 = vunpack.c.h.b16 %v1503
        %v2804 = vunpack.c.l.b16 %v1504
        %v2805 = vunpack.c.h.b16 %v1504
        %v2806 = vunpack.c.l.b16 %v1505
        %v2807 = vunpack.c.h.b16 %v1505
        %v2808 = vunpack.c.l.b16 %v1506
        %v2809 = vunpack.c.h.b16 %v1506
        %v2810 = vunpack.c.l.b16 %v1507
        %v2811 = vunpack.c.h.b16 %v1507
        %v2812 = vunpack.c.l.b16 %v1508
        %v2813 = vunpack.c.h.b16 %v1508
        %v2814 = vunpack.c.l.b16 %v1509
        %v2815 = vunpack.c.h.b16 %v1509
        %v2816 = vunpack.c.l.b16 %v1510
        %v2817 = vunpack.c.h.b16 %v1510
        %v2818 = vunpack.c.l.b16 %v1511
        %v2819 = vunpack.c.h.b16 %v1511
        %v2820 = vunpack.c.l.b16 %v1512
        %v2821 = vunpack.c.h.b16 %v1512
        %v2822 = vunpack.c.l.b16 %v1513
        %v2823 = vunpack.c.h.b16 %v1513
        %v2824 = vunpack.c.l.b16 %v1514
        %v2825 = vunpack.c.h.b16 %v1514
        %v2826 = vunpack.c.l.b16 %v1515
        %v2827 = vunpack.c.h.b16 %v1515
        %v2828 = vunpack.c.l.b16 %v1516
        %v2829 = vunpack.c.h.b16 %v1516
        %v2830 = vunpack.c.l.b16 %v1517
        %v2831 = vunpack.c.h.b16 %v1517
        %v2832 = vunpack.c.l.b16 %v1518
        %v2833 = vunpack.c.h.b16 %v1518
        %v2834 = vunpack.c.l.b16 %v1519
        %v2835 = vunpack.c.h.b16 %v1519
        %v2836 = vunpack.c.l.b16 %v1520
        %v2837 = vunpack.c.h.b16 %v1520
        %v2838 = vunpack.c.l.b16 %v1521
        %v2839 = vunpack.c.h.b16 %v1521
        %v2840 = vunpack.c.l.b16 %v1522
        %v2841 = vunpack.c.h.b16 %v1522
        %v2842 = vunpack.c.l.b16 %v1523
        %v2843 = vunpack.c.h.b16 %v1523
        %v2844 = vunpack.c.l.b16 %v1524
        %v2845 = vunpack.c.h.b16 %v1524
        %v2846 = vunpack.c.l.b16 %v1525
        %v2847 = vunpack.c.h.b16 %v1525
        %v2848 = vunpack.c.l.b16 %v1526
        %v2849 = vunpack.c.h.b16 %v1526
        %v2850 = vunpack.c.l.b16 %v1527
        %v2851 = vunpack.c.h.b16 %v1527
        %v2852 = vunpack.c.l.b16 %v1528
        %v2853 = vunpack.c.h.b16 %v1528
        %v2854 = vunpack.c.l.b16 %v1529
        %v2855 = vunpack.c.h.b16 %v1529
        %v2856 = vunpack.c.l.b16 %v1530
        %v2857 = vunpack.c.h.b16 %v1530
        %v2858 = vunpack.c.l.b16 %v1531
        %v2859 = vunpack.c.h.b16 %v1531
        %v2860 = vunpack.c.l.b16 %v1532
        %v2861 = vunpack.c.h.b16 %v1532
        %v2862 = vunpack.c.l.b16 %v1533
        %v2863 = vunpack.c.h.b16 %v1533
        %v2864 = vunpack.c.l.b16 %v1534
        %v2865 = vunpack.c.h.b16 %v1534
        %v2866 = vunpack.c.l.b16 %v1535
        %v2867 = vunpack.c.h.b16 %v1535
        %v2868 = vunpack.c.l.b16 %v1536
        %v2869 = vunpack.c.h.b16 %v1536
        %v2870 = vunpack.c.l.b16 %v1537
        %v2871 = vunpack.c.h.b16 %v1537
        %v2872 = vunpack.c.l.b16 %v1538
        %v2873 = vunpack.c.h.b16 %v1538
        %v2874 = vunpack.c.l.b16 %v1539
        %v2875 = vunpack.c.h.b16 %v1539
        %v2876 = vunpack.c.l.b16 %v1540
        %v2877 = vunpack.c.h.b16 %v1540
        %v2878 = vunpack.c.l.b16 %v1541
        %v2879 = vunpack.c.h.b16 %v1541
        %v2880 = vunpack.c.l.b16 %v1542
        %v2881 = vunpack.c.h.b16 %v1542
        %v2882 = vunpack.c.l.b16 %v1543
        %v2883 = vunpack.c.h.b16 %v1543
        %v2884 = vunpack.c.l.b16 %v1544
        %v2885 = vunpack.c.h.b16 %v1544
        %v2886 = vunpack.c.l.b16 %v1545
        %v2887 = vunpack.c.h.b16 %v1545
        %v2888 = vunpack.c.l.b16 %v1546
        %v2889 = vunpack.c.h.b16 %v1546
        %v2890 = vunpack.c.l.b16 %v1547
        %v2891 = vunpack.c.h.b16 %v1547
        %v2892 = vunpack.c.l.b16 %v1548
        %v2893 = vunpack.c.h.b16 %v1548
        %v2894 = vunpack.c.l.b16 %v1549
        %v2895 = vunpack.c.h.b16 %v1549
        %v2896 = vunpack.c.l.b16 %v1550
        %v2897 = vunpack.c.h.b16 %v1550
        %v2898 = vunpack.c.l.b16 %v1551
        %v2899 = vunpack.c.h.b16 %v1551
        %v2900 = vunpack.c.l.b16 %v1552
        %v2901 = vunpack.c.h.b16 %v1552
        %v2902 = vunpack.c.l.b16 %v1553
        %v2903 = vunpack.c.h.b16 %v1553
        %v2904 = vunpack.c.l.b16 %v1554
        %v2905 = vunpack.c.h.b16 %v1554
        %v2906 = vunpack.c.l.b16 %v1555
        %v2907 = vunpack.c.h.b16 %v1555
        %v2908 = vunpack.c.l.b16 %v1556
        %v2909 = vunpack.c.h.b16 %v1556
        %v2910 = vunpack.c.l.b16 %v1557
        %v2911 = vunpack.c.h.b16 %v1557
        %v2912 = vunpack.c.l.b16 %v1558
        %v2913 = vunpack.c.h.b16 %v1558
        %v2914 = vunpack.c.l.b16 %v1559
        %v2915 = vunpack.c.h.b16 %v1559
        %v2916 = vunpack.c.l.b16 %v1560
        %v2917 = vunpack.c.h.b16 %v1560
        %v2918 = vunpack.c.l.b16 %v1561
        %v2919 = vunpack.c.h.b16 %v1561
        %v2920 = vunpack.c.l.b16 %v1562
        %v2921 = vunpack.c.h.b16 %v1562
        %v2922 = vunpack.c.l.b16 %v1563
        %v2923 = vunpack.c.h.b16 %v1563
        %v2924 = vunpack.c.l.b16 %v1564
        %v2925 = vunpack.c.h.b16 %v1564
        %v2926 = vunpack.c.l.b16 %v1565
        %v2927 = vunpack.c.h.b16 %v1565
        %v2928 = vunpack.c.l.b16 %v1566
        %v2929 = vunpack.c.h.b16 %v1566
        %v2930 = vunpack.c.l.b16 %v1567
        %v2931 = vunpack.c.h.b16 %v1567
        %v2932 = vunpack.c.l.b16 %v1568
        %v2933 = vunpack.c.h.b16 %v1568
        %v2934 = vunpack.c.l.b16 %v1569
        %v2935 = vunpack.c.h.b16 %v1569
        %v2936 = vunpack.c.l.b16 %v1570
        %v2937 = vunpack.c.h.b16 %v1570
        %v2938 = vunpack.c.l.b16 %v1571
        %v2939 = vunpack.c.h.b16 %v1571
        %v2940 = vunpack.c.l.b16 %v1572
        %v2941 = vunpack.c.h.b16 %v1572
        %v2942 = vunpack.c.l.b16 %v1573
        %v2943 = vunpack.c.h.b16 %v1573
        %v2944 = vunpack.c.l.b16 %v1574
        %v2945 = vunpack.c.h.b16 %v1574
        %v2946 = vunpack.c.l.b16 %v1575
        %v2947 = vunpack.c.h.b16 %v1575
        %v2948 = vunpack.c.l.b16 %v1576
        %v2949 = vunpack.c.h.b16 %v1576
        %v2950 = vunpack.c.l.b16 %v1577
        %v2951 = vunpack.c.h.b16 %v1577
        %v2952 = vunpack.c.l.b16 %v1578
        %v2953 = vunpack.c.h.b16 %v1578
        %v2954 = vunpack.c.l.b16 %v1579
        %v2955 = vunpack.c.h.b16 %v1579
        %v2956 = vunpack.c.l.b16 %v1580
        %v2957 = vunpack.c.h.b16 %v1580
        %v2958 = vunpack.c.l.b16 %v1581
        %v2959 = vunpack.c.h.b16 %v1581
        %v2960 = vunpack.c.l.b16 %v1582
        %v2961 = vunpack.c.h.b16 %v1582
        %v2962 = vunpack.c.l.b16 %v1583
        %v2963 = vunpack.c.h.b16 %v1583
        %v2964 = vunpack.c.l.b16 %v1584
        %v2965 = vunpack.c.h.b16 %v1584
        %v2966 = vunpack.c.l.b16 %v1585
        %v2967 = vunpack.c.h.b16 %v1585
        %v2968 = vunpack.c.l.b16 %v1586
        %v2969 = vunpack.c.h.b16 %v1586
        %v2970 = vunpack.c.l.b16 %v1587
        %v2971 = vunpack.c.h.b16 %v1587
        %v2972 = vunpack.c.l.b16 %v1588
        %v2973 = vunpack.c.h.b16 %v1588
        %v2974 = vunpack.c.l.b16 %v1589
        %v2975 = vunpack.c.h.b16 %v1589
        %v2976 = vunpack.c.l.b16 %v1590
        %v2977 = vunpack.c.h.b16 %v1590
        %v2978 = vunpack.c.l.b16 %v1591
        %v2979 = vunpack.c.h.b16 %v1591
        %v2980 = vunpack.c.l.b16 %v1592
        %v2981 = vunpack.c.h.b16 %v1592
        %v2982 = vunpack.c.l.b16 %v1593
        %v2983 = vunpack.c.h.b16 %v1593
        %v2984 = vunpack.c.l.b16 %v1594
        %v2985 = vunpack.c.h.b16 %v1594
        %v2986 = vunpack.c.l.b16 %v1595
        %v2987 = vunpack.c.h.b16 %v1595
        %v2988 = vunpack.c.l.b16 %v1596
        %v2989 = vunpack.c.h.b16 %v1596
        %v2990 = vunpack.c.l.b16 %v1597
        %v2991 = vunpack.c.h.b16 %v1597
        %v2992 = vunpack.c.l.b16 %v1598
        %v2993 = vunpack.c.h.b16 %v1598
        %v2994 = vunpack.c.l.b16 %v1599
        %v2995 = vunpack.c.h.b16 %v1599
        %v2996 = vunpack.c.l.b16 %v1600
        %v2997 = vunpack.c.h.b16 %v1600
        %v2998 = vunpack.c.l.b16 %v1601
        %v2999 = vunpack.c.h.b16 %v1601
        %v3000 = vunpack.c.l.b16 %v1602
        %v3001 = vunpack.c.h.b16 %v1602
        %v3002 = vunpack.c.l.b16 %v1603
        %v3003 = vunpack.c.h.b16 %v1603
        %v3004 = vunpack.c.l.b16 %v1604
        %v3005 = vunpack.c.h.b16 %v1604
        %v3006 = vunpack.c.l.b16 %v1605
        %v3007 = vunpack.c.h.b16 %v1605
        %v3008 = vunpack.c.l.b16 %v1606
        %v3009 = vunpack.c.h.b16 %v1606
        %v3010 = vunpack.c.l.b16 %v1607
        %v3011 = vunpack.c.h.b16 %v1607
        %v3012 = vunpack.c.l.b16 %v1608
        %v3013 = vunpack.c.h.b16 %v1608
        %v3014 = vunpack.c.l.b16 %v1609
        %v3015 = vunpack.c.h.b16 %v1609
        %v3016 = vunpack.c.l.b16 %v1610
        %v3017 = vunpack.c.h.b16 %v1610
        %v3018 = vunpack.c.l.b16 %v1611
        %v3019 = vunpack.c.h.b16 %v1611
        %v3020 = vunpack.c.l.b16 %v1612
        %v3021 = vunpack.c.h.b16 %v1612
        %v3022 = vunpack.c.l.b16 %v1613
        %v3023 = vunpack.c.h.b16 %v1613
        %v3024 = vunpack.c.l.b16 %v1614
        %v3025 = vunpack.c.h.b16 %v1614
        %v3026 = vunpack.c.l.b16 %v1615
        %v3027 = vunpack.c.h.b16 %v1615
        %v3028 = vunpack.c.l.b16 %v1616
        %v3029 = vunpack.c.h.b16 %v1616
        %v3030 = vunpack.c.l.b16 %v1617
        %v3031 = vunpack.c.h.b16 %v1617
        %v3032 = vunpack.c.l.b16 %v1618
        %v3033 = vunpack.c.h.b16 %v1618
        %v3034 = vunpack.c.l.b16 %v1619
        %v3035 = vunpack.c.h.b16 %v1619
        %v3036 = vunpack.c.l.b16 %v1620
        %v3037 = vunpack.c.h.b16 %v1620
        %v3038 = vunpack.c.l.b16 %v1621
        %v3039 = vunpack.c.h.b16 %v1621
        %v3040 = vunpack.c.l.b16 %v1622
        %v3041 = vunpack.c.h.b16 %v1622
        %v3042 = vunpack.c.l.b16 %v1623
        %v3043 = vunpack.c.h.b16 %v1623
        %v3044 = vunpack.c.l.b16 %v1624
        %v3045 = vunpack.c.h.b16 %v1624
        %v3046 = vunpack.c.l.b16 %v1625
        %v3047 = vunpack.c.h.b16 %v1625
        %v3048 = vunpack.c.l.b16 %v1626
        %v3049 = vunpack.c.h.b16 %v1626
        %v3050 = vunpack.c.l.b16 %v1627
        %v3051 = vunpack.c.h.b16 %v1627
        %v3052 = vunpack.c.l.b16 %v1628
        %v3053 = vunpack.c.h.b16 %v1628
        %v3054 = vunpack.c.l.b16 %v1629
        %v3055 = vunpack.c.h.b16 %v1629
        %v3056 = vunpack.c.l.b16 %v1630
        %v3057 = vunpack.c.h.b16 %v1630
        %v3058 = vunpack.c.l.b16 %v1631
        %v3059 = vunpack.c.h.b16 %v1631
        %v3060 = vunpack.c.l.b16 %v1632
        %v3061 = vunpack.c.h.b16 %v1632
        %v3062 = vpack.c.b16 %v2202, %v2198
        %v3063 = vpack.c.b16 %v2203, %v2199
        %v3064 = vpack.c.b16 %v2204, %v2200
        %v3065 = vpack.c.b16 %v2205, %v2201
        %v3066 = vpack.c.b16 %v2210, %v2206
        %v3067 = vpack.c.b16 %v2211, %v2207
        %v3068 = vpack.c.b16 %v2212, %v2208
        %v3069 = vpack.c.b16 %v2213, %v2209
        %v3070 = vpack.c.b16 %v2218, %v2214
        %v3071 = vpack.c.b16 %v2219, %v2215
        %v3072 = vpack.c.b16 %v2220, %v2216
        %v3073 = vpack.c.b16 %v2221, %v2217
        %v3074 = vpack.c.b16 %v2226, %v2222
        %v3075 = vpack.c.b16 %v2227, %v2223
        %v3076 = vpack.c.b16 %v2228, %v2224
        %v3077 = vpack.c.b16 %v2229, %v2225
        %v3078 = vpack.c.b16 %v2234, %v2230
        %v3079 = vpack.c.b16 %v2235, %v2231
        %v3080 = vpack.c.b16 %v2236, %v2232
        %v3081 = vpack.c.b16 %v2237, %v2233
        %v3082 = vpack.c.b16 %v2242, %v2238
        %v3083 = vpack.c.b16 %v2243, %v2239
        %v3084 = vpack.c.b16 %v2244, %v2240
        %v3085 = vpack.c.b16 %v2245, %v2241
        %v3086 = vpack.c.b16 %v2250, %v2246
        %v3087 = vpack.c.b16 %v2251, %v2247
        %v3088 = vpack.c.b16 %v2252, %v2248
        %v3089 = vpack.c.b16 %v2253, %v2249
        %v3090 = vpack.c.b16 %v2258, %v2254
        %v3091 = vpack.c.b16 %v2259, %v2255
        %v3092 = vpack.c.b16 %v2260, %v2256
        %v3093 = vpack.c.b16 %v2261, %v2257
        %v3094 = vpack.c.b16 %v2266, %v2262
        %v3095 = vpack.c.b16 %v2267, %v2263
        %v3096 = vpack.c.b16 %v2268, %v2264
        %v3097 = vpack.c.b16 %v2269, %v2265
        %v3098 = vpack.c.b16 %v2274, %v2270
        %v3099 = vpack.c.b16 %v2275, %v2271
        %v3100 = vpack.c.b16 %v2276, %v2272
        %v3101 = vpack.c.b16 %v2277, %v2273
        %v3102 = vpack.c.b16 %v2282, %v2278
        %v3103 = vpack.c.b16 %v2283, %v2279
        %v3104 = vpack.c.b16 %v2284, %v2280
        %v3105 = vpack.c.b16 %v2285, %v2281
        %v3106 = vpack.c.b16 %v2290, %v2286
        %v3107 = vpack.c.b16 %v2291, %v2287
        %v3108 = vpack.c.b16 %v2292, %v2288
        %v3109 = vpack.c.b16 %v2293, %v2289
        %v3110 = vpack.c.b16 %v2298, %v2294
        %v3111 = vpack.c.b16 %v2299, %v2295
        %v3112 = vpack.c.b16 %v2300, %v2296
        %v3113 = vpack.c.b16 %v2301, %v2297
        %v3114 = vpack.c.b16 %v2306, %v2302
        %v3115 = vpack.c.b16 %v2307, %v2303
        %v3116 = vpack.c.b16 %v2308, %v2304
        %v3117 = vpack.c.b16 %v2309, %v2305
        %v3118 = vpack.c.b16 %v2314, %v2310
        %v3119 = vpack.c.b16 %v2315, %v2311
        %v3120 = vpack.c.b16 %v2316, %v2312
        %v3121 = vpack.c.b16 %v2317, %v2313
        %v3122 = vpack.c.b16 %v2322, %v2318
        %v3123 = vpack.c.b16 %v2323, %v2319
        %v3124 = vpack.c.b16 %v2324, %v2320
        %v3125 = vpack.c.b16 %v2325, %v2321
        %v3126 = vpack.c.b16 %v2330, %v2326
        %v3127 = vpack.c.b16 %v2331, %v2327
        %v3128 = vpack.c.b16 %v2332, %v2328
        %v3129 = vpack.c.b16 %v2333, %v2329
        %v3130 = vpack.c.b16 %v2338, %v2334
        %v3131 = vpack.c.b16 %v2339, %v2335
        %v3132 = vpack.c.b16 %v2340, %v2336
        %v3133 = vpack.c.b16 %v2341, %v2337
        %v3134 = vpack.c.b16 %v2346, %v2342
        %v3135 = vpack.c.b16 %v2347, %v2343
        %v3136 = vpack.c.b16 %v2348, %v2344
        %v3137 = vpack.c.b16 %v2349, %v2345
        %v3138 = vpack.c.b16 %v2354, %v2350
        %v3139 = vpack.c.b16 %v2355, %v2351
        %v3140 = vpack.c.b16 %v2356, %v2352
        %v3141 = vpack.c.b16 %v2357, %v2353
        %v3142 = vpack.c.b16 %v2362, %v2358
        %v3143 = vpack.c.b16 %v2363, %v2359
        %v3144 = vpack.c.b16 %v2364, %v2360
        %v3145 = vpack.c.b16 %v2365, %v2361
        %v3146 = vpack.c.b16 %v2370, %v2366
        %v3147 = vpack.c.b16 %v2371, %v2367
        %v3148 = vpack.c.b16 %v2372, %v2368
        %v3149 = vpack.c.b16 %v2373, %v2369
        %v3150 = vpack.c.b16 %v2378, %v2374
        %v3151 = vpack.c.b16 %v2379, %v2375
        %v3152 = vpack.c.b16 %v2380, %v2376
        %v3153 = vpack.c.b16 %v2381, %v2377
        %v3154 = vpack.c.b16 %v2386, %v2382
        %v3155 = vpack.c.b16 %v2387, %v2383
        %v3156 = vpack.c.b16 %v2388, %v2384
        %v3157 = vpack.c.b16 %v2389, %v2385
        %v3158 = vpack.c.b16 %v2394, %v2390
        %v3159 = vpack.c.b16 %v2395, %v2391
        %v3160 = vpack.c.b16 %v2396, %v2392
        %v3161 = vpack.c.b16 %v2397, %v2393
        %v3162 = vpack.c.b16 %v2402, %v2398
        %v3163 = vpack.c.b16 %v2403, %v2399
        %v3164 = vpack.c.b16 %v2404, %v2400
        %v3165 = vpack.c.b16 %v2405, %v2401
        %v3166 = vpack.c.b16 %v2410, %v2406
        %v3167 = vpack.c.b16 %v2411, %v2407
        %v3168 = vpack.c.b16 %v2412, %v2408
        %v3169 = vpack.c.b16 %v2413, %v2409
        %v3170 = vpack.c.b16 %v2418, %v2414
        %v3171 = vpack.c.b16 %v2419, %v2415
        %v3172 = vpack.c.b16 %v2420, %v2416
        %v3173 = vpack.c.b16 %v2421, %v2417
        %v3174 = vpack.c.b16 %v2426, %v2422
        %v3175 = vpack.c.b16 %v2427, %v2423
        %v3176 = vpack.c.b16 %v2428, %v2424
        %v3177 = vpack.c.b16 %v2429, %v2425
        %v3178 = vpack.c.b16 %v2434, %v2430
        %v3179 = vpack.c.b16 %v2435, %v2431
        %v3180 = vpack.c.b16 %v2436, %v2432
        %v3181 = vpack.c.b16 %v2437, %v2433
        %v3182 = vpack.c.b16 %v2442, %v2438
        %v3183 = vpack.c.b16 %v2443, %v2439
        %v3184 = vpack.c.b16 %v2444, %v2440
        %v3185 = vpack.c.b16 %v2445, %v2441
        %v3186 = vpack.c.b16 %v2450, %v2446
        %v3187 = vpack.c.b16 %v2451, %v2447
        %v3188 = vpack.c.b16 %v2452, %v2448
        %v3189 = vpack.c.b16 %v2453, %v2449
        %v3190 = vpack.c.b16 %v2458, %v2454
        %v3191 = vpack.c.b16 %v2459, %v2455
        %v3192 = vpack.c.b16 %v2460, %v2456
        %v3193 = vpack.c.b16 %v2461, %v2457
        %v3194 = vpack.c.b16 %v2466, %v2462
        %v3195 = vpack.c.b16 %v2467, %v2463
        %v3196 = vpack.c.b16 %v2468, %v2464
        %v3197 = vpack.c.b16 %v2469, %v2465
        %v3198 = vpack.c.b16 %v2474, %v2470
        %v3199 = vpack.c.b16 %v2475, %v2471
        %v3200 = vpack.c.b16 %v2476, %v2472
        %v3201 = vpack.c.b16 %v2477, %v2473
        %v3202 = vpack.c.b16 %v2482, %v2478
        %v3203 = vpack.c.b16 %v2483, %v2479
        %v3204 = vpack.c.b16 %v2484, %v2480
        %v3205 = vpack.c.b16 %v2485, %v2481
        %v3206 = vpack.c.b16 %v2490, %v2486
        %v3207 = vpack.c.b16 %v2491, %v2487
        %v3208 = vpack.c.b16 %v2492, %v2488
        %v3209 = vpack.c.b16 %v2493, %v2489
        %v3210 = vpack.c.b16 %v2498, %v2494
        %v3211 = vpack.c.b16 %v2499, %v2495
        %v3212 = vpack.c.b16 %v2500, %v2496
        %v3213 = vpack.c.b16 %v2501, %v2497
        %v3214 = vpack.c.b16 %v2506, %v2502
        %v3215 = vpack.c.b16 %v2507, %v2503
        %v3216 = vpack.c.b16 %v2508, %v2504
        %v3217 = vpack.c.b16 %v2509, %v2505
        %v3218 = vpack.c.b16 %v2514, %v2510
        %v3219 = vpack.c.b16 %v2515, %v2511
        %v3220 = vpack.c.b16 %v2516, %v2512
        %v3221 = vpack.c.b16 %v2517, %v2513
        %v3222 = vpack.c.b16 %v2522, %v2518
        %v3223 = vpack.c.b16 %v2523, %v2519
        %v3224 = vpack.c.b16 %v2524, %v2520
        %v3225 = vpack.c.b16 %v2525, %v2521
        %v3226 = vpack.c.b16 %v2530, %v2526
        %v3227 = vpack.c.b16 %v2531, %v2527
        %v3228 = vpack.c.b16 %v2532, %v2528
        %v3229 = vpack.c.b16 %v2533, %v2529
        %v3230 = vpack.c.b16 %v2538, %v2534
        %v3231 = vpack.c.b16 %v2539, %v2535
        %v3232 = vpack.c.b16 %v2540, %v2536
        %v3233 = vpack.c.b16 %v2541, %v2537
        %v3234 = vpack.c.b16 %v2546, %v2542
        %v3235 = vpack.c.b16 %v2547, %v2543
        %v3236 = vpack.c.b16 %v2548, %v2544
        %v3237 = vpack.c.b16 %v2549, %v2545
        %v3238 = vpack.c.b16 %v2554, %v2550
        %v3239 = vpack.c.b16 %v2555, %v2551
        %v3240 = vpack.c.b16 %v2556, %v2552
        %v3241 = vpack.c.b16 %v2557, %v2553
        %v3242 = vpack.c.b16 %v2562, %v2558
        %v3243 = vpack.c.b16 %v2563, %v2559
        %v3244 = vpack.c.b16 %v2564, %v2560
        %v3245 = vpack.c.b16 %v2565, %v2561
        %v3246 = vpack.c.b16 %v2570, %v2566
        %v3247 = vpack.c.b16 %v2571, %v2567
        %v3248 = vpack.c.b16 %v2572, %v2568
        %v3249 = vpack.c.b16 %v2573, %v2569
        %v3250 = vpack.c.b16 %v2578, %v2574
        %v3251 = vpack.c.b16 %v2579, %v2575
        %v3252 = vpack.c.b16 %v2580, %v2576
        %v3253 = vpack.c.b16 %v2581, %v2577
        %v3254 = vpack.c.b16 %v2586, %v2582
        %v3255 = vpack.c.b16 %v2587, %v2583
        %v3256 = vpack.c.b16 %v2588, %v2584
        %v3257 = vpack.c.b16 %v2589, %v2585
        %v3258 = vpack.c.b16 %v2594, %v2590
        %v3259 = vpack.c.b16 %v2595, %v2591
        %v3260 = vpack.c.b16 %v2596, %v2592
        %v3261 = vpack.c.b16 %v2597, %v2593
        %v3262 = vpack.c.b16 %v2602, %v2598
        %v3263 = vpack.c.b16 %v2603, %v2599
        %v3264 = vpack.c.b16 %v2604, %v2600
        %v3265 = vpack.c.b16 %v2605, %v2601
        %v3266 = vpack.c.b16 %v2610, %v2606
        %v3267 = vpack.c.b16 %v2611, %v2607
        %v3268 = vpack.c.b16 %v2612, %v2608
        %v3269 = vpack.c.b16 %v2613, %v2609
        %v3270 = vpack.c.b16 %v2618, %v2614
        %v3271 = vpack.c.b16 %v2619, %v2615
        %v3272 = vpack.c.b16 %v2620, %v2616
        %v3273 = vpack.c.b16 %v2621, %v2617
        %v3274 = vpack.c.b16 %v2626, %v2622
        %v3275 = vpack.c.b16 %v2627, %v2623
        %v3276 = vpack.c.b16 %v2628, %v2624
        %v3277 = vpack.c.b16 %v2629, %v2625
        %v3278 = vpack.c.b16 %v2634, %v2630
        %v3279 = vpack.c.b16 %v2635, %v2631
        %v3280 = vpack.c.b16 %v2636, %v2632
        %v3281 = vpack.c.b16 %v2637, %v2633
        %v3282 = vpack.c.b16 %v2642, %v2638
        %v3283 = vpack.c.b16 %v2643, %v2639
        %v3284 = vpack.c.b16 %v2644, %v2640
        %v3285 = vpack.c.b16 %v2645, %v2641
        %v3286 = vpack.c.b16 %v2650, %v2646
        %v3287 = vpack.c.b16 %v2651, %v2647
        %v3288 = vpack.c.b16 %v2652, %v2648
        %v3289 = vpack.c.b16 %v2653, %v2649
        %v3290 = vpack.c.b16 %v2658, %v2654
        %v3291 = vpack.c.b16 %v2659, %v2655
        %v3292 = vpack.c.b16 %v2660, %v2656
        %v3293 = vpack.c.b16 %v2661, %v2657
        %v3294 = vpack.c.b16 %v2666, %v2662
        %v3295 = vpack.c.b16 %v2667, %v2663
        %v3296 = vpack.c.b16 %v2668, %v2664
        %v3297 = vpack.c.b16 %v2669, %v2665
        %v3298 = vpack.c.b16 %v2674, %v2670
        %v3299 = vpack.c.b16 %v2675, %v2671
        %v3300 = vpack.c.b16 %v2676, %v2672
        %v3301 = vpack.c.b16 %v2677, %v2673
        %v3302 = vpack.c.b16 %v2682, %v2678
        %v3303 = vpack.c.b16 %v2683, %v2679
        %v3304 = vpack.c.b16 %v2684, %v2680
        %v3305 = vpack.c.b16 %v2685, %v2681
        %v3306 = vpack.c.b16 %v2690, %v2686
        %v3307 = vpack.c.b16 %v2691, %v2687
        %v3308 = vpack.c.b16 %v2692, %v2688
        %v3309 = vpack.c.b16 %v2693, %v2689
        %v3310 = vpack.c.b16 %v2698, %v2694
        %v3311 = vpack.c.b16 %v2699, %v2695
        %v3312 = vpack.c.b16 %v2700, %v2696
        %v3313 = vpack.c.b16 %v2701, %v2697
        %v3314 = vpack.c.b16 %v2706, %v2702
        %v3315 = vpack.c.b16 %v2707, %v2703
        %v3316 = vpack.c.b16 %v2708, %v2704
        %v3317 = vpack.c.b16 %v2709, %v2705
        %v3318 = vpack.c.b16 %v2714, %v2710
        %v3319 = vpack.c.b16 %v2715, %v2711
        %v3320 = vpack.c.b16 %v2716, %v2712
        %v3321 = vpack.c.b16 %v2717, %v2713
        %v3322 = vpack.c.b16 %v2722, %v2718
        %v3323 = vpack.c.b16 %v2723, %v2719
        %v3324 = vpack.c.b16 %v2724, %v2720
        %v3325 = vpack.c.b16 %v2725, %v2721
        %v3326 = vpack.c.b16 %v2730, %v2726
        %v3327 = vpack.c.b16 %v2731, %v2727
        %v3328 = vpack.c.b16 %v2732, %v2728
        %v3329 = vpack.c.b16 %v2733, %v2729
        %v3330 = vpack.c.b16 %v2738, %v2734
        %v3331 = vpack.c.b16 %v2739, %v2735
        %v3332 = vpack.c.b16 %v2740, %v2736
        %v3333 = vpack.c.b16 %v2741, %v2737
        %v3334 = vpack.c.b16 %v2746, %v2742
        %v3335 = vpack.c.b16 %v2747, %v2743
        %v3336 = vpack.c.b16 %v2748, %v2744
        %v3337 = vpack.c.b16 %v2749, %v2745
        %v3338 = vpack.c.b16 %v2754, %v2750
        %v3339 = vpack.c.b16 %v2755, %v2751
        %v3340 = vpack.c.b16 %v2756, %v2752
        %v3341 = vpack.c.b16 %v2757, %v2753
        %v3342 = vpack.c.b16 %v2762, %v2758
        %v3343 = vpack.c.b16 %v2763, %v2759
        %v3344 = vpack.c.b16 %v2764, %v2760
        %v3345 = vpack.c.b16 %v2765, %v2761
        %v3346 = vpack.c.b16 %v2770, %v2766
        %v3347 = vpack.c.b16 %v2771, %v2767
        %v3348 = vpack.c.b16 %v2772, %v2768
        %v3349 = vpack.c.b16 %v2773, %v2769
        %v3350 = vpack.c.b16 %v2778, %v2774
        %v3351 = vpack.c.b16 %v2779, %v2775
        %v3352 = vpack.c.b16 %v2780, %v2776
        %v3353 = vpack.c.b16 %v2781, %v2777
        %v3354 = vpack.c.b16 %v2786, %v2782
        %v3355 = vpack.c.b16 %v2787, %v2783
        %v3356 = vpack.c.b16 %v2788, %v2784
        %v3357 = vpack.c.b16 %v2789, %v2785
        %v3358 = vpack.c.b16 %v2794, %v2790
        %v3359 = vpack.c.b16 %v2795, %v2791
        %v3360 = vpack.c.b16 %v2796, %v2792
        %v3361 = vpack.c.b16 %v2797, %v2793
        %v3362 = vpack.c.b16 %v2802, %v2798
        %v3363 = vpack.c.b16 %v2803, %v2799
        %v3364 = vpack.c.b16 %v2804, %v2800
        %v3365 = vpack.c.b16 %v2805, %v2801
        %v3366 = vpack.c.b16 %v2810, %v2806
        %v3367 = vpack.c.b16 %v2811, %v2807
        %v3368 = vpack.c.b16 %v2812, %v2808
        %v3369 = vpack.c.b16 %v2813, %v2809
        %v3370 = vpack.c.b16 %v2818, %v2814
        %v3371 = vpack.c.b16 %v2819, %v2815
        %v3372 = vpack.c.b16 %v2820, %v2816
        %v3373 = vpack.c.b16 %v2821, %v2817
        %v3374 = vpack.c.b16 %v2826, %v2822
        %v3375 = vpack.c.b16 %v2827, %v2823
        %v3376 = vpack.c.b16 %v2828, %v2824
        %v3377 = vpack.c.b16 %v2829, %v2825
        %v3378 = vpack.c.b16 %v2834, %v2830
        %v3379 = vpack.c.b16 %v2835, %v2831
        %v3380 = vpack.c.b16 %v2836, %v2832
        %v3381 = vpack.c.b16 %v2837, %v2833
        %v3382 = vpack.c.b16 %v2842, %v2838
        %v3383 = vpack.c.b16 %v2843, %v2839
        %v3384 = vpack.c.b16 %v2844, %v2840
        %v3385 = vpack.c.b16 %v2845, %v2841
        %v3386 = vpack.c.b16 %v2850, %v2846
        %v3387 = vpack.c.b16 %v2851, %v2847
        %v3388 = vpack.c.b16 %v2852, %v2848
        %v3389 = vpack.c.b16 %v2853, %v2849
        %v3390 = vpack.c.b16 %v2858, %v2854
        %v3391 = vpack.c.b16 %v2859, %v2855
        %v3392 = vpack.c.b16 %v2860, %v2856
        %v3393 = vpack.c.b16 %v2861, %v2857
        %v3394 = vpack.c.b16 %v2866, %v2862
        %v3395 = vpack.c.b16 %v2867, %v2863
        %v3396 = vpack.c.b16 %v2868, %v2864
        %v3397 = vpack.c.b16 %v2869, %v2865
        %v3398 = vpack.c.b16 %v2874, %v2870
        %v3399 = vpack.c.b16 %v2875, %v2871
        %v3400 = vpack.c.b16 %v2876, %v2872
        %v3401 = vpack.c.b16 %v2877, %v2873
        %v3402 = vpack.c.b16 %v2882, %v2878
        %v3403 = vpack.c.b16 %v2883, %v2879
        %v3404 = vpack.c.b16 %v2884, %v2880
        %v3405 = vpack.c.b16 %v2885, %v2881
        %v3406 = vpack.c.b16 %v2890, %v2886
        %v3407 = vpack.c.b16 %v2891, %v2887
        %v3408 = vpack.c.b16 %v2892, %v2888
        %v3409 = vpack.c.b16 %v2893, %v2889
        %v3410 = vpack.c.b16 %v2898, %v2894
        %v3411 = vpack.c.b16 %v2899, %v2895
        %v3412 = vpack.c.b16 %v2900, %v2896
        %v3413 = vpack.c.b16 %v2901, %v2897
        %v3414 = vpack.c.b16 %v2906, %v2902
        %v3415 = vpack.c.b16 %v2907, %v2903
        %v3416 = vpack.c.b16 %v2908, %v2904
        %v3417 = vpack.c.b16 %v2909, %v2905
        %v3418 = vpack.c.b16 %v2914, %v2910
        %v3419 = vpack.c.b16 %v2915, %v2911
        %v3420 = vpack.c.b16 %v2916, %v2912
        %v3421 = vpack.c.b16 %v2917, %v2913
        %v3422 = vpack.c.b16 %v2922, %v2918
        %v3423 = vpack.c.b16 %v2923, %v2919
        %v3424 = vpack.c.b16 %v2924, %v2920
        %v3425 = vpack.c.b16 %v2925, %v2921
        %v3426 = vpack.c.b16 %v2930, %v2926
        %v3427 = vpack.c.b16 %v2931, %v2927
        %v3428 = vpack.c.b16 %v2932, %v2928
        %v3429 = vpack.c.b16 %v2933, %v2929
        %v3430 = vpack.c.b16 %v2938, %v2934
        %v3431 = vpack.c.b16 %v2939, %v2935
        %v3432 = vpack.c.b16 %v2940, %v2936
        %v3433 = vpack.c.b16 %v2941, %v2937
        %v3434 = vpack.c.b16 %v2946, %v2942
        %v3435 = vpack.c.b16 %v2947, %v2943
        %v3436 = vpack.c.b16 %v2948, %v2944
        %v3437 = vpack.c.b16 %v2949, %v2945
        %v3438 = vpack.c.b16 %v2954, %v2950
        %v3439 = vpack.c.b16 %v2955, %v2951
        %v3440 = vpack.c.b16 %v2956, %v2952
        %v3441 = vpack.c.b16 %v2957, %v2953
        %v3442 = vpack.c.b16 %v2962, %v2958
        %v3443 = vpack.c.b16 %v2963, %v2959
        %v3444 = vpack.c.b16 %v2964, %v2960
        %v3445 = vpack.c.b16 %v2965, %v2961
        %v3446 = vpack.c.b16 %v2970, %v2966
        %v3447 = vpack.c.b16 %v2971, %v2967
        %v3448 = vpack.c.b16 %v2972, %v2968
        %v3449 = vpack.c.b16 %v2973, %v2969
        %v3450 = vpack.c.b16 %v2978, %v2974
        %v3451 = vpack.c.b16 %v2979, %v2975
        %v3452 = vpack.c.b16 %v2980, %v2976
        %v3453 = vpack.c.b16 %v2981, %v2977
        %v3454 = vpack.c.b16 %v2986, %v2982
        %v3455 = vpack.c.b16 %v2987, %v2983
        %v3456 = vpack.c.b16 %v2988, %v2984
        %v3457 = vpack.c.b16 %v2989, %v2985
        %v3458 = vpack.c.b16 %v2994, %v2990
        %v3459 = vpack.c.b16 %v2995, %v2991
        %v3460 = vpack.c.b16 %v2996, %v2992
        %v3461 = vpack.c.b16 %v2997, %v2993
        %v3462 = vpack.c.b16 %v3002, %v2998
        %v3463 = vpack.c.b16 %v3003, %v2999
        %v3464 = vpack.c.b16 %v3004, %v3000
        %v3465 = vpack.c.b16 %v3005, %v3001
        %v3466 = vpack.c.b16 %v3010, %v3006
        %v3467 = vpack.c.b16 %v3011, %v3007
        %v3468 = vpack.c.b16 %v3012, %v3008
        %v3469 = vpack.c.b16 %v3013, %v3009
        %v3470 = vpack.c.b16 %v3018, %v3014
        %v3471 = vpack.c.b16 %v3019, %v3015
        %v3472 = vpack.c.b16 %v3020, %v3016
        %v3473 = vpack.c.b16 %v3021, %v3017
        %v3474 = vpack.c.b16 %v3026, %v3022
        %v3475 = vpack.c.b16 %v3027, %v3023
        %v3476 = vpack.c.b16 %v3028, %v3024
        %v3477 = vpack.c.b16 %v3029, %v3025
        %v3478 = vpack.c.b16 %v3034, %v3030
        %v3479 = vpack.c.b16 %v3035, %v3031
        %v3480 = vpack.c.b16 %v3036, %v3032
        %v3481 = vpack.c.b16 %v3037, %v3033
        %v3482 = vpack.c.b16 %v3042, %v3038
        %v3483 = vpack.c.b16 %v3043, %v3039
        %v3484 = vpack.c.b16 %v3044, %v3040
        %v3485 = vpack.c.b16 %v3045, %v3041
        %v3486 = vpack.c.b16 %v3050, %v3046
        %v3487 = vpack.c.b16 %v3051, %v3047
        %v3488 = vpack.c.b16 %v3052, %v3048
        %v3489 = vpack.c.b16 %v3053, %v3049
        %v3490 = vpack.c.b16 %v3058, %v3054
        %v3491 = vpack.c.b16 %v3059, %v3055
        %v3492 = vpack.c.b16 %v3060, %v3056
        %v3493 = vpack.c.b16 %v3061, %v3057
        %vm3926 = vcmask 523264
        %v3928 = vsel %vm3926, %v1750, 0
        %3930 = vmatprep.subr.bf16.mxu0 %v3063
        %3931 = vmatpush1.bf16.msra.mxu0 %v3062
        %3932 = vmatprep.subr.bf16.mxu0 %v3067
        %3933 = vmatpush1.bf16.msra.mxu0 %v3066
        %3934 = vmatprep.subr.bf16.mxu0 %v3071
        %3935 = vmatpush1.bf16.msra.mxu0 %v3070
        %3936 = vmatprep.subr.bf16.mxu0 %v3075
        %3937 = vmatpush1.bf16.msra.mxu0 %v3074
        %3938 = vmatprep.subr.bf16.mxu0 %v3079
        %3939 = vmatpush1.bf16.msra.mxu0 %v3078
        %3940 = vmatprep.subr.bf16.mxu0 %v3083
        %3941 = vmatpush1.bf16.msra.mxu0 %v3082
        %3942 = vmatprep.subr.bf16.mxu0 %v3087
        %3943 = vmatpush1.bf16.msra.mxu0 %v3086
        %3944 = vmatprep.subr.bf16.mxu0 %v3091
        %3945 = vmatpush1.bf16.msra.mxu0 %v3090
        %3946 = vmatprep.subr.bf16.mxu0 %v3095
        %3947 = vmatpush1.bf16.msra.mxu0 %v3094
        %3948 = vmatprep.subr.bf16.mxu0 %v3099
        %3949 = vmatpush1.bf16.msra.mxu0 %v3098
        %3950 = vmatprep.subr.bf16.mxu0 %v3103
        %3951 = vmatpush1.bf16.msra.mxu0 %v3102
        %3952 = vmatprep.subr.bf16.mxu0 %v3107
        %3953 = vmatpush1.bf16.msra.mxu0 %v3106
        %3954 = vmatprep.subr.bf16.mxu0 %v3111
        %3955 = vmatpush1.bf16.msra.mxu0 %v3110
        %3956 = vmatprep.subr.bf16.mxu0 %v3115
        %3957 = vmatpush1.bf16.msra.mxu0 %v3114
        %3958 = vmatprep.subr.bf16.mxu0 %v3119
        %3959 = vmatpush1.bf16.msra.mxu0 %v3118
        %3960 = vmatprep.subr.bf16.mxu0 %v3123
        %3961 = vmatpush1.bf16.msra.mxu0 %v3122
        %3962 = vmatprep.mubr.bf16.mxu0 %v1694
        %3963 = vmatmul.mubr.bf16.gmra.mrb[0].mxu0 %v1680
        %v3964 = vpop.f32.mrb[0].mxu0
        %v3965 = vadd.f32 %v1638, %v3964
        %v3966 = vpop.f32.mrb[0].mxu0
        %v3967 = vadd.f32 %v1642, %v3966
        %v3968 = vpop.f32.mrb[0].mxu0
        %v3969 = vpop.f32.mrb[0].mxu0
        %3970 = vdwg.mxu0
        %3971 = vmatprep.subr.bf16.mxu0 %v3127
        %3972 = vmatpush1.bf16.msra.mxu0 %v3126
        %3973 = vmatprep.subr.bf16.mxu0 %v3131
        %3974 = vmatpush1.bf16.msra.mxu0 %v3130
        %3975 = vmatprep.subr.bf16.mxu0 %v3135
        %3976 = vmatpush1.bf16.msra.mxu0 %v3134
        %3977 = vmatprep.subr.bf16.mxu0 %v3139
        %3978 = vmatpush1.bf16.msra.mxu0 %v3138
        %3979 = vmatprep.subr.bf16.mxu0 %v3143
        %3980 = vmatpush1.bf16.msra.mxu0 %v3142
        %3981 = vmatprep.subr.bf16.mxu0 %v3147
        %3982 = vmatpush1.bf16.msra.mxu0 %v3146
        %3983 = vmatprep.subr.bf16.mxu0 %v3151
        %3984 = vmatpush1.bf16.msra.mxu0 %v3150
        %3985 = vmatprep.subr.bf16.mxu0 %v3155
        %3986 = vmatpush1.bf16.msra.mxu0 %v3154
        %3987 = vmatprep.subr.bf16.mxu0 %v3159
        %3988 = vmatpush1.bf16.msra.mxu0 %v3158
        %3989 = vmatprep.subr.bf16.mxu0 %v3163
        %3990 = vmatpush1.bf16.msra.mxu0 %v3162
        %3991 = vmatprep.subr.bf16.mxu0 %v3167
        %3992 = vmatpush1.bf16.msra.mxu0 %v3166
        %3993 = vmatprep.subr.bf16.mxu0 %v3171
        %3994 = vmatpush1.bf16.msra.mxu0 %v3170
        %3995 = vmatprep.subr.bf16.mxu0 %v3175
        %3996 = vmatpush1.bf16.msra.mxu0 %v3174
        %3997 = vmatprep.subr.bf16.mxu0 %v3179
        %3998 = vmatpush1.bf16.msra.mxu0 %v3178
        %3999 = vmatprep.subr.bf16.mxu0 %v3183
        %4000 = vmatpush1.bf16.msra.mxu0 %v3182
        %4001 = vmatprep.subr.bf16.mxu0 %v3187
        %4002 = vmatpush1.bf16.msra.mxu0 %v3186
        %4003 = vmatprep.mubr.bf16.mxu0 %v1704
        %4004 = vmatmul.mubr.bf16.gmra.mrb[0].mxu0 %v1702
        %v4005 = vpop.f32.mrb[0].mxu0
        %v4006 = vadd.f32 %v3965, %v4005
        %v4007 = vpop.f32.mrb[0].mxu0
        %v4008 = vadd.f32 %v3967, %v4007
        %v4009 = vpop.f32.mrb[0].mxu0
        %v4010 = vpop.f32.mrb[0].mxu0
        %4011 = vdwg.mxu0
        %4012 = vmatprep.subr.bf16.mxu0 %v3191
        %4013 = vmatpush1.bf16.msra.mxu0 %v3190
        %4014 = vmatprep.subr.bf16.mxu0 %v3195
        %4015 = vmatpush1.bf16.msra.mxu0 %v3194
        %4016 = vmatprep.subr.bf16.mxu0 %v3199
        %4017 = vmatpush1.bf16.msra.mxu0 %v3198
        %4018 = vmatprep.subr.bf16.mxu0 %v3203
        %4019 = vmatpush1.bf16.msra.mxu0 %v3202
        %4020 = vmatprep.subr.bf16.mxu0 %v3207
        %4021 = vmatpush1.bf16.msra.mxu0 %v3206
        %4022 = vmatprep.subr.bf16.mxu0 %v3211
        %4023 = vmatpush1.bf16.msra.mxu0 %v3210
        %4024 = vmatprep.subr.bf16.mxu0 %v3215
        %4025 = vmatpush1.bf16.msra.mxu0 %v3214
        %4026 = vmatprep.subr.bf16.mxu0 %v3219
        %4027 = vmatpush1.bf16.msra.mxu0 %v3218
        %4028 = vmatprep.subr.bf16.mxu0 %v3223
        %4029 = vmatpush1.bf16.msra.mxu0 %v3222
        %4030 = vmatprep.subr.bf16.mxu0 %v3227
        %4031 = vmatpush1.bf16.msra.mxu0 %v3226
        %4032 = vmatprep.subr.bf16.mxu0 %v3231
        %4033 = vmatpush1.bf16.msra.mxu0 %v3230
        %4034 = vmatprep.subr.bf16.mxu0 %v3235
        %4035 = vmatpush1.bf16.msra.mxu0 %v3234
        %4036 = vmatprep.subr.bf16.mxu0 %v3239
        %4037 = vmatpush1.bf16.msra.mxu0 %v3238
        %4038 = vmatprep.subr.bf16.mxu0 %v3243
        %4039 = vmatpush1.bf16.msra.mxu0 %v3242
        %4040 = vmatprep.subr.bf16.mxu0 %v3247
        %4041 = vmatpush1.bf16.msra.mxu0 %v3246
        %4042 = vmatprep.subr.bf16.mxu0 %v3251
        %4043 = vmatpush1.bf16.msra.mxu0 %v3250
        %4044 = vmatprep.mubr.bf16.mxu0 %v1701
        %4045 = vmatmul.mubr.bf16.gmra.mrb[0].mxu0 %v1687
        %v4046 = vpop.f32.mrb[0].mxu0
        %v4047 = vadd.f32 %v4006, %v4046
        %v4048 = vpop.f32.mrb[0].mxu0
        %v4049 = vadd.f32 %v4008, %v4048
        %v4050 = vpop.f32.mrb[0].mxu0
        %v4051 = vpop.f32.mrb[0].mxu0
        %4052 = vdwg.mxu0
        %4053 = vmatprep.subr.bf16.mxu0 %v3255
        %4054 = vmatpush1.bf16.msra.mxu0 %v3254
        %4055 = vmatprep.subr.bf16.mxu0 %v3259
        %4056 = vmatpush1.bf16.msra.mxu0 %v3258
        %4057 = vmatprep.subr.bf16.mxu0 %v3263
        %4058 = vmatpush1.bf16.msra.mxu0 %v3262
        %4059 = vmatprep.subr.bf16.mxu0 %v3267
        %4060 = vmatpush1.bf16.msra.mxu0 %v3266
        %4061 = vmatprep.subr.bf16.mxu0 %v3271
        %4062 = vmatpush1.bf16.msra.mxu0 %v3270
        %4063 = vmatprep.subr.bf16.mxu0 %v3275
        %4064 = vmatpush1.bf16.msra.mxu0 %v3274
        %4065 = vmatprep.subr.bf16.mxu0 %v3279
        %4066 = vmatpush1.bf16.msra.mxu0 %v3278
        %4067 = vmatprep.subr.bf16.mxu0 %v3283
        %4068 = vmatpush1.bf16.msra.mxu0 %v3282
        %4069 = vmatprep.subr.bf16.mxu0 %v3287
        %4070 = vmatpush1.bf16.msra.mxu0 %v3286
        %4071 = vmatprep.subr.bf16.mxu0 %v3291
        %4072 = vmatpush1.bf16.msra.mxu0 %v3290
        %4073 = vmatprep.subr.bf16.mxu0 %v3295
        %4074 = vmatpush1.bf16.msra.mxu0 %v3294
        %4075 = vmatprep.subr.bf16.mxu0 %v3299
        %4076 = vmatpush1.bf16.msra.mxu0 %v3298
        %4077 = vmatprep.subr.bf16.mxu0 %v3303
        %4078 = vmatpush1.bf16.msra.mxu0 %v3302
        %4079 = vmatprep.subr.bf16.mxu0 %v3307
        %4080 = vmatpush1.bf16.msra.mxu0 %v3306
        %4081 = vmatprep.subr.bf16.mxu0 %v3311
        %4082 = vmatpush1.bf16.msra.mxu0 %v3310
        %4083 = vmatprep.subr.bf16.mxu0 %v3315
        %4084 = vmatpush1.bf16.msra.mxu0 %v3314
        %4085 = vmatprep.mubr.bf16.mxu0 %v1705
        %4086 = vmatmul.mubr.bf16.gmra.mrb[0].mxu0 %v1703
        %v4087 = vpop.f32.mrb[0].mxu0
        %v4088 = vadd.f32 %v4047, %v4087
        %v4089 = vpop.f32.mrb[0].mxu0
        %v4090 = vadd.f32 %v4049, %v4089
        %v4091 = vpop.f32.mrb[0].mxu0
        %v4092 = vpop.f32.mrb[0].mxu0
        %4093 = vdwg.mxu0
        %4094 = vmatprep.subr.bf16.mxu0 %v3319
        %4095 = vmatpush1.bf16.msra.mxu0 %v3318
        %4096 = vmatprep.subr.bf16.mxu0 %v3323
        %4097 = vmatpush1.bf16.msra.mxu0 %v3322
        %4098 = vmatprep.subr.bf16.mxu0 %v3327
        %4099 = vmatpush1.bf16.msra.mxu0 %v3326
        %4100 = vmatprep.subr.bf16.mxu0 %v3331
        %4101 = vmatpush1.bf16.msra.mxu0 %v3330
        %4102 = vmatprep.subr.bf16.mxu0 %v3335
        %4103 = vmatpush1.bf16.msra.mxu0 %v3334
        %4104 = vmatprep.subr.bf16.mxu0 %v3339
        %4105 = vmatpush1.bf16.msra.mxu0 %v3338
        %4106 = vmatprep.subr.bf16.mxu0 %v3343
        %4107 = vmatpush1.bf16.msra.mxu0 %v3342
        %4108 = vmatprep.subr.bf16.mxu0 %v3347
        %4109 = vmatpush1.bf16.msra.mxu0 %v3346
        %4110 = vmatprep.subr.bf16.mxu0 %v3351
        %4111 = vmatpush1.bf16.msra.mxu0 %v3350
        %4112 = vmatprep.subr.bf16.mxu0 %v3355
        %4113 = vmatpush1.bf16.msra.mxu0 %v3354
        %4114 = vmatprep.subr.bf16.mxu0 %v3359
        %4115 = vmatpush1.bf16.msra.mxu0 %v3358
        %4116 = vmatprep.subr.bf16.mxu0 %v3363
        %4117 = vmatpush1.bf16.msra.mxu0 %v3362
        %4118 = vmatprep.subr.bf16.mxu0 %v3367
        %4119 = vmatpush1.bf16.msra.mxu0 %v3366
        %4120 = vmatprep.subr.bf16.mxu0 %v3371
        %4121 = vmatpush1.bf16.msra.mxu0 %v3370
        %4122 = vmatprep.subr.bf16.mxu0 %v3375
        %4123 = vmatpush1.bf16.msra.mxu0 %v3374
        %4124 = vmatprep.subr.bf16.mxu0 %v3379
        %4125 = vmatpush1.bf16.msra.mxu0 %v3378
        %4126 = vmatprep.mubr.bf16.mxu0 %v1743
        %4127 = vmatmul.mubr.bf16.gmra.mrb[0].mxu0 %v1729
        %v4128 = vpop.f32.mrb[0].mxu0
        %v4129 = vadd.f32 %v4088, %v4128
        %v4130 = vpop.f32.mrb[0].mxu0
        %v4131 = vadd.f32 %v4090, %v4130
        %v4132 = vpop.f32.mrb[0].mxu0
        %v4133 = vpop.f32.mrb[0].mxu0
        %4134 = vdwg.mxu0
        %4135 = vmatprep.subr.bf16.mxu0 %v3383
        %4136 = vmatpush1.bf16.msra.mxu0 %v3382
        %4137 = vmatprep.subr.bf16.mxu0 %v3387
        %4138 = vmatpush1.bf16.msra.mxu0 %v3386
        %4139 = vmatprep.subr.bf16.mxu0 %v3391
        %4140 = vmatpush1.bf16.msra.mxu0 %v3390
        %4141 = vmatprep.subr.bf16.mxu0 %v3395
        %4142 = vmatpush1.bf16.msra.mxu0 %v3394
        %4143 = vmatprep.subr.bf16.mxu0 %v3399
        %4144 = vmatpush1.bf16.msra.mxu0 %v3398
        %4145 = vmatprep.subr.bf16.mxu0 %v3403
        %4146 = vmatpush1.bf16.msra.mxu0 %v3402
        %4147 = vmatprep.subr.bf16.mxu0 %v3407
        %4148 = vmatpush1.bf16.msra.mxu0 %v3406
        %4149 = vmatprep.subr.bf16.mxu0 %v3411
        %4150 = vmatpush1.bf16.msra.mxu0 %v3410
        %4151 = vmatprep.subr.bf16.mxu0 %v3415
        %4152 = vmatpush1.bf16.msra.mxu0 %v3414
        %4153 = vmatprep.subr.bf16.mxu0 %v3419
        %4154 = vmatpush1.bf16.msra.mxu0 %v3418
        %4155 = vmatprep.subr.bf16.mxu0 %v3423
        %4156 = vmatpush1.bf16.msra.mxu0 %v3422
        %4157 = vmatprep.subr.bf16.mxu0 %v3427
        %4158 = vmatpush1.bf16.msra.mxu0 %v3426
        %4159 = vmatprep.subr.bf16.mxu0 %v3431
        %4160 = vmatpush1.bf16.msra.mxu0 %v3430
        %4161 = vmatprep.subr.bf16.mxu0 %v3435
        %4162 = vmatpush1.bf16.msra.mxu0 %v3434
        %4163 = vmatprep.subr.bf16.mxu0 %v3439
        %4164 = vmatpush1.bf16.msra.mxu0 %v3438
        %4165 = vmatprep.subr.bf16.mxu0 %v3443
        %4166 = vmatpush1.bf16.msra.mxu0 %v3442
        %4167 = vmatprep.mubr.bf16.mxu0 %v1752
        %4168 = vmatmul.mubr.bf16.gmra.mrb[0].mxu0 %v1751
        %v4169 = vpop.f32.mrb[0].mxu0
        %v4170 = vadd.f32 %v4129, %v4169
        %v4171 = vpop.f32.mrb[0].mxu0
        %v4172 = vadd.f32 %v4131, %v4171
        %v4173 = vpop.f32.mrb[0].mxu0
        %v4174 = vpop.f32.mrb[0].mxu0
        %4175 = vdwg.mxu0
        %4176 = vmatprep.subr.bf16.mxu0 %v3447
        %4177 = vmatpush1.bf16.msra.mxu0 %v3446
        %4178 = vmatprep.subr.bf16.mxu0 %v3451
        %4179 = vmatpush1.bf16.msra.mxu0 %v3450
        %4180 = vmatprep.subr.bf16.mxu0 %v3455
        %4181 = vmatpush1.bf16.msra.mxu0 %v3454
        %4182 = vmatprep.subr.bf16.mxu0 %v3459
        %4183 = vmatpush1.bf16.msra.mxu0 %v3458
        %4184 = vmatprep.subr.bf16.mxu0 %v3463
        %4185 = vmatpush1.bf16.msra.mxu0 %v3462
        %4186 = vmatprep.subr.bf16.mxu0 %v3467
        %4187 = vmatpush1.bf16.msra.mxu0 %v3466
        %4188 = vmatprep.subr.bf16.mxu0 %v3471
        %4189 = vmatpush1.bf16.msra.mxu0 %v3470
        %4190 = vmatprep.subr.bf16.mxu0 %v3475
        %4191 = vmatpush1.bf16.msra.mxu0 %v3474
        %4192 = vmatprep.subr.bf16.mxu0 %v3479
        %4193 = vmatpush1.bf16.msra.mxu0 %v3478
        %4194 = vmatprep.subr.bf16.mxu0 %v3483
        %4195 = vmatpush1.bf16.msra.mxu0 %v3482
        %4196 = vmatprep.subr.bf16.mxu0 %v3487
        %4197 = vmatpush1.bf16.msra.mxu0 %v3486
        %4198 = vmatprep.subr.bf16.mxu0 %v3491
        %4199 = vmatpush1.bf16.msra.mxu0 %v3490
        %4200 = vmatprep.subr.bf16.mxu0 0
        %4201 = vmatpush1.bf16.msra.mxu0 0
        %4202 = vmatprep.subr.bf16.mxu0 0
        %4203 = vmatpush1.bf16.msra.mxu0 0
        %4204 = vmatprep.subr.bf16.mxu0 0
        %4205 = vmatpush1.bf16.msra.mxu0 0
        %4206 = vmatprep.subr.bf16.mxu0 0
        %4207 = vmatpush1.bf16.msra.mxu0 0
        %4208 = vmatprep.mubr.bf16.mxu0 %v3928
        %4209 = vmatmul.mubr.bf16.gmra.mrb[0].mxu0 %v1736
        %v4210 = vpop.f32.mrb[0].mxu0
        %v4211 = vadd.f32 %v4170, %v4210
        %v4212 = vpop.f32.mrb[0].mxu0
        %v4213 = vadd.f32 %v4172, %v4212
        %v4214 = vpop.f32.mrb[0].mxu0
        %v4215 = vpop.f32.mrb[0].mxu0
        %4216 = vdwg.mxu0
        %4217 = vmatprep.subr.bf16.mxu0 %v3065
        %4218 = vmatpush1.bf16.msra.mxu0 %v3064
        %4219 = vmatprep.subr.bf16.mxu0 %v3069
        %4220 = vmatpush1.bf16.msra.mxu0 %v3068
        %4221 = vmatprep.subr.bf16.mxu0 %v3073
        %4222 = vmatpush1.bf16.msra.mxu0 %v3072
        %4223 = vmatprep.subr.bf16.mxu0 %v3077
        %4224 = vmatpush1.bf16.msra.mxu0 %v3076
        %4225 = vmatprep.subr.bf16.mxu0 %v3081
        %4226 = vmatpush1.bf16.msra.mxu0 %v3080
        %4227 = vmatprep.subr.bf16.mxu0 %v3085
        %4228 = vmatpush1.bf16.msra.mxu0 %v3084
        %4229 = vmatprep.subr.bf16.mxu0 %v3089
        %4230 = vmatpush1.bf16.msra.mxu0 %v3088
        %4231 = vmatprep.subr.bf16.mxu0 %v3093
        %4232 = vmatpush1.bf16.msra.mxu0 %v3092
        %4233 = vmatprep.subr.bf16.mxu0 %v3097
        %4234 = vmatpush1.bf16.msra.mxu0 %v3096
        %4235 = vmatprep.subr.bf16.mxu0 %v3101
        %4236 = vmatpush1.bf16.msra.mxu0 %v3100
        %4237 = vmatprep.subr.bf16.mxu0 %v3105
        %4238 = vmatpush1.bf16.msra.mxu0 %v3104
        %4239 = vmatprep.subr.bf16.mxu0 %v3109
        %4240 = vmatpush1.bf16.msra.mxu0 %v3108
        %4241 = vmatprep.subr.bf16.mxu0 %v3113
        %4242 = vmatpush1.bf16.msra.mxu0 %v3112
        %4243 = vmatprep.subr.bf16.mxu0 %v3117
        %4244 = vmatpush1.bf16.msra.mxu0 %v3116
        %4245 = vmatprep.subr.bf16.mxu0 %v3121
        %4246 = vmatpush1.bf16.msra.mxu0 %v3120
        %4247 = vmatprep.subr.bf16.mxu0 %v3125
        %4248 = vmatpush1.bf16.msra.mxu0 %v3124
        %4249 = vmatprep.mubr.bf16.mxu0 %v1694
        %4250 = vmatmul.mubr.bf16.gmra.mrb[0].mxu0 %v1680
        %v4251 = vpop.f32.mrb[0].mxu0
        %v4252 = vadd.f32 %v1646, %v4251
        %v4253 = vpop.f32.mrb[0].mxu0
        %v4254 = vadd.f32 %v1650, %v4253
        %v4255 = vpop.f32.mrb[0].mxu0
        %v4256 = vpop.f32.mrb[0].mxu0
        %4257 = vdwg.mxu0
        %4258 = vmatprep.subr.bf16.mxu0 %v3129
        %4259 = vmatpush1.bf16.msra.mxu0 %v3128
        %4260 = vmatprep.subr.bf16.mxu0 %v3133
        %4261 = vmatpush1.bf16.msra.mxu0 %v3132
        %4262 = vmatprep.subr.bf16.mxu0 %v3137
        %4263 = vmatpush1.bf16.msra.mxu0 %v3136
        %4264 = vmatprep.subr.bf16.mxu0 %v3141
        %4265 = vmatpush1.bf16.msra.mxu0 %v3140
        %4266 = vmatprep.subr.bf16.mxu0 %v3145
        %4267 = vmatpush1.bf16.msra.mxu0 %v3144
        %4268 = vmatprep.subr.bf16.mxu0 %v3149
        %4269 = vmatpush1.bf16.msra.mxu0 %v3148
        %4270 = vmatprep.subr.bf16.mxu0 %v3153
        %4271 = vmatpush1.bf16.msra.mxu0 %v3152
        %4272 = vmatprep.subr.bf16.mxu0 %v3157
        %4273 = vmatpush1.bf16.msra.mxu0 %v3156
        %4274 = vmatprep.subr.bf16.mxu0 %v3161
        %4275 = vmatpush1.bf16.msra.mxu0 %v3160
        %4276 = vmatprep.subr.bf16.mxu0 %v3165
        %4277 = vmatpush1.bf16.msra.mxu0 %v3164
        %4278 = vmatprep.subr.bf16.mxu0 %v3169
        %4279 = vmatpush1.bf16.msra.mxu0 %v3168
        %4280 = vmatprep.subr.bf16.mxu0 %v3173
        %4281 = vmatpush1.bf16.msra.mxu0 %v3172
        %4282 = vmatprep.subr.bf16.mxu0 %v3177
        %4283 = vmatpush1.bf16.msra.mxu0 %v3176
        %4284 = vmatprep.subr.bf16.mxu0 %v3181
        %4285 = vmatpush1.bf16.msra.mxu0 %v3180
        %4286 = vmatprep.subr.bf16.mxu0 %v3185
        %4287 = vmatpush1.bf16.msra.mxu0 %v3184
        %4288 = vmatprep.subr.bf16.mxu0 %v3189
        %4289 = vmatpush1.bf16.msra.mxu0 %v3188
        %4290 = vmatprep.mubr.bf16.mxu0 %v1704
        %4291 = vmatmul.mubr.bf16.gmra.mrb[0].mxu0 %v1702
        %v4292 = vpop.f32.mrb[0].mxu0
        %v4293 = vadd.f32 %v4252, %v4292
        %v4294 = vpop.f32.mrb[0].mxu0
        %v4295 = vadd.f32 %v4254, %v4294
        %v4296 = vpop.f32.mrb[0].mxu0
        %v4297 = vpop.f32.mrb[0].mxu0
        %4298 = vdwg.mxu0
        %4299 = vmatprep.subr.bf16.mxu0 %v3193
        %4300 = vmatpush1.bf16.msra.mxu0 %v3192
        %4301 = vmatprep.subr.bf16.mxu0 %v3197
        %4302 = vmatpush1.bf16.msra.mxu0 %v3196
        %4303 = vmatprep.subr.bf16.mxu0 %v3201
        %4304 = vmatpush1.bf16.msra.mxu0 %v3200
        %4305 = vmatprep.subr.bf16.mxu0 %v3205
        %4306 = vmatpush1.bf16.msra.mxu0 %v3204
        %4307 = vmatprep.subr.bf16.mxu0 %v3209
        %4308 = vmatpush1.bf16.msra.mxu0 %v3208
        %4309 = vmatprep.subr.bf16.mxu0 %v3213
        %4310 = vmatpush1.bf16.msra.mxu0 %v3212
        %4311 = vmatprep.subr.bf16.mxu0 %v3217
        %4312 = vmatpush1.bf16.msra.mxu0 %v3216
        %4313 = vmatprep.subr.bf16.mxu0 %v3221
        %4314 = vmatpush1.bf16.msra.mxu0 %v3220
        %4315 = vmatprep.subr.bf16.mxu0 %v3225
        %4316 = vmatpush1.bf16.msra.mxu0 %v3224
        %4317 = vmatprep.subr.bf16.mxu0 %v3229
        %4318 = vmatpush1.bf16.msra.mxu0 %v3228
        %4319 = vmatprep.subr.bf16.mxu0 %v3233
        %4320 = vmatpush1.bf16.msra.mxu0 %v3232
        %4321 = vmatprep.subr.bf16.mxu0 %v3237
        %4322 = vmatpush1.bf16.msra.mxu0 %v3236
        %4323 = vmatprep.subr.bf16.mxu0 %v3241
        %4324 = vmatpush1.bf16.msra.mxu0 %v3240
        %4325 = vmatprep.subr.bf16.mxu0 %v3245
        %4326 = vmatpush1.bf16.msra.mxu0 %v3244
        %4327 = vmatprep.subr.bf16.mxu0 %v3249
        %4328 = vmatpush1.bf16.msra.mxu0 %v3248
        %4329 = vmatprep.subr.bf16.mxu0 %v3253
        %4330 = vmatpush1.bf16.msra.mxu0 %v3252
        %4331 = vmatprep.mubr.bf16.mxu0 %v1701
        %4332 = vmatmul.mubr.bf16.gmra.mrb[0].mxu0 %v1687
        %v4333 = vpop.f32.mrb[0].mxu0
        %v4334 = vadd.f32 %v4293, %v4333
        %v4335 = vpop.f32.mrb[0].mxu0
        %v4336 = vadd.f32 %v4295, %v4335
        %v4337 = vpop.f32.mrb[0].mxu0
        %v4338 = vpop.f32.mrb[0].mxu0
        %4339 = vdwg.mxu0
        %4340 = vmatprep.subr.bf16.mxu0 %v3257
        %4341 = vmatpush1.bf16.msra.mxu0 %v3256
        %4342 = vmatprep.subr.bf16.mxu0 %v3261
        %4343 = vmatpush1.bf16.msra.mxu0 %v3260
        %4344 = vmatprep.subr.bf16.mxu0 %v3265
        %4345 = vmatpush1.bf16.msra.mxu0 %v3264
        %4346 = vmatprep.subr.bf16.mxu0 %v3269
        %4347 = vmatpush1.bf16.msra.mxu0 %v3268
        %4348 = vmatprep.subr.bf16.mxu0 %v3273
        %4349 = vmatpush1.bf16.msra.mxu0 %v3272
        %4350 = vmatprep.subr.bf16.mxu0 %v3277
        %4351 = vmatpush1.bf16.msra.mxu0 %v3276
        %4352 = vmatprep.subr.bf16.mxu0 %v3281
        %4353 = vmatpush1.bf16.msra.mxu0 %v3280
        %4354 = vmatprep.subr.bf16.mxu0 %v3285
        %4355 = vmatpush1.bf16.msra.mxu0 %v3284
        %4356 = vmatprep.subr.bf16.mxu0 %v3289
        %4357 = vmatpush1.bf16.msra.mxu0 %v3288
        %4358 = vmatprep.subr.bf16.mxu0 %v3293
        %4359 = vmatpush1.bf16.msra.mxu0 %v3292
        %4360 = vmatprep.subr.bf16.mxu0 %v3297
        %4361 = vmatpush1.bf16.msra.mxu0 %v3296
        %4362 = vmatprep.subr.bf16.mxu0 %v3301
        %4363 = vmatpush1.bf16.msra.mxu0 %v3300
        %4364 = vmatprep.subr.bf16.mxu0 %v3305
        %4365 = vmatpush1.bf16.msra.mxu0 %v3304
        %4366 = vmatprep.subr.bf16.mxu0 %v3309
        %4367 = vmatpush1.bf16.msra.mxu0 %v3308
        %4368 = vmatprep.subr.bf16.mxu0 %v3313
        %4369 = vmatpush1.bf16.msra.mxu0 %v3312
        %4370 = vmatprep.subr.bf16.mxu0 %v3317
        %4371 = vmatpush1.bf16.msra.mxu0 %v3316
        %4372 = vmatprep.mubr.bf16.mxu0 %v1705
        %4373 = vmatmul.mubr.bf16.gmra.mrb[0].mxu0 %v1703
        %v4374 = vpop.f32.mrb[0].mxu0
        %v4375 = vadd.f32 %v4334, %v4374
        %v4376 = vpop.f32.mrb[0].mxu0
        %v4377 = vadd.f32 %v4336, %v4376
        %v4378 = vpop.f32.mrb[0].mxu0
        %v4379 = vpop.f32.mrb[0].mxu0
        %4380 = vdwg.mxu0
        %4381 = vmatprep.subr.bf16.mxu0 %v3321
        %4382 = vmatpush1.bf16.msra.mxu0 %v3320
        %4383 = vmatprep.subr.bf16.mxu0 %v3325
        %4384 = vmatpush1.bf16.msra.mxu0 %v3324
        %4385 = vmatprep.subr.bf16.mxu0 %v3329
        %4386 = vmatpush1.bf16.msra.mxu0 %v3328
        %4387 = vmatprep.subr.bf16.mxu0 %v3333
        %4388 = vmatpush1.bf16.msra.mxu0 %v3332
        %4389 = vmatprep.subr.bf16.mxu0 %v3337
        %4390 = vmatpush1.bf16.msra.mxu0 %v3336
        %4391 = vmatprep.subr.bf16.mxu0 %v3341
        %4392 = vmatpush1.bf16.msra.mxu0 %v3340
        %4393 = vmatprep.subr.bf16.mxu0 %v3345
        %4394 = vmatpush1.bf16.msra.mxu0 %v3344
        %4395 = vmatprep.subr.bf16.mxu0 %v3349
        %4396 = vmatpush1.bf16.msra.mxu0 %v3348
        %4397 = vmatprep.subr.bf16.mxu0 %v3353
        %4398 = vmatpush1.bf16.msra.mxu0 %v3352
        %4399 = vmatprep.subr.bf16.mxu0 %v3357
        %4400 = vmatpush1.bf16.msra.mxu0 %v3356
        %4401 = vmatprep.subr.bf16.mxu0 %v3361
        %4402 = vmatpush1.bf16.msra.mxu0 %v3360
        %4403 = vmatprep.subr.bf16.mxu0 %v3365
        %4404 = vmatpush1.bf16.msra.mxu0 %v3364
        %4405 = vmatprep.subr.bf16.mxu0 %v3369
        %4406 = vmatpush1.bf16.msra.mxu0 %v3368
        %4407 = vmatprep.subr.bf16.mxu0 %v3373
        %4408 = vmatpush1.bf16.msra.mxu0 %v3372
        %4409 = vmatprep.subr.bf16.mxu0 %v3377
        %4410 = vmatpush1.bf16.msra.mxu0 %v3376
        %4411 = vmatprep.subr.bf16.mxu0 %v3381
        %4412 = vmatpush1.bf16.msra.mxu0 %v3380
        %4413 = vmatprep.mubr.bf16.mxu0 %v1743
        %4414 = vmatmul.mubr.bf16.gmra.mrb[0].mxu0 %v1729
        %v4415 = vpop.f32.mrb[0].mxu0
        %v4416 = vadd.f32 %v4375, %v4415
        %v4417 = vpop.f32.mrb[0].mxu0
        %v4418 = vadd.f32 %v4377, %v4417
        %v4419 = vpop.f32.mrb[0].mxu0
        %v4420 = vpop.f32.mrb[0].mxu0
        %4421 = vdwg.mxu0
        %4422 = vmatprep.subr.bf16.mxu0 %v3385
        %4423 = vmatpush1.bf16.msra.mxu0 %v3384
        %4424 = vmatprep.subr.bf16.mxu0 %v3389
        %4425 = vmatpush1.bf16.msra.mxu0 %v3388
        %4426 = vmatprep.subr.bf16.mxu0 %v3393
        %4427 = vmatpush1.bf16.msra.mxu0 %v3392
        %4428 = vmatprep.subr.bf16.mxu0 %v3397
        %4429 = vmatpush1.bf16.msra.mxu0 %v3396
        %4430 = vmatprep.subr.bf16.mxu0 %v3401
        %4431 = vmatpush1.bf16.msra.mxu0 %v3400
        %4432 = vmatprep.subr.bf16.mxu0 %v3405
        %4433 = vmatpush1.bf16.msra.mxu0 %v3404
        %4434 = vmatprep.subr.bf16.mxu0 %v3409
        %4435 = vmatpush1.bf16.msra.mxu0 %v3408
        %4436 = vmatprep.subr.bf16.mxu0 %v3413
        %4437 = vmatpush1.bf16.msra.mxu0 %v3412
        %4438 = vmatprep.subr.bf16.mxu0 %v3417
        %4439 = vmatpush1.bf16.msra.mxu0 %v3416
        %4440 = vmatprep.subr.bf16.mxu0 %v3421
        %4441 = vmatpush1.bf16.msra.mxu0 %v3420
        %4442 = vmatprep.subr.bf16.mxu0 %v3425
        %4443 = vmatpush1.bf16.msra.mxu0 %v3424
        %4444 = vmatprep.subr.bf16.mxu0 %v3429
        %4445 = vmatpush1.bf16.msra.mxu0 %v3428
        %4446 = vmatprep.subr.bf16.mxu0 %v3433
        %4447 = vmatpush1.bf16.msra.mxu0 %v3432
        %4448 = vmatprep.subr.bf16.mxu0 %v3437
        %4449 = vmatpush1.bf16.msra.mxu0 %v3436
        %4450 = vmatprep.subr.bf16.mxu0 %v3441
        %4451 = vmatpush1.bf16.msra.mxu0 %v3440
        %4452 = vmatprep.subr.bf16.mxu0 %v3445
        %4453 = vmatpush1.bf16.msra.mxu0 %v3444
        %4454 = vmatprep.mubr.bf16.mxu0 %v1752
        %4455 = vmatmul.mubr.bf16.gmra.mrb[0].mxu0 %v1751
        %v4456 = vpop.f32.mrb[0].mxu0
        %v4457 = vadd.f32 %v4416, %v4456
        %v4458 = vpop.f32.mrb[0].mxu0
        %v4459 = vadd.f32 %v4418, %v4458
        %v4460 = vpop.f32.mrb[0].mxu0
        %v4461 = vpop.f32.mrb[0].mxu0
        %4462 = vdwg.mxu0
        %4463 = vmatprep.subr.bf16.mxu0 %v3449
        %4464 = vmatpush1.bf16.msra.mxu0 %v3448
        %4465 = vmatprep.subr.bf16.mxu0 %v3453
        %4466 = vmatpush1.bf16.msra.mxu0 %v3452
        %4467 = vmatprep.subr.bf16.mxu0 %v3457
        %4468 = vmatpush1.bf16.msra.mxu0 %v3456
        %4469 = vmatprep.subr.bf16.mxu0 %v3461
        %4470 = vmatpush1.bf16.msra.mxu0 %v3460
        %4471 = vmatprep.subr.bf16.mxu0 %v3465
        %4472 = vmatpush1.bf16.msra.mxu0 %v3464
        %4473 = vmatprep.subr.bf16.mxu0 %v3469
        %4474 = vmatpush1.bf16.msra.mxu0 %v3468
        %4475 = vmatprep.subr.bf16.mxu0 %v3473
        %4476 = vmatpush1.bf16.msra.mxu0 %v3472
        %4477 = vmatprep.subr.bf16.mxu0 %v3477
        %4478 = vmatpush1.bf16.msra.mxu0 %v3476
        %4479 = vmatprep.subr.bf16.mxu0 %v3481
        %4480 = vmatpush1.bf16.msra.mxu0 %v3480
        %4481 = vmatprep.subr.bf16.mxu0 %v3485
        %4482 = vmatpush1.bf16.msra.mxu0 %v3484
        %4483 = vmatprep.subr.bf16.mxu0 %v3489
        %4484 = vmatpush1.bf16.msra.mxu0 %v3488
        %4485 = vmatprep.subr.bf16.mxu0 %v3493
        %4486 = vmatpush1.bf16.msra.mxu0 %v3492
        %4487 = vmatprep.subr.bf16.mxu0 0
        %4488 = vmatpush1.bf16.msra.mxu0 0
        %4489 = vmatprep.subr.bf16.mxu0 0
        %4490 = vmatpush1.bf16.msra.mxu0 0
        %4491 = vmatprep.subr.bf16.mxu0 0
        %4492 = vmatpush1.bf16.msra.mxu0 0
        %4493 = vmatprep.subr.bf16.mxu0 0
        %4494 = vmatpush1.bf16.msra.mxu0 0
        %4495 = vmatprep.mubr.bf16.mxu0 %v3928
        %4496 = vmatmul.mubr.bf16.gmra.mrb[0].mxu0 %v1736
        %v4497 = vpop.f32.mrb[0].mxu0
        %v4498 = vadd.f32 %v4457, %v4497
        %v4499 = vpop.f32.mrb[0].mxu0
        %v4500 = vadd.f32 %v4459, %v4499
        %v4501 = vpop.f32.mrb[0].mxu0
        %v4502 = vpop.f32.mrb[0].mxu0
        %4503 = vdwg.mxu0
        %v4504 = vmax.f32 %v4211, 0.0
        %v4505 = vmax.f32 %v4213, 0.0
        %v4506 = vmax.f32 %v4498, 0.0
        %v4507 = vmax.f32 %v4500, 0.0
        %v4508 = vld [vmem:[#allocation2] sm:$0xff]
        %v4509 = vld [vmem:[#allocation2 + $0x8] sm:$0xff]
        %v4510 = vpack.c.bf16 %v4504, %v4504
        %v4511 = vpack.c.bf16 %v4505, %v4505
        %v4512 = vpack.c.bf16 %v4506, %v4506
        %v4513 = vpack.c.bf16 %v4507, %v4507
        %v4514 = vld [vmem:[%s1190] sm:$0xff]
        %v4515 = vld [vmem:[%s1190 + $0x8] sm:$0xff]
        %v4516 = vld [vmem:[%s1190 + $0x10] sm:$0xff]
        %v4517 = vld [vmem:[%s1190 + $0x18] sm:$0xff]
        %v4518 = vld [vmem:[%s1190 + $0x20] sm:$0xff]
        %v4519 = vld [vmem:[%s1190 + $0x28] sm:$0xff]
        %v4520 = vld [vmem:[%s1190 + $0x30] sm:$0xff]
        %v4521 = vld [vmem:[%s1190 + $0x38] sm:$0xff]
        %v4522 = vld [vmem:[%s1190 + $0x40] sm:$0xff]
        %v4523 = vld [vmem:[%s1190 + $0x48] sm:$0xff]
        %v4524 = vld [vmem:[%s1190 + $0x50] sm:$0xff]
        %v4525 = vld [vmem:[%s1190 + $0x58] sm:$0xff]
        %v4526 = vld [vmem:[%s1190 + $0x60] sm:$0xff]
        %v4527 = vld [vmem:[%s1190 + $0x68] sm:$0xff]
        %v4528 = vld [vmem:[%s1190 + $0x70] sm:$0xff]
        %v4529 = vld [vmem:[%s1190 + $0x78] sm:$0xff]
        %v4530 = vld [vmem:[%s1190 + $0x80] sm:$0xff]
        %v4531 = vld [vmem:[%s1190 + $0x88] sm:$0xff]
        %v4532 = vld [vmem:[%s1190 + $0x90] sm:$0xff]
        %v4533 = vld [vmem:[%s1190 + $0x98] sm:$0xff]
        %v4534 = vld [vmem:[%s1190 + $0xa0] sm:$0xff]
        %v4535 = vld [vmem:[%s1190 + $0xa8] sm:$0xff]
        %v4536 = vld [vmem:[%s1190 + $0xb0] sm:$0xff]
        %v4537 = vld [vmem:[%s1190 + $0xb8] sm:$0xff]
        %v4538 = vld [vmem:[%s1190 + $0xc0] sm:$0xff]
        %v4539 = vld [vmem:[%s1190 + $0xc8] sm:$0xff]
        %v4540 = vld [vmem:[%s1190 + $0xd0] sm:$0xff]
        %v4541 = vld [vmem:[%s1190 + $0xd8] sm:$0xff]
        %v4542 = vld [vmem:[%s1190 + $0xe0] sm:$0xff]
        %v4543 = vld [vmem:[%s1190 + $0xe8] sm:$0xff]
        %v4544 = vld [vmem:[%s1190 + $0xf0] sm:$0xff]
        %v4545 = vld [vmem:[%s1190 + $0xf8] sm:$0xff]
        %v4546 = vld [vmem:[%s1190 + $0x100] sm:$0xff]
        %v4547 = vld [vmem:[%s1190 + $0x108] sm:$0xff]
        %v4548 = vld [vmem:[%s1190 + $0x110] sm:$0xff]
        %v4549 = vld [vmem:[%s1190 + $0x118] sm:$0xff]
        %v4550 = vld [vmem:[%s1190 + $0x120] sm:$0xff]
        %v4551 = vld [vmem:[%s1190 + $0x128] sm:$0xff]
        %v4552 = vld [vmem:[%s1190 + $0x130] sm:$0xff]
        %v4553 = vld [vmem:[%s1190 + $0x138] sm:$0xff]
        %v4554 = vld [vmem:[%s1190 + $0x140] sm:$0xff]
        %v4555 = vld [vmem:[%s1190 + $0x148] sm:$0xff]
        %v4556 = vld [vmem:[%s1190 + $0x150] sm:$0xff]
        %v4557 = vld [vmem:[%s1190 + $0x158] sm:$0xff]
        %v4558 = vld [vmem:[%s1190 + $0x160] sm:$0xff]
        %v4559 = vld [vmem:[%s1190 + $0x168] sm:$0xff]
        %v4560 = vld [vmem:[%s1190 + $0x170] sm:$0xff]
        %v4561 = vld [vmem:[%s1190 + $0x178] sm:$0xff]
        %v4562 = vld [vmem:[%s1190 + $0x180] sm:$0xff]
        %v4563 = vld [vmem:[%s1190 + $0x188] sm:$0xff]
        %v4564 = vld [vmem:[%s1190 + $0x190] sm:$0xff]
        %v4565 = vld [vmem:[%s1190 + $0x198] sm:$0xff]
        %v4566 = vld [vmem:[%s1190 + $0x1a0] sm:$0xff]
        %v4567 = vld [vmem:[%s1190 + $0x1a8] sm:$0xff]
        %v4568 = vld [vmem:[%s1190 + $0x1b0] sm:$0xff]
        %v4569 = vld [vmem:[%s1190 + $0x1b8] sm:$0xff]
        %v4570 = vld [vmem:[%s1190 + $0x1c0] sm:$0xff]
        %v4571 = vld [vmem:[%s1190 + $0x1c8] sm:$0xff]
        %v4572 = vld [vmem:[%s1190 + $0x1d0] sm:$0xff]
        %v4573 = vld [vmem:[%s1190 + $0x1d8] sm:$0xff]
        %v4574 = vld [vmem:[%s1190 + $0x1e0] sm:$0xff]
        %v4575 = vld [vmem:[%s1190 + $0x1e8] sm:$0xff]
        %v4576 = vld [vmem:[%s1190 + $0x1f0] sm:$0xff]
        %v4577 = vld [vmem:[%s1190 + $0x1f8] sm:$0xff]
        %v4578 = vld [vmem:[%s1190 + $0x200] sm:$0xff]
        %v4579 = vld [vmem:[%s1190 + $0x208] sm:$0xff]
        %v4580 = vld [vmem:[%s1190 + $0x210] sm:$0xff]
        %v4581 = vld [vmem:[%s1190 + $0x218] sm:$0xff]
        %v4582 = vld [vmem:[%s1190 + $0x220] sm:$0xff]
        %v4583 = vld [vmem:[%s1190 + $0x228] sm:$0xff]
        %v4584 = vld [vmem:[%s1190 + $0x230] sm:$0xff]
        %v4585 = vld [vmem:[%s1190 + $0x238] sm:$0xff]
        %v4586 = vld [vmem:[%s1190 + $0x240] sm:$0xff]
        %v4587 = vld [vmem:[%s1190 + $0x248] sm:$0xff]
        %v4588 = vld [vmem:[%s1190 + $0x250] sm:$0xff]
        %v4589 = vld [vmem:[%s1190 + $0x258] sm:$0xff]
        %v4590 = vld [vmem:[%s1190 + $0x260] sm:$0xff]
        %v4591 = vld [vmem:[%s1190 + $0x268] sm:$0xff]
        %v4592 = vld [vmem:[%s1190 + $0x270] sm:$0xff]
        %v4593 = vld [vmem:[%s1190 + $0x278] sm:$0xff]
        %v4594 = vld [vmem:[%s1190 + $0x280] sm:$0xff]
        %v4595 = vld [vmem:[%s1190 + $0x288] sm:$0xff]
        %v4596 = vld [vmem:[%s1190 + $0x290] sm:$0xff]
        %v4597 = vld [vmem:[%s1190 + $0x298] sm:$0xff]
        %v4598 = vld [vmem:[%s1190 + $0x2a0] sm:$0xff]
        %v4599 = vld [vmem:[%s1190 + $0x2a8] sm:$0xff]
        %v4600 = vld [vmem:[%s1190 + $0x2b0] sm:$0xff]
        %v4601 = vld [vmem:[%s1190 + $0x2b8] sm:$0xff]
        %v4602 = vld [vmem:[%s1190 + $0x2c0] sm:$0xff]
        %v4603 = vld [vmem:[%s1190 + $0x2c8] sm:$0xff]
        %v4604 = vld [vmem:[%s1190 + $0x2d0] sm:$0xff]
        %v4605 = vld [vmem:[%s1190 + $0x2d8] sm:$0xff]
        %v4606 = vld [vmem:[%s1190 + $0x2e0] sm:$0xff]
        %v4607 = vld [vmem:[%s1190 + $0x2e8] sm:$0xff]
        %v4608 = vld [vmem:[%s1190 + $0x2f0] sm:$0xff]
        %v4609 = vld [vmem:[%s1190 + $0x2f8] sm:$0xff]
        %v4610 = vld [vmem:[%s1190 + $0x300] sm:$0xff]
        %v4611 = vld [vmem:[%s1190 + $0x308] sm:$0xff]
        %v4612 = vld [vmem:[%s1190 + $0x310] sm:$0xff]
        %v4613 = vld [vmem:[%s1190 + $0x318] sm:$0xff]
        %v4614 = vld [vmem:[%s1190 + $0x320] sm:$0xff]
        %v4615 = vld [vmem:[%s1190 + $0x328] sm:$0xff]
        %v4616 = vld [vmem:[%s1190 + $0x330] sm:$0xff]
        %v4617 = vld [vmem:[%s1190 + $0x338] sm:$0xff]
        %v4618 = vld [vmem:[%s1190 + $0x340] sm:$0xff]
        %v4619 = vld [vmem:[%s1190 + $0x348] sm:$0xff]
        %v4620 = vld [vmem:[%s1190 + $0x350] sm:$0xff]
        %v4621 = vld [vmem:[%s1190 + $0x358] sm:$0xff]
        %v4622 = vld [vmem:[%s1190 + $0x360] sm:$0xff]
        %v4623 = vld [vmem:[%s1190 + $0x368] sm:$0xff]
        %v4624 = vld [vmem:[%s1190 + $0x370] sm:$0xff]
        %v4625 = vld [vmem:[%s1190 + $0x378] sm:$0xff]
        %v4626 = vld [vmem:[%s1190 + $0x380] sm:$0xff]
        %v4627 = vld [vmem:[%s1190 + $0x388] sm:$0xff]
        %v4628 = vld [vmem:[%s1190 + $0x390] sm:$0xff]
        %v4629 = vld [vmem:[%s1190 + $0x398] sm:$0xff]
        %v4630 = vld [vmem:[%s1190 + $0x3a0] sm:$0xff]
        %v4631 = vld [vmem:[%s1190 + $0x3a8] sm:$0xff]
        %v4632 = vld [vmem:[%s1190 + $0x3b0] sm:$0xff]
        %v4633 = vld [vmem:[%s1190 + $0x3b8] sm:$0xff]
        %v4634 = vld [vmem:[%s1190 + $0x3c0] sm:$0xff]
        %v4635 = vld [vmem:[%s1190 + $0x3c8] sm:$0xff]
        %v4636 = vld [vmem:[%s1190 + $0x3d0] sm:$0xff]
        %v4637 = vld [vmem:[%s1190 + $0x3d8] sm:$0xff]
        %v4638 = vld [vmem:[%s1190 + $0x3e0] sm:$0xff]
        %v4639 = vld [vmem:[%s1190 + $0x3e8] sm:$0xff]
        %v4640 = vld [vmem:[%s1190 + $0x3f0] sm:$0xff]
        %v4641 = vld [vmem:[%s1190 + $0x3f8] sm:$0xff]
        %v4642 = vld [vmem:[%s1190 + $0x400] sm:$0xff]
        %v4643 = vld [vmem:[%s1190 + $0x408] sm:$0xff]
        %v4644 = vld [vmem:[%s1190 + $0x410] sm:$0xff]
        %v4645 = vld [vmem:[%s1190 + $0x418] sm:$0xff]
        %v4646 = vld [vmem:[%s1190 + $0x420] sm:$0xff]
        %v4647 = vld [vmem:[%s1190 + $0x428] sm:$0xff]
        %v4648 = vld [vmem:[%s1190 + $0x430] sm:$0xff]
        %v4649 = vld [vmem:[%s1190 + $0x438] sm:$0xff]
        %v4650 = vld [vmem:[%s1190 + $0x440] sm:$0xff]
        %v4651 = vld [vmem:[%s1190 + $0x448] sm:$0xff]
        %v4652 = vld [vmem:[%s1190 + $0x450] sm:$0xff]
        %v4653 = vld [vmem:[%s1190 + $0x458] sm:$0xff]
        %v4654 = vld [vmem:[%s1190 + $0x460] sm:$0xff]
        %v4655 = vld [vmem:[%s1190 + $0x468] sm:$0xff]
        %v4656 = vld [vmem:[%s1190 + $0x470] sm:$0xff]
        %v4657 = vld [vmem:[%s1190 + $0x478] sm:$0xff]
        %v4658 = vld [vmem:[%s1190 + $0x480] sm:$0xff]
        %v4659 = vld [vmem:[%s1190 + $0x488] sm:$0xff]
        %v4660 = vld [vmem:[%s1190 + $0x490] sm:$0xff]
        %v4661 = vld [vmem:[%s1190 + $0x498] sm:$0xff]
        %v4662 = vld [vmem:[%s1190 + $0x4a0] sm:$0xff]
        %v4663 = vld [vmem:[%s1190 + $0x4a8] sm:$0xff]
        %v4664 = vld [vmem:[%s1190 + $0x4b0] sm:$0xff]
        %v4665 = vld [vmem:[%s1190 + $0x4b8] sm:$0xff]
        %v4666 = vld [vmem:[%s1190 + $0x4c0] sm:$0xff]
        %v4667 = vld [vmem:[%s1190 + $0x4c8] sm:$0xff]
        %v4668 = vld [vmem:[%s1190 + $0x4d0] sm:$0xff]
        %v4669 = vld [vmem:[%s1190 + $0x4d8] sm:$0xff]
        %v4670 = vld [vmem:[%s1190 + $0x4e0] sm:$0xff]
        %v4671 = vld [vmem:[%s1190 + $0x4e8] sm:$0xff]
        %v4672 = vld [vmem:[%s1190 + $0x4f0] sm:$0xff]
        %v4673 = vld [vmem:[%s1190 + $0x4f8] sm:$0xff]
        %v4674 = vld [vmem:[%s1190 + $0x500] sm:$0xff]
        %v4675 = vld [vmem:[%s1190 + $0x508] sm:$0xff]
        %v4676 = vld [vmem:[%s1190 + $0x510] sm:$0xff]
        %v4677 = vld [vmem:[%s1190 + $0x518] sm:$0xff]
        %v4678 = vld [vmem:[%s1190 + $0x520] sm:$0xff]
        %v4679 = vld [vmem:[%s1190 + $0x528] sm:$0xff]
        %v4680 = vld [vmem:[%s1190 + $0x530] sm:$0xff]
        %v4681 = vld [vmem:[%s1190 + $0x538] sm:$0xff]
        %v4682 = vld [vmem:[%s1190 + $0x540] sm:$0xff]
        %v4683 = vld [vmem:[%s1190 + $0x548] sm:$0xff]
        %v4684 = vld [vmem:[%s1190 + $0x550] sm:$0xff]
        %v4685 = vld [vmem:[%s1190 + $0x558] sm:$0xff]
        %v4686 = vld [vmem:[%s1190 + $0x560] sm:$0xff]
        %v4687 = vld [vmem:[%s1190 + $0x568] sm:$0xff]
        %v4688 = vld [vmem:[%s1190 + $0x570] sm:$0xff]
        %v4689 = vld [vmem:[%s1190 + $0x578] sm:$0xff]
        %v4690 = vld [vmem:[%s1190 + $0x580] sm:$0xff]
        %v4691 = vld [vmem:[%s1190 + $0x588] sm:$0xff]
        %v4692 = vld [vmem:[%s1190 + $0x590] sm:$0xff]
        %v4693 = vld [vmem:[%s1190 + $0x598] sm:$0xff]
        %v4694 = vld [vmem:[%s1190 + $0x5a0] sm:$0xff]
        %v4695 = vld [vmem:[%s1190 + $0x5a8] sm:$0xff]
        %v4696 = vld [vmem:[%s1190 + $0x5b0] sm:$0xff]
        %v4697 = vld [vmem:[%s1190 + $0x5b8] sm:$0xff]
        %v4698 = vld [vmem:[%s1190 + $0x5c0] sm:$0xff]
        %v4699 = vld [vmem:[%s1190 + $0x5c8] sm:$0xff]
        %v4700 = vld [vmem:[%s1190 + $0x5d0] sm:$0xff]
        %v4701 = vld [vmem:[%s1190 + $0x5d8] sm:$0xff]
        %v4702 = vld [vmem:[%s1190 + $0x5e0] sm:$0xff]
        %v4703 = vld [vmem:[%s1190 + $0x5e8] sm:$0xff]
        %v4704 = vld [vmem:[%s1190 + $0x5f0] sm:$0xff]
        %v4705 = vld [vmem:[%s1190 + $0x5f8] sm:$0xff]
        %v4706 = vld [vmem:[%s1190 + $0x600] sm:$0xff]
        %v4707 = vld [vmem:[%s1190 + $0x608] sm:$0xff]
        %v4708 = vld [vmem:[%s1190 + $0x610] sm:$0xff]
        %v4709 = vld [vmem:[%s1190 + $0x618] sm:$0xff]
        %v4710 = vld [vmem:[%s1190 + $0x620] sm:$0xff]
        %v4711 = vld [vmem:[%s1190 + $0x628] sm:$0xff]
        %v4712 = vld [vmem:[%s1190 + $0x630] sm:$0xff]
        %v4713 = vld [vmem:[%s1190 + $0x638] sm:$0xff]
        %v4714 = vld [vmem:[%s1190 + $0x640] sm:$0xff]
        %v4715 = vld [vmem:[%s1190 + $0x648] sm:$0xff]
        %v4716 = vld [vmem:[%s1190 + $0x650] sm:$0xff]
        %v4717 = vld [vmem:[%s1190 + $0x658] sm:$0xff]
        %v4718 = vld [vmem:[%s1190 + $0x660] sm:$0xff]
        %v4719 = vld [vmem:[%s1190 + $0x668] sm:$0xff]
        %v4720 = vld [vmem:[%s1190 + $0x670] sm:$0xff]
        %v4721 = vld [vmem:[%s1190 + $0x678] sm:$0xff]
        %v4722 = vld [vmem:[%s1190 + $0x680] sm:$0xff]
        %v4723 = vld [vmem:[%s1190 + $0x688] sm:$0xff]
        %v4724 = vld [vmem:[%s1190 + $0x690] sm:$0xff]
        %v4725 = vld [vmem:[%s1190 + $0x698] sm:$0xff]
        %v4726 = vld [vmem:[%s1190 + $0x6a0] sm:$0xff]
        %v4727 = vld [vmem:[%s1190 + $0x6a8] sm:$0xff]
        %v4728 = vld [vmem:[%s1190 + $0x6b0] sm:$0xff]
        %v4729 = vld [vmem:[%s1190 + $0x6b8] sm:$0xff]
        %v4730 = vld [vmem:[%s1190 + $0x6c0] sm:$0xff]
        %v4731 = vld [vmem:[%s1190 + $0x6c8] sm:$0xff]
        %v4732 = vld [vmem:[%s1190 + $0x6d0] sm:$0xff]
        %v4733 = vld [vmem:[%s1190 + $0x6d8] sm:$0xff]
        %v4734 = vld [vmem:[%s1190 + $0x6e0] sm:$0xff]
        %v4735 = vld [vmem:[%s1190 + $0x6e8] sm:$0xff]
        %v4736 = vld [vmem:[%s1190 + $0x6f0] sm:$0xff]
        %v4737 = vld [vmem:[%s1190 + $0x6f8] sm:$0xff]
        %v4738 = vld [vmem:[%s1190 + $0x700] sm:$0xff]
        %v4739 = vld [vmem:[%s1190 + $0x708] sm:$0xff]
        %v4740 = vld [vmem:[%s1190 + $0x710] sm:$0xff]
        %v4741 = vld [vmem:[%s1190 + $0x718] sm:$0xff]
        %v4742 = vld [vmem:[%s1190 + $0x720] sm:$0xff]
        %v4743 = vld [vmem:[%s1190 + $0x728] sm:$0xff]
        %v4744 = vld [vmem:[%s1190 + $0x730] sm:$0xff]
        %v4745 = vld [vmem:[%s1190 + $0x738] sm:$0xff]
        %v4746 = vld [vmem:[%s1190 + $0x740] sm:$0xff]
        %v4747 = vld [vmem:[%s1190 + $0x748] sm:$0xff]
        %v4748 = vld [vmem:[%s1190 + $0x750] sm:$0xff]
        %v4749 = vld [vmem:[%s1190 + $0x758] sm:$0xff]
        %v4750 = vld [vmem:[%s1190 + $0x760] sm:$0xff]
        %v4751 = vld [vmem:[%s1190 + $0x768] sm:$0xff]
        %v4752 = vld [vmem:[%s1190 + $0x770] sm:$0xff]
        %v4753 = vld [vmem:[%s1190 + $0x778] sm:$0xff]
        %v4754 = vld [vmem:[%s1190 + $0x780] sm:$0xff]
        %v4755 = vld [vmem:[%s1190 + $0x788] sm:$0xff]
        %v4756 = vld [vmem:[%s1190 + $0x790] sm:$0xff]
        %v4757 = vld [vmem:[%s1190 + $0x798] sm:$0xff]
        %v4758 = vld [vmem:[%s1190 + $0x7a0] sm:$0xff]
        %v4759 = vld [vmem:[%s1190 + $0x7a8] sm:$0xff]
        %v4760 = vld [vmem:[%s1190 + $0x7b0] sm:$0xff]
        %v4761 = vld [vmem:[%s1190 + $0x7b8] sm:$0xff]
        %v4762 = vld [vmem:[%s1190 + $0x7c0] sm:$0xff]
        %v4763 = vld [vmem:[%s1190 + $0x7c8] sm:$0xff]
        %v4764 = vld [vmem:[%s1190 + $0x7d0] sm:$0xff]
        %v4765 = vld [vmem:[%s1190 + $0x7d8] sm:$0xff]
        %v4766 = vld [vmem:[%s1190 + $0x7e0] sm:$0xff]
        %v4767 = vld [vmem:[%s1190 + $0x7e8] sm:$0xff]
        %v4768 = vld [vmem:[%s1190 + $0x7f0] sm:$0xff]
        %v4769 = vld [vmem:[%s1190 + $0x7f8] sm:$0xff]
        %v5026 = vunpack.c.l.b16 %v4514
        %v5027 = vunpack.c.h.b16 %v4514
        %v5028 = vunpack.c.l.b16 %v4515
        %v5029 = vunpack.c.h.b16 %v4515
        %v5030 = vunpack.c.l.b16 %v4516
        %v5031 = vunpack.c.h.b16 %v4516
        %v5032 = vunpack.c.l.b16 %v4517
        %v5033 = vunpack.c.h.b16 %v4517
        %v5034 = vunpack.c.l.b16 %v4518
        %v5035 = vunpack.c.h.b16 %v4518
        %v5036 = vunpack.c.l.b16 %v4519
        %v5037 = vunpack.c.h.b16 %v4519
        %v5038 = vunpack.c.l.b16 %v4520
        %v5039 = vunpack.c.h.b16 %v4520
        %v5040 = vunpack.c.l.b16 %v4521
        %v5041 = vunpack.c.h.b16 %v4521
        %v5042 = vunpack.c.l.b16 %v4522
        %v5043 = vunpack.c.h.b16 %v4522
        %v5044 = vunpack.c.l.b16 %v4523
        %v5045 = vunpack.c.h.b16 %v4523
        %v5046 = vunpack.c.l.b16 %v4524
        %v5047 = vunpack.c.h.b16 %v4524
        %v5048 = vunpack.c.l.b16 %v4525
        %v5049 = vunpack.c.h.b16 %v4525
        %v5050 = vunpack.c.l.b16 %v4526
        %v5051 = vunpack.c.h.b16 %v4526
        %v5052 = vunpack.c.l.b16 %v4527
        %v5053 = vunpack.c.h.b16 %v4527
        %v5054 = vunpack.c.l.b16 %v4528
        %v5055 = vunpack.c.h.b16 %v4528
        %v5056 = vunpack.c.l.b16 %v4529
        %v5057 = vunpack.c.h.b16 %v4529
        %v5058 = vunpack.c.l.b16 %v4530
        %v5059 = vunpack.c.h.b16 %v4530
        %v5060 = vunpack.c.l.b16 %v4531
        %v5061 = vunpack.c.h.b16 %v4531
        %v5062 = vunpack.c.l.b16 %v4532
        %v5063 = vunpack.c.h.b16 %v4532
        %v5064 = vunpack.c.l.b16 %v4533
        %v5065 = vunpack.c.h.b16 %v4533
        %v5066 = vunpack.c.l.b16 %v4534
        %v5067 = vunpack.c.h.b16 %v4534
        %v5068 = vunpack.c.l.b16 %v4535
        %v5069 = vunpack.c.h.b16 %v4535
        %v5070 = vunpack.c.l.b16 %v4536
        %v5071 = vunpack.c.h.b16 %v4536
        %v5072 = vunpack.c.l.b16 %v4537
        %v5073 = vunpack.c.h.b16 %v4537
        %v5074 = vunpack.c.l.b16 %v4538
        %v5075 = vunpack.c.h.b16 %v4538
        %v5076 = vunpack.c.l.b16 %v4539
        %v5077 = vunpack.c.h.b16 %v4539
        %v5078 = vunpack.c.l.b16 %v4540
        %v5079 = vunpack.c.h.b16 %v4540
        %v5080 = vunpack.c.l.b16 %v4541
        %v5081 = vunpack.c.h.b16 %v4541
        %v5082 = vunpack.c.l.b16 %v4542
        %v5083 = vunpack.c.h.b16 %v4542
        %v5084 = vunpack.c.l.b16 %v4543
        %v5085 = vunpack.c.h.b16 %v4543
        %v5086 = vunpack.c.l.b16 %v4544
        %v5087 = vunpack.c.h.b16 %v4544
        %v5088 = vunpack.c.l.b16 %v4545
        %v5089 = vunpack.c.h.b16 %v4545
        %v5090 = vunpack.c.l.b16 %v4546
        %v5091 = vunpack.c.h.b16 %v4546
        %v5092 = vunpack.c.l.b16 %v4547
        %v5093 = vunpack.c.h.b16 %v4547
        %v5094 = vunpack.c.l.b16 %v4548
        %v5095 = vunpack.c.h.b16 %v4548
        %v5096 = vunpack.c.l.b16 %v4549
        %v5097 = vunpack.c.h.b16 %v4549
        %v5098 = vunpack.c.l.b16 %v4550
        %v5099 = vunpack.c.h.b16 %v4550
        %v5100 = vunpack.c.l.b16 %v4551
        %v5101 = vunpack.c.h.b16 %v4551
        %v5102 = vunpack.c.l.b16 %v4552
        %v5103 = vunpack.c.h.b16 %v4552
        %v5104 = vunpack.c.l.b16 %v4553
        %v5105 = vunpack.c.h.b16 %v4553
        %v5106 = vunpack.c.l.b16 %v4554
        %v5107 = vunpack.c.h.b16 %v4554
        %v5108 = vunpack.c.l.b16 %v4555
        %v5109 = vunpack.c.h.b16 %v4555
        %v5110 = vunpack.c.l.b16 %v4556
        %v5111 = vunpack.c.h.b16 %v4556
        %v5112 = vunpack.c.l.b16 %v4557
        %v5113 = vunpack.c.h.b16 %v4557
        %v5114 = vunpack.c.l.b16 %v4558
        %v5115 = vunpack.c.h.b16 %v4558
        %v5116 = vunpack.c.l.b16 %v4559
        %v5117 = vunpack.c.h.b16 %v4559
        %v5118 = vunpack.c.l.b16 %v4560
        %v5119 = vunpack.c.h.b16 %v4560
        %v5120 = vunpack.c.l.b16 %v4561
        %v5121 = vunpack.c.h.b16 %v4561
        %v5122 = vunpack.c.l.b16 %v4562
        %v5123 = vunpack.c.h.b16 %v4562
        %v5124 = vunpack.c.l.b16 %v4563
        %v5125 = vunpack.c.h.b16 %v4563
        %v5126 = vunpack.c.l.b16 %v4564
        %v5127 = vunpack.c.h.b16 %v4564
        %v5128 = vunpack.c.l.b16 %v4565
        %v5129 = vunpack.c.h.b16 %v4565
        %v5130 = vunpack.c.l.b16 %v4566
        %v5131 = vunpack.c.h.b16 %v4566
        %v5132 = vunpack.c.l.b16 %v4567
        %v5133 = vunpack.c.h.b16 %v4567
        %v5134 = vunpack.c.l.b16 %v4568
        %v5135 = vunpack.c.h.b16 %v4568
        %v5136 = vunpack.c.l.b16 %v4569
        %v5137 = vunpack.c.h.b16 %v4569
        %v5138 = vunpack.c.l.b16 %v4570
        %v5139 = vunpack.c.h.b16 %v4570
        %v5140 = vunpack.c.l.b16 %v4571
        %v5141 = vunpack.c.h.b16 %v4571
        %v5142 = vunpack.c.l.b16 %v4572
        %v5143 = vunpack.c.h.b16 %v4572
        %v5144 = vunpack.c.l.b16 %v4573
        %v5145 = vunpack.c.h.b16 %v4573
        %v5146 = vunpack.c.l.b16 %v4574
        %v5147 = vunpack.c.h.b16 %v4574
        %v5148 = vunpack.c.l.b16 %v4575
        %v5149 = vunpack.c.h.b16 %v4575
        %v5150 = vunpack.c.l.b16 %v4576
        %v5151 = vunpack.c.h.b16 %v4576
        %v5152 = vunpack.c.l.b16 %v4577
        %v5153 = vunpack.c.h.b16 %v4577
        %v5154 = vunpack.c.l.b16 %v4578
        %v5155 = vunpack.c.h.b16 %v4578
        %v5156 = vunpack.c.l.b16 %v4579
        %v5157 = vunpack.c.h.b16 %v4579
        %v5158 = vunpack.c.l.b16 %v4580
        %v5159 = vunpack.c.h.b16 %v4580
        %v5160 = vunpack.c.l.b16 %v4581
        %v5161 = vunpack.c.h.b16 %v4581
        %v5162 = vunpack.c.l.b16 %v4582
        %v5163 = vunpack.c.h.b16 %v4582
        %v5164 = vunpack.c.l.b16 %v4583
        %v5165 = vunpack.c.h.b16 %v4583
        %v5166 = vunpack.c.l.b16 %v4584
        %v5167 = vunpack.c.h.b16 %v4584
        %v5168 = vunpack.c.l.b16 %v4585
        %v5169 = vunpack.c.h.b16 %v4585
        %v5170 = vunpack.c.l.b16 %v4586
        %v5171 = vunpack.c.h.b16 %v4586
        %v5172 = vunpack.c.l.b16 %v4587
        %v5173 = vunpack.c.h.b16 %v4587
        %v5174 = vunpack.c.l.b16 %v4588
        %v5175 = vunpack.c.h.b16 %v4588
        %v5176 = vunpack.c.l.b16 %v4589
        %v5177 = vunpack.c.h.b16 %v4589
        %v5178 = vunpack.c.l.b16 %v4590
        %v5179 = vunpack.c.h.b16 %v4590
        %v5180 = vunpack.c.l.b16 %v4591
        %v5181 = vunpack.c.h.b16 %v4591
        %v5182 = vunpack.c.l.b16 %v4592
        %v5183 = vunpack.c.h.b16 %v4592
        %v5184 = vunpack.c.l.b16 %v4593
        %v5185 = vunpack.c.h.b16 %v4593
        %v5186 = vunpack.c.l.b16 %v4594
        %v5187 = vunpack.c.h.b16 %v4594
        %v5188 = vunpack.c.l.b16 %v4595
        %v5189 = vunpack.c.h.b16 %v4595
        %v5190 = vunpack.c.l.b16 %v4596
        %v5191 = vunpack.c.h.b16 %v4596
        %v5192 = vunpack.c.l.b16 %v4597
        %v5193 = vunpack.c.h.b16 %v4597
        %v5194 = vunpack.c.l.b16 %v4598
        %v5195 = vunpack.c.h.b16 %v4598
        %v5196 = vunpack.c.l.b16 %v4599
        %v5197 = vunpack.c.h.b16 %v4599
        %v5198 = vunpack.c.l.b16 %v4600
        %v5199 = vunpack.c.h.b16 %v4600
        %v5200 = vunpack.c.l.b16 %v4601
        %v5201 = vunpack.c.h.b16 %v4601
        %v5202 = vunpack.c.l.b16 %v4602
        %v5203 = vunpack.c.h.b16 %v4602
        %v5204 = vunpack.c.l.b16 %v4603
        %v5205 = vunpack.c.h.b16 %v4603
        %v5206 = vunpack.c.l.b16 %v4604
        %v5207 = vunpack.c.h.b16 %v4604
        %v5208 = vunpack.c.l.b16 %v4605
        %v5209 = vunpack.c.h.b16 %v4605
        %v5210 = vunpack.c.l.b16 %v4606
        %v5211 = vunpack.c.h.b16 %v4606
        %v5212 = vunpack.c.l.b16 %v4607
        %v5213 = vunpack.c.h.b16 %v4607
        %v5214 = vunpack.c.l.b16 %v4608
        %v5215 = vunpack.c.h.b16 %v4608
        %v5216 = vunpack.c.l.b16 %v4609
        %v5217 = vunpack.c.h.b16 %v4609
        %v5218 = vunpack.c.l.b16 %v4610
        %v5219 = vunpack.c.h.b16 %v4610
        %v5220 = vunpack.c.l.b16 %v4611
        %v5221 = vunpack.c.h.b16 %v4611
        %v5222 = vunpack.c.l.b16 %v4612
        %v5223 = vunpack.c.h.b16 %v4612
        %v5224 = vunpack.c.l.b16 %v4613
        %v5225 = vunpack.c.h.b16 %v4613
        %v5226 = vunpack.c.l.b16 %v4614
        %v5227 = vunpack.c.h.b16 %v4614
        %v5228 = vunpack.c.l.b16 %v4615
        %v5229 = vunpack.c.h.b16 %v4615
        %v5230 = vunpack.c.l.b16 %v4616
        %v5231 = vunpack.c.h.b16 %v4616
        %v5232 = vunpack.c.l.b16 %v4617
        %v5233 = vunpack.c.h.b16 %v4617
        %v5234 = vunpack.c.l.b16 %v4618
        %v5235 = vunpack.c.h.b16 %v4618
        %v5236 = vunpack.c.l.b16 %v4619
        %v5237 = vunpack.c.h.b16 %v4619
        %v5238 = vunpack.c.l.b16 %v4620
        %v5239 = vunpack.c.h.b16 %v4620
        %v5240 = vunpack.c.l.b16 %v4621
        %v5241 = vunpack.c.h.b16 %v4621
        %v5242 = vunpack.c.l.b16 %v4622
        %v5243 = vunpack.c.h.b16 %v4622
        %v5244 = vunpack.c.l.b16 %v4623
        %v5245 = vunpack.c.h.b16 %v4623
        %v5246 = vunpack.c.l.b16 %v4624
        %v5247 = vunpack.c.h.b16 %v4624
        %v5248 = vunpack.c.l.b16 %v4625
        %v5249 = vunpack.c.h.b16 %v4625
        %v5250 = vunpack.c.l.b16 %v4626
        %v5251 = vunpack.c.h.b16 %v4626
        %v5252 = vunpack.c.l.b16 %v4627
        %v5253 = vunpack.c.h.b16 %v4627
        %v5254 = vunpack.c.l.b16 %v4628
        %v5255 = vunpack.c.h.b16 %v4628
        %v5256 = vunpack.c.l.b16 %v4629
        %v5257 = vunpack.c.h.b16 %v4629
        %v5258 = vunpack.c.l.b16 %v4630
        %v5259 = vunpack.c.h.b16 %v4630
        %v5260 = vunpack.c.l.b16 %v4631
        %v5261 = vunpack.c.h.b16 %v4631
        %v5262 = vunpack.c.l.b16 %v4632
        %v5263 = vunpack.c.h.b16 %v4632
        %v5264 = vunpack.c.l.b16 %v4633
        %v5265 = vunpack.c.h.b16 %v4633
        %v5266 = vunpack.c.l.b16 %v4634
        %v5267 = vunpack.c.h.b16 %v4634
        %v5268 = vunpack.c.l.b16 %v4635
        %v5269 = vunpack.c.h.b16 %v4635
        %v5270 = vunpack.c.l.b16 %v4636
        %v5271 = vunpack.c.h.b16 %v4636
        %v5272 = vunpack.c.l.b16 %v4637
        %v5273 = vunpack.c.h.b16 %v4637
        %v5274 = vunpack.c.l.b16 %v4638
        %v5275 = vunpack.c.h.b16 %v4638
        %v5276 = vunpack.c.l.b16 %v4639
        %v5277 = vunpack.c.h.b16 %v4639
        %v5278 = vunpack.c.l.b16 %v4640
        %v5279 = vunpack.c.h.b16 %v4640
        %v5280 = vunpack.c.l.b16 %v4641
        %v5281 = vunpack.c.h.b16 %v4641
        %v5282 = vunpack.c.l.b16 %v4642
        %v5283 = vunpack.c.h.b16 %v4642
        %v5284 = vunpack.c.l.b16 %v4643
        %v5285 = vunpack.c.h.b16 %v4643
        %v5286 = vunpack.c.l.b16 %v4644
        %v5287 = vunpack.c.h.b16 %v4644
        %v5288 = vunpack.c.l.b16 %v4645
        %v5289 = vunpack.c.h.b16 %v4645
        %v5290 = vunpack.c.l.b16 %v4646
        %v5291 = vunpack.c.h.b16 %v4646
        %v5292 = vunpack.c.l.b16 %v4647
        %v5293 = vunpack.c.h.b16 %v4647
        %v5294 = vunpack.c.l.b16 %v4648
        %v5295 = vunpack.c.h.b16 %v4648
        %v5296 = vunpack.c.l.b16 %v4649
        %v5297 = vunpack.c.h.b16 %v4649
        %v5298 = vunpack.c.l.b16 %v4650
        %v5299 = vunpack.c.h.b16 %v4650
        %v5300 = vunpack.c.l.b16 %v4651
        %v5301 = vunpack.c.h.b16 %v4651
        %v5302 = vunpack.c.l.b16 %v4652
        %v5303 = vunpack.c.h.b16 %v4652
        %v5304 = vunpack.c.l.b16 %v4653
        %v5305 = vunpack.c.h.b16 %v4653
        %v5306 = vunpack.c.l.b16 %v4654
        %v5307 = vunpack.c.h.b16 %v4654
        %v5308 = vunpack.c.l.b16 %v4655
        %v5309 = vunpack.c.h.b16 %v4655
        %v5310 = vunpack.c.l.b16 %v4656
        %v5311 = vunpack.c.h.b16 %v4656
        %v5312 = vunpack.c.l.b16 %v4657
        %v5313 = vunpack.c.h.b16 %v4657
        %v5314 = vunpack.c.l.b16 %v4658
        %v5315 = vunpack.c.h.b16 %v4658
        %v5316 = vunpack.c.l.b16 %v4659
        %v5317 = vunpack.c.h.b16 %v4659
        %v5318 = vunpack.c.l.b16 %v4660
        %v5319 = vunpack.c.h.b16 %v4660
        %v5320 = vunpack.c.l.b16 %v4661
        %v5321 = vunpack.c.h.b16 %v4661
        %v5322 = vunpack.c.l.b16 %v4662
        %v5323 = vunpack.c.h.b16 %v4662
        %v5324 = vunpack.c.l.b16 %v4663
        %v5325 = vunpack.c.h.b16 %v4663
        %v5326 = vunpack.c.l.b16 %v4664
        %v5327 = vunpack.c.h.b16 %v4664
        %v5328 = vunpack.c.l.b16 %v4665
        %v5329 = vunpack.c.h.b16 %v4665
        %v5330 = vunpack.c.l.b16 %v4666
        %v5331 = vunpack.c.h.b16 %v4666
        %v5332 = vunpack.c.l.b16 %v4667
        %v5333 = vunpack.c.h.b16 %v4667
        %v5334 = vunpack.c.l.b16 %v4668
        %v5335 = vunpack.c.h.b16 %v4668
        %v5336 = vunpack.c.l.b16 %v4669
        %v5337 = vunpack.c.h.b16 %v4669
        %v5338 = vunpack.c.l.b16 %v4670
        %v5339 = vunpack.c.h.b16 %v4670
        %v5340 = vunpack.c.l.b16 %v4671
        %v5341 = vunpack.c.h.b16 %v4671
        %v5342 = vunpack.c.l.b16 %v4672
        %v5343 = vunpack.c.h.b16 %v4672
        %v5344 = vunpack.c.l.b16 %v4673
        %v5345 = vunpack.c.h.b16 %v4673
        %v5346 = vunpack.c.l.b16 %v4674
        %v5347 = vunpack.c.h.b16 %v4674
        %v5348 = vunpack.c.l.b16 %v4675
        %v5349 = vunpack.c.h.b16 %v4675
        %v5350 = vunpack.c.l.b16 %v4676
        %v5351 = vunpack.c.h.b16 %v4676
        %v5352 = vunpack.c.l.b16 %v4677
        %v5353 = vunpack.c.h.b16 %v4677
        %v5354 = vunpack.c.l.b16 %v4678
        %v5355 = vunpack.c.h.b16 %v4678
        %v5356 = vunpack.c.l.b16 %v4679
        %v5357 = vunpack.c.h.b16 %v4679
        %v5358 = vunpack.c.l.b16 %v4680
        %v5359 = vunpack.c.h.b16 %v4680
        %v5360 = vunpack.c.l.b16 %v4681
        %v5361 = vunpack.c.h.b16 %v4681
        %v5362 = vunpack.c.l.b16 %v4682
        %v5363 = vunpack.c.h.b16 %v4682
        %v5364 = vunpack.c.l.b16 %v4683
        %v5365 = vunpack.c.h.b16 %v4683
        %v5366 = vunpack.c.l.b16 %v4684
        %v5367 = vunpack.c.h.b16 %v4684
        %v5368 = vunpack.c.l.b16 %v4685
        %v5369 = vunpack.c.h.b16 %v4685
        %v5370 = vunpack.c.l.b16 %v4686
        %v5371 = vunpack.c.h.b16 %v4686
        %v5372 = vunpack.c.l.b16 %v4687
        %v5373 = vunpack.c.h.b16 %v4687
        %v5374 = vunpack.c.l.b16 %v4688
        %v5375 = vunpack.c.h.b16 %v4688
        %v5376 = vunpack.c.l.b16 %v4689
        %v5377 = vunpack.c.h.b16 %v4689
        %v5378 = vunpack.c.l.b16 %v4690
        %v5379 = vunpack.c.h.b16 %v4690
        %v5380 = vunpack.c.l.b16 %v4691
        %v5381 = vunpack.c.h.b16 %v4691
        %v5382 = vunpack.c.l.b16 %v4692
        %v5383 = vunpack.c.h.b16 %v4692
        %v5384 = vunpack.c.l.b16 %v4693
        %v5385 = vunpack.c.h.b16 %v4693
        %v5386 = vunpack.c.l.b16 %v4694
        %v5387 = vunpack.c.h.b16 %v4694
        %v5388 = vunpack.c.l.b16 %v4695
        %v5389 = vunpack.c.h.b16 %v4695
        %v5390 = vunpack.c.l.b16 %v4696
        %v5391 = vunpack.c.h.b16 %v4696
        %v5392 = vunpack.c.l.b16 %v4697
        %v5393 = vunpack.c.h.b16 %v4697
        %v5394 = vunpack.c.l.b16 %v4698
        %v5395 = vunpack.c.h.b16 %v4698
        %v5396 = vunpack.c.l.b16 %v4699
        %v5397 = vunpack.c.h.b16 %v4699
        %v5398 = vunpack.c.l.b16 %v4700
        %v5399 = vunpack.c.h.b16 %v4700
        %v5400 = vunpack.c.l.b16 %v4701
        %v5401 = vunpack.c.h.b16 %v4701
        %v5402 = vunpack.c.l.b16 %v4702
        %v5403 = vunpack.c.h.b16 %v4702
        %v5404 = vunpack.c.l.b16 %v4703
        %v5405 = vunpack.c.h.b16 %v4703
        %v5406 = vunpack.c.l.b16 %v4704
        %v5407 = vunpack.c.h.b16 %v4704
        %v5408 = vunpack.c.l.b16 %v4705
        %v5409 = vunpack.c.h.b16 %v4705
        %v5410 = vunpack.c.l.b16 %v4706
        %v5411 = vunpack.c.h.b16 %v4706
        %v5412 = vunpack.c.l.b16 %v4707
        %v5413 = vunpack.c.h.b16 %v4707
        %v5414 = vunpack.c.l.b16 %v4708
        %v5415 = vunpack.c.h.b16 %v4708
        %v5416 = vunpack.c.l.b16 %v4709
        %v5417 = vunpack.c.h.b16 %v4709
        %v5418 = vunpack.c.l.b16 %v4710
        %v5419 = vunpack.c.h.b16 %v4710
        %v5420 = vunpack.c.l.b16 %v4711
        %v5421 = vunpack.c.h.b16 %v4711
        %v5422 = vunpack.c.l.b16 %v4712
        %v5423 = vunpack.c.h.b16 %v4712
        %v5424 = vunpack.c.l.b16 %v4713
        %v5425 = vunpack.c.h.b16 %v4713
        %v5426 = vunpack.c.l.b16 %v4714
        %v5427 = vunpack.c.h.b16 %v4714
        %v5428 = vunpack.c.l.b16 %v4715
        %v5429 = vunpack.c.h.b16 %v4715
        %v5430 = vunpack.c.l.b16 %v4716
        %v5431 = vunpack.c.h.b16 %v4716
        %v5432 = vunpack.c.l.b16 %v4717
        %v5433 = vunpack.c.h.b16 %v4717
        %v5434 = vunpack.c.l.b16 %v4718
        %v5435 = vunpack.c.h.b16 %v4718
        %v5436 = vunpack.c.l.b16 %v4719
        %v5437 = vunpack.c.h.b16 %v4719
        %v5438 = vunpack.c.l.b16 %v4720
        %v5439 = vunpack.c.h.b16 %v4720
        %v5440 = vunpack.c.l.b16 %v4721
        %v5441 = vunpack.c.h.b16 %v4721
        %v5442 = vunpack.c.l.b16 %v4722
        %v5443 = vunpack.c.h.b16 %v4722
        %v5444 = vunpack.c.l.b16 %v4723
        %v5445 = vunpack.c.h.b16 %v4723
        %v5446 = vunpack.c.l.b16 %v4724
        %v5447 = vunpack.c.h.b16 %v4724
        %v5448 = vunpack.c.l.b16 %v4725
        %v5449 = vunpack.c.h.b16 %v4725
        %v5450 = vunpack.c.l.b16 %v4726
        %v5451 = vunpack.c.h.b16 %v4726
        %v5452 = vunpack.c.l.b16 %v4727
        %v5453 = vunpack.c.h.b16 %v4727
        %v5454 = vunpack.c.l.b16 %v4728
        %v5455 = vunpack.c.h.b16 %v4728
        %v5456 = vunpack.c.l.b16 %v4729
        %v5457 = vunpack.c.h.b16 %v4729
        %v5458 = vunpack.c.l.b16 %v4730
        %v5459 = vunpack.c.h.b16 %v4730
        %v5460 = vunpack.c.l.b16 %v4731
        %v5461 = vunpack.c.h.b16 %v4731
        %v5462 = vunpack.c.l.b16 %v4732
        %v5463 = vunpack.c.h.b16 %v4732
        %v5464 = vunpack.c.l.b16 %v4733
        %v5465 = vunpack.c.h.b16 %v4733
        %v5466 = vunpack.c.l.b16 %v4734
        %v5467 = vunpack.c.h.b16 %v4734
        %v5468 = vunpack.c.l.b16 %v4735
        %v5469 = vunpack.c.h.b16 %v4735
        %v5470 = vunpack.c.l.b16 %v4736
        %v5471 = vunpack.c.h.b16 %v4736
        %v5472 = vunpack.c.l.b16 %v4737
        %v5473 = vunpack.c.h.b16 %v4737
        %v5474 = vunpack.c.l.b16 %v4738
        %v5475 = vunpack.c.h.b16 %v4738
        %v5476 = vunpack.c.l.b16 %v4739
        %v5477 = vunpack.c.h.b16 %v4739
        %v5478 = vunpack.c.l.b16 %v4740
        %v5479 = vunpack.c.h.b16 %v4740
        %v5480 = vunpack.c.l.b16 %v4741
        %v5481 = vunpack.c.h.b16 %v4741
        %v5482 = vunpack.c.l.b16 %v4742
        %v5483 = vunpack.c.h.b16 %v4742
        %v5484 = vunpack.c.l.b16 %v4743
        %v5485 = vunpack.c.h.b16 %v4743
        %v5486 = vunpack.c.l.b16 %v4744
        %v5487 = vunpack.c.h.b16 %v4744
        %v5488 = vunpack.c.l.b16 %v4745
        %v5489 = vunpack.c.h.b16 %v4745
        %v5490 = vunpack.c.l.b16 %v4746
        %v5491 = vunpack.c.h.b16 %v4746
        %v5492 = vunpack.c.l.b16 %v4747
        %v5493 = vunpack.c.h.b16 %v4747
        %v5494 = vunpack.c.l.b16 %v4748
        %v5495 = vunpack.c.h.b16 %v4748
        %v5496 = vunpack.c.l.b16 %v4749
        %v5497 = vunpack.c.h.b16 %v4749
        %v5498 = vunpack.c.l.b16 %v4750
        %v5499 = vunpack.c.h.b16 %v4750
        %v5500 = vunpack.c.l.b16 %v4751
        %v5501 = vunpack.c.h.b16 %v4751
        %v5502 = vunpack.c.l.b16 %v4752
        %v5503 = vunpack.c.h.b16 %v4752
        %v5504 = vunpack.c.l.b16 %v4753
        %v5505 = vunpack.c.h.b16 %v4753
        %v5506 = vunpack.c.l.b16 %v4754
        %v5507 = vunpack.c.h.b16 %v4754
        %v5508 = vunpack.c.l.b16 %v4755
        %v5509 = vunpack.c.h.b16 %v4755
        %v5510 = vunpack.c.l.b16 %v4756
        %v5511 = vunpack.c.h.b16 %v4756
        %v5512 = vunpack.c.l.b16 %v4757
        %v5513 = vunpack.c.h.b16 %v4757
        %v5514 = vunpack.c.l.b16 %v4758
        %v5515 = vunpack.c.h.b16 %v4758
        %v5516 = vunpack.c.l.b16 %v4759
        %v5517 = vunpack.c.h.b16 %v4759
        %v5518 = vunpack.c.l.b16 %v4760
        %v5519 = vunpack.c.h.b16 %v4760
        %v5520 = vunpack.c.l.b16 %v4761
        %v5521 = vunpack.c.h.b16 %v4761
        %v5522 = vunpack.c.l.b16 %v4762
        %v5523 = vunpack.c.h.b16 %v4762
        %v5524 = vunpack.c.l.b16 %v4763
        %v5525 = vunpack.c.h.b16 %v4763
        %v5526 = vunpack.c.l.b16 %v4764
        %v5527 = vunpack.c.h.b16 %v4764
        %v5528 = vunpack.c.l.b16 %v4765
        %v5529 = vunpack.c.h.b16 %v4765
        %v5530 = vunpack.c.l.b16 %v4766
        %v5531 = vunpack.c.h.b16 %v4766
        %v5532 = vunpack.c.l.b16 %v4767
        %v5533 = vunpack.c.h.b16 %v4767
        %v5534 = vunpack.c.l.b16 %v4768
        %v5535 = vunpack.c.h.b16 %v4768
        %v5536 = vunpack.c.l.b16 %v4769
        %v5537 = vunpack.c.h.b16 %v4769
        %v5538 = vpack.c.b16 %v5034, %v5026
        %v5539 = vpack.c.b16 %v5035, %v5027
        %v5540 = vpack.c.b16 %v5036, %v5028
        %v5541 = vpack.c.b16 %v5037, %v5029
        %v5542 = vpack.c.b16 %v5038, %v5030
        %v5543 = vpack.c.b16 %v5039, %v5031
        %v5544 = vpack.c.b16 %v5040, %v5032
        %v5545 = vpack.c.b16 %v5041, %v5033
        %v5546 = vpack.c.b16 %v5050, %v5042
        %v5547 = vpack.c.b16 %v5051, %v5043
        %v5548 = vpack.c.b16 %v5052, %v5044
        %v5549 = vpack.c.b16 %v5053, %v5045
        %v5550 = vpack.c.b16 %v5054, %v5046
        %v5551 = vpack.c.b16 %v5055, %v5047
        %v5552 = vpack.c.b16 %v5056, %v5048
        %v5553 = vpack.c.b16 %v5057, %v5049
        %v5554 = vpack.c.b16 %v5066, %v5058
        %v5555 = vpack.c.b16 %v5067, %v5059
        %v5556 = vpack.c.b16 %v5068, %v5060
        %v5557 = vpack.c.b16 %v5069, %v5061
        %v5558 = vpack.c.b16 %v5070, %v5062
        %v5559 = vpack.c.b16 %v5071, %v5063
        %v5560 = vpack.c.b16 %v5072, %v5064
        %v5561 = vpack.c.b16 %v5073, %v5065
        %v5562 = vpack.c.b16 %v5082, %v5074
        %v5563 = vpack.c.b16 %v5083, %v5075
        %v5564 = vpack.c.b16 %v5084, %v5076
        %v5565 = vpack.c.b16 %v5085, %v5077
        %v5566 = vpack.c.b16 %v5086, %v5078
        %v5567 = vpack.c.b16 %v5087, %v5079
        %v5568 = vpack.c.b16 %v5088, %v5080
        %v5569 = vpack.c.b16 %v5089, %v5081
        %v5570 = vpack.c.b16 %v5098, %v5090
        %v5571 = vpack.c.b16 %v5099, %v5091
        %v5572 = vpack.c.b16 %v5100, %v5092
        %v5573 = vpack.c.b16 %v5101, %v5093
        %v5574 = vpack.c.b16 %v5102, %v5094
        %v5575 = vpack.c.b16 %v5103, %v5095
        %v5576 = vpack.c.b16 %v5104, %v5096
        %v5577 = vpack.c.b16 %v5105, %v5097
        %v5578 = vpack.c.b16 %v5114, %v5106
        %v5579 = vpack.c.b16 %v5115, %v5107
        %v5580 = vpack.c.b16 %v5116, %v5108
        %v5581 = vpack.c.b16 %v5117, %v5109
        %v5582 = vpack.c.b16 %v5118, %v5110
        %v5583 = vpack.c.b16 %v5119, %v5111
        %v5584 = vpack.c.b16 %v5120, %v5112
        %v5585 = vpack.c.b16 %v5121, %v5113
        %v5586 = vpack.c.b16 %v5130, %v5122
        %v5587 = vpack.c.b16 %v5131, %v5123
        %v5588 = vpack.c.b16 %v5132, %v5124
        %v5589 = vpack.c.b16 %v5133, %v5125
        %v5590 = vpack.c.b16 %v5134, %v5126
        %v5591 = vpack.c.b16 %v5135, %v5127
        %v5592 = vpack.c.b16 %v5136, %v5128
        %v5593 = vpack.c.b16 %v5137, %v5129
        %v5594 = vpack.c.b16 %v5146, %v5138
        %v5595 = vpack.c.b16 %v5147, %v5139
        %v5596 = vpack.c.b16 %v5148, %v5140
        %v5597 = vpack.c.b16 %v5149, %v5141
        %v5598 = vpack.c.b16 %v5150, %v5142
        %v5599 = vpack.c.b16 %v5151, %v5143
        %v5600 = vpack.c.b16 %v5152, %v5144
        %v5601 = vpack.c.b16 %v5153, %v5145
        %v5602 = vpack.c.b16 %v5162, %v5154
        %v5603 = vpack.c.b16 %v5163, %v5155
        %v5604 = vpack.c.b16 %v5164, %v5156
        %v5605 = vpack.c.b16 %v5165, %v5157
        %v5606 = vpack.c.b16 %v5166, %v5158
        %v5607 = vpack.c.b16 %v5167, %v5159
        %v5608 = vpack.c.b16 %v5168, %v5160
        %v5609 = vpack.c.b16 %v5169, %v5161
        %v5610 = vpack.c.b16 %v5178, %v5170
        %v5611 = vpack.c.b16 %v5179, %v5171
        %v5612 = vpack.c.b16 %v5180, %v5172
        %v5613 = vpack.c.b16 %v5181, %v5173
        %v5614 = vpack.c.b16 %v5182, %v5174
        %v5615 = vpack.c.b16 %v5183, %v5175
        %v5616 = vpack.c.b16 %v5184, %v5176
        %v5617 = vpack.c.b16 %v5185, %v5177
        %v5618 = vpack.c.b16 %v5194, %v5186
        %v5619 = vpack.c.b16 %v5195, %v5187
        %v5620 = vpack.c.b16 %v5196, %v5188
        %v5621 = vpack.c.b16 %v5197, %v5189
        %v5622 = vpack.c.b16 %v5198, %v5190
        %v5623 = vpack.c.b16 %v5199, %v5191
        %v5624 = vpack.c.b16 %v5200, %v5192
        %v5625 = vpack.c.b16 %v5201, %v5193
        %v5626 = vpack.c.b16 %v5210, %v5202
        %v5627 = vpack.c.b16 %v5211, %v5203
        %v5628 = vpack.c.b16 %v5212, %v5204
        %v5629 = vpack.c.b16 %v5213, %v5205
        %v5630 = vpack.c.b16 %v5214, %v5206
        %v5631 = vpack.c.b16 %v5215, %v5207
        %v5632 = vpack.c.b16 %v5216, %v5208
        %v5633 = vpack.c.b16 %v5217, %v5209
        %v5634 = vpack.c.b16 %v5226, %v5218
        %v5635 = vpack.c.b16 %v5227, %v5219
        %v5636 = vpack.c.b16 %v5228, %v5220
        %v5637 = vpack.c.b16 %v5229, %v5221
        %v5638 = vpack.c.b16 %v5230, %v5222
        %v5639 = vpack.c.b16 %v5231, %v5223
        %v5640 = vpack.c.b16 %v5232, %v5224
        %v5641 = vpack.c.b16 %v5233, %v5225
        %v5642 = vpack.c.b16 %v5242, %v5234
        %v5643 = vpack.c.b16 %v5243, %v5235
        %v5644 = vpack.c.b16 %v5244, %v5236
        %v5645 = vpack.c.b16 %v5245, %v5237
        %v5646 = vpack.c.b16 %v5246, %v5238
        %v5647 = vpack.c.b16 %v5247, %v5239
        %v5648 = vpack.c.b16 %v5248, %v5240
        %v5649 = vpack.c.b16 %v5249, %v5241
        %v5650 = vpack.c.b16 %v5258, %v5250
        %v5651 = vpack.c.b16 %v5259, %v5251
        %v5652 = vpack.c.b16 %v5260, %v5252
        %v5653 = vpack.c.b16 %v5261, %v5253
        %v5654 = vpack.c.b16 %v5262, %v5254
        %v5655 = vpack.c.b16 %v5263, %v5255
        %v5656 = vpack.c.b16 %v5264, %v5256
        %v5657 = vpack.c.b16 %v5265, %v5257
        %v5658 = vpack.c.b16 %v5274, %v5266
        %v5659 = vpack.c.b16 %v5275, %v5267
        %v5660 = vpack.c.b16 %v5276, %v5268
        %v5661 = vpack.c.b16 %v5277, %v5269
        %v5662 = vpack.c.b16 %v5278, %v5270
        %v5663 = vpack.c.b16 %v5279, %v5271
        %v5664 = vpack.c.b16 %v5280, %v5272
        %v5665 = vpack.c.b16 %v5281, %v5273
        %v5666 = vpack.c.b16 %v5290, %v5282
        %v5667 = vpack.c.b16 %v5291, %v5283
        %v5668 = vpack.c.b16 %v5292, %v5284
        %v5669 = vpack.c.b16 %v5293, %v5285
        %v5670 = vpack.c.b16 %v5294, %v5286
        %v5671 = vpack.c.b16 %v5295, %v5287
        %v5672 = vpack.c.b16 %v5296, %v5288
        %v5673 = vpack.c.b16 %v5297, %v5289
        %v5674 = vpack.c.b16 %v5306, %v5298
        %v5675 = vpack.c.b16 %v5307, %v5299
        %v5676 = vpack.c.b16 %v5308, %v5300
        %v5677 = vpack.c.b16 %v5309, %v5301
        %v5678 = vpack.c.b16 %v5310, %v5302
        %v5679 = vpack.c.b16 %v5311, %v5303
        %v5680 = vpack.c.b16 %v5312, %v5304
        %v5681 = vpack.c.b16 %v5313, %v5305
        %v5682 = vpack.c.b16 %v5322, %v5314
        %v5683 = vpack.c.b16 %v5323, %v5315
        %v5684 = vpack.c.b16 %v5324, %v5316
        %v5685 = vpack.c.b16 %v5325, %v5317
        %v5686 = vpack.c.b16 %v5326, %v5318
        %v5687 = vpack.c.b16 %v5327, %v5319
        %v5688 = vpack.c.b16 %v5328, %v5320
        %v5689 = vpack.c.b16 %v5329, %v5321
        %v5690 = vpack.c.b16 %v5338, %v5330
        %v5691 = vpack.c.b16 %v5339, %v5331
        %v5692 = vpack.c.b16 %v5340, %v5332
        %v5693 = vpack.c.b16 %v5341, %v5333
        %v5694 = vpack.c.b16 %v5342, %v5334
        %v5695 = vpack.c.b16 %v5343, %v5335
        %v5696 = vpack.c.b16 %v5344, %v5336
        %v5697 = vpack.c.b16 %v5345, %v5337
        %v5698 = vpack.c.b16 %v5354, %v5346
        %v5699 = vpack.c.b16 %v5355, %v5347
        %v5700 = vpack.c.b16 %v5356, %v5348
        %v5701 = vpack.c.b16 %v5357, %v5349
        %v5702 = vpack.c.b16 %v5358, %v5350
        %v5703 = vpack.c.b16 %v5359, %v5351
        %v5704 = vpack.c.b16 %v5360, %v5352
        %v5705 = vpack.c.b16 %v5361, %v5353
        %v5706 = vpack.c.b16 %v5370, %v5362
        %v5707 = vpack.c.b16 %v5371, %v5363
        %v5708 = vpack.c.b16 %v5372, %v5364
        %v5709 = vpack.c.b16 %v5373, %v5365
        %v5710 = vpack.c.b16 %v5374, %v5366
        %v5711 = vpack.c.b16 %v5375, %v5367
        %v5712 = vpack.c.b16 %v5376, %v5368
        %v5713 = vpack.c.b16 %v5377, %v5369
        %v5714 = vpack.c.b16 %v5386, %v5378
        %v5715 = vpack.c.b16 %v5387, %v5379
        %v5716 = vpack.c.b16 %v5388, %v5380
        %v5717 = vpack.c.b16 %v5389, %v5381
        %v5718 = vpack.c.b16 %v5390, %v5382
        %v5719 = vpack.c.b16 %v5391, %v5383
        %v5720 = vpack.c.b16 %v5392, %v5384
        %v5721 = vpack.c.b16 %v5393, %v5385
        %v5722 = vpack.c.b16 %v5402, %v5394
        %v5723 = vpack.c.b16 %v5403, %v5395
        %v5724 = vpack.c.b16 %v5404, %v5396
        %v5725 = vpack.c.b16 %v5405, %v5397
        %v5726 = vpack.c.b16 %v5406, %v5398
        %v5727 = vpack.c.b16 %v5407, %v5399
        %v5728 = vpack.c.b16 %v5408, %v5400
        %v5729 = vpack.c.b16 %v5409, %v5401
        %v5730 = vpack.c.b16 %v5418, %v5410
        %v5731 = vpack.c.b16 %v5419, %v5411
        %v5732 = vpack.c.b16 %v5420, %v5412
        %v5733 = vpack.c.b16 %v5421, %v5413
        %v5734 = vpack.c.b16 %v5422, %v5414
        %v5735 = vpack.c.b16 %v5423, %v5415
        %v5736 = vpack.c.b16 %v5424, %v5416
        %v5737 = vpack.c.b16 %v5425, %v5417
        %v5738 = vpack.c.b16 %v5434, %v5426
        %v5739 = vpack.c.b16 %v5435, %v5427
        %v5740 = vpack.c.b16 %v5436, %v5428
        %v5741 = vpack.c.b16 %v5437, %v5429
        %v5742 = vpack.c.b16 %v5438, %v5430
        %v5743 = vpack.c.b16 %v5439, %v5431
        %v5744 = vpack.c.b16 %v5440, %v5432
        %v5745 = vpack.c.b16 %v5441, %v5433
        %v5746 = vpack.c.b16 %v5450, %v5442
        %v5747 = vpack.c.b16 %v5451, %v5443
        %v5748 = vpack.c.b16 %v5452, %v5444
        %v5749 = vpack.c.b16 %v5453, %v5445
        %v5750 = vpack.c.b16 %v5454, %v5446
        %v5751 = vpack.c.b16 %v5455, %v5447
        %v5752 = vpack.c.b16 %v5456, %v5448
        %v5753 = vpack.c.b16 %v5457, %v5449
        %v5754 = vpack.c.b16 %v5466, %v5458
        %v5755 = vpack.c.b16 %v5467, %v5459
        %v5756 = vpack.c.b16 %v5468, %v5460
        %v5757 = vpack.c.b16 %v5469, %v5461
        %v5758 = vpack.c.b16 %v5470, %v5462
        %v5759 = vpack.c.b16 %v5471, %v5463
        %v5760 = vpack.c.b16 %v5472, %v5464
        %v5761 = vpack.c.b16 %v5473, %v5465
        %v5762 = vpack.c.b16 %v5482, %v5474
        %v5763 = vpack.c.b16 %v5483, %v5475
        %v5764 = vpack.c.b16 %v5484, %v5476
        %v5765 = vpack.c.b16 %v5485, %v5477
        %v5766 = vpack.c.b16 %v5486, %v5478
        %v5767 = vpack.c.b16 %v5487, %v5479
        %v5768 = vpack.c.b16 %v5488, %v5480
        %v5769 = vpack.c.b16 %v5489, %v5481
        %v5770 = vpack.c.b16 %v5498, %v5490
        %v5771 = vpack.c.b16 %v5499, %v5491
        %v5772 = vpack.c.b16 %v5500, %v5492
        %v5773 = vpack.c.b16 %v5501, %v5493
        %v5774 = vpack.c.b16 %v5502, %v5494
        %v5775 = vpack.c.b16 %v5503, %v5495
        %v5776 = vpack.c.b16 %v5504, %v5496
        %v5777 = vpack.c.b16 %v5505, %v5497
        %v5778 = vpack.c.b16 %v5514, %v5506
        %v5779 = vpack.c.b16 %v5515, %v5507
        %v5780 = vpack.c.b16 %v5516, %v5508
        %v5781 = vpack.c.b16 %v5517, %v5509
        %v5782 = vpack.c.b16 %v5518, %v5510
        %v5783 = vpack.c.b16 %v5519, %v5511
        %v5784 = vpack.c.b16 %v5520, %v5512
        %v5785 = vpack.c.b16 %v5521, %v5513
        %v5786 = vpack.c.b16 %v5530, %v5522
        %v5787 = vpack.c.b16 %v5531, %v5523
        %v5788 = vpack.c.b16 %v5532, %v5524
        %v5789 = vpack.c.b16 %v5533, %v5525
        %v5790 = vpack.c.b16 %v5534, %v5526
        %v5791 = vpack.c.b16 %v5535, %v5527
        %v5792 = vpack.c.b16 %v5536, %v5528
        %v5793 = vpack.c.b16 %v5537, %v5529
        %6050 = vmatprep.subr.bf16.mxu0 %v5539
        %6051 = vmatpush1.bf16.msra.mxu0 %v5538
        %6052 = vmatprep.subr.bf16.mxu0 %v5547
        %6053 = vmatpush1.bf16.msra.mxu0 %v5546
        %6054 = vmatprep.subr.bf16.mxu0 %v5555
        %6055 = vmatpush1.bf16.msra.mxu0 %v5554
        %6056 = vmatprep.subr.bf16.mxu0 %v5563
        %6057 = vmatpush1.bf16.msra.mxu0 %v5562
        %6058 = vmatprep.subr.bf16.mxu0 %v5571
        %6059 = vmatpush1.bf16.msra.mxu0 %v5570
        %6060 = vmatprep.subr.bf16.mxu0 %v5579
        %6061 = vmatpush1.bf16.msra.mxu0 %v5578
        %6062 = vmatprep.subr.bf16.mxu0 %v5587
        %6063 = vmatpush1.bf16.msra.mxu0 %v5586
        %6064 = vmatprep.subr.bf16.mxu0 %v5595
        %6065 = vmatpush1.bf16.msra.mxu0 %v5594
        %6066 = vmatprep.subr.bf16.mxu0 %v5603
        %6067 = vmatpush1.bf16.msra.mxu0 %v5602
        %6068 = vmatprep.subr.bf16.mxu0 %v5611
        %6069 = vmatpush1.bf16.msra.mxu0 %v5610
        %6070 = vmatprep.subr.bf16.mxu0 %v5619
        %6071 = vmatpush1.bf16.msra.mxu0 %v5618
        %6072 = vmatprep.subr.bf16.mxu0 %v5627
        %6073 = vmatpush1.bf16.msra.mxu0 %v5626
        %6074 = vmatprep.subr.bf16.mxu0 %v5635
        %6075 = vmatpush1.bf16.msra.mxu0 %v5634
        %6076 = vmatprep.subr.bf16.mxu0 %v5643
        %6077 = vmatpush1.bf16.msra.mxu0 %v5642
        %6078 = vmatprep.subr.bf16.mxu0 %v5651
        %6079 = vmatpush1.bf16.msra.mxu0 %v5650
        %6080 = vmatprep.subr.bf16.mxu0 %v5659
        %6081 = vmatpush1.bf16.msra.mxu0 %v5658
        %6082 = vmatprep.mubr.bf16.mxu0 %v4511
        %6083 = vmatmul.mubr.bf16.gmra.mrb[0].mxu0 %v4510
        %v6084 = vpop.f32.mrb[0].mxu0
        %v6085 = vadd.f32 0.0, %v6084
        %v6086 = vpop.f32.mrb[0].mxu0
        %v6087 = vadd.f32 0.0, %v6086
        %v6088 = vpop.f32.mrb[0].mxu0
        %v6089 = vpop.f32.mrb[0].mxu0
        %6090 = vdwg.mxu0
        %6091 = vmatprep.subr.bf16.mxu0 %v5667
        %6092 = vmatpush1.bf16.msra.mxu0 %v5666
        %6093 = vmatprep.subr.bf16.mxu0 %v5675
        %6094 = vmatpush1.bf16.msra.mxu0 %v5674
        %6095 = vmatprep.subr.bf16.mxu0 %v5683
        %6096 = vmatpush1.bf16.msra.mxu0 %v5682
        %6097 = vmatprep.subr.bf16.mxu0 %v5691
        %6098 = vmatpush1.bf16.msra.mxu0 %v5690
        %6099 = vmatprep.subr.bf16.mxu0 %v5699
        %6100 = vmatpush1.bf16.msra.mxu0 %v5698
        %6101 = vmatprep.subr.bf16.mxu0 %v5707
        %6102 = vmatpush1.bf16.msra.mxu0 %v5706
        %6103 = vmatprep.subr.bf16.mxu0 %v5715
        %6104 = vmatpush1.bf16.msra.mxu0 %v5714
        %6105 = vmatprep.subr.bf16.mxu0 %v5723
        %6106 = vmatpush1.bf16.msra.mxu0 %v5722
        %6107 = vmatprep.subr.bf16.mxu0 %v5731
        %6108 = vmatpush1.bf16.msra.mxu0 %v5730
        %6109 = vmatprep.subr.bf16.mxu0 %v5739
        %6110 = vmatpush1.bf16.msra.mxu0 %v5738
        %6111 = vmatprep.subr.bf16.mxu0 %v5747
        %6112 = vmatpush1.bf16.msra.mxu0 %v5746
        %6113 = vmatprep.subr.bf16.mxu0 %v5755
        %6114 = vmatpush1.bf16.msra.mxu0 %v5754
        %6115 = vmatprep.subr.bf16.mxu0 %v5763
        %6116 = vmatpush1.bf16.msra.mxu0 %v5762
        %6117 = vmatprep.subr.bf16.mxu0 %v5771
        %6118 = vmatpush1.bf16.msra.mxu0 %v5770
        %6119 = vmatprep.subr.bf16.mxu0 %v5779
        %6120 = vmatpush1.bf16.msra.mxu0 %v5778
        %6121 = vmatprep.subr.bf16.mxu0 %v5787
        %6122 = vmatpush1.bf16.msra.mxu0 %v5786
        %6123 = vmatprep.mubr.bf16.mxu0 %v4513
        %6124 = vmatmul.mubr.bf16.gmra.mrb[0].mxu0 %v4512
        %v6125 = vpop.f32.mrb[0].mxu0
        %v6126 = vadd.f32 %v6085, %v6125
        %v6127 = vpop.f32.mrb[0].mxu0
        %v6128 = vadd.f32 %v6087, %v6127
        %v6129 = vpop.f32.mrb[0].mxu0
        %v6130 = vpop.f32.mrb[0].mxu0
        %6131 = vdwg.mxu0
        %6132 = vmatprep.subr.bf16.mxu0 %v5541
        %6133 = vmatpush1.bf16.msra.mxu0 %v5540
        %6134 = vmatprep.subr.bf16.mxu0 %v5549
        %6135 = vmatpush1.bf16.msra.mxu0 %v5548
        %6136 = vmatprep.subr.bf16.mxu0 %v5557
        %6137 = vmatpush1.bf16.msra.mxu0 %v5556
        %6138 = vmatprep.subr.bf16.mxu0 %v5565
        %6139 = vmatpush1.bf16.msra.mxu0 %v5564
        %6140 = vmatprep.subr.bf16.mxu0 %v5573
        %6141 = vmatpush1.bf16.msra.mxu0 %v5572
        %6142 = vmatprep.subr.bf16.mxu0 %v5581
        %6143 = vmatpush1.bf16.msra.mxu0 %v5580
        %6144 = vmatprep.subr.bf16.mxu0 %v5589
        %6145 = vmatpush1.bf16.msra.mxu0 %v5588
        %6146 = vmatprep.subr.bf16.mxu0 %v5597
        %6147 = vmatpush1.bf16.msra.mxu0 %v5596
        %6148 = vmatprep.subr.bf16.mxu0 %v5605
        %6149 = vmatpush1.bf16.msra.mxu0 %v5604
        %6150 = vmatprep.subr.bf16.mxu0 %v5613
        %6151 = vmatpush1.bf16.msra.mxu0 %v5612
        %6152 = vmatprep.subr.bf16.mxu0 %v5621
        %6153 = vmatpush1.bf16.msra.mxu0 %v5620
        %6154 = vmatprep.subr.bf16.mxu0 %v5629
        %6155 = vmatpush1.bf16.msra.mxu0 %v5628
        %6156 = vmatprep.subr.bf16.mxu0 %v5637
        %6157 = vmatpush1.bf16.msra.mxu0 %v5636
        %6158 = vmatprep.subr.bf16.mxu0 %v5645
        %6159 = vmatpush1.bf16.msra.mxu0 %v5644
        %6160 = vmatprep.subr.bf16.mxu0 %v5653
        %6161 = vmatpush1.bf16.msra.mxu0 %v5652
        %6162 = vmatprep.subr.bf16.mxu0 %v5661
        %6163 = vmatpush1.bf16.msra.mxu0 %v5660
        %6164 = vmatprep.mubr.bf16.mxu0 %v4511
        %6165 = vmatmul.mubr.bf16.gmra.mrb[0].mxu0 %v4510
        %v6166 = vpop.f32.mrb[0].mxu0
        %v6167 = vadd.f32 0.0, %v6166
        %v6168 = vpop.f32.mrb[0].mxu0
        %v6169 = vadd.f32 0.0, %v6168
        %v6170 = vpop.f32.mrb[0].mxu0
        %v6171 = vpop.f32.mrb[0].mxu0
        %6172 = vdwg.mxu0
        %6173 = vmatprep.subr.bf16.mxu0 %v5669
        %6174 = vmatpush1.bf16.msra.mxu0 %v5668
        %6175 = vmatprep.subr.bf16.mxu0 %v5677
        %6176 = vmatpush1.bf16.msra.mxu0 %v5676
        %6177 = vmatprep.subr.bf16.mxu0 %v5685
        %6178 = vmatpush1.bf16.msra.mxu0 %v5684
        %6179 = vmatprep.subr.bf16.mxu0 %v5693
        %6180 = vmatpush1.bf16.msra.mxu0 %v5692
        %6181 = vmatprep.subr.bf16.mxu0 %v5701
        %6182 = vmatpush1.bf16.msra.mxu0 %v5700
        %6183 = vmatprep.subr.bf16.mxu0 %v5709
        %6184 = vmatpush1.bf16.msra.mxu0 %v5708
        %6185 = vmatprep.subr.bf16.mxu0 %v5717
        %6186 = vmatpush1.bf16.msra.mxu0 %v5716
        %6187 = vmatprep.subr.bf16.mxu0 %v5725
        %6188 = vmatpush1.bf16.msra.mxu0 %v5724
        %6189 = vmatprep.subr.bf16.mxu0 %v5733
        %6190 = vmatpush1.bf16.msra.mxu0 %v5732
        %6191 = vmatprep.subr.bf16.mxu0 %v5741
        %6192 = vmatpush1.bf16.msra.mxu0 %v5740
        %6193 = vmatprep.subr.bf16.mxu0 %v5749
        %6194 = vmatpush1.bf16.msra.mxu0 %v5748
        %6195 = vmatprep.subr.bf16.mxu0 %v5757
        %6196 = vmatpush1.bf16.msra.mxu0 %v5756
        %6197 = vmatprep.subr.bf16.mxu0 %v5765
        %6198 = vmatpush1.bf16.msra.mxu0 %v5764
        %6199 = vmatprep.subr.bf16.mxu0 %v5773
        %6200 = vmatpush1.bf16.msra.mxu0 %v5772
        %6201 = vmatprep.subr.bf16.mxu0 %v5781
        %6202 = vmatpush1.bf16.msra.mxu0 %v5780
        %6203 = vmatprep.subr.bf16.mxu0 %v5789
        %6204 = vmatpush1.bf16.msra.mxu0 %v5788
        %6205 = vmatprep.mubr.bf16.mxu0 %v4513
        %6206 = vmatmul.mubr.bf16.gmra.mrb[0].mxu0 %v4512
        %v6207 = vpop.f32.mrb[0].mxu0
        %v6208 = vadd.f32 %v6167, %v6207
        %v6209 = vpop.f32.mrb[0].mxu0
        %v6210 = vadd.f32 %v6169, %v6209
        %v6211 = vpop.f32.mrb[0].mxu0
        %v6212 = vpop.f32.mrb[0].mxu0
        %6213 = vdwg.mxu0
        %6214 = vmatprep.subr.bf16.mxu0 %v5543
        %6215 = vmatpush1.bf16.msra.mxu0 %v5542
        %6216 = vmatprep.subr.bf16.mxu0 %v5551
        %6217 = vmatpush1.bf16.msra.mxu0 %v5550
        %6218 = vmatprep.subr.bf16.mxu0 %v5559
        %6219 = vmatpush1.bf16.msra.mxu0 %v5558
        %6220 = vmatprep.subr.bf16.mxu0 %v5567
        %6221 = vmatpush1.bf16.msra.mxu0 %v5566
        %6222 = vmatprep.subr.bf16.mxu0 %v5575
        %6223 = vmatpush1.bf16.msra.mxu0 %v5574
        %6224 = vmatprep.subr.bf16.mxu0 %v5583
        %6225 = vmatpush1.bf16.msra.mxu0 %v5582
        %6226 = vmatprep.subr.bf16.mxu0 %v5591
        %6227 = vmatpush1.bf16.msra.mxu0 %v5590
        %6228 = vmatprep.subr.bf16.mxu0 %v5599
        %6229 = vmatpush1.bf16.msra.mxu0 %v5598
        %6230 = vmatprep.subr.bf16.mxu0 %v5607
        %6231 = vmatpush1.bf16.msra.mxu0 %v5606
        %6232 = vmatprep.subr.bf16.mxu0 %v5615
        %6233 = vmatpush1.bf16.msra.mxu0 %v5614
        %6234 = vmatprep.subr.bf16.mxu0 %v5623
        %6235 = vmatpush1.bf16.msra.mxu0 %v5622
        %6236 = vmatprep.subr.bf16.mxu0 %v5631
        %6237 = vmatpush1.bf16.msra.mxu0 %v5630
        %6238 = vmatprep.subr.bf16.mxu0 %v5639
        %6239 = vmatpush1.bf16.msra.mxu0 %v5638
        %6240 = vmatprep.subr.bf16.mxu0 %v5647
        %6241 = vmatpush1.bf16.msra.mxu0 %v5646
        %6242 = vmatprep.subr.bf16.mxu0 %v5655
        %6243 = vmatpush1.bf16.msra.mxu0 %v5654
        %6244 = vmatprep.subr.bf16.mxu0 %v5663
        %6245 = vmatpush1.bf16.msra.mxu0 %v5662
        %6246 = vmatprep.mubr.bf16.mxu0 %v4511
        %6247 = vmatmul.mubr.bf16.gmra.mrb[0].mxu0 %v4510
        %v6248 = vpop.f32.mrb[0].mxu0
        %v6249 = vadd.f32 0.0, %v6248
        %v6250 = vpop.f32.mrb[0].mxu0
        %v6251 = vadd.f32 0.0, %v6250
        %v6252 = vpop.f32.mrb[0].mxu0
        %v6253 = vpop.f32.mrb[0].mxu0
        %6254 = vdwg.mxu0
        %6255 = vmatprep.subr.bf16.mxu0 %v5671
        %6256 = vmatpush1.bf16.msra.mxu0 %v5670
        %6257 = vmatprep.subr.bf16.mxu0 %v5679
        %6258 = vmatpush1.bf16.msra.mxu0 %v5678
        %6259 = vmatprep.subr.bf16.mxu0 %v5687
        %6260 = vmatpush1.bf16.msra.mxu0 %v5686
        %6261 = vmatprep.subr.bf16.mxu0 %v5695
        %6262 = vmatpush1.bf16.msra.mxu0 %v5694
        %6263 = vmatprep.subr.bf16.mxu0 %v5703
        %6264 = vmatpush1.bf16.msra.mxu0 %v5702
        %6265 = vmatprep.subr.bf16.mxu0 %v5711
        %6266 = vmatpush1.bf16.msra.mxu0 %v5710
        %6267 = vmatprep.subr.bf16.mxu0 %v5719
        %6268 = vmatpush1.bf16.msra.mxu0 %v5718
        %6269 = vmatprep.subr.bf16.mxu0 %v5727
        %6270 = vmatpush1.bf16.msra.mxu0 %v5726
        %6271 = vmatprep.subr.bf16.mxu0 %v5735
        %6272 = vmatpush1.bf16.msra.mxu0 %v5734
        %6273 = vmatprep.subr.bf16.mxu0 %v5743
        %6274 = vmatpush1.bf16.msra.mxu0 %v5742
        %6275 = vmatprep.subr.bf16.mxu0 %v5751
        %6276 = vmatpush1.bf16.msra.mxu0 %v5750
        %6277 = vmatprep.subr.bf16.mxu0 %v5759
        %6278 = vmatpush1.bf16.msra.mxu0 %v5758
        %6279 = vmatprep.subr.bf16.mxu0 %v5767
        %6280 = vmatpush1.bf16.msra.mxu0 %v5766
        %6281 = vmatprep.subr.bf16.mxu0 %v5775
        %6282 = vmatpush1.bf16.msra.mxu0 %v5774
        %6283 = vmatprep.subr.bf16.mxu0 %v5783
        %6284 = vmatpush1.bf16.msra.mxu0 %v5782
        %6285 = vmatprep.subr.bf16.mxu0 %v5791
        %6286 = vmatpush1.bf16.msra.mxu0 %v5790
        %6287 = vmatprep.mubr.bf16.mxu0 %v4513
        %6288 = vmatmul.mubr.bf16.gmra.mrb[0].mxu0 %v4512
        %v6289 = vpop.f32.mrb[0].mxu0
        %v6290 = vadd.f32 %v6249, %v6289
        %v6291 = vpop.f32.mrb[0].mxu0
        %v6292 = vadd.f32 %v6251, %v6291
        %v6293 = vpop.f32.mrb[0].mxu0
        %v6294 = vpop.f32.mrb[0].mxu0
        %6295 = vdwg.mxu0
        %6296 = vmatprep.subr.bf16.mxu0 %v5545
        %6297 = vmatpush1.bf16.msra.mxu0 %v5544
        %6298 = vmatprep.subr.bf16.mxu0 %v5553
        %6299 = vmatpush1.bf16.msra.mxu0 %v5552
        %6300 = vmatprep.subr.bf16.mxu0 %v5561
        %6301 = vmatpush1.bf16.msra.mxu0 %v5560
        %6302 = vmatprep.subr.bf16.mxu0 %v5569
        %6303 = vmatpush1.bf16.msra.mxu0 %v5568
        %6304 = vmatprep.subr.bf16.mxu0 %v5577
        %6305 = vmatpush1.bf16.msra.mxu0 %v5576
        %6306 = vmatprep.subr.bf16.mxu0 %v5585
        %6307 = vmatpush1.bf16.msra.mxu0 %v5584
        %6308 = vmatprep.subr.bf16.mxu0 %v5593
        %6309 = vmatpush1.bf16.msra.mxu0 %v5592
        %6310 = vmatprep.subr.bf16.mxu0 %v5601
        %6311 = vmatpush1.bf16.msra.mxu0 %v5600
        %6312 = vmatprep.subr.bf16.mxu0 %v5609
        %6313 = vmatpush1.bf16.msra.mxu0 %v5608
        %6314 = vmatprep.subr.bf16.mxu0 %v5617
        %6315 = vmatpush1.bf16.msra.mxu0 %v5616
        %6316 = vmatprep.subr.bf16.mxu0 %v5625
        %6317 = vmatpush1.bf16.msra.mxu0 %v5624
        %6318 = vmatprep.subr.bf16.mxu0 %v5633
        %6319 = vmatpush1.bf16.msra.mxu0 %v5632
        %6320 = vmatprep.subr.bf16.mxu0 %v5641
        %6321 = vmatpush1.bf16.msra.mxu0 %v5640
        %6322 = vmatprep.subr.bf16.mxu0 %v5649
        %6323 = vmatpush1.bf16.msra.mxu0 %v5648
        %6324 = vmatprep.subr.bf16.mxu0 %v5657
        %6325 = vmatpush1.bf16.msra.mxu0 %v5656
        %6326 = vmatprep.subr.bf16.mxu0 %v5665
        %6327 = vmatpush1.bf16.msra.mxu0 %v5664
        %6328 = vmatprep.mubr.bf16.mxu0 %v4511
        %6329 = vmatmul.mubr.bf16.gmra.mrb[0].mxu0 %v4510
        %v6330 = vpop.f32.mrb[0].mxu0
        %v6331 = vadd.f32 0.0, %v6330
        %v6332 = vpop.f32.mrb[0].mxu0
        %v6333 = vadd.f32 0.0, %v6332
        %v6334 = vpop.f32.mrb[0].mxu0
        %v6335 = vpop.f32.mrb[0].mxu0
        %6336 = vdwg.mxu0
        %6337 = vmatprep.subr.bf16.mxu0 %v5673
        %6338 = vmatpush1.bf16.msra.mxu0 %v5672
        %6339 = vmatprep.subr.bf16.mxu0 %v5681
        %6340 = vmatpush1.bf16.msra.mxu0 %v5680
        %6341 = vmatprep.subr.bf16.mxu0 %v5689
        %6342 = vmatpush1.bf16.msra.mxu0 %v5688
        %6343 = vmatprep.subr.bf16.mxu0 %v5697
        %6344 = vmatpush1.bf16.msra.mxu0 %v5696
        %6345 = vmatprep.subr.bf16.mxu0 %v5705
        %6346 = vmatpush1.bf16.msra.mxu0 %v5704
        %6347 = vmatprep.subr.bf16.mxu0 %v5713
        %6348 = vmatpush1.bf16.msra.mxu0 %v5712
        %6349 = vmatprep.subr.bf16.mxu0 %v5721
        %6350 = vmatpush1.bf16.msra.mxu0 %v5720
        %6351 = vmatprep.subr.bf16.mxu0 %v5729
        %6352 = vmatpush1.bf16.msra.mxu0 %v5728
        %6353 = vmatprep.subr.bf16.mxu0 %v5737
        %6354 = vmatpush1.bf16.msra.mxu0 %v5736
        %6355 = vmatprep.subr.bf16.mxu0 %v5745
        %6356 = vmatpush1.bf16.msra.mxu0 %v5744
        %6357 = vmatprep.subr.bf16.mxu0 %v5753
        %6358 = vmatpush1.bf16.msra.mxu0 %v5752
        %6359 = vmatprep.subr.bf16.mxu0 %v5761
        %6360 = vmatpush1.bf16.msra.mxu0 %v5760
        %6361 = vmatprep.subr.bf16.mxu0 %v5769
        %6362 = vmatpush1.bf16.msra.mxu0 %v5768
        %6363 = vmatprep.subr.bf16.mxu0 %v5777
        %6364 = vmatpush1.bf16.msra.mxu0 %v5776
        %6365 = vmatprep.subr.bf16.mxu0 %v5785
        %6366 = vmatpush1.bf16.msra.mxu0 %v5784
        %6367 = vmatprep.subr.bf16.mxu0 %v5793
        %6368 = vmatpush1.bf16.msra.mxu0 %v5792
        %6369 = vmatprep.mubr.bf16.mxu0 %v4513
        %6370 = vmatmul.mubr.bf16.gmra.mrb[0].mxu0 %v4512
        %v6371 = vpop.f32.mrb[0].mxu0
        %v6372 = vadd.f32 %v6331, %v6371
        %v6373 = vpop.f32.mrb[0].mxu0
        %v6374 = vadd.f32 %v6333, %v6373
        %v6375 = vpop.f32.mrb[0].mxu0
        %v6376 = vpop.f32.mrb[0].mxu0
        %6377 = vdwg.mxu0
        %v6386 = vcombine.low %v6126, %v6128
        %v6387 = vcombine.low %v6208, %v6210
        %v6389 = vunpack.c.l.s4 1983009808
        %v6390 = vunpack.c.0.s8 %v6389
        %v6391 = vlaneseq
        %v6392 = vshrl.u32 %v6391, 7
        %v6393 = vsub.s32 %v6390, %v6392
        %v6394 = vrot.slane %v6386, %v6393
        %v6396 = vunpack.c.l.s4 1983009808
        %v6397 = vunpack.c.0.s8 %v6396
        %v6398 = vlaneseq
        %v6399 = vshrl.u32 %v6398, 7
        %v6400 = vsub.s32 %v6397, %v6399
        %v6401 = vrot.slane %v6387, %v6400
        %v6402 = vcombine.low %v6394, %v6401
        %v6403 = vcombine.low %v6290, %v6292
        %v6404 = vcombine.low %v6372, %v6374
        %v6406 = vunpack.c.l.s4 1983009808
        %v6407 = vunpack.c.0.s8 %v6406
        %v6408 = vlaneseq
        %v6409 = vshrl.u32 %v6408, 7
        %v6410 = vsub.s32 %v6407, %v6409
        %v6411 = vrot.slane %v6403, %v6410
        %v6413 = vunpack.c.l.s4 1983009808
        %v6414 = vunpack.c.0.s8 %v6413
        %v6415 = vlaneseq
        %v6416 = vshrl.u32 %v6415, 7
        %v6417 = vsub.s32 %v6414, %v6416
        %v6418 = vrot.slane %v6404, %v6417
        %v6419 = vcombine.low %v6411, %v6418
        %v6422 = vadd.f32 %v4508, %v6402
        %v6423 = vadd.f32 %v4509, %v6419
        %6424 = vst [vmem:[#allocation2] sm:$0xff] %v6422
        %6425 = vst [vmem:[#allocation2 + $0x8] sm:$0xff] %v6423
        %p6426 = scmp.eq.s32.totalorder %s19, 3
        // Predicated region
        $region76: #{cnn_model_forward.5} parent=66 // pred_check
          %p6427 = pneg %p6426
        $region77: #{cnn_model_forward.5} parent=66 // pred_check_branch
          %6429 = sbr.rel (%p6427) target = $region79
        $region78: #{cnn_model_forward.5} parent=66 // pred_region
          %v6430 = vld [vmem:[#allocation2] sm:$0xff]
          %v6431 = vld [vmem:[#allocation2 + $0x8] sm:$0xff]
          %v6432 = vld [vmem:[%s4] sm:$0xff]
          %v6434 = vlaneseq
          %v6435 = vshrl.u32 %v6434, 7
          %v6436 = vsub.s32 0, %v6435
          %v6437 = vrot.slane %v6432, %v6436
          %v6438 = vlaneseq
          %v6439 = vshrl.u32 %v6438, 7
          %v6440 = vsub.s32 1, %v6439
          %v6441 = vrot.slane %v6432, %v6440
          %v6442 = vlaneseq
          %v6443 = vshrl.u32 %v6442, 7
          %v6444 = vsub.s32 2, %v6443
          %v6445 = vrot.slane %v6432, %v6444
          %v6446 = vlaneseq
          %v6447 = vshrl.u32 %v6446, 7
          %v6448 = vsub.s32 3, %v6447
          %v6449 = vrot.slane %v6432, %v6448
          %v6450 = vlaneseq
          %v6451 = vshrl.u32 %v6450, 7
          %v6452 = vsub.s32 4, %v6451
          %v6453 = vrot.slane %v6432, %v6452
          %v6454 = vlaneseq
          %v6455 = vshrl.u32 %v6454, 7
          %v6456 = vsub.s32 5, %v6455
          %v6457 = vrot.slane %v6432, %v6456
          %v6458 = vlaneseq
          %v6459 = vshrl.u32 %v6458, 7
          %v6460 = vsub.s32 6, %v6459
          %v6461 = vrot.slane %v6432, %v6460
          %v6462 = vlaneseq
          %v6463 = vshrl.u32 %v6462, 7
          %v6464 = vsub.s32 7, %v6463
          %v6465 = vrot.slane %v6432, %v6464
          %v6466 = vcombine.low %v6437, %v6441
          %v6467 = vcombine.low %v6445, %v6449
          %v6469 = vunpack.c.l.s4 1983009808
          %v6470 = vunpack.c.0.s8 %v6469
          %v6471 = vlaneseq
          %v6472 = vshrl.u32 %v6471, 7
          %v6473 = vsub.s32 %v6470, %v6472
          %v6474 = vrot.slane %v6466, %v6473
          %v6476 = vunpack.c.l.s4 1983009808
          %v6477 = vunpack.c.0.s8 %v6476
          %v6478 = vlaneseq
          %v6479 = vshrl.u32 %v6478, 7
          %v6480 = vsub.s32 %v6477, %v6479
          %v6481 = vrot.slane %v6467, %v6480
          %v6482 = vcombine.low %v6474, %v6481
          %v6483 = vcombine.low %v6453, %v6457
          %v6484 = vcombine.low %v6461, %v6465
          %v6486 = vunpack.c.l.s4 1983009808
          %v6487 = vunpack.c.0.s8 %v6486
          %v6488 = vlaneseq
          %v6489 = vshrl.u32 %v6488, 7
          %v6490 = vsub.s32 %v6487, %v6489
          %v6491 = vrot.slane %v6483, %v6490
          %v6493 = vunpack.c.l.s4 1983009808
          %v6494 = vunpack.c.0.s8 %v6493
          %v6495 = vlaneseq
          %v6496 = vshrl.u32 %v6495, 7
          %v6497 = vsub.s32 %v6494, %v6496
          %v6498 = vrot.slane %v6484, %v6497
          %v6499 = vcombine.low %v6491, %v6498
          %v6502 = vadd.f32 %v6430, %v6482
          %v6503 = vadd.f32 %v6431, %v6499
          %v6504 = vmax.f32 %v6502, 0.0
          %v6505 = vmax.f32 %v6503, 0.0
          %v6508 = vcombine.high %v6504, %v6504
          %v6510 = vunpack.c.l.s4 1983009808
          %v6511 = vunpack.c.0.s8 %v6510
          %v6512 = vlaneseq
          %v6513 = vshrl.u32 %v6512, 7
          %v6514 = vsub.s32 %v6511, %v6513
          %v6515 = vrot.slane %v6504, %v6514
          %v6517 = vunpack.c.l.s4 1983009808
          %v6518 = vunpack.c.0.s8 %v6517
          %v6519 = vlaneseq
          %v6520 = vshrl.u32 %v6519, 7
          %v6521 = vsub.s32 %v6518, %v6520
          %v6522 = vrot.slane %v6508, %v6521
          %v6523 = vcombine.high %v6515, %v6515
          %v6524 = vcombine.high %v6522, %v6522
          %v6525 = vcombine.high %v6505, %v6505
          %v6527 = vunpack.c.l.s4 1983009808
          %v6528 = vunpack.c.0.s8 %v6527
          %v6529 = vlaneseq
          %v6530 = vshrl.u32 %v6529, 7
          %v6531 = vsub.s32 %v6528, %v6530
          %v6532 = vrot.slane %v6505, %v6531
          %v6534 = vunpack.c.l.s4 1983009808
          %v6535 = vunpack.c.0.s8 %v6534
          %v6536 = vlaneseq
          %v6537 = vshrl.u32 %v6536, 7
          %v6538 = vsub.s32 %v6535, %v6537
          %v6539 = vrot.slane %v6525, %v6538
          %v6540 = vcombine.high %v6532, %v6532
          %v6541 = vcombine.high %v6539, %v6539
          %v6550 = vpack.c.bf16 %v6515, %v6515
          %v6551 = vpack.c.bf16 %v6523, %v6523
          %v6552 = vpack.c.bf16 %v6522, %v6522
          %v6553 = vpack.c.bf16 %v6524, %v6524
          %v6554 = vpack.c.bf16 %v6532, %v6532
          %v6555 = vpack.c.bf16 %v6540, %v6540
          %v6556 = vpack.c.bf16 %v6539, %v6539
          %v6557 = vpack.c.bf16 %v6541, %v6541
          %v6558 = vld [vmem:[%s5] sm:$0xf]
          %v6559 = vld [vmem:[%s5 + $0x4] sm:$0xf]
          %v6560 = vld [vmem:[%s5 + $0x8] sm:$0xf]
          %v6561 = vld [vmem:[%s5 + $0xc] sm:$0xf]
          %v6562 = vld [vmem:[%s5 + $0x10] sm:$0xf]
          %v6563 = vld [vmem:[%s5 + $0x14] sm:$0xf]
          %v6564 = vld [vmem:[%s5 + $0x18] sm:$0xf]
          %v6565 = vld [vmem:[%s5 + $0x1c] sm:$0xf]
          %v6566 = vld [vmem:[%s5 + $0x20] sm:$0xf]
          %v6567 = vld [vmem:[%s5 + $0x24] sm:$0xf]
          %v6568 = vld [vmem:[%s5 + $0x28] sm:$0xf]
          %v6569 = vld [vmem:[%s5 + $0x2c] sm:$0xf]
          %v6570 = vld [vmem:[%s5 + $0x30] sm:$0xf]
          %v6571 = vld [vmem:[%s5 + $0x34] sm:$0xf]
          %v6572 = vld [vmem:[%s5 + $0x38] sm:$0xf]
          %v6573 = vld [vmem:[%s5 + $0x3c] sm:$0xf]
          %v6574 = vld [vmem:[%s5 + $0x40] sm:$0xf]
          %v6575 = vld [vmem:[%s5 + $0x44] sm:$0xf]
          %v6576 = vld [vmem:[%s5 + $0x48] sm:$0xf]
          %v6577 = vld [vmem:[%s5 + $0x4c] sm:$0xf]
          %v6578 = vld [vmem:[%s5 + $0x50] sm:$0xf]
          %v6579 = vld [vmem:[%s5 + $0x54] sm:$0xf]
          %v6580 = vld [vmem:[%s5 + $0x58] sm:$0xf]
          %v6581 = vld [vmem:[%s5 + $0x5c] sm:$0xf]
          %v6582 = vld [vmem:[%s5 + $0x60] sm:$0xf]
          %v6583 = vld [vmem:[%s5 + $0x64] sm:$0xf]
          %v6584 = vld [vmem:[%s5 + $0x68] sm:$0xf]
          %v6585 = vld [vmem:[%s5 + $0x6c] sm:$0xf]
          %v6586 = vld [vmem:[%s5 + $0x70] sm:$0xf]
          %v6587 = vld [vmem:[%s5 + $0x74] sm:$0xf]
          %v6588 = vld [vmem:[%s5 + $0x78] sm:$0xf]
          %v6589 = vld [vmem:[%s5 + $0x7c] sm:$0xf]
          %v6590 = vld [vmem:[%s5 + $0x80] sm:$0xf]
          %v6591 = vld [vmem:[%s5 + $0x84] sm:$0xf]
          %v6592 = vld [vmem:[%s5 + $0x88] sm:$0xf]
          %v6593 = vld [vmem:[%s5 + $0x8c] sm:$0xf]
          %v6594 = vld [vmem:[%s5 + $0x90] sm:$0xf]
          %v6595 = vld [vmem:[%s5 + $0x94] sm:$0xf]
          %v6596 = vld [vmem:[%s5 + $0x98] sm:$0xf]
          %v6597 = vld [vmem:[%s5 + $0x9c] sm:$0xf]
          %v6598 = vld [vmem:[%s5 + $0xa0] sm:$0xf]
          %v6599 = vld [vmem:[%s5 + $0xa4] sm:$0xf]
          %v6600 = vld [vmem:[%s5 + $0xa8] sm:$0xf]
          %v6601 = vld [vmem:[%s5 + $0xac] sm:$0xf]
          %v6602 = vld [vmem:[%s5 + $0xb0] sm:$0xf]
          %v6603 = vld [vmem:[%s5 + $0xb4] sm:$0xf]
          %v6604 = vld [vmem:[%s5 + $0xb8] sm:$0xf]
          %v6605 = vld [vmem:[%s5 + $0xbc] sm:$0xf]
          %v6606 = vld [vmem:[%s5 + $0xc0] sm:$0xf]
          %v6607 = vld [vmem:[%s5 + $0xc4] sm:$0xf]
          %v6608 = vld [vmem:[%s5 + $0xc8] sm:$0xf]
          %v6609 = vld [vmem:[%s5 + $0xcc] sm:$0xf]
          %v6610 = vld [vmem:[%s5 + $0xd0] sm:$0xf]
          %v6611 = vld [vmem:[%s5 + $0xd4] sm:$0xf]
          %v6612 = vld [vmem:[%s5 + $0xd8] sm:$0xf]
          %v6613 = vld [vmem:[%s5 + $0xdc] sm:$0xf]
          %v6614 = vld [vmem:[%s5 + $0xe0] sm:$0xf]
          %v6615 = vld [vmem:[%s5 + $0xe4] sm:$0xf]
          %v6616 = vld [vmem:[%s5 + $0xe8] sm:$0xf]
          %v6617 = vld [vmem:[%s5 + $0xec] sm:$0xf]
          %v6618 = vld [vmem:[%s5 + $0xf0] sm:$0xf]
          %v6619 = vld [vmem:[%s5 + $0xf4] sm:$0xf]
          %v6620 = vld [vmem:[%s5 + $0xf8] sm:$0xf]
          %v6621 = vld [vmem:[%s5 + $0xfc] sm:$0xf]
          %v6622 = vld [vmem:[%s5 + $0x100] sm:$0xf]
          %v6623 = vld [vmem:[%s5 + $0x104] sm:$0xf]
          %v6624 = vld [vmem:[%s5 + $0x108] sm:$0xf]
          %v6625 = vld [vmem:[%s5 + $0x10c] sm:$0xf]
          %v6626 = vld [vmem:[%s5 + $0x110] sm:$0xf]
          %v6627 = vld [vmem:[%s5 + $0x114] sm:$0xf]
          %v6628 = vld [vmem:[%s5 + $0x118] sm:$0xf]
          %v6629 = vld [vmem:[%s5 + $0x11c] sm:$0xf]
          %v6630 = vld [vmem:[%s5 + $0x120] sm:$0xf]
          %v6631 = vld [vmem:[%s5 + $0x124] sm:$0xf]
          %v6632 = vld [vmem:[%s5 + $0x128] sm:$0xf]
          %v6633 = vld [vmem:[%s5 + $0x12c] sm:$0xf]
          %v6634 = vld [vmem:[%s5 + $0x130] sm:$0xf]
          %v6635 = vld [vmem:[%s5 + $0x134] sm:$0xf]
          %v6636 = vld [vmem:[%s5 + $0x138] sm:$0xf]
          %v6637 = vld [vmem:[%s5 + $0x13c] sm:$0xf]
          %v6638 = vld [vmem:[%s5 + $0x140] sm:$0xf]
          %v6639 = vld [vmem:[%s5 + $0x144] sm:$0xf]
          %v6640 = vld [vmem:[%s5 + $0x148] sm:$0xf]
          %v6641 = vld [vmem:[%s5 + $0x14c] sm:$0xf]
          %v6642 = vld [vmem:[%s5 + $0x150] sm:$0xf]
          %v6643 = vld [vmem:[%s5 + $0x154] sm:$0xf]
          %v6644 = vld [vmem:[%s5 + $0x158] sm:$0xf]
          %v6645 = vld [vmem:[%s5 + $0x15c] sm:$0xf]
          %v6646 = vld [vmem:[%s5 + $0x160] sm:$0xf]
          %v6647 = vld [vmem:[%s5 + $0x164] sm:$0xf]
          %v6648 = vld [vmem:[%s5 + $0x168] sm:$0xf]
          %v6649 = vld [vmem:[%s5 + $0x16c] sm:$0xf]
          %v6650 = vld [vmem:[%s5 + $0x170] sm:$0xf]
          %v6651 = vld [vmem:[%s5 + $0x174] sm:$0xf]
          %v6652 = vld [vmem:[%s5 + $0x178] sm:$0xf]
          %v6653 = vld [vmem:[%s5 + $0x17c] sm:$0xf]
          %v6654 = vld [vmem:[%s5 + $0x180] sm:$0xf]
          %v6655 = vld [vmem:[%s5 + $0x184] sm:$0xf]
          %v6656 = vld [vmem:[%s5 + $0x188] sm:$0xf]
          %v6657 = vld [vmem:[%s5 + $0x18c] sm:$0xf]
          %v6658 = vld [vmem:[%s5 + $0x190] sm:$0xf]
          %v6659 = vld [vmem:[%s5 + $0x194] sm:$0xf]
          %v6660 = vld [vmem:[%s5 + $0x198] sm:$0xf]
          %v6661 = vld [vmem:[%s5 + $0x19c] sm:$0xf]
          %v6662 = vld [vmem:[%s5 + $0x1a0] sm:$0xf]
          %v6663 = vld [vmem:[%s5 + $0x1a4] sm:$0xf]
          %v6664 = vld [vmem:[%s5 + $0x1a8] sm:$0xf]
          %v6665 = vld [vmem:[%s5 + $0x1ac] sm:$0xf]
          %v6666 = vld [vmem:[%s5 + $0x1b0] sm:$0xf]
          %v6667 = vld [vmem:[%s5 + $0x1b4] sm:$0xf]
          %v6668 = vld [vmem:[%s5 + $0x1b8] sm:$0xf]
          %v6669 = vld [vmem:[%s5 + $0x1bc] sm:$0xf]
          %v6670 = vld [vmem:[%s5 + $0x1c0] sm:$0xf]
          %v6671 = vld [vmem:[%s5 + $0x1c4] sm:$0xf]
          %v6672 = vld [vmem:[%s5 + $0x1c8] sm:$0xf]
          %v6673 = vld [vmem:[%s5 + $0x1cc] sm:$0xf]
          %v6674 = vld [vmem:[%s5 + $0x1d0] sm:$0xf]
          %v6675 = vld [vmem:[%s5 + $0x1d4] sm:$0xf]
          %v6676 = vld [vmem:[%s5 + $0x1d8] sm:$0xf]
          %v6677 = vld [vmem:[%s5 + $0x1dc] sm:$0xf]
          %v6678 = vld [vmem:[%s5 + $0x1e0] sm:$0xf]
          %v6679 = vld [vmem:[%s5 + $0x1e4] sm:$0xf]
          %v6680 = vld [vmem:[%s5 + $0x1e8] sm:$0xf]
          %v6681 = vld [vmem:[%s5 + $0x1ec] sm:$0xf]
          %v6682 = vld [vmem:[%s5 + $0x1f0] sm:$0xf]
          %v6683 = vld [vmem:[%s5 + $0x1f4] sm:$0xf]
          %v6684 = vld [vmem:[%s5 + $0x1f8] sm:$0xf]
          %v6685 = vld [vmem:[%s5 + $0x1fc] sm:$0xf]
          %v6686 = vld [vmem:[%s6] sm:$0x1]
          %v6688 = vlaneseq
          %v6689 = vshrl.u32 %v6688, 7
          %v6690 = vsub.s32 0, %v6689
          %v6691 = vrot.slane %v6686, %v6690
          %v6821 = vunpack.c.l.b16 %v6558
          %v6822 = vunpack.c.l.b16 %v6559
          %v6823 = vunpack.c.l.b16 %v6560
          %v6824 = vunpack.c.l.b16 %v6561
          %v6825 = vunpack.c.l.b16 %v6562
          %v6826 = vunpack.c.l.b16 %v6563
          %v6827 = vunpack.c.l.b16 %v6564
          %v6828 = vunpack.c.l.b16 %v6565
          %v6829 = vunpack.c.l.b16 %v6566
          %v6830 = vunpack.c.l.b16 %v6567
          %v6831 = vunpack.c.l.b16 %v6568
          %v6832 = vunpack.c.l.b16 %v6569
          %v6833 = vunpack.c.l.b16 %v6570
          %v6834 = vunpack.c.l.b16 %v6571
          %v6835 = vunpack.c.l.b16 %v6572
          %v6836 = vunpack.c.l.b16 %v6573
          %v6837 = vunpack.c.l.b16 %v6574
          %v6838 = vunpack.c.l.b16 %v6575
          %v6839 = vunpack.c.l.b16 %v6576
          %v6840 = vunpack.c.l.b16 %v6577
          %v6841 = vunpack.c.l.b16 %v6578
          %v6842 = vunpack.c.l.b16 %v6579
          %v6843 = vunpack.c.l.b16 %v6580
          %v6844 = vunpack.c.l.b16 %v6581
          %v6845 = vunpack.c.l.b16 %v6582
          %v6846 = vunpack.c.l.b16 %v6583
          %v6847 = vunpack.c.l.b16 %v6584
          %v6848 = vunpack.c.l.b16 %v6585
          %v6849 = vunpack.c.l.b16 %v6586
          %v6850 = vunpack.c.l.b16 %v6587
          %v6851 = vunpack.c.l.b16 %v6588
          %v6852 = vunpack.c.l.b16 %v6589
          %v6853 = vunpack.c.l.b16 %v6590
          %v6854 = vunpack.c.l.b16 %v6591
          %v6855 = vunpack.c.l.b16 %v6592
          %v6856 = vunpack.c.l.b16 %v6593
          %v6857 = vunpack.c.l.b16 %v6594
          %v6858 = vunpack.c.l.b16 %v6595
          %v6859 = vunpack.c.l.b16 %v6596
          %v6860 = vunpack.c.l.b16 %v6597
          %v6861 = vunpack.c.l.b16 %v6598
          %v6862 = vunpack.c.l.b16 %v6599
          %v6863 = vunpack.c.l.b16 %v6600
          %v6864 = vunpack.c.l.b16 %v6601
          %v6865 = vunpack.c.l.b16 %v6602
          %v6866 = vunpack.c.l.b16 %v6603
          %v6867 = vunpack.c.l.b16 %v6604
          %v6868 = vunpack.c.l.b16 %v6605
          %v6869 = vunpack.c.l.b16 %v6606
          %v6870 = vunpack.c.l.b16 %v6607
          %v6871 = vunpack.c.l.b16 %v6608
          %v6872 = vunpack.c.l.b16 %v6609
          %v6873 = vunpack.c.l.b16 %v6610
          %v6874 = vunpack.c.l.b16 %v6611
          %v6875 = vunpack.c.l.b16 %v6612
          %v6876 = vunpack.c.l.b16 %v6613
          %v6877 = vunpack.c.l.b16 %v6614
          %v6878 = vunpack.c.l.b16 %v6615
          %v6879 = vunpack.c.l.b16 %v6616
          %v6880 = vunpack.c.l.b16 %v6617
          %v6881 = vunpack.c.l.b16 %v6618
          %v6882 = vunpack.c.l.b16 %v6619
          %v6883 = vunpack.c.l.b16 %v6620
          %v6884 = vunpack.c.l.b16 %v6621
          %v6885 = vunpack.c.l.b16 %v6622
          %v6886 = vunpack.c.l.b16 %v6623
          %v6887 = vunpack.c.l.b16 %v6624
          %v6888 = vunpack.c.l.b16 %v6625
          %v6889 = vunpack.c.l.b16 %v6626
          %v6890 = vunpack.c.l.b16 %v6627
          %v6891 = vunpack.c.l.b16 %v6628
          %v6892 = vunpack.c.l.b16 %v6629
          %v6893 = vunpack.c.l.b16 %v6630
          %v6894 = vunpack.c.l.b16 %v6631
          %v6895 = vunpack.c.l.b16 %v6632
          %v6896 = vunpack.c.l.b16 %v6633
          %v6897 = vunpack.c.l.b16 %v6634
          %v6898 = vunpack.c.l.b16 %v6635
          %v6899 = vunpack.c.l.b16 %v6636
          %v6900 = vunpack.c.l.b16 %v6637
          %v6901 = vunpack.c.l.b16 %v6638
          %v6902 = vunpack.c.l.b16 %v6639
          %v6903 = vunpack.c.l.b16 %v6640
          %v6904 = vunpack.c.l.b16 %v6641
          %v6905 = vunpack.c.l.b16 %v6642
          %v6906 = vunpack.c.l.b16 %v6643
          %v6907 = vunpack.c.l.b16 %v6644
          %v6908 = vunpack.c.l.b16 %v6645
          %v6909 = vunpack.c.l.b16 %v6646
          %v6910 = vunpack.c.l.b16 %v6647
          %v6911 = vunpack.c.l.b16 %v6648
          %v6912 = vunpack.c.l.b16 %v6649
          %v6913 = vunpack.c.l.b16 %v6650
          %v6914 = vunpack.c.l.b16 %v6651
          %v6915 = vunpack.c.l.b16 %v6652
          %v6916 = vunpack.c.l.b16 %v6653
          %v6917 = vunpack.c.l.b16 %v6654
          %v6918 = vunpack.c.l.b16 %v6655
          %v6919 = vunpack.c.l.b16 %v6656
          %v6920 = vunpack.c.l.b16 %v6657
          %v6921 = vunpack.c.l.b16 %v6658
          %v6922 = vunpack.c.l.b16 %v6659
          %v6923 = vunpack.c.l.b16 %v6660
          %v6924 = vunpack.c.l.b16 %v6661
          %v6925 = vunpack.c.l.b16 %v6662
          %v6926 = vunpack.c.l.b16 %v6663
          %v6927 = vunpack.c.l.b16 %v6664
          %v6928 = vunpack.c.l.b16 %v6665
          %v6929 = vunpack.c.l.b16 %v6666
          %v6930 = vunpack.c.l.b16 %v6667
          %v6931 = vunpack.c.l.b16 %v6668
          %v6932 = vunpack.c.l.b16 %v6669
          %v6933 = vunpack.c.l.b16 %v6670
          %v6934 = vunpack.c.l.b16 %v6671
          %v6935 = vunpack.c.l.b16 %v6672
          %v6936 = vunpack.c.l.b16 %v6673
          %v6937 = vunpack.c.l.b16 %v6674
          %v6938 = vunpack.c.l.b16 %v6675
          %v6939 = vunpack.c.l.b16 %v6676
          %v6940 = vunpack.c.l.b16 %v6677
          %v6941 = vunpack.c.l.b16 %v6678
          %v6942 = vunpack.c.l.b16 %v6679
          %v6943 = vunpack.c.l.b16 %v6680
          %v6944 = vunpack.c.l.b16 %v6681
          %v6945 = vunpack.c.l.b16 %v6682
          %v6946 = vunpack.c.l.b16 %v6683
          %v6947 = vunpack.c.l.b16 %v6684
          %v6948 = vunpack.c.l.b16 %v6685
          %v6949 = vpack.c.b16 %v6822, %v6821
          %v6950 = vpack.c.b16 %v6824, %v6823
          %v6951 = vpack.c.b16 %v6826, %v6825
          %v6952 = vpack.c.b16 %v6828, %v6827
          %v6953 = vpack.c.b16 %v6830, %v6829
          %v6954 = vpack.c.b16 %v6832, %v6831
          %v6955 = vpack.c.b16 %v6834, %v6833
          %v6956 = vpack.c.b16 %v6836, %v6835
          %v6957 = vpack.c.b16 %v6838, %v6837
          %v6958 = vpack.c.b16 %v6840, %v6839
          %v6959 = vpack.c.b16 %v6842, %v6841
          %v6960 = vpack.c.b16 %v6844, %v6843
          %v6961 = vpack.c.b16 %v6846, %v6845
          %v6962 = vpack.c.b16 %v6848, %v6847
          %v6963 = vpack.c.b16 %v6850, %v6849
          %v6964 = vpack.c.b16 %v6852, %v6851
          %v6965 = vpack.c.b16 %v6854, %v6853
          %v6966 = vpack.c.b16 %v6856, %v6855
          %v6967 = vpack.c.b16 %v6858, %v6857
          %v6968 = vpack.c.b16 %v6860, %v6859
          %v6969 = vpack.c.b16 %v6862, %v6861
          %v6970 = vpack.c.b16 %v6864, %v6863
          %v6971 = vpack.c.b16 %v6866, %v6865
          %v6972 = vpack.c.b16 %v6868, %v6867
          %v6973 = vpack.c.b16 %v6870, %v6869
          %v6974 = vpack.c.b16 %v6872, %v6871
          %v6975 = vpack.c.b16 %v6874, %v6873
          %v6976 = vpack.c.b16 %v6876, %v6875
          %v6977 = vpack.c.b16 %v6878, %v6877
          %v6978 = vpack.c.b16 %v6880, %v6879
          %v6979 = vpack.c.b16 %v6882, %v6881
          %v6980 = vpack.c.b16 %v6884, %v6883
          %v6981 = vpack.c.b16 %v6886, %v6885
          %v6982 = vpack.c.b16 %v6888, %v6887
          %v6983 = vpack.c.b16 %v6890, %v6889
          %v6984 = vpack.c.b16 %v6892, %v6891
          %v6985 = vpack.c.b16 %v6894, %v6893
          %v6986 = vpack.c.b16 %v6896, %v6895
          %v6987 = vpack.c.b16 %v6898, %v6897
          %v6988 = vpack.c.b16 %v6900, %v6899
          %v6989 = vpack.c.b16 %v6902, %v6901
          %v6990 = vpack.c.b16 %v6904, %v6903
          %v6991 = vpack.c.b16 %v6906, %v6905
          %v6992 = vpack.c.b16 %v6908, %v6907
          %v6993 = vpack.c.b16 %v6910, %v6909
          %v6994 = vpack.c.b16 %v6912, %v6911
          %v6995 = vpack.c.b16 %v6914, %v6913
          %v6996 = vpack.c.b16 %v6916, %v6915
          %v6997 = vpack.c.b16 %v6918, %v6917
          %v6998 = vpack.c.b16 %v6920, %v6919
          %v6999 = vpack.c.b16 %v6922, %v6921
          %v7000 = vpack.c.b16 %v6924, %v6923
          %v7001 = vpack.c.b16 %v6926, %v6925
          %v7002 = vpack.c.b16 %v6928, %v6927
          %v7003 = vpack.c.b16 %v6930, %v6929
          %v7004 = vpack.c.b16 %v6932, %v6931
          %v7005 = vpack.c.b16 %v6934, %v6933
          %v7006 = vpack.c.b16 %v6936, %v6935
          %v7007 = vpack.c.b16 %v6938, %v6937
          %v7008 = vpack.c.b16 %v6940, %v6939
          %v7009 = vpack.c.b16 %v6942, %v6941
          %v7010 = vpack.c.b16 %v6944, %v6943
          %v7011 = vpack.c.b16 %v6946, %v6945
          %v7012 = vpack.c.b16 %v6948, %v6947
          %7077 = vmatprep.subr.bf16.mxu0 0
          %7078 = vmatpush1.bf16.msra.mxu0 %v6949
          %7079 = vmatprep.subr.bf16.mxu0 0
          %7080 = vmatpush1.bf16.msra.mxu0 %v6950
          %7081 = vmatprep.subr.bf16.mxu0 0
          %7082 = vmatpush1.bf16.msra.mxu0 %v6951
          %7083 = vmatprep.subr.bf16.mxu0 0
          %7084 = vmatpush1.bf16.msra.mxu0 %v6952
          %7085 = vmatprep.subr.bf16.mxu0 0
          %7086 = vmatpush1.bf16.msra.mxu0 %v6953
          %7087 = vmatprep.subr.bf16.mxu0 0
          %7088 = vmatpush1.bf16.msra.mxu0 %v6954
          %7089 = vmatprep.subr.bf16.mxu0 0
          %7090 = vmatpush1.bf16.msra.mxu0 %v6955
          %7091 = vmatprep.subr.bf16.mxu0 0
          %7092 = vmatpush1.bf16.msra.mxu0 %v6956
          %7093 = vmatprep.subr.bf16.mxu0 0
          %7094 = vmatpush1.bf16.msra.mxu0 %v6957
          %7095 = vmatprep.subr.bf16.mxu0 0
          %7096 = vmatpush1.bf16.msra.mxu0 %v6958
          %7097 = vmatprep.subr.bf16.mxu0 0
          %7098 = vmatpush1.bf16.msra.mxu0 %v6959
          %7099 = vmatprep.subr.bf16.mxu0 0
          %7100 = vmatpush1.bf16.msra.mxu0 %v6960
          %7101 = vmatprep.subr.bf16.mxu0 0
          %7102 = vmatpush1.bf16.msra.mxu0 %v6961
          %7103 = vmatprep.subr.bf16.mxu0 0
          %7104 = vmatpush1.bf16.msra.mxu0 %v6962
          %7105 = vmatprep.subr.bf16.mxu0 0
          %7106 = vmatpush1.bf16.msra.mxu0 %v6963
          %7107 = vmatprep.subr.bf16.mxu0 0
          %7108 = vmatpush1.bf16.msra.mxu0 %v6964
          %7109 = vmatprep.mubr.bf16.mxu0 %v6551
          %7110 = vmatmul.mubr.bf16.gmra.mrb[0].mxu0 %v6550
          %v7111 = vpop.f32.mrb[0].mxu0
          %v7112 = vadd.f32 %v6691, %v7111
          %v7113 = vpop.f32.mrb[0].mxu0
          %v7114 = vpop.f32.mrb[0].mxu0
          %v7115 = vpop.f32.mrb[0].mxu0
          %7116 = vdwg.mxu0
          %7117 = vmatprep.subr.bf16.mxu0 0
          %7118 = vmatpush1.bf16.msra.mxu0 %v6965
          %7119 = vmatprep.subr.bf16.mxu0 0
          %7120 = vmatpush1.bf16.msra.mxu0 %v6966
          %7121 = vmatprep.subr.bf16.mxu0 0
          %7122 = vmatpush1.bf16.msra.mxu0 %v6967
          %7123 = vmatprep.subr.bf16.mxu0 0
          %7124 = vmatpush1.bf16.msra.mxu0 %v6968
          %7125 = vmatprep.subr.bf16.mxu0 0
          %7126 = vmatpush1.bf16.msra.mxu0 %v6969
          %7127 = vmatprep.subr.bf16.mxu0 0
          %7128 = vmatpush1.bf16.msra.mxu0 %v6970
          %7129 = vmatprep.subr.bf16.mxu0 0
          %7130 = vmatpush1.bf16.msra.mxu0 %v6971
          %7131 = vmatprep.subr.bf16.mxu0 0
          %7132 = vmatpush1.bf16.msra.mxu0 %v6972
          %7133 = vmatprep.subr.bf16.mxu0 0
          %7134 = vmatpush1.bf16.msra.mxu0 %v6973
          %7135 = vmatprep.subr.bf16.mxu0 0
          %7136 = vmatpush1.bf16.msra.mxu0 %v6974
          %7137 = vmatprep.subr.bf16.mxu0 0
          %7138 = vmatpush1.bf16.msra.mxu0 %v6975
          %7139 = vmatprep.subr.bf16.mxu0 0
          %7140 = vmatpush1.bf16.msra.mxu0 %v6976
          %7141 = vmatprep.subr.bf16.mxu0 0
          %7142 = vmatpush1.bf16.msra.mxu0 %v6977
          %7143 = vmatprep.subr.bf16.mxu0 0
          %7144 = vmatpush1.bf16.msra.mxu0 %v6978
          %7145 = vmatprep.subr.bf16.mxu0 0
          %7146 = vmatpush1.bf16.msra.mxu0 %v6979
          %7147 = vmatprep.subr.bf16.mxu0 0
          %7148 = vmatpush1.bf16.msra.mxu0 %v6980
          %7149 = vmatprep.mubr.bf16.mxu0 %v6553
          %7150 = vmatmul.mubr.bf16.gmra.mrb[0].mxu0 %v6552
          %v7151 = vpop.f32.mrb[0].mxu0
          %v7152 = vadd.f32 %v7112, %v7151
          %v7153 = vpop.f32.mrb[0].mxu0
          %v7154 = vpop.f32.mrb[0].mxu0
          %v7155 = vpop.f32.mrb[0].mxu0
          %7156 = vdwg.mxu0
          %7157 = vmatprep.subr.bf16.mxu0 0
          %7158 = vmatpush1.bf16.msra.mxu0 %v6981
          %7159 = vmatprep.subr.bf16.mxu0 0
          %7160 = vmatpush1.bf16.msra.mxu0 %v6982
          %7161 = vmatprep.subr.bf16.mxu0 0
          %7162 = vmatpush1.bf16.msra.mxu0 %v6983
          %7163 = vmatprep.subr.bf16.mxu0 0
          %7164 = vmatpush1.bf16.msra.mxu0 %v6984
          %7165 = vmatprep.subr.bf16.mxu0 0
          %7166 = vmatpush1.bf16.msra.mxu0 %v6985
          %7167 = vmatprep.subr.bf16.mxu0 0
          %7168 = vmatpush1.bf16.msra.mxu0 %v6986
          %7169 = vmatprep.subr.bf16.mxu0 0
          %7170 = vmatpush1.bf16.msra.mxu0 %v6987
          %7171 = vmatprep.subr.bf16.mxu0 0
          %7172 = vmatpush1.bf16.msra.mxu0 %v6988
          %7173 = vmatprep.subr.bf16.mxu0 0
          %7174 = vmatpush1.bf16.msra.mxu0 %v6989
          %7175 = vmatprep.subr.bf16.mxu0 0
          %7176 = vmatpush1.bf16.msra.mxu0 %v6990
          %7177 = vmatprep.subr.bf16.mxu0 0
          %7178 = vmatpush1.bf16.msra.mxu0 %v6991
          %7179 = vmatprep.subr.bf16.mxu0 0
          %7180 = vmatpush1.bf16.msra.mxu0 %v6992
          %7181 = vmatprep.subr.bf16.mxu0 0
          %7182 = vmatpush1.bf16.msra.mxu0 %v6993
          %7183 = vmatprep.subr.bf16.mxu0 0
          %7184 = vmatpush1.bf16.msra.mxu0 %v6994
          %7185 = vmatprep.subr.bf16.mxu0 0
          %7186 = vmatpush1.bf16.msra.mxu0 %v6995
          %7187 = vmatprep.subr.bf16.mxu0 0
          %7188 = vmatpush1.bf16.msra.mxu0 %v6996
          %7189 = vmatprep.mubr.bf16.mxu0 %v6555
          %7190 = vmatmul.mubr.bf16.gmra.mrb[0].mxu0 %v6554
          %v7191 = vpop.f32.mrb[0].mxu0
          %v7192 = vadd.f32 %v7152, %v7191
          %v7193 = vpop.f32.mrb[0].mxu0
          %v7194 = vpop.f32.mrb[0].mxu0
          %v7195 = vpop.f32.mrb[0].mxu0
          %7196 = vdwg.mxu0
          %7197 = vmatprep.subr.bf16.mxu0 0
          %7198 = vmatpush1.bf16.msra.mxu0 %v6997
          %7199 = vmatprep.subr.bf16.mxu0 0
          %7200 = vmatpush1.bf16.msra.mxu0 %v6998
          %7201 = vmatprep.subr.bf16.mxu0 0
          %7202 = vmatpush1.bf16.msra.mxu0 %v6999
          %7203 = vmatprep.subr.bf16.mxu0 0
          %7204 = vmatpush1.bf16.msra.mxu0 %v7000
          %7205 = vmatprep.subr.bf16.mxu0 0
          %7206 = vmatpush1.bf16.msra.mxu0 %v7001
          %7207 = vmatprep.subr.bf16.mxu0 0
          %7208 = vmatpush1.bf16.msra.mxu0 %v7002
          %7209 = vmatprep.subr.bf16.mxu0 0
          %7210 = vmatpush1.bf16.msra.mxu0 %v7003
          %7211 = vmatprep.subr.bf16.mxu0 0
          %7212 = vmatpush1.bf16.msra.mxu0 %v7004
          %7213 = vmatprep.subr.bf16.mxu0 0
          %7214 = vmatpush1.bf16.msra.mxu0 %v7005
          %7215 = vmatprep.subr.bf16.mxu0 0
          %7216 = vmatpush1.bf16.msra.mxu0 %v7006
          %7217 = vmatprep.subr.bf16.mxu0 0
          %7218 = vmatpush1.bf16.msra.mxu0 %v7007
          %7219 = vmatprep.subr.bf16.mxu0 0
          %7220 = vmatpush1.bf16.msra.mxu0 %v7008
          %7221 = vmatprep.subr.bf16.mxu0 0
          %7222 = vmatpush1.bf16.msra.mxu0 %v7009
          %7223 = vmatprep.subr.bf16.mxu0 0
          %7224 = vmatpush1.bf16.msra.mxu0 %v7010
          %7225 = vmatprep.subr.bf16.mxu0 0
          %7226 = vmatpush1.bf16.msra.mxu0 %v7011
          %7227 = vmatprep.subr.bf16.mxu0 0
          %7228 = vmatpush1.bf16.msra.mxu0 %v7012
          %7229 = vmatprep.mubr.bf16.mxu0 %v6557
          %7230 = vmatmul.mubr.bf16.gmra.mrb[0].mxu0 %v6556
          %v7231 = vpop.f32.mrb[0].mxu0
          %v7232 = vadd.f32 %v7192, %v7231
          %v7233 = vpop.f32.mrb[0].mxu0
          %v7234 = vpop.f32.mrb[0].mxu0
          %v7235 = vpop.f32.mrb[0].mxu0
          %7236 = vdwg.mxu0
          %7237 = vst [vmem:[#allocation4] sm:$0x3] %v7232
        $region79: #{cnn_model_forward.5} parent=66 // pred_fallthru
          _
        // Predicated region
        $region80: #{cnn_model_forward.5} parent=66 // pred_check
          %p7238 = pneg %p194
        $region81: #{cnn_model_forward.5} parent=66 // pred_check_branch
          %7240 = sbr.rel (%p7238) target = $region83
        $region82: #{cnn_model_forward.5} parent=66 // pred_region
          %s7242 = ssub.s32 32, 32
          %7243 = vsyncadd [#allocation5], %s7242
          %s7245 = sshll.u32 [#allocation4], 4
          %s7246 = int_to_ptr.vmem [resolvable:$true] %s7245
          %7248 = dma.vmem_to_hbm [thread:$0]  %s7246, 32, %s7, [#allocation5]
        $region83: #{cnn_model_forward.5} parent=66 // pred_fallthru
          _
        // Predicated region
        $region84: #{cnn_model_forward.5} parent=66 // pred_check
          %p7249 = pneg %p194
        $region85: #{cnn_model_forward.5} parent=66 // pred_check_branch
          %7251 = sbr.rel (%p7249) target = $region87
        $region86: #{cnn_model_forward.5} parent=66 // pred_region
          %7252 = dma.done [#allocation5], 32
        $region87: #{cnn_model_forward.5} parent=66 // pred_fallthru
          _
      $region67: #{cnn_model_forward.5} parent=5 // pred_fallthru
        _
      %p7253 = scmp.le.s32.totalorder 2, %s14
      // Predicated region
      $region88: #{cnn_model_forward.5} parent=5 // pred_check
        %p7254 = pneg %p7253
      $region89: #{cnn_model_forward.5} parent=5 // pred_check_branch
        %7256 = sbr.rel (%p7254) target = $region91
      $region90: #{cnn_model_forward.5} parent=5 // pred_region
        %s7257 = ssub.s32 %s14, 2
      $region91: #{cnn_model_forward.5} parent=5 // pred_fallthru
        _
    $region6: #{cnn_model_forward.5} parent=1 // loop_footer
      %s18 = sadd.s32 1, %s14
    $region7: #{cnn_model_forward.5} parent=1 // loop_footer_branch
      %13 = sbr.rel target = $region3
    $region8: #{cnn_model_forward.5} parent=1 // loop_exit
      _
    %7258 = vsyncpa [#allocation5], 1
    %s7259 = scalar_lea.sflag [#allocation5], 1
    %7260 = vsyncpa %s7259, 1

</llo_original>
